<compile_context>
chip_gen: v5e
topology: v5e:2x2
jax: 0.10.0
libtpu: 0.0.40
codegen_flags: <defaults>
</compile_context>

<pallas_src>
import jax
import jax.numpy as jnp
import numpy as np
from jax.experimental import pallas as pl
from jax.experimental.pallas import tpu as pltpu

P_POOL = 196          # 14 * 14 pooled spatial positions
K_TAPS = 27           # 3 in-channels * 3 * 3 kernel taps
KQ = 4 * K_TAPS       # quadrant-folded contraction dim (108)
C_OUT = 8             # conv output channels
N_CONV = 4 * C_OUT    # 32 conv-dot output columns (quadrant-major)
N_FC = 128            # FC output dim padded 5 -> 128 (lane-dense stores)


def simple_cnn_kernel(p_ref, wq_ref, bconv_ref, wfc_ref, bfc_ref, out_ref):
    bt = p_ref.shape[1]

    # --- conv: all 4 pool quadrants in one MXU dot -------------------------
    # (196, BT, 108) -> (196*BT, 108): merges leading dim into 8-aligned
    # sublanes, layout-free.
    sp = p_ref[...].reshape(P_POOL * bt, KQ)
    z = jnp.dot(sp, wq_ref[...],
                preferred_element_type=jnp.float32)          # (196*BT, 32)

    # --- 2x2 max-pool over the 4 quadrant lane-groups, + bias, ReLU --------
    m = jnp.maximum(jnp.maximum(z[:, 0:8], z[:, 8:16]),
                    jnp.maximum(z[:, 16:24], z[:, 24:32]))    # (196*BT, 8)
    m = jnp.maximum(m + bconv_ref[...], 0.0)

    # --- FC on the MXU: batch over pooled position p, contract 8 channels --
    m3 = m.reshape(P_POOL, bt, C_OUT)                         # layout-free split
    part = jax.lax.dot_general(
        m3, wfc_ref[...],
        dimension_numbers=(((2,), (1,)), ((0,), (0,))),
        preferred_element_type=jnp.float32)                   # (196, BT, 128)
    out_ref[...] = jnp.sum(part, axis=0) + bfc_ref[...]       # (BT, 128)


def _im2col_pool_quadrants(x):
    """x: (B, 3, 30, 30) NCHW -> patches (196, B, 108) with [p, b, q*27 + k].

    p = hh*14 + ww (pooled position), q = qr*2 + qc (2x2 pool quadrant),
    k = ci*9 + kh*3 + kw (PyTorch OIHW weight flattening).
    """
    B = x.shape[0]
    cols = []
    for qr in range(2):
        for qc in range(2):
            for ci in range(3):
                for kh in range(3):
                    for kw in range(3):
                        sl = x[:, ci,
                               qr + kh:qr + kh + 28:2,
                               qc + kw:qc + kw + 28:2]        # (B, 14, 14)
                        cols.append(sl.reshape(B, P_POOL))
    pat = jnp.stack(cols, axis=-1)                            # (B, 196, 108)
    return pat.transpose(1, 0, 2)                             # (196, B, 108)


def simple_cnn_forward(x, params, *, block_b=8,
                       vmem_limit_bytes=32 * 1024 * 1024):
    wconv, bconv, wfc, bfc = params                 # (8,3,3,3),(8,),(5,1568),(5,)
    x = x.astype(jnp.float32)
    B = x.shape[0]
    bt = int(block_b)
    assert bt % 8 == 0, "batch tile must be a multiple of 8 (sublane alignment)"
    b_pad = ((B + bt - 1) // bt) * bt

    patches = _im2col_pool_quadrants(x)                       # (196, B, 108)
    if b_pad != B:
        patches = jnp.pad(patches, ((0, 0), (0, b_pad - B), (0, 0)))

    # Block-diagonal conv weight: column q*8+c applies Wconv[c] to quadrant q.
    wflat = wconv.reshape(C_OUT, K_TAPS).astype(jnp.float32)  # (8, 27)
    wq = jnp.kron(jnp.eye(4, dtype=jnp.float32), wflat.T)     # (108, 32)
    bconv_row = bconv.reshape(1, C_OUT).astype(jnp.float32)

    # FC weights: wfc[o, c*196 + p] -> (p, c, o), output zero-padded 5 -> 128.
    wfc_h = wfc.reshape(5, C_OUT, P_POOL).transpose(2, 1, 0).astype(jnp.float32)
    wfc_h = jnp.pad(wfc_h, ((0, 0), (0, 0), (0, N_FC - 5)))   # (196, 8, 128)
    bfc_row = jnp.pad(bfc.astype(jnp.float32), (0, N_FC - 5)).reshape(1, N_FC)

    out = pl.pallas_call(
        simple_cnn_kernel,
        out_shape=jax.ShapeDtypeStruct((b_pad, N_FC), jnp.float32),
        grid_spec=pltpu.PrefetchScalarGridSpec(
            num_scalar_prefetch=0,
            grid=(b_pad // bt,),
            in_specs=[
                pl.BlockSpec((P_POOL, bt, KQ), lambda i: (0, i, 0)),
                pl.BlockSpec((KQ, N_CONV), lambda i: (0, 0)),
                pl.BlockSpec((1, C_OUT), lambda i: (0, 0)),
                pl.BlockSpec((P_POOL, C_OUT, N_FC), lambda i: (0, 0, 0)),
                pl.BlockSpec((1, N_FC), lambda i: (0, 0)),
            ],
            out_specs=pl.BlockSpec((bt, N_FC), lambda i: (i, 0)),
        ),
        compiler_params=pltpu.CompilerParams(
            dimension_semantics=("parallel",),
            vmem_limit_bytes=vmem_limit_bytes),
    )(patches, wq, bconv_row, wfc_h, bfc_row)

    return out[:B, :5]


def reference_forward(x, params):
    """Pure-JAX reference matching the PyTorch forward exactly."""
    wconv, bconv, wfc, bfc = params
    y = jax.lax.conv_general_dilated(
        x, wconv, window_strides=(1, 1), padding="VALID",
        dimension_numbers=("NCHW", "OIHW", "NCHW"))
    y = jnp.maximum(y + bconv.reshape(1, 8, 1, 1), 0.0)
    y = jax.lax.reduce_window(y, -jnp.inf, jax.lax.max,
                              (1, 1, 2, 2), (1, 1, 2, 2), "VALID")
    flat = y.reshape(x.shape[0], -1)          # NCHW flatten: (B, 8*14*14=1568)
    return flat @ wfc.T + bfc


def init_params(key):
    kw1, kb1, kw2, kb2 = jax.random.split(key, 4)
    bound1 = 1.0 / np.sqrt(3 * 3 * 3)          # Conv2d default init bound
    wconv = jax.random.uniform(kw1, (8, 3, 3, 3), jnp.float32, -bound1, bound1)
    bconv = jax.random.uniform(kb1, (8,), jnp.float32, -bound1, bound1)
    bound2 = 1.0 / np.sqrt(1568.0)             # Linear default init bound
    wfc = jax.random.uniform(kw2, (5, 1568), jnp.float32, -bound2, bound2)
    bfc = jax.random.uniform(kb2, (5,), jnp.float32, -bound2, bound2)
    return wconv, bconv, wfc, bfc


if __name__ == "__main__":
    key = jax.random.PRNGKey(0)
    kx, kp = jax.random.split(key)
    # Input spatial size 30 is implied by fc1 = Linear(1568, 5): 8*14*14 = 1568.
    # B=14 exercises both batch padding (14 -> 16) and a 2-step parallel grid.
    x = jax.random.normal(kx, (14, 3, 30, 30), jnp.float32)
    params = init_params(kp)

    out = jax.block_until_ready(simple_cnn_forward(x, params, block_b=8))
    ref = jax.block_until_ready(reference_forward(x, params))
    np.testing.assert_allclose(np.asarray(out), np.asarray(ref),
                               rtol=2e-3, atol=2e-3)
    print("KERNEL_OK")
</pallas_src>

<mosaic_0001>
module attributes {stable_mosaic.version = 11 : i64} {
  func.func @simple_cnn_kernel(%arg0: i32, %arg1: memref<196x8x108xf32, #tpu.memory_space<vmem>>, %arg2: memref<108x32xf32, #tpu.memory_space<vmem>>, %arg3: memref<1x8xf32, #tpu.memory_space<vmem>>, %arg4: memref<196x8x128xf32, #tpu.memory_space<vmem>>, %arg5: memref<1x128xf32, #tpu.memory_space<vmem>>, %arg6: memref<8x128xf32, #tpu.memory_space<vmem>>) attributes {dimension_semantics = [#tpu.dimension_semantics<parallel>], iteration_bounds = array<i64: 2>, scalar_prefetch = 0 : i64, scratch_operands = 0 : i64, tpu.core_type = #tpu.core_type<tc>, window_params = [{transform_indices = @transform_0, window_bounds = array<i64: 196, 8, 108>}, {pipeline_mode = #tpu.pipeline_mode<synchronous>, transform_indices = @transform_1, window_bounds = array<i64: 108, 32>}, {pipeline_mode = #tpu.pipeline_mode<synchronous>, transform_indices = @transform_2, window_bounds = array<i64: 1, 8>}, {pipeline_mode = #tpu.pipeline_mode<synchronous>, transform_indices = @transform_3, window_bounds = array<i64: 196, 8, 128>}, {pipeline_mode = #tpu.pipeline_mode<synchronous>, transform_indices = @transform_4, window_bounds = array<i64: 1, 128>}, {transform_indices = @transform_5, window_bounds = array<i64: 8, 128>}]} {
    %c0 = arith.constant 0 : index
    %c0_0 = arith.constant 0 : index
    %c0_1 = arith.constant 0 : index
    %0 = vector.load %arg1[%c0, %c0_0, %c0_1] : memref<196x8x108xf32, #tpu.memory_space<vmem>>, vector<196x8x108xf32>
    %1 = vector.shape_cast %0 : vector<196x8x108xf32> to vector<1568x108xf32>
    %c0_2 = arith.constant 0 : index
    %c0_3 = arith.constant 0 : index
    %2 = vector.load %arg2[%c0_2, %c0_3] : memref<108x32xf32, #tpu.memory_space<vmem>>, vector<108x32xf32>
    %cst = arith.constant dense<0.000000e+00> : vector<1568x32xf32>
    %3 = tpu.matmul %1, %2, %cst {dimension_numbers = #tpu.dot_dimension_numbers<[1], [0], [0], [1], [0, 0, 1, 1], [], []>} : vector<1568x108xf32>, vector<108x32xf32>, vector<1568x32xf32> -> vector<1568x32xf32>
    %4 = vector.extract_strided_slice %3 {offsets = [0, 0], sizes = [1568, 8], strides = [1, 1]} : vector<1568x32xf32> to vector<1568x8xf32>
    %5 = vector.extract_strided_slice %3 {offsets = [0, 8], sizes = [1568, 8], strides = [1, 1]} : vector<1568x32xf32> to vector<1568x8xf32>
    %6 = arith.maximumf %4, %5 : vector<1568x8xf32>
    %7 = vector.extract_strided_slice %3 {offsets = [0, 16], sizes = [1568, 8], strides = [1, 1]} : vector<1568x32xf32> to vector<1568x8xf32>
    %8 = vector.extract_strided_slice %3 {offsets = [0, 24], sizes = [1568, 8], strides = [1, 1]} : vector<1568x32xf32> to vector<1568x8xf32>
    %9 = arith.maximumf %7, %8 : vector<1568x8xf32>
    %10 = arith.maximumf %6, %9 : vector<1568x8xf32>
    %c0_4 = arith.constant 0 : index
    %c0_5 = arith.constant 0 : index
    %11 = vector.load %arg3[%c0_4, %c0_5] : memref<1x8xf32, #tpu.memory_space<vmem>>, vector<1x8xf32>
    %12 = vector.broadcast %11 : vector<1x8xf32> to vector<1568x8xf32>
    %13 = arith.addf %10, %12 : vector<1568x8xf32>
    %cst_6 = arith.constant 0.000000e+00 : f32
    %14 = vector.broadcast %cst_6 : f32 to vector<1568x8xf32>
    %15 = arith.maximumf %13, %14 : vector<1568x8xf32>
    %16 = vector.shape_cast %15 : vector<1568x8xf32> to vector<196x8x8xf32>
    %c0_7 = arith.constant 0 : index
    %c0_8 = arith.constant 0 : index
    %c0_9 = arith.constant 0 : index
    %17 = vector.load %arg4[%c0_7, %c0_8, %c0_9] : memref<196x8x128xf32, #tpu.memory_space<vmem>>, vector<196x8x128xf32>
    %cst_10 = arith.constant dense<0.000000e+00> : vector<196x8x128xf32>
    %18 = tpu.matmul %16, %17, %cst_10 {dimension_numbers = #tpu.dot_dimension_numbers<[2], [1], [1], [2], [0, 0, 0, 1, 1, 2], [0], [0]>} : vector<196x8x8xf32>, vector<196x8x128xf32>, vector<196x8x128xf32> -> vector<196x8x128xf32>
    %cst_11 = arith.constant dense<0.000000e+00> : vector<8x128xf32>
    %19 = vector.multi_reduction <add>, %18, %cst_11 [0] : vector<196x8x128xf32> to vector<8x128xf32>
    %c0_12 = arith.constant 0 : index
    %c0_13 = arith.constant 0 : index
    %20 = vector.load %arg5[%c0_12, %c0_13] : memref<1x128xf32, #tpu.memory_space<vmem>>, vector<1x128xf32>
    %21 = vector.broadcast %20 : vector<1x128xf32> to vector<8x128xf32>
    %22 = arith.addf %19, %21 : vector<8x128xf32>
    %c0_14 = arith.constant 0 : index
    %c0_15 = arith.constant 0 : index
    %23 = vector.load %arg6[%c0_14, %c0_15] : memref<8x128xf32, #tpu.memory_space<vmem>>, vector<8x128xf32>
    tpu.vector_store %arg6[%c0_14, %c0_15], %22 {strides = array<i32>} : memref<8x128xf32, #tpu.memory_space<vmem>>, vector<8x128xf32>,
    return
  }
  func.func @transform_0(%arg0: i32) -> (i32, i32, i32) {
    %c0_i32 = arith.constant 0 : i32
    %c0_i32_0 = arith.constant 0 : i32
    %c0_i32_1 = arith.constant 0 : i32
    return %c0_i32, %arg0, %c0_i32_0 : i32, i32, i32
  }
  func.func @transform_1(%arg0: i32) -> (i32, i32) {
    %c0_i32 = arith.constant 0 : i32
    %c0_i32_0 = arith.constant 0 : i32
    %c0_i32_1 = arith.constant 0 : i32
    return %c0_i32, %c0_i32_0 : i32, i32
  }
  func.func @transform_2(%arg0: i32) -> (i32, i32) {
    %c0_i32 = arith.constant 0 : i32
    %c0_i32_0 = arith.constant 0 : i32
    %c0_i32_1 = arith.constant 0 : i32
    return %c0_i32, %c0_i32_0 : i32, i32
  }
  func.func @transform_3(%arg0: i32) -> (i32, i32, i32) {
    %c0_i32 = arith.constant 0 : i32
    %c0_i32_0 = arith.constant 0 : i32
    %c0_i32_1 = arith.constant 0 : i32
    %c0_i32_2 = arith.constant 0 : i32
    return %c0_i32, %c0_i32_0, %c0_i32_1 : i32, i32, i32
  }
  func.func @transform_4(%arg0: i32) -> (i32, i32) {
    %c0_i32 = arith.constant 0 : i32
    %c0_i32_0 = arith.constant 0 : i32
    %c0_i32_1 = arith.constant 0 : i32
    return %c0_i32, %c0_i32_0 : i32, i32
  }
  func.func @transform_5(%arg0: i32) -> (i32, i32) {
    %c0_i32 = arith.constant 0 : i32
    %c0_i32_0 = arith.constant 0 : i32
    return %arg0, %c0_i32 : i32, i32
  }
}

</mosaic_0001>

<llo_original>
// kernel: tpu_custom_call.1
$region0: #{tpu_custom_call.1}
  #allocation0 [shape = 'u32[]', space=smem, size = 0x4, offset = 0x4, fixed_abs, tag = 'smem constant byte address 0x4 - core index']
  #allocation1 [shape = 'u32[72,128]{1,0:T(1,128)}', space=vmem, size = 0x9000, scoped, tag = 'internal scratch']
  %s0 = inlined_call_operand.hbm [shape: f32[196,16,108], index: 0, kind: input, shape index: {}]
  %s1 = inlined_call_operand.vmem [shape: f32[108,32], index: 1, kind: input, shape index: {}]
  %s2 = inlined_call_operand.hbm [shape: f32[1,8], index: 2, kind: input, shape index: {}]
  %s3 = inlined_call_operand.hbm [shape: f32[196,8,128], index: 3, kind: input, shape index: {}]
  %s4 = inlined_call_operand.hbm [shape: f32[1,128], index: 4, kind: input, shape index: {}]
  %s5 = inlined_call_operand.hbm [shape: f32[16,128], index: 5, kind: output, shape index: {}]
  %s6 = sld [smem:[#allocation0]]
  $region69: #{tpu_custom_call.1} parent=0
    _
  %s8 = ssub.s32 1, %s6
  %s9 = scalar_select 0, %s8, %s6
  $region1: #{tpu_custom_call.1} parent=0
    #allocation2 [shape = 'u8[1605632]{0}', space=vmem, size = 0x188000, scoped, tag = 'input window, operand 0']
    #allocation3 [shape = 's32[2]{0}', space=sflag, size = 0x8, scoped, tag = 'scoped memory for tpu_custom_call.1']
    #allocation4 [shape = 's32[2]{0}', space=sflag, size = 0x8, scoped, tag = 'scoped memory for tpu_custom_call.1']
    #allocation5 [shape = 'u8[512]{0}', space=vmem, size = 0x400, scoped, tag = 'input window, operand 2, single buffered']
    #allocation6 [shape = 's32[1]{0}', space=sflag, size = 0x4, scoped, tag = 'scoped memory for tpu_custom_call.1']
    #allocation7 [shape = 'u8[802816]{0}', space=vmem, size = 0xc4000, scoped, tag = 'input window, operand 3, single buffered']
    #allocation8 [shape = 'u8[512]{0}', space=vmem, size = 0x400, scoped, tag = 'input window, operand 4, single buffered']
    #allocation9 [shape = 's32[1]{0}', space=sflag, size = 0x4, scoped, tag = 'scoped memory for tpu_custom_call.1']
    #allocation10 [shape = 'u8[8192]{0}', space=vmem, size = 0x2000, scoped, tag = 'output window, operand 0']
    %10 = vsyncpa [#allocation3], 0
    %s11 = scalar_lea.sflag [#allocation3], 1
    %12 = vsyncpa %s11, 0
    %13 = vsyncpa [#allocation6], 0
    %14 = vsyncpa [#allocation9], 0
    %15 = vsyncpa [#allocation4], 0
    %s16 = scalar_lea.sflag [#allocation4], 1
    %17 = vsyncpa %s16, 0
    loop: start=0, step=1, limit=4
    $region2: #{tpu_custom_call.1} parent=1 // loop_pre_header
      _
    $region3: #{tpu_custom_call.1} parent=1 // loop_header
      %s19 = sphi 0, %s23
      %p20 = scmp.ge.s32.totalorder %s19, 4
      %s29 = sphi 0, %s31
      %s32 = sphi 0, %s29
      %s33 = sphi 0, %s32
      %s49 = sphi 0, %s33
      %s53 = sphi 0, %s53
      %s55 = sphi 0, %s53
      %s56 = sphi 0, %s55
      %s70 = sphi 0, %s56
      %s74 = sphi 0, %s74
      %s76 = sphi 0, %s74
      %s77 = sphi 0, %s76
      %s91 = sphi 0, %s77
      %s95 = sphi 0, %s95
      %s97 = sphi 0, %s95
      %s98 = sphi 0, %s97
      %s112 = sphi 0, %s98
      %s116 = sphi 0, %s116
      %s118 = sphi 0, %s116
      %s119 = sphi 0, %s118
      %s133 = sphi 0, %s119
      %s139 = sphi 0, %s141
      %s142 = sphi 0, %s139
      %s143 = sphi 0, %s142
      %s159 = sphi 0, %s143
    $region4: #{tpu_custom_call.1} parent=1 // loop_header_branch
      %22 = sbr.rel (%p20) target = $region8
    $region5: #{tpu_custom_call.1} parent=1 // loop_body
      %s24 = ssub.s32 %s19, 1
      %s25 = ssub.s32 %s19, 2
      %s26 = sadd.s32 %s19, 1
      %s27 = ssub.s32 %s19, %s26
      %p28 = scmp.eq.s32.totalorder %s27, 0
      %s30 = sadd.s32 %s29, 1
      %s31 = scalar_select %p28, %s29, %s30
      %p34 = pneg %p28
      %p35 = scmp.eq.s32.totalorder %s19, 1
      %p36 = por %p34, %p35
      %p37 = scmp.ne.s32.totalorder %s29, %s32
      %p38 = scmp.eq.s32.totalorder %s19, 0
      %p39 = por %p37, %p38
      %p40 = scmp.ne.s32.totalorder %s29, %s32
      %p41 = scmp.eq.s32.totalorder %s24, 1
      %p42 = por %p40, %p41
      %p43 = scmp.ne.s32.totalorder %s32, %s33
      %p44 = scmp.eq.s32.totalorder %s24, 0
      %p45 = por %p43, %p44
      %p46 = scmp.ne.s32.totalorder %s32, %s33
      %p47 = scmp.eq.s32.totalorder %s25, 1
      %p48 = por %p46, %p47
      %p50 = scmp.ne.s32.totalorder %s33, %s49
      %p51 = scmp.eq.s32.totalorder %s25, 0
      %p52 = por %p50, %p51
      %s54 = sadd.s32 %s53, 1
      %p57 = scmp.eq.s32.totalorder %s19, 1
      %p58 = scmp.ne.s32.totalorder %s53, %s55
      %p59 = scmp.eq.s32.totalorder %s19, 0
      %p60 = por %p58, %p59
      %p61 = scmp.ne.s32.totalorder %s53, %s55
      %p62 = scmp.eq.s32.totalorder %s24, 1
      %p63 = por %p61, %p62
      %p64 = scmp.ne.s32.totalorder %s55, %s56
      %p65 = scmp.eq.s32.totalorder %s24, 0
      %p66 = por %p64, %p65
      %p67 = scmp.ne.s32.totalorder %s55, %s56
      %p68 = scmp.eq.s32.totalorder %s25, 1
      %p69 = por %p67, %p68
      %p71 = scmp.ne.s32.totalorder %s56, %s70
      %p72 = scmp.eq.s32.totalorder %s25, 0
      %p73 = por %p71, %p72
      %s75 = sadd.s32 %s74, 1
      %p78 = scmp.eq.s32.totalorder %s19, 1
      %p79 = scmp.ne.s32.totalorder %s74, %s76
      %p80 = scmp.eq.s32.totalorder %s19, 0
      %p81 = por %p79, %p80
      %p82 = scmp.ne.s32.totalorder %s74, %s76
      %p83 = scmp.eq.s32.totalorder %s24, 1
      %p84 = por %p82, %p83
      %p85 = scmp.ne.s32.totalorder %s76, %s77
      %p86 = scmp.eq.s32.totalorder %s24, 0
      %p87 = por %p85, %p86
      %p88 = scmp.ne.s32.totalorder %s76, %s77
      %p89 = scmp.eq.s32.totalorder %s25, 1
      %p90 = por %p88, %p89
      %p92 = scmp.ne.s32.totalorder %s77, %s91
      %p93 = scmp.eq.s32.totalorder %s25, 0
      %p94 = por %p92, %p93
      %s96 = sadd.s32 %s95, 1
      %p99 = scmp.eq.s32.totalorder %s19, 1
      %p100 = scmp.ne.s32.totalorder %s95, %s97
      %p101 = scmp.eq.s32.totalorder %s19, 0
      %p102 = por %p100, %p101
      %p103 = scmp.ne.s32.totalorder %s95, %s97
      %p104 = scmp.eq.s32.totalorder %s24, 1
      %p105 = por %p103, %p104
      %p106 = scmp.ne.s32.totalorder %s97, %s98
      %p107 = scmp.eq.s32.totalorder %s24, 0
      %p108 = por %p106, %p107
      %p109 = scmp.ne.s32.totalorder %s97, %s98
      %p110 = scmp.eq.s32.totalorder %s25, 1
      %p111 = por %p109, %p110
      %p113 = scmp.ne.s32.totalorder %s98, %s112
      %p114 = scmp.eq.s32.totalorder %s25, 0
      %p115 = por %p113, %p114
      %s117 = sadd.s32 %s116, 1
      %p120 = scmp.eq.s32.totalorder %s19, 1
      %p121 = scmp.ne.s32.totalorder %s116, %s118
      %p122 = scmp.eq.s32.totalorder %s19, 0
      %p123 = por %p121, %p122
      %p124 = scmp.ne.s32.totalorder %s116, %s118
      %p125 = scmp.eq.s32.totalorder %s24, 1
      %p126 = por %p124, %p125
      %p127 = scmp.ne.s32.totalorder %s118, %s119
      %p128 = scmp.eq.s32.totalorder %s24, 0
      %p129 = por %p127, %p128
      %p130 = scmp.ne.s32.totalorder %s118, %s119
      %p131 = scmp.eq.s32.totalorder %s25, 1
      %p132 = por %p130, %p131
      %p134 = scmp.ne.s32.totalorder %s119, %s133
      %p135 = scmp.eq.s32.totalorder %s25, 0
      %p136 = por %p134, %p135
      %s137 = ssub.s32 %s19, %s26
      %p138 = scmp.eq.s32.totalorder %s137, 0
      %s140 = sadd.s32 %s139, 1
      %s141 = scalar_select %p138, %s139, %s140
      %p144 = pneg %p138
      %p145 = scmp.eq.s32.totalorder %s19, 1
      %p146 = por %p144, %p145
      %p147 = scmp.ne.s32.totalorder %s139, %s142
      %p148 = scmp.eq.s32.totalorder %s19, 0
      %p149 = por %p147, %p148
      %p150 = scmp.ne.s32.totalorder %s139, %s142
      %p151 = scmp.eq.s32.totalorder %s24, 1
      %p152 = por %p150, %p151
      %p153 = scmp.ne.s32.totalorder %s142, %s143
      %p154 = scmp.eq.s32.totalorder %s24, 0
      %p155 = por %p153, %p154
      %p156 = scmp.ne.s32.totalorder %s142, %s143
      %p157 = scmp.eq.s32.totalorder %s25, 1
      %p158 = por %p156, %p157
      %p160 = scmp.ne.s32.totalorder %s143, %s159
      %p161 = scmp.eq.s32.totalorder %s25, 0
      %p162 = por %p160, %p161
      %p163 = scmp.le.s32.totalorder 1, %s19
      %p164 = scmp.lt.s32.totalorder %s19, 3
      %p165 = pnand %p163, %p164
      %p166 = pneg %p165
      // Predicated region
      $region9: #{tpu_custom_call.1} parent=5 // pred_check
        _
      $region10: #{tpu_custom_call.1} parent=5 // pred_check_branch
        %168 = sbr.rel (%p165) target = $region12
      $region11: #{tpu_custom_call.1} parent=5 // pred_region
        %s169 = ssub.s32 %s19, 1
        // Predicated region
        $region13: #{tpu_custom_call.1} parent=11 // pred_check
          %p170 = pneg %p66
        $region14: #{tpu_custom_call.1} parent=11 // pred_check_branch
          %172 = sbr.rel (%p170) target = $region16
        $region15: #{tpu_custom_call.1} parent=11 // pred_region
          _
        $region16: #{tpu_custom_call.1} parent=11 // pred_fallthru
          _
        // Predicated region
        $region17: #{tpu_custom_call.1} parent=11 // pred_check
          %p173 = pneg %p87
        $region18: #{tpu_custom_call.1} parent=11 // pred_check_branch
          %175 = sbr.rel (%p173) target = $region20
        $region19: #{tpu_custom_call.1} parent=11 // pred_region
          %177 = vsyncadd [#allocation6], 0
          %s179 = sshll.u32 %s2, 4
          %s180 = int_to_ptr.hbm [resolvable:$true] %s179
          %s181 = sshll.u32 [#allocation5], 4
          %s182 = int_to_ptr.vmem [resolvable:$true] %s181
          %184 = dma.hbm_to_vmem [thread:$0]  %s180, 16, %s182, [#allocation6]
        $region20: #{tpu_custom_call.1} parent=11 // pred_fallthru
          _
        // Predicated region
        $region21: #{tpu_custom_call.1} parent=11 // pred_check
          %p185 = pneg %p108
        $region22: #{tpu_custom_call.1} parent=11 // pred_check_branch
          %187 = sbr.rel (%p185) target = $region24
        $region23: #{tpu_custom_call.1} parent=11 // pred_region
          %189 = vsyncadd [#allocation6], 0
          %s190 = sshll.u32 %s3, 4
          %s191 = int_to_ptr.hbm [resolvable:$true] %s190
          %s192 = sshll.u32 [#allocation7], 4
          %s193 = int_to_ptr.vmem [resolvable:$true] %s192
          %198 = dma.hbm_to_vmem [thread:$0]  %s191, 25088, %s193, [#allocation6], 128, 128, 8
        $region24: #{tpu_custom_call.1} parent=11 // pred_fallthru
          _
        // Predicated region
        $region25: #{tpu_custom_call.1} parent=11 // pred_check
          %p199 = pneg %p129
        $region26: #{tpu_custom_call.1} parent=11 // pred_check_branch
          %201 = sbr.rel (%p199) target = $region28
        $region27: #{tpu_custom_call.1} parent=11 // pred_region
          %203 = vsyncadd [#allocation9], 0
          %s205 = sshll.u32 %s4, 4
          %s206 = int_to_ptr.hbm [resolvable:$true] %s205
          %s207 = sshll.u32 [#allocation8], 4
          %s208 = int_to_ptr.vmem [resolvable:$true] %s207
          %210 = dma.hbm_to_vmem [thread:$0]  %s206, 16, %s208, [#allocation9]
        $region28: #{tpu_custom_call.1} parent=11 // pred_fallthru
          _
      $region12: #{tpu_custom_call.1} parent=5 // pred_fallthru
        _
      %p211 = scmp.lt.s32.totalorder %s19, 2
      // Predicated region
      $region29: #{tpu_custom_call.1} parent=5 // pred_check
        %p212 = pneg %p211
      $region30: #{tpu_custom_call.1} parent=5 // pred_check_branch
        %214 = sbr.rel (%p212) target = $region32
      $region31: #{tpu_custom_call.1} parent=5 // pred_region
        // Predicated region
        $region33: #{tpu_custom_call.1} parent=31 // pred_check
          %p215 = pneg %p39
        $region34: #{tpu_custom_call.1} parent=31 // pred_check_branch
          %217 = sbr.rel (%p215) target = $region36
        $region35: #{tpu_custom_call.1} parent=31 // pred_region
          %s218 = sand.u32 %s29, 1
          %s219 = scalar_lea.sflag [#allocation3], %s218
          %s220 = sand.u32 %s29, 1
          %s221 = smul.addr %s220, 1568
          %s222 = scalar_lea.vmem [#allocation2], %s221
          %224 = vsyncadd %s219, 0
          %s225 = smul.addr %s19, 8
          %s226 = scalar_lea.hbm %s0, %s225
          %s227 = sshll.u32 %s226, 4
          %s228 = int_to_ptr.hbm [resolvable:$true] %s227
          %s229 = sshll.u32 %s222, 4
          %s230 = int_to_ptr.vmem [resolvable:$true] %s229
          %235 = dma.hbm_to_vmem [thread:$0]  %s228, 25088, %s230, %s219, 256, 128, 8
        $region36: #{tpu_custom_call.1} parent=31 // pred_fallthru
          _
      $region32: #{tpu_custom_call.1} parent=5 // pred_fallthru
        _
      %p236 = scmp.le.s32.totalorder 1, %s19
      %p237 = scmp.lt.s32.totalorder %s19, 3
      %p238 = pnand %p236, %p237
      %p239 = pneg %p238
      // Predicated region
      $region37: #{tpu_custom_call.1} parent=5 // pred_check
        _
      $region38: #{tpu_custom_call.1} parent=5 // pred_check_branch
        %241 = sbr.rel (%p238) target = $region40
      $region39: #{tpu_custom_call.1} parent=5 // pred_region
        %s242 = ssub.s32 %s19, 1
        %s243 = sand.u32 %s32, 1
        %s244 = scalar_lea.sflag [#allocation3], %s243
        %s245 = sand.u32 %s32, 1
        %s246 = smul.addr %s245, 1568
        %s247 = scalar_lea.vmem [#allocation2], %s246
        // Predicated region
        $region41: #{tpu_custom_call.1} parent=39 // pred_check
          %p248 = pneg %p45
        $region42: #{tpu_custom_call.1} parent=39 // pred_check_branch
          %250 = sbr.rel (%p248) target = $region44
        $region43: #{tpu_custom_call.1} parent=39 // pred_region
          %252 = dma.done %s244, 25088
        $region44: #{tpu_custom_call.1} parent=39 // pred_fallthru
          _
        // Predicated region
        $region45: #{tpu_custom_call.1} parent=39 // pred_check
          %p253 = pneg %p87
        $region46: #{tpu_custom_call.1} parent=39 // pred_check_branch
          %255 = sbr.rel (%p253) target = $region48
        $region47: #{tpu_custom_call.1} parent=39 // pred_region
          %257 = dma.done [#allocation6], 16
        $region48: #{tpu_custom_call.1} parent=39 // pred_fallthru
          _
        // Predicated region
        $region49: #{tpu_custom_call.1} parent=39 // pred_check
          %p258 = pneg %p108
        $region50: #{tpu_custom_call.1} parent=39 // pred_check_branch
          %260 = sbr.rel (%p258) target = $region52
        $region51: #{tpu_custom_call.1} parent=39 // pred_region
          %262 = dma.done [#allocation6], 25088
        $region52: #{tpu_custom_call.1} parent=39 // pred_fallthru
          _
        // Predicated region
        $region53: #{tpu_custom_call.1} parent=39 // pred_check
          %p263 = pneg %p129
        $region54: #{tpu_custom_call.1} parent=39 // pred_check_branch
          %265 = sbr.rel (%p263) target = $region56
        $region55: #{tpu_custom_call.1} parent=39 // pred_region
          %267 = dma.done [#allocation9], 16
        $region56: #{tpu_custom_call.1} parent=39 // pred_fallthru
          _
        %s268 = sand.u32 %s32, 1
        %s269 = scalar_lea.sflag [#allocation3], %s268
        %s270 = sand.u32 %s32, 1
        %s271 = smul.addr %s270, 1568
        %s272 = scalar_lea.vmem [#allocation2], %s271
        %p273 = pneg %p45
        %p274 = pneg %p42
        %p275 = pneg %p66
        %p276 = pneg %p63
        %p277 = pneg %p87
        %p278 = pneg %p84
        %p279 = pneg %p108
        %p280 = pneg %p105
        %p281 = pneg %p129
        %p282 = pneg %p126
        %p283 = pneg %p155
        %p284 = pneg %p152
        %s285 = sand.u32 %s142, 1
        %s286 = scalar_lea.sflag [#allocation4], %s285
        %s287 = sand.u32 %s142, 1
        %s288 = smul.addr %s287, 8
        %s289 = scalar_lea.vmem [#allocation10], %s288
        %v290 = vld [vmem:[%s247] sm:$0xff]
        %v291 = vld [vmem:[%s247 + $0x8] sm:$0xff]
        %v292 = vld [vmem:[%s247 + $0x10] sm:$0xff]
        %v293 = vld [vmem:[%s247 + $0x18] sm:$0xff]
        %v294 = vld [vmem:[%s247 + $0x20] sm:$0xff]
        %v295 = vld [vmem:[%s247 + $0x28] sm:$0xff]
        %v296 = vld [vmem:[%s247 + $0x30] sm:$0xff]
        %v297 = vld [vmem:[%s247 + $0x38] sm:$0xff]
        %v298 = vld [vmem:[%s247 + $0x40] sm:$0xff]
        %v299 = vld [vmem:[%s247 + $0x48] sm:$0xff]
        %v300 = vld [vmem:[%s247 + $0x50] sm:$0xff]
        %v301 = vld [vmem:[%s247 + $0x58] sm:$0xff]
        %v302 = vld [vmem:[%s247 + $0x60] sm:$0xff]
        %v303 = vld [vmem:[%s247 + $0x68] sm:$0xff]
        %v304 = vld [vmem:[%s247 + $0x70] sm:$0xff]
        %v305 = vld [vmem:[%s247 + $0x78] sm:$0xff]
        %v306 = vld [vmem:[%s247 + $0x80] sm:$0xff]
        %v307 = vld [vmem:[%s247 + $0x88] sm:$0xff]
        %v308 = vld [vmem:[%s247 + $0x90] sm:$0xff]
        %v309 = vld [vmem:[%s247 + $0x98] sm:$0xff]
        %v310 = vld [vmem:[%s247 + $0xa0] sm:$0xff]
        %v311 = vld [vmem:[%s247 + $0xa8] sm:$0xff]
        %v312 = vld [vmem:[%s247 + $0xb0] sm:$0xff]
        %v313 = vld [vmem:[%s247 + $0xb8] sm:$0xff]
        %v314 = vld [vmem:[%s247 + $0xc0] sm:$0xff]
        %v315 = vld [vmem:[%s247 + $0xc8] sm:$0xff]
        %v316 = vld [vmem:[%s247 + $0xd0] sm:$0xff]
        %v317 = vld [vmem:[%s247 + $0xd8] sm:$0xff]
        %v318 = vld [vmem:[%s247 + $0xe0] sm:$0xff]
        %v319 = vld [vmem:[%s247 + $0xe8] sm:$0xff]
        %v320 = vld [vmem:[%s247 + $0xf0] sm:$0xff]
        %v321 = vld [vmem:[%s247 + $0xf8] sm:$0xff]
        %v322 = vld [vmem:[%s247 + $0x100] sm:$0xff]
        %v323 = vld [vmem:[%s247 + $0x108] sm:$0xff]
        %v324 = vld [vmem:[%s247 + $0x110] sm:$0xff]
        %v325 = vld [vmem:[%s247 + $0x118] sm:$0xff]
        %v326 = vld [vmem:[%s247 + $0x120] sm:$0xff]
        %v327 = vld [vmem:[%s247 + $0x128] sm:$0xff]
        %v328 = vld [vmem:[%s247 + $0x130] sm:$0xff]
        %v329 = vld [vmem:[%s247 + $0x138] sm:$0xff]
        %v330 = vld [vmem:[%s247 + $0x140] sm:$0xff]
        %v331 = vld [vmem:[%s247 + $0x148] sm:$0xff]
        %v332 = vld [vmem:[%s247 + $0x150] sm:$0xff]
        %v333 = vld [vmem:[%s247 + $0x158] sm:$0xff]
        %v334 = vld [vmem:[%s247 + $0x160] sm:$0xff]
        %v335 = vld [vmem:[%s247 + $0x168] sm:$0xff]
        %v336 = vld [vmem:[%s247 + $0x170] sm:$0xff]
        %v337 = vld [vmem:[%s247 + $0x178] sm:$0xff]
        %v338 = vld [vmem:[%s247 + $0x180] sm:$0xff]
        %v339 = vld [vmem:[%s247 + $0x188] sm:$0xff]
        %v340 = vld [vmem:[%s247 + $0x190] sm:$0xff]
        %v341 = vld [vmem:[%s247 + $0x198] sm:$0xff]
        %v342 = vld [vmem:[%s247 + $0x1a0] sm:$0xff]
        %v343 = vld [vmem:[%s247 + $0x1a8] sm:$0xff]
        %v344 = vld [vmem:[%s247 + $0x1b0] sm:$0xff]
        %v345 = vld [vmem:[%s247 + $0x1b8] sm:$0xff]
        %v346 = vld [vmem:[%s247 + $0x1c0] sm:$0xff]
        %v347 = vld [vmem:[%s247 + $0x1c8] sm:$0xff]
        %v348 = vld [vmem:[%s247 + $0x1d0] sm:$0xff]
        %v349 = vld [vmem:[%s247 + $0x1d8] sm:$0xff]
        %v350 = vld [vmem:[%s247 + $0x1e0] sm:$0xff]
        %v351 = vld [vmem:[%s247 + $0x1e8] sm:$0xff]
        %v352 = vld [vmem:[%s247 + $0x1f0] sm:$0xff]
        %v353 = vld [vmem:[%s247 + $0x1f8] sm:$0xff]
        %v354 = vld [vmem:[%s247 + $0x200] sm:$0xff]
        %v355 = vld [vmem:[%s247 + $0x208] sm:$0xff]
        %v356 = vld [vmem:[%s247 + $0x210] sm:$0xff]
        %v357 = vld [vmem:[%s247 + $0x218] sm:$0xff]
        %v358 = vld [vmem:[%s247 + $0x220] sm:$0xff]
        %v359 = vld [vmem:[%s247 + $0x228] sm:$0xff]
        %v360 = vld [vmem:[%s247 + $0x230] sm:$0xff]
        %v361 = vld [vmem:[%s247 + $0x238] sm:$0xff]
        %v362 = vld [vmem:[%s247 + $0x240] sm:$0xff]
        %v363 = vld [vmem:[%s247 + $0x248] sm:$0xff]
        %v364 = vld [vmem:[%s247 + $0x250] sm:$0xff]
        %v365 = vld [vmem:[%s247 + $0x258] sm:$0xff]
        %v366 = vld [vmem:[%s247 + $0x260] sm:$0xff]
        %v367 = vld [vmem:[%s247 + $0x268] sm:$0xff]
        %v368 = vld [vmem:[%s247 + $0x270] sm:$0xff]
        %v369 = vld [vmem:[%s247 + $0x278] sm:$0xff]
        %v370 = vld [vmem:[%s247 + $0x280] sm:$0xff]
        %v371 = vld [vmem:[%s247 + $0x288] sm:$0xff]
        %v372 = vld [vmem:[%s247 + $0x290] sm:$0xff]
        %v373 = vld [vmem:[%s247 + $0x298] sm:$0xff]
        %v374 = vld [vmem:[%s247 + $0x2a0] sm:$0xff]
        %v375 = vld [vmem:[%s247 + $0x2a8] sm:$0xff]
        %v376 = vld [vmem:[%s247 + $0x2b0] sm:$0xff]
        %v377 = vld [vmem:[%s247 + $0x2b8] sm:$0xff]
        %v378 = vld [vmem:[%s247 + $0x2c0] sm:$0xff]
        %v379 = vld [vmem:[%s247 + $0x2c8] sm:$0xff]
        %v380 = vld [vmem:[%s247 + $0x2d0] sm:$0xff]
        %v381 = vld [vmem:[%s247 + $0x2d8] sm:$0xff]
        %v382 = vld [vmem:[%s247 + $0x2e0] sm:$0xff]
        %v383 = vld [vmem:[%s247 + $0x2e8] sm:$0xff]
        %v384 = vld [vmem:[%s247 + $0x2f0] sm:$0xff]
        %v385 = vld [vmem:[%s247 + $0x2f8] sm:$0xff]
        %v386 = vld [vmem:[%s247 + $0x300] sm:$0xff]
        %v387 = vld [vmem:[%s247 + $0x308] sm:$0xff]
        %v388 = vld [vmem:[%s247 + $0x310] sm:$0xff]
        %v389 = vld [vmem:[%s247 + $0x318] sm:$0xff]
        %v390 = vld [vmem:[%s247 + $0x320] sm:$0xff]
        %v391 = vld [vmem:[%s247 + $0x328] sm:$0xff]
        %v392 = vld [vmem:[%s247 + $0x330] sm:$0xff]
        %v393 = vld [vmem:[%s247 + $0x338] sm:$0xff]
        %v394 = vld [vmem:[%s247 + $0x340] sm:$0xff]
        %v395 = vld [vmem:[%s247 + $0x348] sm:$0xff]
        %v396 = vld [vmem:[%s247 + $0x350] sm:$0xff]
        %v397 = vld [vmem:[%s247 + $0x358] sm:$0xff]
        %v398 = vld [vmem:[%s247 + $0x360] sm:$0xff]
        %v399 = vld [vmem:[%s247 + $0x368] sm:$0xff]
        %v400 = vld [vmem:[%s247 + $0x370] sm:$0xff]
        %v401 = vld [vmem:[%s247 + $0x378] sm:$0xff]
        %v402 = vld [vmem:[%s247 + $0x380] sm:$0xff]
        %v403 = vld [vmem:[%s247 + $0x388] sm:$0xff]
        %v404 = vld [vmem:[%s247 + $0x390] sm:$0xff]
        %v405 = vld [vmem:[%s247 + $0x398] sm:$0xff]
        %v406 = vld [vmem:[%s247 + $0x3a0] sm:$0xff]
        %v407 = vld [vmem:[%s247 + $0x3a8] sm:$0xff]
        %v408 = vld [vmem:[%s247 + $0x3b0] sm:$0xff]
        %v409 = vld [vmem:[%s247 + $0x3b8] sm:$0xff]
        %v410 = vld [vmem:[%s247 + $0x3c0] sm:$0xff]
        %v411 = vld [vmem:[%s247 + $0x3c8] sm:$0xff]
        %v412 = vld [vmem:[%s247 + $0x3d0] sm:$0xff]
        %v413 = vld [vmem:[%s247 + $0x3d8] sm:$0xff]
        %v414 = vld [vmem:[%s247 + $0x3e0] sm:$0xff]
        %v415 = vld [vmem:[%s247 + $0x3e8] sm:$0xff]
        %v416 = vld [vmem:[%s247 + $0x3f0] sm:$0xff]
        %v417 = vld [vmem:[%s247 + $0x3f8] sm:$0xff]
        %v418 = vld [vmem:[%s247 + $0x400] sm:$0xff]
        %v419 = vld [vmem:[%s247 + $0x408] sm:$0xff]
        %v420 = vld [vmem:[%s247 + $0x410] sm:$0xff]
        %v421 = vld [vmem:[%s247 + $0x418] sm:$0xff]
        %v422 = vld [vmem:[%s247 + $0x420] sm:$0xff]
        %v423 = vld [vmem:[%s247 + $0x428] sm:$0xff]
        %v424 = vld [vmem:[%s247 + $0x430] sm:$0xff]
        %v425 = vld [vmem:[%s247 + $0x438] sm:$0xff]
        %v426 = vld [vmem:[%s247 + $0x440] sm:$0xff]
        %v427 = vld [vmem:[%s247 + $0x448] sm:$0xff]
        %v428 = vld [vmem:[%s247 + $0x450] sm:$0xff]
        %v429 = vld [vmem:[%s247 + $0x458] sm:$0xff]
        %v430 = vld [vmem:[%s247 + $0x460] sm:$0xff]
        %v431 = vld [vmem:[%s247 + $0x468] sm:$0xff]
        %v432 = vld [vmem:[%s247 + $0x470] sm:$0xff]
        %v433 = vld [vmem:[%s247 + $0x478] sm:$0xff]
        %v434 = vld [vmem:[%s247 + $0x480] sm:$0xff]
        %v435 = vld [vmem:[%s247 + $0x488] sm:$0xff]
        %v436 = vld [vmem:[%s247 + $0x490] sm:$0xff]
        %v437 = vld [vmem:[%s247 + $0x498] sm:$0xff]
        %v438 = vld [vmem:[%s247 + $0x4a0] sm:$0xff]
        %v439 = vld [vmem:[%s247 + $0x4a8] sm:$0xff]
        %v440 = vld [vmem:[%s247 + $0x4b0] sm:$0xff]
        %v441 = vld [vmem:[%s247 + $0x4b8] sm:$0xff]
        %v442 = vld [vmem:[%s247 + $0x4c0] sm:$0xff]
        %v443 = vld [vmem:[%s247 + $0x4c8] sm:$0xff]
        %v444 = vld [vmem:[%s247 + $0x4d0] sm:$0xff]
        %v445 = vld [vmem:[%s247 + $0x4d8] sm:$0xff]
        %v446 = vld [vmem:[%s247 + $0x4e0] sm:$0xff]
        %v447 = vld [vmem:[%s247 + $0x4e8] sm:$0xff]
        %v448 = vld [vmem:[%s247 + $0x4f0] sm:$0xff]
        %v449 = vld [vmem:[%s247 + $0x4f8] sm:$0xff]
        %v450 = vld [vmem:[%s247 + $0x500] sm:$0xff]
        %v451 = vld [vmem:[%s247 + $0x508] sm:$0xff]
        %v452 = vld [vmem:[%s247 + $0x510] sm:$0xff]
        %v453 = vld [vmem:[%s247 + $0x518] sm:$0xff]
        %v454 = vld [vmem:[%s247 + $0x520] sm:$0xff]
        %v455 = vld [vmem:[%s247 + $0x528] sm:$0xff]
        %v456 = vld [vmem:[%s247 + $0x530] sm:$0xff]
        %v457 = vld [vmem:[%s247 + $0x538] sm:$0xff]
        %v458 = vld [vmem:[%s247 + $0x540] sm:$0xff]
        %v459 = vld [vmem:[%s247 + $0x548] sm:$0xff]
        %v460 = vld [vmem:[%s247 + $0x550] sm:$0xff]
        %v461 = vld [vmem:[%s247 + $0x558] sm:$0xff]
        %v462 = vld [vmem:[%s247 + $0x560] sm:$0xff]
        %v463 = vld [vmem:[%s247 + $0x568] sm:$0xff]
        %v464 = vld [vmem:[%s247 + $0x570] sm:$0xff]
        %v465 = vld [vmem:[%s247 + $0x578] sm:$0xff]
        %v466 = vld [vmem:[%s247 + $0x580] sm:$0xff]
        %v467 = vld [vmem:[%s247 + $0x588] sm:$0xff]
        %v468 = vld [vmem:[%s247 + $0x590] sm:$0xff]
        %v469 = vld [vmem:[%s247 + $0x598] sm:$0xff]
        %v470 = vld [vmem:[%s247 + $0x5a0] sm:$0xff]
        %v471 = vld [vmem:[%s247 + $0x5a8] sm:$0xff]
        %v472 = vld [vmem:[%s247 + $0x5b0] sm:$0xff]
        %v473 = vld [vmem:[%s247 + $0x5b8] sm:$0xff]
        %v474 = vld [vmem:[%s247 + $0x5c0] sm:$0xff]
        %v475 = vld [vmem:[%s247 + $0x5c8] sm:$0xff]
        %v476 = vld [vmem:[%s247 + $0x5d0] sm:$0xff]
        %v477 = vld [vmem:[%s247 + $0x5d8] sm:$0xff]
        %v478 = vld [vmem:[%s247 + $0x5e0] sm:$0xff]
        %v479 = vld [vmem:[%s247 + $0x5e8] sm:$0xff]
        %v480 = vld [vmem:[%s247 + $0x5f0] sm:$0xff]
        %v481 = vld [vmem:[%s247 + $0x5f8] sm:$0xff]
        %v482 = vld [vmem:[%s247 + $0x600] sm:$0xff]
        %v483 = vld [vmem:[%s247 + $0x608] sm:$0xff]
        %v484 = vld [vmem:[%s247 + $0x610] sm:$0xff]
        %v485 = vld [vmem:[%s247 + $0x618] sm:$0xff]
        %v486 = vld [vmem:[%s1] sm:$0xff]
        %v487 = vld [vmem:[%s1 + $0x8] sm:$0xff]
        %v488 = vld [vmem:[%s1 + $0x10] sm:$0xff]
        %v489 = vld [vmem:[%s1 + $0x18] sm:$0xff]
        %v490 = vld [vmem:[%s1 + $0x20] sm:$0xff]
        %v491 = vld [vmem:[%s1 + $0x28] sm:$0xff]
        %v492 = vld [vmem:[%s1 + $0x30] sm:$0xff]
        %v493 = vld [vmem:[%s1 + $0x38] sm:$0xff]
        %v494 = vld [vmem:[%s1 + $0x40] sm:$0xff]
        %v495 = vld [vmem:[%s1 + $0x48] sm:$0xff]
        %v496 = vld [vmem:[%s1 + $0x50] sm:$0xff]
        %v497 = vld [vmem:[%s1 + $0x58] sm:$0xff]
        %v498 = vld [vmem:[%s1 + $0x60] sm:$0xff]
        %v499 = vld [vmem:[%s1 + $0x68] sm:$0xf]
        %vm500 = vcmask 883712
        %v502 = vsel %vm500, %v290, 0
        %v505 = vsel %vm500, %v291, 0
        %v508 = vsel %vm500, %v292, 0
        %v511 = vsel %vm500, %v293, 0
        %v514 = vsel %vm500, %v294, 0
        %v517 = vsel %vm500, %v295, 0
        %v520 = vsel %vm500, %v296, 0
        %v523 = vsel %vm500, %v297, 0
        %v526 = vsel %vm500, %v298, 0
        %v529 = vsel %vm500, %v299, 0
        %v532 = vsel %vm500, %v300, 0
        %v535 = vsel %vm500, %v301, 0
        %v538 = vsel %vm500, %v302, 0
        %v541 = vsel %vm500, %v303, 0
        %v544 = vsel %vm500, %v304, 0
        %v547 = vsel %vm500, %v305, 0
        %v550 = vsel %vm500, %v306, 0
        %v553 = vsel %vm500, %v307, 0
        %v556 = vsel %vm500, %v308, 0
        %v559 = vsel %vm500, %v309, 0
        %v562 = vsel %vm500, %v310, 0
        %v565 = vsel %vm500, %v311, 0
        %v568 = vsel %vm500, %v312, 0
        %v571 = vsel %vm500, %v313, 0
        %v574 = vsel %vm500, %v314, 0
        %v577 = vsel %vm500, %v315, 0
        %v580 = vsel %vm500, %v316, 0
        %v583 = vsel %vm500, %v317, 0
        %v586 = vsel %vm500, %v318, 0
        %v589 = vsel %vm500, %v319, 0
        %v592 = vsel %vm500, %v320, 0
        %v595 = vsel %vm500, %v321, 0
        %v598 = vsel %vm500, %v322, 0
        %v601 = vsel %vm500, %v323, 0
        %v604 = vsel %vm500, %v324, 0
        %v607 = vsel %vm500, %v325, 0
        %v610 = vsel %vm500, %v326, 0
        %v613 = vsel %vm500, %v327, 0
        %v616 = vsel %vm500, %v328, 0
        %v619 = vsel %vm500, %v329, 0
        %v622 = vsel %vm500, %v330, 0
        %v625 = vsel %vm500, %v331, 0
        %v628 = vsel %vm500, %v332, 0
        %v631 = vsel %vm500, %v333, 0
        %v634 = vsel %vm500, %v334, 0
        %v637 = vsel %vm500, %v335, 0
        %v640 = vsel %vm500, %v336, 0
        %v643 = vsel %vm500, %v337, 0
        %v646 = vsel %vm500, %v338, 0
        %v649 = vsel %vm500, %v339, 0
        %v652 = vsel %vm500, %v340, 0
        %v655 = vsel %vm500, %v341, 0
        %v658 = vsel %vm500, %v342, 0
        %v661 = vsel %vm500, %v343, 0
        %v664 = vsel %vm500, %v344, 0
        %v667 = vsel %vm500, %v345, 0
        %v670 = vsel %vm500, %v346, 0
        %v673 = vsel %vm500, %v347, 0
        %v676 = vsel %vm500, %v348, 0
        %v679 = vsel %vm500, %v349, 0
        %v682 = vsel %vm500, %v350, 0
        %v685 = vsel %vm500, %v351, 0
        %v688 = vsel %vm500, %v352, 0
        %v691 = vsel %vm500, %v353, 0
        %v694 = vsel %vm500, %v354, 0
        %v697 = vsel %vm500, %v355, 0
        %v700 = vsel %vm500, %v356, 0
        %v703 = vsel %vm500, %v357, 0
        %v706 = vsel %vm500, %v358, 0
        %v709 = vsel %vm500, %v359, 0
        %v712 = vsel %vm500, %v360, 0
        %v715 = vsel %vm500, %v361, 0
        %v718 = vsel %vm500, %v362, 0
        %v721 = vsel %vm500, %v363, 0
        %v724 = vsel %vm500, %v364, 0
        %v727 = vsel %vm500, %v365, 0
        %v730 = vsel %vm500, %v366, 0
        %v733 = vsel %vm500, %v367, 0
        %v736 = vsel %vm500, %v368, 0
        %v739 = vsel %vm500, %v369, 0
        %v742 = vsel %vm500, %v370, 0
        %v745 = vsel %vm500, %v371, 0
        %v748 = vsel %vm500, %v372, 0
        %v751 = vsel %vm500, %v373, 0
        %v754 = vsel %vm500, %v374, 0
        %v757 = vsel %vm500, %v375, 0
        %v760 = vsel %vm500, %v376, 0
        %v763 = vsel %vm500, %v377, 0
        %v766 = vsel %vm500, %v378, 0
        %v769 = vsel %vm500, %v379, 0
        %v772 = vsel %vm500, %v380, 0
        %v775 = vsel %vm500, %v381, 0
        %v778 = vsel %vm500, %v382, 0
        %v781 = vsel %vm500, %v383, 0
        %v784 = vsel %vm500, %v384, 0
        %v787 = vsel %vm500, %v385, 0
        %v790 = vsel %vm500, %v386, 0
        %v793 = vsel %vm500, %v387, 0
        %v796 = vsel %vm500, %v388, 0
        %v799 = vsel %vm500, %v389, 0
        %v802 = vsel %vm500, %v390, 0
        %v805 = vsel %vm500, %v391, 0
        %v808 = vsel %vm500, %v392, 0
        %v811 = vsel %vm500, %v393, 0
        %v814 = vsel %vm500, %v394, 0
        %v817 = vsel %vm500, %v395, 0
        %v820 = vsel %vm500, %v396, 0
        %v823 = vsel %vm500, %v397, 0
        %v826 = vsel %vm500, %v398, 0
        %v829 = vsel %vm500, %v399, 0
        %v832 = vsel %vm500, %v400, 0
        %v835 = vsel %vm500, %v401, 0
        %v838 = vsel %vm500, %v402, 0
        %v841 = vsel %vm500, %v403, 0
        %v844 = vsel %vm500, %v404, 0
        %v847 = vsel %vm500, %v405, 0
        %v850 = vsel %vm500, %v406, 0
        %v853 = vsel %vm500, %v407, 0
        %v856 = vsel %vm500, %v408, 0
        %v859 = vsel %vm500, %v409, 0
        %v862 = vsel %vm500, %v410, 0
        %v865 = vsel %vm500, %v411, 0
        %v868 = vsel %vm500, %v412, 0
        %v871 = vsel %vm500, %v413, 0
        %v874 = vsel %vm500, %v414, 0
        %v877 = vsel %vm500, %v415, 0
        %v880 = vsel %vm500, %v416, 0
        %v883 = vsel %vm500, %v417, 0
        %v886 = vsel %vm500, %v418, 0
        %v889 = vsel %vm500, %v419, 0
        %v892 = vsel %vm500, %v420, 0
        %v895 = vsel %vm500, %v421, 0
        %v898 = vsel %vm500, %v422, 0
        %v901 = vsel %vm500, %v423, 0
        %v904 = vsel %vm500, %v424, 0
        %v907 = vsel %vm500, %v425, 0
        %v910 = vsel %vm500, %v426, 0
        %v913 = vsel %vm500, %v427, 0
        %v916 = vsel %vm500, %v428, 0
        %v919 = vsel %vm500, %v429, 0
        %v922 = vsel %vm500, %v430, 0
        %v925 = vsel %vm500, %v431, 0
        %v928 = vsel %vm500, %v432, 0
        %v931 = vsel %vm500, %v433, 0
        %v934 = vsel %vm500, %v434, 0
        %v937 = vsel %vm500, %v435, 0
        %v940 = vsel %vm500, %v436, 0
        %v943 = vsel %vm500, %v437, 0
        %v946 = vsel %vm500, %v438, 0
        %v949 = vsel %vm500, %v439, 0
        %v952 = vsel %vm500, %v440, 0
        %v955 = vsel %vm500, %v441, 0
        %v958 = vsel %vm500, %v442, 0
        %v961 = vsel %vm500, %v443, 0
        %v964 = vsel %vm500, %v444, 0
        %v967 = vsel %vm500, %v445, 0
        %v970 = vsel %vm500, %v446, 0
        %v973 = vsel %vm500, %v447, 0
        %v976 = vsel %vm500, %v448, 0
        %v979 = vsel %vm500, %v449, 0
        %v982 = vsel %vm500, %v450, 0
        %v985 = vsel %vm500, %v451, 0
        %v988 = vsel %vm500, %v452, 0
        %v991 = vsel %vm500, %v453, 0
        %v994 = vsel %vm500, %v454, 0
        %v997 = vsel %vm500, %v455, 0
        %v1000 = vsel %vm500, %v456, 0
        %v1003 = vsel %vm500, %v457, 0
        %v1006 = vsel %vm500, %v458, 0
        %v1009 = vsel %vm500, %v459, 0
        %v1012 = vsel %vm500, %v460, 0
        %v1015 = vsel %vm500, %v461, 0
        %v1018 = vsel %vm500, %v462, 0
        %v1021 = vsel %vm500, %v463, 0
        %v1024 = vsel %vm500, %v464, 0
        %v1027 = vsel %vm500, %v465, 0
        %v1030 = vsel %vm500, %v466, 0
        %v1033 = vsel %vm500, %v467, 0
        %v1036 = vsel %vm500, %v468, 0
        %v1039 = vsel %vm500, %v469, 0
        %v1042 = vsel %vm500, %v470, 0
        %v1045 = vsel %vm500, %v471, 0
        %v1048 = vsel %vm500, %v472, 0
        %v1051 = vsel %vm500, %v473, 0
        %v1054 = vsel %vm500, %v474, 0
        %v1057 = vsel %vm500, %v475, 0
        %v1060 = vsel %vm500, %v476, 0
        %v1063 = vsel %vm500, %v477, 0
        %v1066 = vsel %vm500, %v478, 0
        %v1069 = vsel %vm500, %v479, 0
        %v1072 = vsel %vm500, %v480, 0
        %v1075 = vsel %vm500, %v481, 0
        %v1078 = vsel %vm500, %v482, 0
        %v1081 = vsel %vm500, %v483, 0
        %v1084 = vsel %vm500, %v484, 0
        %v1087 = vsel %vm500, %v485, 0
        %vm1089 = vcmask 1043456
        %v1091 = vsel %vm1089, %v499, 0
        %1093 = vmatpush.msra.mxu0 0.0
        %1094 = vmatpush.msra.mxu0 0.0
        %1095 = vmatpush.msra.mxu0 %v1091
        %1096 = vmatpush.msra.mxu0 %v498
        %1097 = vmatpush.msra.mxu0 %v497
        %1098 = vmatpush.msra.mxu0 %v496
        %1099 = vmatpush.msra.mxu0 %v495
        %1100 = vmatpush.msra.mxu0 %v494
        %1101 = vmatpush.msra.mxu0 %v493
        %1102 = vmatpush.msra.mxu0 %v492
        %1103 = vmatpush.msra.mxu0 %v491
        %1104 = vmatpush.msra.mxu0 %v490
        %1105 = vmatpush.msra.mxu0 %v489
        %1106 = vmatpush.msra.mxu0 %v488
        %1107 = vmatpush.msra.mxu0 %v487
        %1108 = vmatpush.msra.mxu0 %v486
        %1109 = vmatmul.f32.gmra.mxu0 %v502
        %v1110 = vpop.f32.mrf.mxu0
        %v1111 = vadd.f32 0.0, %v1110
        %1112 = vmatmul.f32.gmra.mxu0 %v505
        %v1113 = vpop.f32.mrf.mxu0
        %v1114 = vadd.f32 0.0, %v1113
        %1115 = vmatmul.f32.gmra.mxu0 %v508
        %v1116 = vpop.f32.mrf.mxu0
        %v1117 = vadd.f32 0.0, %v1116
        %1118 = vmatmul.f32.gmra.mxu0 %v511
        %v1119 = vpop.f32.mrf.mxu0
        %v1120 = vadd.f32 0.0, %v1119
        %1121 = vmatmul.f32.gmra.mxu0 %v514
        %v1122 = vpop.f32.mrf.mxu0
        %v1123 = vadd.f32 0.0, %v1122
        %1124 = vmatmul.f32.gmra.mxu0 %v517
        %v1125 = vpop.f32.mrf.mxu0
        %v1126 = vadd.f32 0.0, %v1125
        %1127 = vmatmul.f32.gmra.mxu0 %v520
        %v1128 = vpop.f32.mrf.mxu0
        %v1129 = vadd.f32 0.0, %v1128
        %1130 = vmatmul.f32.gmra.mxu0 %v523
        %v1131 = vpop.f32.mrf.mxu0
        %v1132 = vadd.f32 0.0, %v1131
        %1133 = vmatmul.f32.gmra.mxu0 %v526
        %v1134 = vpop.f32.mrf.mxu0
        %v1135 = vadd.f32 0.0, %v1134
        %1136 = vmatmul.f32.gmra.mxu0 %v529
        %v1137 = vpop.f32.mrf.mxu0
        %v1138 = vadd.f32 0.0, %v1137
        %1139 = vmatmul.f32.gmra.mxu0 %v532
        %v1140 = vpop.f32.mrf.mxu0
        %v1141 = vadd.f32 0.0, %v1140
        %1142 = vmatmul.f32.gmra.mxu0 %v535
        %v1143 = vpop.f32.mrf.mxu0
        %v1144 = vadd.f32 0.0, %v1143
        %1145 = vmatmul.f32.gmra.mxu0 %v538
        %v1146 = vpop.f32.mrf.mxu0
        %v1147 = vadd.f32 0.0, %v1146
        %1148 = vmatmul.f32.gmra.mxu0 %v541
        %v1149 = vpop.f32.mrf.mxu0
        %v1150 = vadd.f32 0.0, %v1149
        %1151 = vmatmul.f32.gmra.mxu0 %v544
        %v1152 = vpop.f32.mrf.mxu0
        %v1153 = vadd.f32 0.0, %v1152
        %1154 = vmatmul.f32.gmra.mxu0 %v547
        %v1155 = vpop.f32.mrf.mxu0
        %v1156 = vadd.f32 0.0, %v1155
        %1157 = vmatmul.f32.gmra.mxu0 %v550
        %v1158 = vpop.f32.mrf.mxu0
        %v1159 = vadd.f32 0.0, %v1158
        %1160 = vmatmul.f32.gmra.mxu0 %v553
        %v1161 = vpop.f32.mrf.mxu0
        %v1162 = vadd.f32 0.0, %v1161
        %1163 = vmatmul.f32.gmra.mxu0 %v556
        %v1164 = vpop.f32.mrf.mxu0
        %v1165 = vadd.f32 0.0, %v1164
        %1166 = vmatmul.f32.gmra.mxu0 %v559
        %v1167 = vpop.f32.mrf.mxu0
        %v1168 = vadd.f32 0.0, %v1167
        %1169 = vmatmul.f32.gmra.mxu0 %v562
        %v1170 = vpop.f32.mrf.mxu0
        %v1171 = vadd.f32 0.0, %v1170
        %1172 = vmatmul.f32.gmra.mxu0 %v565
        %v1173 = vpop.f32.mrf.mxu0
        %v1174 = vadd.f32 0.0, %v1173
        %1175 = vmatmul.f32.gmra.mxu0 %v568
        %v1176 = vpop.f32.mrf.mxu0
        %v1177 = vadd.f32 0.0, %v1176
        %1178 = vmatmul.f32.gmra.mxu0 %v571
        %v1179 = vpop.f32.mrf.mxu0
        %v1180 = vadd.f32 0.0, %v1179
        %1181 = vmatmul.f32.gmra.mxu0 %v574
        %v1182 = vpop.f32.mrf.mxu0
        %v1183 = vadd.f32 0.0, %v1182
        %1184 = vmatmul.f32.gmra.mxu0 %v577
        %v1185 = vpop.f32.mrf.mxu0
        %v1186 = vadd.f32 0.0, %v1185
        %1187 = vmatmul.f32.gmra.mxu0 %v580
        %v1188 = vpop.f32.mrf.mxu0
        %v1189 = vadd.f32 0.0, %v1188
        %1190 = vmatmul.f32.gmra.mxu0 %v583
        %v1191 = vpop.f32.mrf.mxu0
        %v1192 = vadd.f32 0.0, %v1191
        %1193 = vmatmul.f32.gmra.mxu0 %v586
        %v1194 = vpop.f32.mrf.mxu0
        %v1195 = vadd.f32 0.0, %v1194
        %1196 = vmatmul.f32.gmra.mxu0 %v589
        %v1197 = vpop.f32.mrf.mxu0
        %v1198 = vadd.f32 0.0, %v1197
        %1199 = vmatmul.f32.gmra.mxu0 %v592
        %v1200 = vpop.f32.mrf.mxu0
        %v1201 = vadd.f32 0.0, %v1200
        %1202 = vmatmul.f32.gmra.mxu0 %v595
        %v1203 = vpop.f32.mrf.mxu0
        %v1204 = vadd.f32 0.0, %v1203
        %1205 = vmatmul.f32.gmra.mxu0 %v598
        %v1206 = vpop.f32.mrf.mxu0
        %v1207 = vadd.f32 0.0, %v1206
        %1208 = vmatmul.f32.gmra.mxu0 %v601
        %v1209 = vpop.f32.mrf.mxu0
        %v1210 = vadd.f32 0.0, %v1209
        %1211 = vmatmul.f32.gmra.mxu0 %v604
        %v1212 = vpop.f32.mrf.mxu0
        %v1213 = vadd.f32 0.0, %v1212
        %1214 = vmatmul.f32.gmra.mxu0 %v607
        %v1215 = vpop.f32.mrf.mxu0
        %v1216 = vadd.f32 0.0, %v1215
        %1217 = vmatmul.f32.gmra.mxu0 %v610
        %v1218 = vpop.f32.mrf.mxu0
        %v1219 = vadd.f32 0.0, %v1218
        %1220 = vmatmul.f32.gmra.mxu0 %v613
        %v1221 = vpop.f32.mrf.mxu0
        %v1222 = vadd.f32 0.0, %v1221
        %1223 = vmatmul.f32.gmra.mxu0 %v616
        %v1224 = vpop.f32.mrf.mxu0
        %v1225 = vadd.f32 0.0, %v1224
        %1226 = vmatmul.f32.gmra.mxu0 %v619
        %v1227 = vpop.f32.mrf.mxu0
        %v1228 = vadd.f32 0.0, %v1227
        %1229 = vmatmul.f32.gmra.mxu0 %v622
        %v1230 = vpop.f32.mrf.mxu0
        %v1231 = vadd.f32 0.0, %v1230
        %1232 = vmatmul.f32.gmra.mxu0 %v625
        %v1233 = vpop.f32.mrf.mxu0
        %v1234 = vadd.f32 0.0, %v1233
        %1235 = vmatmul.f32.gmra.mxu0 %v628
        %v1236 = vpop.f32.mrf.mxu0
        %v1237 = vadd.f32 0.0, %v1236
        %1238 = vmatmul.f32.gmra.mxu0 %v631
        %v1239 = vpop.f32.mrf.mxu0
        %v1240 = vadd.f32 0.0, %v1239
        %1241 = vmatmul.f32.gmra.mxu0 %v634
        %v1242 = vpop.f32.mrf.mxu0
        %v1243 = vadd.f32 0.0, %v1242
        %1244 = vmatmul.f32.gmra.mxu0 %v637
        %v1245 = vpop.f32.mrf.mxu0
        %v1246 = vadd.f32 0.0, %v1245
        %1247 = vmatmul.f32.gmra.mxu0 %v640
        %v1248 = vpop.f32.mrf.mxu0
        %v1249 = vadd.f32 0.0, %v1248
        %1250 = vmatmul.f32.gmra.mxu0 %v643
        %v1251 = vpop.f32.mrf.mxu0
        %v1252 = vadd.f32 0.0, %v1251
        %1253 = vmatmul.f32.gmra.mxu0 %v646
        %v1254 = vpop.f32.mrf.mxu0
        %v1255 = vadd.f32 0.0, %v1254
        %1256 = vmatmul.f32.gmra.mxu0 %v649
        %v1257 = vpop.f32.mrf.mxu0
        %v1258 = vadd.f32 0.0, %v1257
        %1259 = vmatmul.f32.gmra.mxu0 %v652
        %v1260 = vpop.f32.mrf.mxu0
        %v1261 = vadd.f32 0.0, %v1260
        %1262 = vmatmul.f32.gmra.mxu0 %v655
        %v1263 = vpop.f32.mrf.mxu0
        %v1264 = vadd.f32 0.0, %v1263
        %1265 = vmatmul.f32.gmra.mxu0 %v658
        %v1266 = vpop.f32.mrf.mxu0
        %v1267 = vadd.f32 0.0, %v1266
        %1268 = vmatmul.f32.gmra.mxu0 %v661
        %v1269 = vpop.f32.mrf.mxu0
        %v1270 = vadd.f32 0.0, %v1269
        %1271 = vmatmul.f32.gmra.mxu0 %v664
        %v1272 = vpop.f32.mrf.mxu0
        %v1273 = vadd.f32 0.0, %v1272
        %1274 = vmatmul.f32.gmra.mxu0 %v667
        %v1275 = vpop.f32.mrf.mxu0
        %v1276 = vadd.f32 0.0, %v1275
        %1277 = vmatmul.f32.gmra.mxu0 %v670
        %v1278 = vpop.f32.mrf.mxu0
        %v1279 = vadd.f32 0.0, %v1278
        %1280 = vmatmul.f32.gmra.mxu0 %v673
        %v1281 = vpop.f32.mrf.mxu0
        %v1282 = vadd.f32 0.0, %v1281
        %1283 = vmatmul.f32.gmra.mxu0 %v676
        %v1284 = vpop.f32.mrf.mxu0
        %v1285 = vadd.f32 0.0, %v1284
        %1286 = vmatmul.f32.gmra.mxu0 %v679
        %v1287 = vpop.f32.mrf.mxu0
        %v1288 = vadd.f32 0.0, %v1287
        %1289 = vmatmul.f32.gmra.mxu0 %v682
        %v1290 = vpop.f32.mrf.mxu0
        %v1291 = vadd.f32 0.0, %v1290
        %1292 = vmatmul.f32.gmra.mxu0 %v685
        %v1293 = vpop.f32.mrf.mxu0
        %v1294 = vadd.f32 0.0, %v1293
        %1295 = vmatmul.f32.gmra.mxu0 %v688
        %v1296 = vpop.f32.mrf.mxu0
        %v1297 = vadd.f32 0.0, %v1296
        %1298 = vmatmul.f32.gmra.mxu0 %v691
        %v1299 = vpop.f32.mrf.mxu0
        %v1300 = vadd.f32 0.0, %v1299
        %1301 = vmatmul.f32.gmra.mxu0 %v694
        %v1302 = vpop.f32.mrf.mxu0
        %v1303 = vadd.f32 0.0, %v1302
        %1304 = vmatmul.f32.gmra.mxu0 %v697
        %v1305 = vpop.f32.mrf.mxu0
        %v1306 = vadd.f32 0.0, %v1305
        %1307 = vmatmul.f32.gmra.mxu0 %v700
        %v1308 = vpop.f32.mrf.mxu0
        %v1309 = vadd.f32 0.0, %v1308
        %1310 = vmatmul.f32.gmra.mxu0 %v703
        %v1311 = vpop.f32.mrf.mxu0
        %v1312 = vadd.f32 0.0, %v1311
        %1313 = vmatmul.f32.gmra.mxu0 %v706
        %v1314 = vpop.f32.mrf.mxu0
        %v1315 = vadd.f32 0.0, %v1314
        %1316 = vmatmul.f32.gmra.mxu0 %v709
        %v1317 = vpop.f32.mrf.mxu0
        %v1318 = vadd.f32 0.0, %v1317
        %1319 = vmatmul.f32.gmra.mxu0 %v712
        %v1320 = vpop.f32.mrf.mxu0
        %v1321 = vadd.f32 0.0, %v1320
        %1322 = vmatmul.f32.gmra.mxu0 %v715
        %v1323 = vpop.f32.mrf.mxu0
        %v1324 = vadd.f32 0.0, %v1323
        %1325 = vmatmul.f32.gmra.mxu0 %v718
        %v1326 = vpop.f32.mrf.mxu0
        %v1327 = vadd.f32 0.0, %v1326
        %1328 = vmatmul.f32.gmra.mxu0 %v721
        %v1329 = vpop.f32.mrf.mxu0
        %v1330 = vadd.f32 0.0, %v1329
        %1331 = vmatmul.f32.gmra.mxu0 %v724
        %v1332 = vpop.f32.mrf.mxu0
        %v1333 = vadd.f32 0.0, %v1332
        %1334 = vmatmul.f32.gmra.mxu0 %v727
        %v1335 = vpop.f32.mrf.mxu0
        %v1336 = vadd.f32 0.0, %v1335
        %1337 = vmatmul.f32.gmra.mxu0 %v730
        %v1338 = vpop.f32.mrf.mxu0
        %v1339 = vadd.f32 0.0, %v1338
        %1340 = vmatmul.f32.gmra.mxu0 %v733
        %v1341 = vpop.f32.mrf.mxu0
        %v1342 = vadd.f32 0.0, %v1341
        %1343 = vmatmul.f32.gmra.mxu0 %v736
        %v1344 = vpop.f32.mrf.mxu0
        %v1345 = vadd.f32 0.0, %v1344
        %1346 = vmatmul.f32.gmra.mxu0 %v739
        %v1347 = vpop.f32.mrf.mxu0
        %v1348 = vadd.f32 0.0, %v1347
        %1349 = vmatmul.f32.gmra.mxu0 %v742
        %v1350 = vpop.f32.mrf.mxu0
        %v1351 = vadd.f32 0.0, %v1350
        %1352 = vmatmul.f32.gmra.mxu0 %v745
        %v1353 = vpop.f32.mrf.mxu0
        %v1354 = vadd.f32 0.0, %v1353
        %1355 = vmatmul.f32.gmra.mxu0 %v748
        %v1356 = vpop.f32.mrf.mxu0
        %v1357 = vadd.f32 0.0, %v1356
        %1358 = vmatmul.f32.gmra.mxu0 %v751
        %v1359 = vpop.f32.mrf.mxu0
        %v1360 = vadd.f32 0.0, %v1359
        %1361 = vmatmul.f32.gmra.mxu0 %v754
        %v1362 = vpop.f32.mrf.mxu0
        %v1363 = vadd.f32 0.0, %v1362
        %1364 = vmatmul.f32.gmra.mxu0 %v757
        %v1365 = vpop.f32.mrf.mxu0
        %v1366 = vadd.f32 0.0, %v1365
        %1367 = vmatmul.f32.gmra.mxu0 %v760
        %v1368 = vpop.f32.mrf.mxu0
        %v1369 = vadd.f32 0.0, %v1368
        %1370 = vmatmul.f32.gmra.mxu0 %v763
        %v1371 = vpop.f32.mrf.mxu0
        %v1372 = vadd.f32 0.0, %v1371
        %1373 = vmatmul.f32.gmra.mxu0 %v766
        %v1374 = vpop.f32.mrf.mxu0
        %v1375 = vadd.f32 0.0, %v1374
        %1376 = vmatmul.f32.gmra.mxu0 %v769
        %v1377 = vpop.f32.mrf.mxu0
        %v1378 = vadd.f32 0.0, %v1377
        %1379 = vmatmul.f32.gmra.mxu0 %v772
        %v1380 = vpop.f32.mrf.mxu0
        %v1381 = vadd.f32 0.0, %v1380
        %1382 = vmatmul.f32.gmra.mxu0 %v775
        %v1383 = vpop.f32.mrf.mxu0
        %v1384 = vadd.f32 0.0, %v1383
        %1385 = vmatmul.f32.gmra.mxu0 %v778
        %v1386 = vpop.f32.mrf.mxu0
        %v1387 = vadd.f32 0.0, %v1386
        %1388 = vmatmul.f32.gmra.mxu0 %v781
        %v1389 = vpop.f32.mrf.mxu0
        %v1390 = vadd.f32 0.0, %v1389
        %1391 = vmatmul.f32.gmra.mxu0 %v784
        %v1392 = vpop.f32.mrf.mxu0
        %v1393 = vadd.f32 0.0, %v1392
        %1394 = vmatmul.f32.gmra.mxu0 %v787
        %v1395 = vpop.f32.mrf.mxu0
        %v1396 = vadd.f32 0.0, %v1395
        %1397 = vmatmul.f32.gmra.mxu0 %v790
        %v1398 = vpop.f32.mrf.mxu0
        %v1399 = vadd.f32 0.0, %v1398
        %1400 = vmatmul.f32.gmra.mxu0 %v793
        %v1401 = vpop.f32.mrf.mxu0
        %v1402 = vadd.f32 0.0, %v1401
        %1403 = vmatmul.f32.gmra.mxu0 %v796
        %v1404 = vpop.f32.mrf.mxu0
        %v1405 = vadd.f32 0.0, %v1404
        %1406 = vmatmul.f32.gmra.mxu0 %v799
        %v1407 = vpop.f32.mrf.mxu0
        %v1408 = vadd.f32 0.0, %v1407
        %1409 = vmatmul.f32.gmra.mxu0 %v802
        %v1410 = vpop.f32.mrf.mxu0
        %v1411 = vadd.f32 0.0, %v1410
        %1412 = vmatmul.f32.gmra.mxu0 %v805
        %v1413 = vpop.f32.mrf.mxu0
        %v1414 = vadd.f32 0.0, %v1413
        %1415 = vmatmul.f32.gmra.mxu0 %v808
        %v1416 = vpop.f32.mrf.mxu0
        %v1417 = vadd.f32 0.0, %v1416
        %1418 = vmatmul.f32.gmra.mxu0 %v811
        %v1419 = vpop.f32.mrf.mxu0
        %v1420 = vadd.f32 0.0, %v1419
        %1421 = vmatmul.f32.gmra.mxu0 %v814
        %v1422 = vpop.f32.mrf.mxu0
        %v1423 = vadd.f32 0.0, %v1422
        %1424 = vmatmul.f32.gmra.mxu0 %v817
        %v1425 = vpop.f32.mrf.mxu0
        %v1426 = vadd.f32 0.0, %v1425
        %1427 = vmatmul.f32.gmra.mxu0 %v820
        %v1428 = vpop.f32.mrf.mxu0
        %v1429 = vadd.f32 0.0, %v1428
        %1430 = vmatmul.f32.gmra.mxu0 %v823
        %v1431 = vpop.f32.mrf.mxu0
        %v1432 = vadd.f32 0.0, %v1431
        %1433 = vmatmul.f32.gmra.mxu0 %v826
        %v1434 = vpop.f32.mrf.mxu0
        %v1435 = vadd.f32 0.0, %v1434
        %1436 = vmatmul.f32.gmra.mxu0 %v829
        %v1437 = vpop.f32.mrf.mxu0
        %v1438 = vadd.f32 0.0, %v1437
        %1439 = vmatmul.f32.gmra.mxu0 %v832
        %v1440 = vpop.f32.mrf.mxu0
        %v1441 = vadd.f32 0.0, %v1440
        %1442 = vmatmul.f32.gmra.mxu0 %v835
        %v1443 = vpop.f32.mrf.mxu0
        %v1444 = vadd.f32 0.0, %v1443
        %1445 = vmatmul.f32.gmra.mxu0 %v838
        %v1446 = vpop.f32.mrf.mxu0
        %v1447 = vadd.f32 0.0, %v1446
        %1448 = vmatmul.f32.gmra.mxu0 %v841
        %v1449 = vpop.f32.mrf.mxu0
        %v1450 = vadd.f32 0.0, %v1449
        %1451 = vmatmul.f32.gmra.mxu0 %v844
        %v1452 = vpop.f32.mrf.mxu0
        %v1453 = vadd.f32 0.0, %v1452
        %1454 = vmatmul.f32.gmra.mxu0 %v847
        %v1455 = vpop.f32.mrf.mxu0
        %v1456 = vadd.f32 0.0, %v1455
        %1457 = vmatmul.f32.gmra.mxu0 %v850
        %v1458 = vpop.f32.mrf.mxu0
        %v1459 = vadd.f32 0.0, %v1458
        %1460 = vmatmul.f32.gmra.mxu0 %v853
        %v1461 = vpop.f32.mrf.mxu0
        %v1462 = vadd.f32 0.0, %v1461
        %1463 = vmatmul.f32.gmra.mxu0 %v856
        %v1464 = vpop.f32.mrf.mxu0
        %v1465 = vadd.f32 0.0, %v1464
        %1466 = vmatmul.f32.gmra.mxu0 %v859
        %v1467 = vpop.f32.mrf.mxu0
        %v1468 = vadd.f32 0.0, %v1467
        %1469 = vmatmul.f32.gmra.mxu0 %v862
        %v1470 = vpop.f32.mrf.mxu0
        %v1471 = vadd.f32 0.0, %v1470
        %1472 = vmatmul.f32.gmra.mxu0 %v865
        %v1473 = vpop.f32.mrf.mxu0
        %v1474 = vadd.f32 0.0, %v1473
        %1475 = vmatmul.f32.gmra.mxu0 %v868
        %v1476 = vpop.f32.mrf.mxu0
        %v1477 = vadd.f32 0.0, %v1476
        %1478 = vmatmul.f32.gmra.mxu0 %v871
        %v1479 = vpop.f32.mrf.mxu0
        %v1480 = vadd.f32 0.0, %v1479
        %1481 = vmatmul.f32.gmra.mxu0 %v874
        %v1482 = vpop.f32.mrf.mxu0
        %v1483 = vadd.f32 0.0, %v1482
        %1484 = vmatmul.f32.gmra.mxu0 %v877
        %v1485 = vpop.f32.mrf.mxu0
        %v1486 = vadd.f32 0.0, %v1485
        %1487 = vmatmul.f32.gmra.mxu0 %v880
        %v1488 = vpop.f32.mrf.mxu0
        %v1489 = vadd.f32 0.0, %v1488
        %1490 = vmatmul.f32.gmra.mxu0 %v883
        %v1491 = vpop.f32.mrf.mxu0
        %v1492 = vadd.f32 0.0, %v1491
        %1493 = vmatmul.f32.gmra.mxu0 %v886
        %v1494 = vpop.f32.mrf.mxu0
        %v1495 = vadd.f32 0.0, %v1494
        %1496 = vmatmul.f32.gmra.mxu0 %v889
        %v1497 = vpop.f32.mrf.mxu0
        %v1498 = vadd.f32 0.0, %v1497
        %1499 = vmatmul.f32.gmra.mxu0 %v892
        %v1500 = vpop.f32.mrf.mxu0
        %v1501 = vadd.f32 0.0, %v1500
        %1502 = vmatmul.f32.gmra.mxu0 %v895
        %v1503 = vpop.f32.mrf.mxu0
        %v1504 = vadd.f32 0.0, %v1503
        %1505 = vmatmul.f32.gmra.mxu0 %v898
        %v1506 = vpop.f32.mrf.mxu0
        %v1507 = vadd.f32 0.0, %v1506
        %1508 = vmatmul.f32.gmra.mxu0 %v901
        %v1509 = vpop.f32.mrf.mxu0
        %v1510 = vadd.f32 0.0, %v1509
        %1511 = vmatmul.f32.gmra.mxu0 %v904
        %v1512 = vpop.f32.mrf.mxu0
        %v1513 = vadd.f32 0.0, %v1512
        %1514 = vmatmul.f32.gmra.mxu0 %v907
        %v1515 = vpop.f32.mrf.mxu0
        %v1516 = vadd.f32 0.0, %v1515
        %1517 = vmatmul.f32.gmra.mxu0 %v910
        %v1518 = vpop.f32.mrf.mxu0
        %v1519 = vadd.f32 0.0, %v1518
        %1520 = vmatmul.f32.gmra.mxu0 %v913
        %v1521 = vpop.f32.mrf.mxu0
        %v1522 = vadd.f32 0.0, %v1521
        %1523 = vmatmul.f32.gmra.mxu0 %v916
        %v1524 = vpop.f32.mrf.mxu0
        %v1525 = vadd.f32 0.0, %v1524
        %1526 = vmatmul.f32.gmra.mxu0 %v919
        %v1527 = vpop.f32.mrf.mxu0
        %v1528 = vadd.f32 0.0, %v1527
        %1529 = vmatmul.f32.gmra.mxu0 %v922
        %v1530 = vpop.f32.mrf.mxu0
        %v1531 = vadd.f32 0.0, %v1530
        %1532 = vmatmul.f32.gmra.mxu0 %v925
        %v1533 = vpop.f32.mrf.mxu0
        %v1534 = vadd.f32 0.0, %v1533
        %1535 = vmatmul.f32.gmra.mxu0 %v928
        %v1536 = vpop.f32.mrf.mxu0
        %v1537 = vadd.f32 0.0, %v1536
        %1538 = vmatmul.f32.gmra.mxu0 %v931
        %v1539 = vpop.f32.mrf.mxu0
        %v1540 = vadd.f32 0.0, %v1539
        %1541 = vmatmul.f32.gmra.mxu0 %v934
        %v1542 = vpop.f32.mrf.mxu0
        %v1543 = vadd.f32 0.0, %v1542
        %1544 = vmatmul.f32.gmra.mxu0 %v937
        %v1545 = vpop.f32.mrf.mxu0
        %v1546 = vadd.f32 0.0, %v1545
        %1547 = vmatmul.f32.gmra.mxu0 %v940
        %v1548 = vpop.f32.mrf.mxu0
        %v1549 = vadd.f32 0.0, %v1548
        %1550 = vmatmul.f32.gmra.mxu0 %v943
        %v1551 = vpop.f32.mrf.mxu0
        %v1552 = vadd.f32 0.0, %v1551
        %1553 = vmatmul.f32.gmra.mxu0 %v946
        %v1554 = vpop.f32.mrf.mxu0
        %v1555 = vadd.f32 0.0, %v1554
        %1556 = vmatmul.f32.gmra.mxu0 %v949
        %v1557 = vpop.f32.mrf.mxu0
        %v1558 = vadd.f32 0.0, %v1557
        %1559 = vmatmul.f32.gmra.mxu0 %v952
        %v1560 = vpop.f32.mrf.mxu0
        %v1561 = vadd.f32 0.0, %v1560
        %1562 = vmatmul.f32.gmra.mxu0 %v955
        %v1563 = vpop.f32.mrf.mxu0
        %v1564 = vadd.f32 0.0, %v1563
        %1565 = vmatmul.f32.gmra.mxu0 %v958
        %v1566 = vpop.f32.mrf.mxu0
        %v1567 = vadd.f32 0.0, %v1566
        %1568 = vmatmul.f32.gmra.mxu0 %v961
        %v1569 = vpop.f32.mrf.mxu0
        %v1570 = vadd.f32 0.0, %v1569
        %1571 = vmatmul.f32.gmra.mxu0 %v964
        %v1572 = vpop.f32.mrf.mxu0
        %v1573 = vadd.f32 0.0, %v1572
        %1574 = vmatmul.f32.gmra.mxu0 %v967
        %v1575 = vpop.f32.mrf.mxu0
        %v1576 = vadd.f32 0.0, %v1575
        %1577 = vmatmul.f32.gmra.mxu0 %v970
        %v1578 = vpop.f32.mrf.mxu0
        %v1579 = vadd.f32 0.0, %v1578
        %1580 = vmatmul.f32.gmra.mxu0 %v973
        %v1581 = vpop.f32.mrf.mxu0
        %v1582 = vadd.f32 0.0, %v1581
        %1583 = vmatmul.f32.gmra.mxu0 %v976
        %v1584 = vpop.f32.mrf.mxu0
        %v1585 = vadd.f32 0.0, %v1584
        %1586 = vmatmul.f32.gmra.mxu0 %v979
        %v1587 = vpop.f32.mrf.mxu0
        %v1588 = vadd.f32 0.0, %v1587
        %1589 = vmatmul.f32.gmra.mxu0 %v982
        %v1590 = vpop.f32.mrf.mxu0
        %v1591 = vadd.f32 0.0, %v1590
        %1592 = vmatmul.f32.gmra.mxu0 %v985
        %v1593 = vpop.f32.mrf.mxu0
        %v1594 = vadd.f32 0.0, %v1593
        %1595 = vmatmul.f32.gmra.mxu0 %v988
        %v1596 = vpop.f32.mrf.mxu0
        %v1597 = vadd.f32 0.0, %v1596
        %1598 = vmatmul.f32.gmra.mxu0 %v991
        %v1599 = vpop.f32.mrf.mxu0
        %v1600 = vadd.f32 0.0, %v1599
        %1601 = vmatmul.f32.gmra.mxu0 %v994
        %v1602 = vpop.f32.mrf.mxu0
        %v1603 = vadd.f32 0.0, %v1602
        %1604 = vmatmul.f32.gmra.mxu0 %v997
        %v1605 = vpop.f32.mrf.mxu0
        %v1606 = vadd.f32 0.0, %v1605
        %1607 = vmatmul.f32.gmra.mxu0 %v1000
        %v1608 = vpop.f32.mrf.mxu0
        %v1609 = vadd.f32 0.0, %v1608
        %1610 = vmatmul.f32.gmra.mxu0 %v1003
        %v1611 = vpop.f32.mrf.mxu0
        %v1612 = vadd.f32 0.0, %v1611
        %1613 = vmatmul.f32.gmra.mxu0 %v1006
        %v1614 = vpop.f32.mrf.mxu0
        %v1615 = vadd.f32 0.0, %v1614
        %1616 = vmatmul.f32.gmra.mxu0 %v1009
        %v1617 = vpop.f32.mrf.mxu0
        %v1618 = vadd.f32 0.0, %v1617
        %1619 = vmatmul.f32.gmra.mxu0 %v1012
        %v1620 = vpop.f32.mrf.mxu0
        %v1621 = vadd.f32 0.0, %v1620
        %1622 = vmatmul.f32.gmra.mxu0 %v1015
        %v1623 = vpop.f32.mrf.mxu0
        %v1624 = vadd.f32 0.0, %v1623
        %1625 = vmatmul.f32.gmra.mxu0 %v1018
        %v1626 = vpop.f32.mrf.mxu0
        %v1627 = vadd.f32 0.0, %v1626
        %1628 = vmatmul.f32.gmra.mxu0 %v1021
        %v1629 = vpop.f32.mrf.mxu0
        %v1630 = vadd.f32 0.0, %v1629
        %1631 = vmatmul.f32.gmra.mxu0 %v1024
        %v1632 = vpop.f32.mrf.mxu0
        %v1633 = vadd.f32 0.0, %v1632
        %1634 = vmatmul.f32.gmra.mxu0 %v1027
        %v1635 = vpop.f32.mrf.mxu0
        %v1636 = vadd.f32 0.0, %v1635
        %1637 = vmatmul.f32.gmra.mxu0 %v1030
        %v1638 = vpop.f32.mrf.mxu0
        %v1639 = vadd.f32 0.0, %v1638
        %1640 = vmatmul.f32.gmra.mxu0 %v1033
        %v1641 = vpop.f32.mrf.mxu0
        %v1642 = vadd.f32 0.0, %v1641
        %1643 = vmatmul.f32.gmra.mxu0 %v1036
        %v1644 = vpop.f32.mrf.mxu0
        %v1645 = vadd.f32 0.0, %v1644
        %1646 = vmatmul.f32.gmra.mxu0 %v1039
        %v1647 = vpop.f32.mrf.mxu0
        %v1648 = vadd.f32 0.0, %v1647
        %1649 = vmatmul.f32.gmra.mxu0 %v1042
        %v1650 = vpop.f32.mrf.mxu0
        %v1651 = vadd.f32 0.0, %v1650
        %1652 = vmatmul.f32.gmra.mxu0 %v1045
        %v1653 = vpop.f32.mrf.mxu0
        %v1654 = vadd.f32 0.0, %v1653
        %1655 = vmatmul.f32.gmra.mxu0 %v1048
        %v1656 = vpop.f32.mrf.mxu0
        %v1657 = vadd.f32 0.0, %v1656
        %1658 = vmatmul.f32.gmra.mxu0 %v1051
        %v1659 = vpop.f32.mrf.mxu0
        %v1660 = vadd.f32 0.0, %v1659
        %1661 = vmatmul.f32.gmra.mxu0 %v1054
        %v1662 = vpop.f32.mrf.mxu0
        %v1663 = vadd.f32 0.0, %v1662
        %1664 = vmatmul.f32.gmra.mxu0 %v1057
        %v1665 = vpop.f32.mrf.mxu0
        %v1666 = vadd.f32 0.0, %v1665
        %1667 = vmatmul.f32.gmra.mxu0 %v1060
        %v1668 = vpop.f32.mrf.mxu0
        %v1669 = vadd.f32 0.0, %v1668
        %1670 = vmatmul.f32.gmra.mxu0 %v1063
        %v1671 = vpop.f32.mrf.mxu0
        %v1672 = vadd.f32 0.0, %v1671
        %1673 = vmatmul.f32.gmra.mxu0 %v1066
        %v1674 = vpop.f32.mrf.mxu0
        %v1675 = vadd.f32 0.0, %v1674
        %1676 = vmatmul.f32.gmra.mxu0 %v1069
        %v1677 = vpop.f32.mrf.mxu0
        %v1678 = vadd.f32 0.0, %v1677
        %1679 = vmatmul.f32.gmra.mxu0 %v1072
        %v1680 = vpop.f32.mrf.mxu0
        %v1681 = vadd.f32 0.0, %v1680
        %1682 = vmatmul.f32.gmra.mxu0 %v1075
        %v1683 = vpop.f32.mrf.mxu0
        %v1684 = vadd.f32 0.0, %v1683
        %1685 = vmatmul.f32.gmra.mxu0 %v1078
        %v1686 = vpop.f32.mrf.mxu0
        %v1687 = vadd.f32 0.0, %v1686
        %1688 = vmatmul.f32.gmra.mxu0 %v1081
        %v1689 = vpop.f32.mrf.mxu0
        %v1690 = vadd.f32 0.0, %v1689
        %1691 = vmatmul.f32.gmra.mxu0 %v1084
        %v1692 = vpop.f32.mrf.mxu0
        %v1693 = vadd.f32 0.0, %v1692
        %1694 = vmatmul.f32.gmra.mxu0 %v1087
        %v1695 = vpop.f32.mrf.mxu0
        %v1696 = vadd.f32 0.0, %v1695
        %1697 = vdwg.mxu0
        %1894 = vrot.lane.b32.xlu0 %v1111, 120
        %v1895 = vpop.permute.xlu0 %1894
        %1896 = vrot.lane.b32.xlu0 %v1114, 120
        %v1897 = vpop.permute.xlu0 %1896
        %1898 = vrot.lane.b32.xlu0 %v1117, 120
        %v1899 = vpop.permute.xlu0 %1898
        %1900 = vrot.lane.b32.xlu0 %v1120, 120
        %v1901 = vpop.permute.xlu0 %1900
        %1902 = vrot.lane.b32.xlu0 %v1123, 120
        %v1903 = vpop.permute.xlu0 %1902
        %1904 = vrot.lane.b32.xlu0 %v1126, 120
        %v1905 = vpop.permute.xlu0 %1904
        %1906 = vrot.lane.b32.xlu0 %v1129, 120
        %v1907 = vpop.permute.xlu0 %1906
        %1908 = vrot.lane.b32.xlu0 %v1132, 120
        %v1909 = vpop.permute.xlu0 %1908
        %1910 = vrot.lane.b32.xlu0 %v1135, 120
        %v1911 = vpop.permute.xlu0 %1910
        %1912 = vrot.lane.b32.xlu0 %v1138, 120
        %v1913 = vpop.permute.xlu0 %1912
        %1914 = vrot.lane.b32.xlu0 %v1141, 120
        %v1915 = vpop.permute.xlu0 %1914
        %1916 = vrot.lane.b32.xlu0 %v1144, 120
        %v1917 = vpop.permute.xlu0 %1916
        %1918 = vrot.lane.b32.xlu0 %v1147, 120
        %v1919 = vpop.permute.xlu0 %1918
        %1920 = vrot.lane.b32.xlu0 %v1150, 120
        %v1921 = vpop.permute.xlu0 %1920
        %1922 = vrot.lane.b32.xlu0 %v1153, 120
        %v1923 = vpop.permute.xlu0 %1922
        %1924 = vrot.lane.b32.xlu0 %v1156, 120
        %v1925 = vpop.permute.xlu0 %1924
        %1926 = vrot.lane.b32.xlu0 %v1159, 120
        %v1927 = vpop.permute.xlu0 %1926
        %1928 = vrot.lane.b32.xlu0 %v1162, 120
        %v1929 = vpop.permute.xlu0 %1928
        %1930 = vrot.lane.b32.xlu0 %v1165, 120
        %v1931 = vpop.permute.xlu0 %1930
        %1932 = vrot.lane.b32.xlu0 %v1168, 120
        %v1933 = vpop.permute.xlu0 %1932
        %1934 = vrot.lane.b32.xlu0 %v1171, 120
        %v1935 = vpop.permute.xlu0 %1934
        %1936 = vrot.lane.b32.xlu0 %v1174, 120
        %v1937 = vpop.permute.xlu0 %1936
        %1938 = vrot.lane.b32.xlu0 %v1177, 120
        %v1939 = vpop.permute.xlu0 %1938
        %1940 = vrot.lane.b32.xlu0 %v1180, 120
        %v1941 = vpop.permute.xlu0 %1940
        %1942 = vrot.lane.b32.xlu0 %v1183, 120
        %v1943 = vpop.permute.xlu0 %1942
        %1944 = vrot.lane.b32.xlu0 %v1186, 120
        %v1945 = vpop.permute.xlu0 %1944
        %1946 = vrot.lane.b32.xlu0 %v1189, 120
        %v1947 = vpop.permute.xlu0 %1946
        %1948 = vrot.lane.b32.xlu0 %v1192, 120
        %v1949 = vpop.permute.xlu0 %1948
        %1950 = vrot.lane.b32.xlu0 %v1195, 120
        %v1951 = vpop.permute.xlu0 %1950
        %1952 = vrot.lane.b32.xlu0 %v1198, 120
        %v1953 = vpop.permute.xlu0 %1952
        %1954 = vrot.lane.b32.xlu0 %v1201, 120
        %v1955 = vpop.permute.xlu0 %1954
        %1956 = vrot.lane.b32.xlu0 %v1204, 120
        %v1957 = vpop.permute.xlu0 %1956
        %1958 = vrot.lane.b32.xlu0 %v1207, 120
        %v1959 = vpop.permute.xlu0 %1958
        %1960 = vrot.lane.b32.xlu0 %v1210, 120
        %v1961 = vpop.permute.xlu0 %1960
        %1962 = vrot.lane.b32.xlu0 %v1213, 120
        %v1963 = vpop.permute.xlu0 %1962
        %1964 = vrot.lane.b32.xlu0 %v1216, 120
        %v1965 = vpop.permute.xlu0 %1964
        %1966 = vrot.lane.b32.xlu0 %v1219, 120
        %v1967 = vpop.permute.xlu0 %1966
        %1968 = vrot.lane.b32.xlu0 %v1222, 120
        %v1969 = vpop.permute.xlu0 %1968
        %1970 = vrot.lane.b32.xlu0 %v1225, 120
        %v1971 = vpop.permute.xlu0 %1970
        %1972 = vrot.lane.b32.xlu0 %v1228, 120
        %v1973 = vpop.permute.xlu0 %1972
        %1974 = vrot.lane.b32.xlu0 %v1231, 120
        %v1975 = vpop.permute.xlu0 %1974
        %1976 = vrot.lane.b32.xlu0 %v1234, 120
        %v1977 = vpop.permute.xlu0 %1976
        %1978 = vrot.lane.b32.xlu0 %v1237, 120
        %v1979 = vpop.permute.xlu0 %1978
        %1980 = vrot.lane.b32.xlu0 %v1240, 120
        %v1981 = vpop.permute.xlu0 %1980
        %1982 = vrot.lane.b32.xlu0 %v1243, 120
        %v1983 = vpop.permute.xlu0 %1982
        %1984 = vrot.lane.b32.xlu0 %v1246, 120
        %v1985 = vpop.permute.xlu0 %1984
        %1986 = vrot.lane.b32.xlu0 %v1249, 120
        %v1987 = vpop.permute.xlu0 %1986
        %1988 = vrot.lane.b32.xlu0 %v1252, 120
        %v1989 = vpop.permute.xlu0 %1988
        %1990 = vrot.lane.b32.xlu0 %v1255, 120
        %v1991 = vpop.permute.xlu0 %1990
        %1992 = vrot.lane.b32.xlu0 %v1258, 120
        %v1993 = vpop.permute.xlu0 %1992
        %1994 = vrot.lane.b32.xlu0 %v1261, 120
        %v1995 = vpop.permute.xlu0 %1994
        %1996 = vrot.lane.b32.xlu0 %v1264, 120
        %v1997 = vpop.permute.xlu0 %1996
        %1998 = vrot.lane.b32.xlu0 %v1267, 120
        %v1999 = vpop.permute.xlu0 %1998
        %2000 = vrot.lane.b32.xlu0 %v1270, 120
        %v2001 = vpop.permute.xlu0 %2000
        %2002 = vrot.lane.b32.xlu0 %v1273, 120
        %v2003 = vpop.permute.xlu0 %2002
        %2004 = vrot.lane.b32.xlu0 %v1276, 120
        %v2005 = vpop.permute.xlu0 %2004
        %2006 = vrot.lane.b32.xlu0 %v1279, 120
        %v2007 = vpop.permute.xlu0 %2006
        %2008 = vrot.lane.b32.xlu0 %v1282, 120
        %v2009 = vpop.permute.xlu0 %2008
        %2010 = vrot.lane.b32.xlu0 %v1285, 120
        %v2011 = vpop.permute.xlu0 %2010
        %2012 = vrot.lane.b32.xlu0 %v1288, 120
        %v2013 = vpop.permute.xlu0 %2012
        %2014 = vrot.lane.b32.xlu0 %v1291, 120
        %v2015 = vpop.permute.xlu0 %2014
        %2016 = vrot.lane.b32.xlu0 %v1294, 120
        %v2017 = vpop.permute.xlu0 %2016
        %2018 = vrot.lane.b32.xlu0 %v1297, 120
        %v2019 = vpop.permute.xlu0 %2018
        %2020 = vrot.lane.b32.xlu0 %v1300, 120
        %v2021 = vpop.permute.xlu0 %2020
        %2022 = vrot.lane.b32.xlu0 %v1303, 120
        %v2023 = vpop.permute.xlu0 %2022
        %2024 = vrot.lane.b32.xlu0 %v1306, 120
        %v2025 = vpop.permute.xlu0 %2024
        %2026 = vrot.lane.b32.xlu0 %v1309, 120
        %v2027 = vpop.permute.xlu0 %2026
        %2028 = vrot.lane.b32.xlu0 %v1312, 120
        %v2029 = vpop.permute.xlu0 %2028
        %2030 = vrot.lane.b32.xlu0 %v1315, 120
        %v2031 = vpop.permute.xlu0 %2030
        %2032 = vrot.lane.b32.xlu0 %v1318, 120
        %v2033 = vpop.permute.xlu0 %2032
        %2034 = vrot.lane.b32.xlu0 %v1321, 120
        %v2035 = vpop.permute.xlu0 %2034
        %2036 = vrot.lane.b32.xlu0 %v1324, 120
        %v2037 = vpop.permute.xlu0 %2036
        %2038 = vrot.lane.b32.xlu0 %v1327, 120
        %v2039 = vpop.permute.xlu0 %2038
        %2040 = vrot.lane.b32.xlu0 %v1330, 120
        %v2041 = vpop.permute.xlu0 %2040
        %2042 = vrot.lane.b32.xlu0 %v1333, 120
        %v2043 = vpop.permute.xlu0 %2042
        %2044 = vrot.lane.b32.xlu0 %v1336, 120
        %v2045 = vpop.permute.xlu0 %2044
        %2046 = vrot.lane.b32.xlu0 %v1339, 120
        %v2047 = vpop.permute.xlu0 %2046
        %2048 = vrot.lane.b32.xlu0 %v1342, 120
        %v2049 = vpop.permute.xlu0 %2048
        %2050 = vrot.lane.b32.xlu0 %v1345, 120
        %v2051 = vpop.permute.xlu0 %2050
        %2052 = vrot.lane.b32.xlu0 %v1348, 120
        %v2053 = vpop.permute.xlu0 %2052
        %2054 = vrot.lane.b32.xlu0 %v1351, 120
        %v2055 = vpop.permute.xlu0 %2054
        %2056 = vrot.lane.b32.xlu0 %v1354, 120
        %v2057 = vpop.permute.xlu0 %2056
        %2058 = vrot.lane.b32.xlu0 %v1357, 120
        %v2059 = vpop.permute.xlu0 %2058
        %2060 = vrot.lane.b32.xlu0 %v1360, 120
        %v2061 = vpop.permute.xlu0 %2060
        %2062 = vrot.lane.b32.xlu0 %v1363, 120
        %v2063 = vpop.permute.xlu0 %2062
        %2064 = vrot.lane.b32.xlu0 %v1366, 120
        %v2065 = vpop.permute.xlu0 %2064
        %2066 = vrot.lane.b32.xlu0 %v1369, 120
        %v2067 = vpop.permute.xlu0 %2066
        %2068 = vrot.lane.b32.xlu0 %v1372, 120
        %v2069 = vpop.permute.xlu0 %2068
        %2070 = vrot.lane.b32.xlu0 %v1375, 120
        %v2071 = vpop.permute.xlu0 %2070
        %2072 = vrot.lane.b32.xlu0 %v1378, 120
        %v2073 = vpop.permute.xlu0 %2072
        %2074 = vrot.lane.b32.xlu0 %v1381, 120
        %v2075 = vpop.permute.xlu0 %2074
        %2076 = vrot.lane.b32.xlu0 %v1384, 120
        %v2077 = vpop.permute.xlu0 %2076
        %2078 = vrot.lane.b32.xlu0 %v1387, 120
        %v2079 = vpop.permute.xlu0 %2078
        %2080 = vrot.lane.b32.xlu0 %v1390, 120
        %v2081 = vpop.permute.xlu0 %2080
        %2082 = vrot.lane.b32.xlu0 %v1393, 120
        %v2083 = vpop.permute.xlu0 %2082
        %2084 = vrot.lane.b32.xlu0 %v1396, 120
        %v2085 = vpop.permute.xlu0 %2084
        %2086 = vrot.lane.b32.xlu0 %v1399, 120
        %v2087 = vpop.permute.xlu0 %2086
        %2088 = vrot.lane.b32.xlu0 %v1402, 120
        %v2089 = vpop.permute.xlu0 %2088
        %2090 = vrot.lane.b32.xlu0 %v1405, 120
        %v2091 = vpop.permute.xlu0 %2090
        %2092 = vrot.lane.b32.xlu0 %v1408, 120
        %v2093 = vpop.permute.xlu0 %2092
        %2094 = vrot.lane.b32.xlu0 %v1411, 120
        %v2095 = vpop.permute.xlu0 %2094
        %2096 = vrot.lane.b32.xlu0 %v1414, 120
        %v2097 = vpop.permute.xlu0 %2096
        %2098 = vrot.lane.b32.xlu0 %v1417, 120
        %v2099 = vpop.permute.xlu0 %2098
        %2100 = vrot.lane.b32.xlu0 %v1420, 120
        %v2101 = vpop.permute.xlu0 %2100
        %2102 = vrot.lane.b32.xlu0 %v1423, 120
        %v2103 = vpop.permute.xlu0 %2102
        %2104 = vrot.lane.b32.xlu0 %v1426, 120
        %v2105 = vpop.permute.xlu0 %2104
        %2106 = vrot.lane.b32.xlu0 %v1429, 120
        %v2107 = vpop.permute.xlu0 %2106
        %2108 = vrot.lane.b32.xlu0 %v1432, 120
        %v2109 = vpop.permute.xlu0 %2108
        %2110 = vrot.lane.b32.xlu0 %v1435, 120
        %v2111 = vpop.permute.xlu0 %2110
        %2112 = vrot.lane.b32.xlu0 %v1438, 120
        %v2113 = vpop.permute.xlu0 %2112
        %2114 = vrot.lane.b32.xlu0 %v1441, 120
        %v2115 = vpop.permute.xlu0 %2114
        %2116 = vrot.lane.b32.xlu0 %v1444, 120
        %v2117 = vpop.permute.xlu0 %2116
        %2118 = vrot.lane.b32.xlu0 %v1447, 120
        %v2119 = vpop.permute.xlu0 %2118
        %2120 = vrot.lane.b32.xlu0 %v1450, 120
        %v2121 = vpop.permute.xlu0 %2120
        %2122 = vrot.lane.b32.xlu0 %v1453, 120
        %v2123 = vpop.permute.xlu0 %2122
        %2124 = vrot.lane.b32.xlu0 %v1456, 120
        %v2125 = vpop.permute.xlu0 %2124
        %2126 = vrot.lane.b32.xlu0 %v1459, 120
        %v2127 = vpop.permute.xlu0 %2126
        %2128 = vrot.lane.b32.xlu0 %v1462, 120
        %v2129 = vpop.permute.xlu0 %2128
        %2130 = vrot.lane.b32.xlu0 %v1465, 120
        %v2131 = vpop.permute.xlu0 %2130
        %2132 = vrot.lane.b32.xlu0 %v1468, 120
        %v2133 = vpop.permute.xlu0 %2132
        %2134 = vrot.lane.b32.xlu0 %v1471, 120
        %v2135 = vpop.permute.xlu0 %2134
        %2136 = vrot.lane.b32.xlu0 %v1474, 120
        %v2137 = vpop.permute.xlu0 %2136
        %2138 = vrot.lane.b32.xlu0 %v1477, 120
        %v2139 = vpop.permute.xlu0 %2138
        %2140 = vrot.lane.b32.xlu0 %v1480, 120
        %v2141 = vpop.permute.xlu0 %2140
        %2142 = vrot.lane.b32.xlu0 %v1483, 120
        %v2143 = vpop.permute.xlu0 %2142
        %2144 = vrot.lane.b32.xlu0 %v1486, 120
        %v2145 = vpop.permute.xlu0 %2144
        %2146 = vrot.lane.b32.xlu0 %v1489, 120
        %v2147 = vpop.permute.xlu0 %2146
        %2148 = vrot.lane.b32.xlu0 %v1492, 120
        %v2149 = vpop.permute.xlu0 %2148
        %2150 = vrot.lane.b32.xlu0 %v1495, 120
        %v2151 = vpop.permute.xlu0 %2150
        %2152 = vrot.lane.b32.xlu0 %v1498, 120
        %v2153 = vpop.permute.xlu0 %2152
        %2154 = vrot.lane.b32.xlu0 %v1501, 120
        %v2155 = vpop.permute.xlu0 %2154
        %2156 = vrot.lane.b32.xlu0 %v1504, 120
        %v2157 = vpop.permute.xlu0 %2156
        %2158 = vrot.lane.b32.xlu0 %v1507, 120
        %v2159 = vpop.permute.xlu0 %2158
        %2160 = vrot.lane.b32.xlu0 %v1510, 120
        %v2161 = vpop.permute.xlu0 %2160
        %2162 = vrot.lane.b32.xlu0 %v1513, 120
        %v2163 = vpop.permute.xlu0 %2162
        %2164 = vrot.lane.b32.xlu0 %v1516, 120
        %v2165 = vpop.permute.xlu0 %2164
        %2166 = vrot.lane.b32.xlu0 %v1519, 120
        %v2167 = vpop.permute.xlu0 %2166
        %2168 = vrot.lane.b32.xlu0 %v1522, 120
        %v2169 = vpop.permute.xlu0 %2168
        %2170 = vrot.lane.b32.xlu0 %v1525, 120
        %v2171 = vpop.permute.xlu0 %2170
        %2172 = vrot.lane.b32.xlu0 %v1528, 120
        %v2173 = vpop.permute.xlu0 %2172
        %2174 = vrot.lane.b32.xlu0 %v1531, 120
        %v2175 = vpop.permute.xlu0 %2174
        %2176 = vrot.lane.b32.xlu0 %v1534, 120
        %v2177 = vpop.permute.xlu0 %2176
        %2178 = vrot.lane.b32.xlu0 %v1537, 120
        %v2179 = vpop.permute.xlu0 %2178
        %2180 = vrot.lane.b32.xlu0 %v1540, 120
        %v2181 = vpop.permute.xlu0 %2180
        %2182 = vrot.lane.b32.xlu0 %v1543, 120
        %v2183 = vpop.permute.xlu0 %2182
        %2184 = vrot.lane.b32.xlu0 %v1546, 120
        %v2185 = vpop.permute.xlu0 %2184
        %2186 = vrot.lane.b32.xlu0 %v1549, 120
        %v2187 = vpop.permute.xlu0 %2186
        %2188 = vrot.lane.b32.xlu0 %v1552, 120
        %v2189 = vpop.permute.xlu0 %2188
        %2190 = vrot.lane.b32.xlu0 %v1555, 120
        %v2191 = vpop.permute.xlu0 %2190
        %2192 = vrot.lane.b32.xlu0 %v1558, 120
        %v2193 = vpop.permute.xlu0 %2192
        %2194 = vrot.lane.b32.xlu0 %v1561, 120
        %v2195 = vpop.permute.xlu0 %2194
        %2196 = vrot.lane.b32.xlu0 %v1564, 120
        %v2197 = vpop.permute.xlu0 %2196
        %2198 = vrot.lane.b32.xlu0 %v1567, 120
        %v2199 = vpop.permute.xlu0 %2198
        %2200 = vrot.lane.b32.xlu0 %v1570, 120
        %v2201 = vpop.permute.xlu0 %2200
        %2202 = vrot.lane.b32.xlu0 %v1573, 120
        %v2203 = vpop.permute.xlu0 %2202
        %2204 = vrot.lane.b32.xlu0 %v1576, 120
        %v2205 = vpop.permute.xlu0 %2204
        %2206 = vrot.lane.b32.xlu0 %v1579, 120
        %v2207 = vpop.permute.xlu0 %2206
        %2208 = vrot.lane.b32.xlu0 %v1582, 120
        %v2209 = vpop.permute.xlu0 %2208
        %2210 = vrot.lane.b32.xlu0 %v1585, 120
        %v2211 = vpop.permute.xlu0 %2210
        %2212 = vrot.lane.b32.xlu0 %v1588, 120
        %v2213 = vpop.permute.xlu0 %2212
        %2214 = vrot.lane.b32.xlu0 %v1591, 120
        %v2215 = vpop.permute.xlu0 %2214
        %2216 = vrot.lane.b32.xlu0 %v1594, 120
        %v2217 = vpop.permute.xlu0 %2216
        %2218 = vrot.lane.b32.xlu0 %v1597, 120
        %v2219 = vpop.permute.xlu0 %2218
        %2220 = vrot.lane.b32.xlu0 %v1600, 120
        %v2221 = vpop.permute.xlu0 %2220
        %2222 = vrot.lane.b32.xlu0 %v1603, 120
        %v2223 = vpop.permute.xlu0 %2222
        %2224 = vrot.lane.b32.xlu0 %v1606, 120
        %v2225 = vpop.permute.xlu0 %2224
        %2226 = vrot.lane.b32.xlu0 %v1609, 120
        %v2227 = vpop.permute.xlu0 %2226
        %2228 = vrot.lane.b32.xlu0 %v1612, 120
        %v2229 = vpop.permute.xlu0 %2228
        %2230 = vrot.lane.b32.xlu0 %v1615, 120
        %v2231 = vpop.permute.xlu0 %2230
        %2232 = vrot.lane.b32.xlu0 %v1618, 120
        %v2233 = vpop.permute.xlu0 %2232
        %2234 = vrot.lane.b32.xlu0 %v1621, 120
        %v2235 = vpop.permute.xlu0 %2234
        %2236 = vrot.lane.b32.xlu0 %v1624, 120
        %v2237 = vpop.permute.xlu0 %2236
        %2238 = vrot.lane.b32.xlu0 %v1627, 120
        %v2239 = vpop.permute.xlu0 %2238
        %2240 = vrot.lane.b32.xlu0 %v1630, 120
        %v2241 = vpop.permute.xlu0 %2240
        %2242 = vrot.lane.b32.xlu0 %v1633, 120
        %v2243 = vpop.permute.xlu0 %2242
        %2244 = vrot.lane.b32.xlu0 %v1636, 120
        %v2245 = vpop.permute.xlu0 %2244
        %2246 = vrot.lane.b32.xlu0 %v1639, 120
        %v2247 = vpop.permute.xlu0 %2246
        %2248 = vrot.lane.b32.xlu0 %v1642, 120
        %v2249 = vpop.permute.xlu0 %2248
        %2250 = vrot.lane.b32.xlu0 %v1645, 120
        %v2251 = vpop.permute.xlu0 %2250
        %2252 = vrot.lane.b32.xlu0 %v1648, 120
        %v2253 = vpop.permute.xlu0 %2252
        %2254 = vrot.lane.b32.xlu0 %v1651, 120
        %v2255 = vpop.permute.xlu0 %2254
        %2256 = vrot.lane.b32.xlu0 %v1654, 120
        %v2257 = vpop.permute.xlu0 %2256
        %2258 = vrot.lane.b32.xlu0 %v1657, 120
        %v2259 = vpop.permute.xlu0 %2258
        %2260 = vrot.lane.b32.xlu0 %v1660, 120
        %v2261 = vpop.permute.xlu0 %2260
        %2262 = vrot.lane.b32.xlu0 %v1663, 120
        %v2263 = vpop.permute.xlu0 %2262
        %2264 = vrot.lane.b32.xlu0 %v1666, 120
        %v2265 = vpop.permute.xlu0 %2264
        %2266 = vrot.lane.b32.xlu0 %v1669, 120
        %v2267 = vpop.permute.xlu0 %2266
        %2268 = vrot.lane.b32.xlu0 %v1672, 120
        %v2269 = vpop.permute.xlu0 %2268
        %2270 = vrot.lane.b32.xlu0 %v1675, 120
        %v2271 = vpop.permute.xlu0 %2270
        %2272 = vrot.lane.b32.xlu0 %v1678, 120
        %v2273 = vpop.permute.xlu0 %2272
        %2274 = vrot.lane.b32.xlu0 %v1681, 120
        %v2275 = vpop.permute.xlu0 %2274
        %2276 = vrot.lane.b32.xlu0 %v1684, 120
        %v2277 = vpop.permute.xlu0 %2276
        %2278 = vrot.lane.b32.xlu0 %v1687, 120
        %v2279 = vpop.permute.xlu0 %2278
        %2280 = vrot.lane.b32.xlu0 %v1690, 120
        %v2281 = vpop.permute.xlu0 %2280
        %2282 = vrot.lane.b32.xlu0 %v1693, 120
        %v2283 = vpop.permute.xlu0 %2282
        %2284 = vrot.lane.b32.xlu0 %v1696, 120
        %v2285 = vpop.permute.xlu0 %2284
        %v2482 = vmax.f32 %v1111, %v1895
        %v2483 = vmax.f32 %v1114, %v1897
        %v2484 = vmax.f32 %v1117, %v1899
        %v2485 = vmax.f32 %v1120, %v1901
        %v2486 = vmax.f32 %v1123, %v1903
        %v2487 = vmax.f32 %v1126, %v1905
        %v2488 = vmax.f32 %v1129, %v1907
        %v2489 = vmax.f32 %v1132, %v1909
        %v2490 = vmax.f32 %v1135, %v1911
        %v2491 = vmax.f32 %v1138, %v1913
        %v2492 = vmax.f32 %v1141, %v1915
        %v2493 = vmax.f32 %v1144, %v1917
        %v2494 = vmax.f32 %v1147, %v1919
        %v2495 = vmax.f32 %v1150, %v1921
        %v2496 = vmax.f32 %v1153, %v1923
        %v2497 = vmax.f32 %v1156, %v1925
        %v2498 = vmax.f32 %v1159, %v1927
        %v2499 = vmax.f32 %v1162, %v1929
        %v2500 = vmax.f32 %v1165, %v1931
        %v2501 = vmax.f32 %v1168, %v1933
        %v2502 = vmax.f32 %v1171, %v1935
        %v2503 = vmax.f32 %v1174, %v1937
        %v2504 = vmax.f32 %v1177, %v1939
        %v2505 = vmax.f32 %v1180, %v1941
        %v2506 = vmax.f32 %v1183, %v1943
        %v2507 = vmax.f32 %v1186, %v1945
        %v2508 = vmax.f32 %v1189, %v1947
        %v2509 = vmax.f32 %v1192, %v1949
        %v2510 = vmax.f32 %v1195, %v1951
        %v2511 = vmax.f32 %v1198, %v1953
        %v2512 = vmax.f32 %v1201, %v1955
        %v2513 = vmax.f32 %v1204, %v1957
        %v2514 = vmax.f32 %v1207, %v1959
        %v2515 = vmax.f32 %v1210, %v1961
        %v2516 = vmax.f32 %v1213, %v1963
        %v2517 = vmax.f32 %v1216, %v1965
        %v2518 = vmax.f32 %v1219, %v1967
        %v2519 = vmax.f32 %v1222, %v1969
        %v2520 = vmax.f32 %v1225, %v1971
        %v2521 = vmax.f32 %v1228, %v1973
        %v2522 = vmax.f32 %v1231, %v1975
        %v2523 = vmax.f32 %v1234, %v1977
        %v2524 = vmax.f32 %v1237, %v1979
        %v2525 = vmax.f32 %v1240, %v1981
        %v2526 = vmax.f32 %v1243, %v1983
        %v2527 = vmax.f32 %v1246, %v1985
        %v2528 = vmax.f32 %v1249, %v1987
        %v2529 = vmax.f32 %v1252, %v1989
        %v2530 = vmax.f32 %v1255, %v1991
        %v2531 = vmax.f32 %v1258, %v1993
        %v2532 = vmax.f32 %v1261, %v1995
        %v2533 = vmax.f32 %v1264, %v1997
        %v2534 = vmax.f32 %v1267, %v1999
        %v2535 = vmax.f32 %v1270, %v2001
        %v2536 = vmax.f32 %v1273, %v2003
        %v2537 = vmax.f32 %v1276, %v2005
        %v2538 = vmax.f32 %v1279, %v2007
        %v2539 = vmax.f32 %v1282, %v2009
        %v2540 = vmax.f32 %v1285, %v2011
        %v2541 = vmax.f32 %v1288, %v2013
        %v2542 = vmax.f32 %v1291, %v2015
        %v2543 = vmax.f32 %v1294, %v2017
        %v2544 = vmax.f32 %v1297, %v2019
        %v2545 = vmax.f32 %v1300, %v2021
        %v2546 = vmax.f32 %v1303, %v2023
        %v2547 = vmax.f32 %v1306, %v2025
        %v2548 = vmax.f32 %v1309, %v2027
        %v2549 = vmax.f32 %v1312, %v2029
        %v2550 = vmax.f32 %v1315, %v2031
        %v2551 = vmax.f32 %v1318, %v2033
        %v2552 = vmax.f32 %v1321, %v2035
        %v2553 = vmax.f32 %v1324, %v2037
        %v2554 = vmax.f32 %v1327, %v2039
        %v2555 = vmax.f32 %v1330, %v2041
        %v2556 = vmax.f32 %v1333, %v2043
        %v2557 = vmax.f32 %v1336, %v2045
        %v2558 = vmax.f32 %v1339, %v2047
        %v2559 = vmax.f32 %v1342, %v2049
        %v2560 = vmax.f32 %v1345, %v2051
        %v2561 = vmax.f32 %v1348, %v2053
        %v2562 = vmax.f32 %v1351, %v2055
        %v2563 = vmax.f32 %v1354, %v2057
        %v2564 = vmax.f32 %v1357, %v2059
        %v2565 = vmax.f32 %v1360, %v2061
        %v2566 = vmax.f32 %v1363, %v2063
        %v2567 = vmax.f32 %v1366, %v2065
        %v2568 = vmax.f32 %v1369, %v2067
        %v2569 = vmax.f32 %v1372, %v2069
        %v2570 = vmax.f32 %v1375, %v2071
        %v2571 = vmax.f32 %v1378, %v2073
        %v2572 = vmax.f32 %v1381, %v2075
        %v2573 = vmax.f32 %v1384, %v2077
        %v2574 = vmax.f32 %v1387, %v2079
        %v2575 = vmax.f32 %v1390, %v2081
        %v2576 = vmax.f32 %v1393, %v2083
        %v2577 = vmax.f32 %v1396, %v2085
        %v2578 = vmax.f32 %v1399, %v2087
        %v2579 = vmax.f32 %v1402, %v2089
        %v2580 = vmax.f32 %v1405, %v2091
        %v2581 = vmax.f32 %v1408, %v2093
        %v2582 = vmax.f32 %v1411, %v2095
        %v2583 = vmax.f32 %v1414, %v2097
        %v2584 = vmax.f32 %v1417, %v2099
        %v2585 = vmax.f32 %v1420, %v2101
        %v2586 = vmax.f32 %v1423, %v2103
        %v2587 = vmax.f32 %v1426, %v2105
        %v2588 = vmax.f32 %v1429, %v2107
        %v2589 = vmax.f32 %v1432, %v2109
        %v2590 = vmax.f32 %v1435, %v2111
        %v2591 = vmax.f32 %v1438, %v2113
        %v2592 = vmax.f32 %v1441, %v2115
        %v2593 = vmax.f32 %v1444, %v2117
        %v2594 = vmax.f32 %v1447, %v2119
        %v2595 = vmax.f32 %v1450, %v2121
        %v2596 = vmax.f32 %v1453, %v2123
        %v2597 = vmax.f32 %v1456, %v2125
        %v2598 = vmax.f32 %v1459, %v2127
        %v2599 = vmax.f32 %v1462, %v2129
        %v2600 = vmax.f32 %v1465, %v2131
        %v2601 = vmax.f32 %v1468, %v2133
        %v2602 = vmax.f32 %v1471, %v2135
        %v2603 = vmax.f32 %v1474, %v2137
        %v2604 = vmax.f32 %v1477, %v2139
        %v2605 = vmax.f32 %v1480, %v2141
        %v2606 = vmax.f32 %v1483, %v2143
        %v2607 = vmax.f32 %v1486, %v2145
        %v2608 = vmax.f32 %v1489, %v2147
        %v2609 = vmax.f32 %v1492, %v2149
        %v2610 = vmax.f32 %v1495, %v2151
        %v2611 = vmax.f32 %v1498, %v2153
        %v2612 = vmax.f32 %v1501, %v2155
        %v2613 = vmax.f32 %v1504, %v2157
        %v2614 = vmax.f32 %v1507, %v2159
        %v2615 = vmax.f32 %v1510, %v2161
        %v2616 = vmax.f32 %v1513, %v2163
        %v2617 = vmax.f32 %v1516, %v2165
        %v2618 = vmax.f32 %v1519, %v2167
        %v2619 = vmax.f32 %v1522, %v2169
        %v2620 = vmax.f32 %v1525, %v2171
        %v2621 = vmax.f32 %v1528, %v2173
        %v2622 = vmax.f32 %v1531, %v2175
        %v2623 = vmax.f32 %v1534, %v2177
        %v2624 = vmax.f32 %v1537, %v2179
        %v2625 = vmax.f32 %v1540, %v2181
        %v2626 = vmax.f32 %v1543, %v2183
        %v2627 = vmax.f32 %v1546, %v2185
        %v2628 = vmax.f32 %v1549, %v2187
        %v2629 = vmax.f32 %v1552, %v2189
        %v2630 = vmax.f32 %v1555, %v2191
        %v2631 = vmax.f32 %v1558, %v2193
        %v2632 = vmax.f32 %v1561, %v2195
        %v2633 = vmax.f32 %v1564, %v2197
        %v2634 = vmax.f32 %v1567, %v2199
        %v2635 = vmax.f32 %v1570, %v2201
        %v2636 = vmax.f32 %v1573, %v2203
        %v2637 = vmax.f32 %v1576, %v2205
        %v2638 = vmax.f32 %v1579, %v2207
        %v2639 = vmax.f32 %v1582, %v2209
        %v2640 = vmax.f32 %v1585, %v2211
        %v2641 = vmax.f32 %v1588, %v2213
        %v2642 = vmax.f32 %v1591, %v2215
        %v2643 = vmax.f32 %v1594, %v2217
        %v2644 = vmax.f32 %v1597, %v2219
        %v2645 = vmax.f32 %v1600, %v2221
        %v2646 = vmax.f32 %v1603, %v2223
        %v2647 = vmax.f32 %v1606, %v2225
        %v2648 = vmax.f32 %v1609, %v2227
        %v2649 = vmax.f32 %v1612, %v2229
        %v2650 = vmax.f32 %v1615, %v2231
        %v2651 = vmax.f32 %v1618, %v2233
        %v2652 = vmax.f32 %v1621, %v2235
        %v2653 = vmax.f32 %v1624, %v2237
        %v2654 = vmax.f32 %v1627, %v2239
        %v2655 = vmax.f32 %v1630, %v2241
        %v2656 = vmax.f32 %v1633, %v2243
        %v2657 = vmax.f32 %v1636, %v2245
        %v2658 = vmax.f32 %v1639, %v2247
        %v2659 = vmax.f32 %v1642, %v2249
        %v2660 = vmax.f32 %v1645, %v2251
        %v2661 = vmax.f32 %v1648, %v2253
        %v2662 = vmax.f32 %v1651, %v2255
        %v2663 = vmax.f32 %v1654, %v2257
        %v2664 = vmax.f32 %v1657, %v2259
        %v2665 = vmax.f32 %v1660, %v2261
        %v2666 = vmax.f32 %v1663, %v2263
        %v2667 = vmax.f32 %v1666, %v2265
        %v2668 = vmax.f32 %v1669, %v2267
        %v2669 = vmax.f32 %v1672, %v2269
        %v2670 = vmax.f32 %v1675, %v2271
        %v2671 = vmax.f32 %v1678, %v2273
        %v2672 = vmax.f32 %v1681, %v2275
        %v2673 = vmax.f32 %v1684, %v2277
        %v2674 = vmax.f32 %v1687, %v2279
        %v2675 = vmax.f32 %v1690, %v2281
        %v2676 = vmax.f32 %v1693, %v2283
        %v2677 = vmax.f32 %v1696, %v2285
        %2874 = vrot.lane.b32.xlu0 %v2482, 112
        %v2875 = vpop.permute.xlu0 %2874
        %2876 = vrot.lane.b32.xlu0 %v2483, 112
        %v2877 = vpop.permute.xlu0 %2876
        %2878 = vrot.lane.b32.xlu0 %v2484, 112
        %v2879 = vpop.permute.xlu0 %2878
        %2880 = vrot.lane.b32.xlu0 %v2485, 112
        %v2881 = vpop.permute.xlu0 %2880
        %2882 = vrot.lane.b32.xlu0 %v2486, 112
        %v2883 = vpop.permute.xlu0 %2882
        %2884 = vrot.lane.b32.xlu0 %v2487, 112
        %v2885 = vpop.permute.xlu0 %2884
        %2886 = vrot.lane.b32.xlu0 %v2488, 112
        %v2887 = vpop.permute.xlu0 %2886
        %2888 = vrot.lane.b32.xlu0 %v2489, 112
        %v2889 = vpop.permute.xlu0 %2888
        %2890 = vrot.lane.b32.xlu0 %v2490, 112
        %v2891 = vpop.permute.xlu0 %2890
        %2892 = vrot.lane.b32.xlu0 %v2491, 112
        %v2893 = vpop.permute.xlu0 %2892
        %2894 = vrot.lane.b32.xlu0 %v2492, 112
        %v2895 = vpop.permute.xlu0 %2894
        %2896 = vrot.lane.b32.xlu0 %v2493, 112
        %v2897 = vpop.permute.xlu0 %2896
        %2898 = vrot.lane.b32.xlu0 %v2494, 112
        %v2899 = vpop.permute.xlu0 %2898
        %2900 = vrot.lane.b32.xlu0 %v2495, 112
        %v2901 = vpop.permute.xlu0 %2900
        %2902 = vrot.lane.b32.xlu0 %v2496, 112
        %v2903 = vpop.permute.xlu0 %2902
        %2904 = vrot.lane.b32.xlu0 %v2497, 112
        %v2905 = vpop.permute.xlu0 %2904
        %2906 = vrot.lane.b32.xlu0 %v2498, 112
        %v2907 = vpop.permute.xlu0 %2906
        %2908 = vrot.lane.b32.xlu0 %v2499, 112
        %v2909 = vpop.permute.xlu0 %2908
        %2910 = vrot.lane.b32.xlu0 %v2500, 112
        %v2911 = vpop.permute.xlu0 %2910
        %2912 = vrot.lane.b32.xlu0 %v2501, 112
        %v2913 = vpop.permute.xlu0 %2912
        %2914 = vrot.lane.b32.xlu0 %v2502, 112
        %v2915 = vpop.permute.xlu0 %2914
        %2916 = vrot.lane.b32.xlu0 %v2503, 112
        %v2917 = vpop.permute.xlu0 %2916
        %2918 = vrot.lane.b32.xlu0 %v2504, 112
        %v2919 = vpop.permute.xlu0 %2918
        %2920 = vrot.lane.b32.xlu0 %v2505, 112
        %v2921 = vpop.permute.xlu0 %2920
        %2922 = vrot.lane.b32.xlu0 %v2506, 112
        %v2923 = vpop.permute.xlu0 %2922
        %2924 = vrot.lane.b32.xlu0 %v2507, 112
        %v2925 = vpop.permute.xlu0 %2924
        %2926 = vrot.lane.b32.xlu0 %v2508, 112
        %v2927 = vpop.permute.xlu0 %2926
        %2928 = vrot.lane.b32.xlu0 %v2509, 112
        %v2929 = vpop.permute.xlu0 %2928
        %2930 = vrot.lane.b32.xlu0 %v2510, 112
        %v2931 = vpop.permute.xlu0 %2930
        %2932 = vrot.lane.b32.xlu0 %v2511, 112
        %v2933 = vpop.permute.xlu0 %2932
        %2934 = vrot.lane.b32.xlu0 %v2512, 112
        %v2935 = vpop.permute.xlu0 %2934
        %2936 = vrot.lane.b32.xlu0 %v2513, 112
        %v2937 = vpop.permute.xlu0 %2936
        %2938 = vrot.lane.b32.xlu0 %v2514, 112
        %v2939 = vpop.permute.xlu0 %2938
        %2940 = vrot.lane.b32.xlu0 %v2515, 112
        %v2941 = vpop.permute.xlu0 %2940
        %2942 = vrot.lane.b32.xlu0 %v2516, 112
        %v2943 = vpop.permute.xlu0 %2942
        %2944 = vrot.lane.b32.xlu0 %v2517, 112
        %v2945 = vpop.permute.xlu0 %2944
        %2946 = vrot.lane.b32.xlu0 %v2518, 112
        %v2947 = vpop.permute.xlu0 %2946
        %2948 = vrot.lane.b32.xlu0 %v2519, 112
        %v2949 = vpop.permute.xlu0 %2948
        %2950 = vrot.lane.b32.xlu0 %v2520, 112
        %v2951 = vpop.permute.xlu0 %2950
        %2952 = vrot.lane.b32.xlu0 %v2521, 112
        %v2953 = vpop.permute.xlu0 %2952
        %2954 = vrot.lane.b32.xlu0 %v2522, 112
        %v2955 = vpop.permute.xlu0 %2954
        %2956 = vrot.lane.b32.xlu0 %v2523, 112
        %v2957 = vpop.permute.xlu0 %2956
        %2958 = vrot.lane.b32.xlu0 %v2524, 112
        %v2959 = vpop.permute.xlu0 %2958
        %2960 = vrot.lane.b32.xlu0 %v2525, 112
        %v2961 = vpop.permute.xlu0 %2960
        %2962 = vrot.lane.b32.xlu0 %v2526, 112
        %v2963 = vpop.permute.xlu0 %2962
        %2964 = vrot.lane.b32.xlu0 %v2527, 112
        %v2965 = vpop.permute.xlu0 %2964
        %2966 = vrot.lane.b32.xlu0 %v2528, 112
        %v2967 = vpop.permute.xlu0 %2966
        %2968 = vrot.lane.b32.xlu0 %v2529, 112
        %v2969 = vpop.permute.xlu0 %2968
        %2970 = vrot.lane.b32.xlu0 %v2530, 112
        %v2971 = vpop.permute.xlu0 %2970
        %2972 = vrot.lane.b32.xlu0 %v2531, 112
        %v2973 = vpop.permute.xlu0 %2972
        %2974 = vrot.lane.b32.xlu0 %v2532, 112
        %v2975 = vpop.permute.xlu0 %2974
        %2976 = vrot.lane.b32.xlu0 %v2533, 112
        %v2977 = vpop.permute.xlu0 %2976
        %2978 = vrot.lane.b32.xlu0 %v2534, 112
        %v2979 = vpop.permute.xlu0 %2978
        %2980 = vrot.lane.b32.xlu0 %v2535, 112
        %v2981 = vpop.permute.xlu0 %2980
        %2982 = vrot.lane.b32.xlu0 %v2536, 112
        %v2983 = vpop.permute.xlu0 %2982
        %2984 = vrot.lane.b32.xlu0 %v2537, 112
        %v2985 = vpop.permute.xlu0 %2984
        %2986 = vrot.lane.b32.xlu0 %v2538, 112
        %v2987 = vpop.permute.xlu0 %2986
        %2988 = vrot.lane.b32.xlu0 %v2539, 112
        %v2989 = vpop.permute.xlu0 %2988
        %2990 = vrot.lane.b32.xlu0 %v2540, 112
        %v2991 = vpop.permute.xlu0 %2990
        %2992 = vrot.lane.b32.xlu0 %v2541, 112
        %v2993 = vpop.permute.xlu0 %2992
        %2994 = vrot.lane.b32.xlu0 %v2542, 112
        %v2995 = vpop.permute.xlu0 %2994
        %2996 = vrot.lane.b32.xlu0 %v2543, 112
        %v2997 = vpop.permute.xlu0 %2996
        %2998 = vrot.lane.b32.xlu0 %v2544, 112
        %v2999 = vpop.permute.xlu0 %2998
        %3000 = vrot.lane.b32.xlu0 %v2545, 112
        %v3001 = vpop.permute.xlu0 %3000
        %3002 = vrot.lane.b32.xlu0 %v2546, 112
        %v3003 = vpop.permute.xlu0 %3002
        %3004 = vrot.lane.b32.xlu0 %v2547, 112
        %v3005 = vpop.permute.xlu0 %3004
        %3006 = vrot.lane.b32.xlu0 %v2548, 112
        %v3007 = vpop.permute.xlu0 %3006
        %3008 = vrot.lane.b32.xlu0 %v2549, 112
        %v3009 = vpop.permute.xlu0 %3008
        %3010 = vrot.lane.b32.xlu0 %v2550, 112
        %v3011 = vpop.permute.xlu0 %3010
        %3012 = vrot.lane.b32.xlu0 %v2551, 112
        %v3013 = vpop.permute.xlu0 %3012
        %3014 = vrot.lane.b32.xlu0 %v2552, 112
        %v3015 = vpop.permute.xlu0 %3014
        %3016 = vrot.lane.b32.xlu0 %v2553, 112
        %v3017 = vpop.permute.xlu0 %3016
        %3018 = vrot.lane.b32.xlu0 %v2554, 112
        %v3019 = vpop.permute.xlu0 %3018
        %3020 = vrot.lane.b32.xlu0 %v2555, 112
        %v3021 = vpop.permute.xlu0 %3020
        %3022 = vrot.lane.b32.xlu0 %v2556, 112
        %v3023 = vpop.permute.xlu0 %3022
        %3024 = vrot.lane.b32.xlu0 %v2557, 112
        %v3025 = vpop.permute.xlu0 %3024
        %3026 = vrot.lane.b32.xlu0 %v2558, 112
        %v3027 = vpop.permute.xlu0 %3026
        %3028 = vrot.lane.b32.xlu0 %v2559, 112
        %v3029 = vpop.permute.xlu0 %3028
        %3030 = vrot.lane.b32.xlu0 %v2560, 112
        %v3031 = vpop.permute.xlu0 %3030
        %3032 = vrot.lane.b32.xlu0 %v2561, 112
        %v3033 = vpop.permute.xlu0 %3032
        %3034 = vrot.lane.b32.xlu0 %v2562, 112
        %v3035 = vpop.permute.xlu0 %3034
        %3036 = vrot.lane.b32.xlu0 %v2563, 112
        %v3037 = vpop.permute.xlu0 %3036
        %3038 = vrot.lane.b32.xlu0 %v2564, 112
        %v3039 = vpop.permute.xlu0 %3038
        %3040 = vrot.lane.b32.xlu0 %v2565, 112
        %v3041 = vpop.permute.xlu0 %3040
        %3042 = vrot.lane.b32.xlu0 %v2566, 112
        %v3043 = vpop.permute.xlu0 %3042
        %3044 = vrot.lane.b32.xlu0 %v2567, 112
        %v3045 = vpop.permute.xlu0 %3044
        %3046 = vrot.lane.b32.xlu0 %v2568, 112
        %v3047 = vpop.permute.xlu0 %3046
        %3048 = vrot.lane.b32.xlu0 %v2569, 112
        %v3049 = vpop.permute.xlu0 %3048
        %3050 = vrot.lane.b32.xlu0 %v2570, 112
        %v3051 = vpop.permute.xlu0 %3050
        %3052 = vrot.lane.b32.xlu0 %v2571, 112
        %v3053 = vpop.permute.xlu0 %3052
        %3054 = vrot.lane.b32.xlu0 %v2572, 112
        %v3055 = vpop.permute.xlu0 %3054
        %3056 = vrot.lane.b32.xlu0 %v2573, 112
        %v3057 = vpop.permute.xlu0 %3056
        %3058 = vrot.lane.b32.xlu0 %v2574, 112
        %v3059 = vpop.permute.xlu0 %3058
        %3060 = vrot.lane.b32.xlu0 %v2575, 112
        %v3061 = vpop.permute.xlu0 %3060
        %3062 = vrot.lane.b32.xlu0 %v2576, 112
        %v3063 = vpop.permute.xlu0 %3062
        %3064 = vrot.lane.b32.xlu0 %v2577, 112
        %v3065 = vpop.permute.xlu0 %3064
        %3066 = vrot.lane.b32.xlu0 %v2578, 112
        %v3067 = vpop.permute.xlu0 %3066
        %3068 = vrot.lane.b32.xlu0 %v2579, 112
        %v3069 = vpop.permute.xlu0 %3068
        %3070 = vrot.lane.b32.xlu0 %v2580, 112
        %v3071 = vpop.permute.xlu0 %3070
        %3072 = vrot.lane.b32.xlu0 %v2581, 112
        %v3073 = vpop.permute.xlu0 %3072
        %3074 = vrot.lane.b32.xlu0 %v2582, 112
        %v3075 = vpop.permute.xlu0 %3074
        %3076 = vrot.lane.b32.xlu0 %v2583, 112
        %v3077 = vpop.permute.xlu0 %3076
        %3078 = vrot.lane.b32.xlu0 %v2584, 112
        %v3079 = vpop.permute.xlu0 %3078
        %3080 = vrot.lane.b32.xlu0 %v2585, 112
        %v3081 = vpop.permute.xlu0 %3080
        %3082 = vrot.lane.b32.xlu0 %v2586, 112
        %v3083 = vpop.permute.xlu0 %3082
        %3084 = vrot.lane.b32.xlu0 %v2587, 112
        %v3085 = vpop.permute.xlu0 %3084
        %3086 = vrot.lane.b32.xlu0 %v2588, 112
        %v3087 = vpop.permute.xlu0 %3086
        %3088 = vrot.lane.b32.xlu0 %v2589, 112
        %v3089 = vpop.permute.xlu0 %3088
        %3090 = vrot.lane.b32.xlu0 %v2590, 112
        %v3091 = vpop.permute.xlu0 %3090
        %3092 = vrot.lane.b32.xlu0 %v2591, 112
        %v3093 = vpop.permute.xlu0 %3092
        %3094 = vrot.lane.b32.xlu0 %v2592, 112
        %v3095 = vpop.permute.xlu0 %3094
        %3096 = vrot.lane.b32.xlu0 %v2593, 112
        %v3097 = vpop.permute.xlu0 %3096
        %3098 = vrot.lane.b32.xlu0 %v2594, 112
        %v3099 = vpop.permute.xlu0 %3098
        %3100 = vrot.lane.b32.xlu0 %v2595, 112
        %v3101 = vpop.permute.xlu0 %3100
        %3102 = vrot.lane.b32.xlu0 %v2596, 112
        %v3103 = vpop.permute.xlu0 %3102
        %3104 = vrot.lane.b32.xlu0 %v2597, 112
        %v3105 = vpop.permute.xlu0 %3104
        %3106 = vrot.lane.b32.xlu0 %v2598, 112
        %v3107 = vpop.permute.xlu0 %3106
        %3108 = vrot.lane.b32.xlu0 %v2599, 112
        %v3109 = vpop.permute.xlu0 %3108
        %3110 = vrot.lane.b32.xlu0 %v2600, 112
        %v3111 = vpop.permute.xlu0 %3110
        %3112 = vrot.lane.b32.xlu0 %v2601, 112
        %v3113 = vpop.permute.xlu0 %3112
        %3114 = vrot.lane.b32.xlu0 %v2602, 112
        %v3115 = vpop.permute.xlu0 %3114
        %3116 = vrot.lane.b32.xlu0 %v2603, 112
        %v3117 = vpop.permute.xlu0 %3116
        %3118 = vrot.lane.b32.xlu0 %v2604, 112
        %v3119 = vpop.permute.xlu0 %3118
        %3120 = vrot.lane.b32.xlu0 %v2605, 112
        %v3121 = vpop.permute.xlu0 %3120
        %3122 = vrot.lane.b32.xlu0 %v2606, 112
        %v3123 = vpop.permute.xlu0 %3122
        %3124 = vrot.lane.b32.xlu0 %v2607, 112
        %v3125 = vpop.permute.xlu0 %3124
        %3126 = vrot.lane.b32.xlu0 %v2608, 112
        %v3127 = vpop.permute.xlu0 %3126
        %3128 = vrot.lane.b32.xlu0 %v2609, 112
        %v3129 = vpop.permute.xlu0 %3128
        %3130 = vrot.lane.b32.xlu0 %v2610, 112
        %v3131 = vpop.permute.xlu0 %3130
        %3132 = vrot.lane.b32.xlu0 %v2611, 112
        %v3133 = vpop.permute.xlu0 %3132
        %3134 = vrot.lane.b32.xlu0 %v2612, 112
        %v3135 = vpop.permute.xlu0 %3134
        %3136 = vrot.lane.b32.xlu0 %v2613, 112
        %v3137 = vpop.permute.xlu0 %3136
        %3138 = vrot.lane.b32.xlu0 %v2614, 112
        %v3139 = vpop.permute.xlu0 %3138
        %3140 = vrot.lane.b32.xlu0 %v2615, 112
        %v3141 = vpop.permute.xlu0 %3140
        %3142 = vrot.lane.b32.xlu0 %v2616, 112
        %v3143 = vpop.permute.xlu0 %3142
        %3144 = vrot.lane.b32.xlu0 %v2617, 112
        %v3145 = vpop.permute.xlu0 %3144
        %3146 = vrot.lane.b32.xlu0 %v2618, 112
        %v3147 = vpop.permute.xlu0 %3146
        %3148 = vrot.lane.b32.xlu0 %v2619, 112
        %v3149 = vpop.permute.xlu0 %3148
        %3150 = vrot.lane.b32.xlu0 %v2620, 112
        %v3151 = vpop.permute.xlu0 %3150
        %3152 = vrot.lane.b32.xlu0 %v2621, 112
        %v3153 = vpop.permute.xlu0 %3152
        %3154 = vrot.lane.b32.xlu0 %v2622, 112
        %v3155 = vpop.permute.xlu0 %3154
        %3156 = vrot.lane.b32.xlu0 %v2623, 112
        %v3157 = vpop.permute.xlu0 %3156
        %3158 = vrot.lane.b32.xlu0 %v2624, 112
        %v3159 = vpop.permute.xlu0 %3158
        %3160 = vrot.lane.b32.xlu0 %v2625, 112
        %v3161 = vpop.permute.xlu0 %3160
        %3162 = vrot.lane.b32.xlu0 %v2626, 112
        %v3163 = vpop.permute.xlu0 %3162
        %3164 = vrot.lane.b32.xlu0 %v2627, 112
        %v3165 = vpop.permute.xlu0 %3164
        %3166 = vrot.lane.b32.xlu0 %v2628, 112
        %v3167 = vpop.permute.xlu0 %3166
        %3168 = vrot.lane.b32.xlu0 %v2629, 112
        %v3169 = vpop.permute.xlu0 %3168
        %3170 = vrot.lane.b32.xlu0 %v2630, 112
        %v3171 = vpop.permute.xlu0 %3170
        %3172 = vrot.lane.b32.xlu0 %v2631, 112
        %v3173 = vpop.permute.xlu0 %3172
        %3174 = vrot.lane.b32.xlu0 %v2632, 112
        %v3175 = vpop.permute.xlu0 %3174
        %3176 = vrot.lane.b32.xlu0 %v2633, 112
        %v3177 = vpop.permute.xlu0 %3176
        %3178 = vrot.lane.b32.xlu0 %v2634, 112
        %v3179 = vpop.permute.xlu0 %3178
        %3180 = vrot.lane.b32.xlu0 %v2635, 112
        %v3181 = vpop.permute.xlu0 %3180
        %3182 = vrot.lane.b32.xlu0 %v2636, 112
        %v3183 = vpop.permute.xlu0 %3182
        %3184 = vrot.lane.b32.xlu0 %v2637, 112
        %v3185 = vpop.permute.xlu0 %3184
        %3186 = vrot.lane.b32.xlu0 %v2638, 112
        %v3187 = vpop.permute.xlu0 %3186
        %3188 = vrot.lane.b32.xlu0 %v2639, 112
        %v3189 = vpop.permute.xlu0 %3188
        %3190 = vrot.lane.b32.xlu0 %v2640, 112
        %v3191 = vpop.permute.xlu0 %3190
        %3192 = vrot.lane.b32.xlu0 %v2641, 112
        %v3193 = vpop.permute.xlu0 %3192
        %3194 = vrot.lane.b32.xlu0 %v2642, 112
        %v3195 = vpop.permute.xlu0 %3194
        %3196 = vrot.lane.b32.xlu0 %v2643, 112
        %v3197 = vpop.permute.xlu0 %3196
        %3198 = vrot.lane.b32.xlu0 %v2644, 112
        %v3199 = vpop.permute.xlu0 %3198
        %3200 = vrot.lane.b32.xlu0 %v2645, 112
        %v3201 = vpop.permute.xlu0 %3200
        %3202 = vrot.lane.b32.xlu0 %v2646, 112
        %v3203 = vpop.permute.xlu0 %3202
        %3204 = vrot.lane.b32.xlu0 %v2647, 112
        %v3205 = vpop.permute.xlu0 %3204
        %3206 = vrot.lane.b32.xlu0 %v2648, 112
        %v3207 = vpop.permute.xlu0 %3206
        %3208 = vrot.lane.b32.xlu0 %v2649, 112
        %v3209 = vpop.permute.xlu0 %3208
        %3210 = vrot.lane.b32.xlu0 %v2650, 112
        %v3211 = vpop.permute.xlu0 %3210
        %3212 = vrot.lane.b32.xlu0 %v2651, 112
        %v3213 = vpop.permute.xlu0 %3212
        %3214 = vrot.lane.b32.xlu0 %v2652, 112
        %v3215 = vpop.permute.xlu0 %3214
        %3216 = vrot.lane.b32.xlu0 %v2653, 112
        %v3217 = vpop.permute.xlu0 %3216
        %3218 = vrot.lane.b32.xlu0 %v2654, 112
        %v3219 = vpop.permute.xlu0 %3218
        %3220 = vrot.lane.b32.xlu0 %v2655, 112
        %v3221 = vpop.permute.xlu0 %3220
        %3222 = vrot.lane.b32.xlu0 %v2656, 112
        %v3223 = vpop.permute.xlu0 %3222
        %3224 = vrot.lane.b32.xlu0 %v2657, 112
        %v3225 = vpop.permute.xlu0 %3224
        %3226 = vrot.lane.b32.xlu0 %v2658, 112
        %v3227 = vpop.permute.xlu0 %3226
        %3228 = vrot.lane.b32.xlu0 %v2659, 112
        %v3229 = vpop.permute.xlu0 %3228
        %3230 = vrot.lane.b32.xlu0 %v2660, 112
        %v3231 = vpop.permute.xlu0 %3230
        %3232 = vrot.lane.b32.xlu0 %v2661, 112
        %v3233 = vpop.permute.xlu0 %3232
        %3234 = vrot.lane.b32.xlu0 %v2662, 112
        %v3235 = vpop.permute.xlu0 %3234
        %3236 = vrot.lane.b32.xlu0 %v2663, 112
        %v3237 = vpop.permute.xlu0 %3236
        %3238 = vrot.lane.b32.xlu0 %v2664, 112
        %v3239 = vpop.permute.xlu0 %3238
        %3240 = vrot.lane.b32.xlu0 %v2665, 112
        %v3241 = vpop.permute.xlu0 %3240
        %3242 = vrot.lane.b32.xlu0 %v2666, 112
        %v3243 = vpop.permute.xlu0 %3242
        %3244 = vrot.lane.b32.xlu0 %v2667, 112
        %v3245 = vpop.permute.xlu0 %3244
        %3246 = vrot.lane.b32.xlu0 %v2668, 112
        %v3247 = vpop.permute.xlu0 %3246
        %3248 = vrot.lane.b32.xlu0 %v2669, 112
        %v3249 = vpop.permute.xlu0 %3248
        %3250 = vrot.lane.b32.xlu0 %v2670, 112
        %v3251 = vpop.permute.xlu0 %3250
        %3252 = vrot.lane.b32.xlu0 %v2671, 112
        %v3253 = vpop.permute.xlu0 %3252
        %3254 = vrot.lane.b32.xlu0 %v2672, 112
        %v3255 = vpop.permute.xlu0 %3254
        %3256 = vrot.lane.b32.xlu0 %v2673, 112
        %v3257 = vpop.permute.xlu0 %3256
        %3258 = vrot.lane.b32.xlu0 %v2674, 112
        %v3259 = vpop.permute.xlu0 %3258
        %3260 = vrot.lane.b32.xlu0 %v2675, 112
        %v3261 = vpop.permute.xlu0 %3260
        %3262 = vrot.lane.b32.xlu0 %v2676, 112
        %v3263 = vpop.permute.xlu0 %3262
        %3264 = vrot.lane.b32.xlu0 %v2677, 112
        %v3265 = vpop.permute.xlu0 %3264
        %v3462 = vmax.f32 %v2482, %v2875
        %v3463 = vmax.f32 %v2483, %v2877
        %v3464 = vmax.f32 %v2484, %v2879
        %v3465 = vmax.f32 %v2485, %v2881
        %v3466 = vmax.f32 %v2486, %v2883
        %v3467 = vmax.f32 %v2487, %v2885
        %v3468 = vmax.f32 %v2488, %v2887
        %v3469 = vmax.f32 %v2489, %v2889
        %v3470 = vmax.f32 %v2490, %v2891
        %v3471 = vmax.f32 %v2491, %v2893
        %v3472 = vmax.f32 %v2492, %v2895
        %v3473 = vmax.f32 %v2493, %v2897
        %v3474 = vmax.f32 %v2494, %v2899
        %v3475 = vmax.f32 %v2495, %v2901
        %v3476 = vmax.f32 %v2496, %v2903
        %v3477 = vmax.f32 %v2497, %v2905
        %v3478 = vmax.f32 %v2498, %v2907
        %v3479 = vmax.f32 %v2499, %v2909
        %v3480 = vmax.f32 %v2500, %v2911
        %v3481 = vmax.f32 %v2501, %v2913
        %v3482 = vmax.f32 %v2502, %v2915
        %v3483 = vmax.f32 %v2503, %v2917
        %v3484 = vmax.f32 %v2504, %v2919
        %v3485 = vmax.f32 %v2505, %v2921
        %v3486 = vmax.f32 %v2506, %v2923
        %v3487 = vmax.f32 %v2507, %v2925
        %v3488 = vmax.f32 %v2508, %v2927
        %v3489 = vmax.f32 %v2509, %v2929
        %v3490 = vmax.f32 %v2510, %v2931
        %v3491 = vmax.f32 %v2511, %v2933
        %v3492 = vmax.f32 %v2512, %v2935
        %v3493 = vmax.f32 %v2513, %v2937
        %v3494 = vmax.f32 %v2514, %v2939
        %v3495 = vmax.f32 %v2515, %v2941
        %v3496 = vmax.f32 %v2516, %v2943
        %v3497 = vmax.f32 %v2517, %v2945
        %v3498 = vmax.f32 %v2518, %v2947
        %v3499 = vmax.f32 %v2519, %v2949
        %v3500 = vmax.f32 %v2520, %v2951
        %v3501 = vmax.f32 %v2521, %v2953
        %v3502 = vmax.f32 %v2522, %v2955
        %v3503 = vmax.f32 %v2523, %v2957
        %v3504 = vmax.f32 %v2524, %v2959
        %v3505 = vmax.f32 %v2525, %v2961
        %v3506 = vmax.f32 %v2526, %v2963
        %v3507 = vmax.f32 %v2527, %v2965
        %v3508 = vmax.f32 %v2528, %v2967
        %v3509 = vmax.f32 %v2529, %v2969
        %v3510 = vmax.f32 %v2530, %v2971
        %v3511 = vmax.f32 %v2531, %v2973
        %v3512 = vmax.f32 %v2532, %v2975
        %v3513 = vmax.f32 %v2533, %v2977
        %v3514 = vmax.f32 %v2534, %v2979
        %v3515 = vmax.f32 %v2535, %v2981
        %v3516 = vmax.f32 %v2536, %v2983
        %v3517 = vmax.f32 %v2537, %v2985
        %v3518 = vmax.f32 %v2538, %v2987
        %v3519 = vmax.f32 %v2539, %v2989
        %v3520 = vmax.f32 %v2540, %v2991
        %v3521 = vmax.f32 %v2541, %v2993
        %v3522 = vmax.f32 %v2542, %v2995
        %v3523 = vmax.f32 %v2543, %v2997
        %v3524 = vmax.f32 %v2544, %v2999
        %v3525 = vmax.f32 %v2545, %v3001
        %v3526 = vmax.f32 %v2546, %v3003
        %v3527 = vmax.f32 %v2547, %v3005
        %v3528 = vmax.f32 %v2548, %v3007
        %v3529 = vmax.f32 %v2549, %v3009
        %v3530 = vmax.f32 %v2550, %v3011
        %v3531 = vmax.f32 %v2551, %v3013
        %v3532 = vmax.f32 %v2552, %v3015
        %v3533 = vmax.f32 %v2553, %v3017
        %v3534 = vmax.f32 %v2554, %v3019
        %v3535 = vmax.f32 %v2555, %v3021
        %v3536 = vmax.f32 %v2556, %v3023
        %v3537 = vmax.f32 %v2557, %v3025
        %v3538 = vmax.f32 %v2558, %v3027
        %v3539 = vmax.f32 %v2559, %v3029
        %v3540 = vmax.f32 %v2560, %v3031
        %v3541 = vmax.f32 %v2561, %v3033
        %v3542 = vmax.f32 %v2562, %v3035
        %v3543 = vmax.f32 %v2563, %v3037
        %v3544 = vmax.f32 %v2564, %v3039
        %v3545 = vmax.f32 %v2565, %v3041
        %v3546 = vmax.f32 %v2566, %v3043
        %v3547 = vmax.f32 %v2567, %v3045
        %v3548 = vmax.f32 %v2568, %v3047
        %v3549 = vmax.f32 %v2569, %v3049
        %v3550 = vmax.f32 %v2570, %v3051
        %v3551 = vmax.f32 %v2571, %v3053
        %v3552 = vmax.f32 %v2572, %v3055
        %v3553 = vmax.f32 %v2573, %v3057
        %v3554 = vmax.f32 %v2574, %v3059
        %v3555 = vmax.f32 %v2575, %v3061
        %v3556 = vmax.f32 %v2576, %v3063
        %v3557 = vmax.f32 %v2577, %v3065
        %v3558 = vmax.f32 %v2578, %v3067
        %v3559 = vmax.f32 %v2579, %v3069
        %v3560 = vmax.f32 %v2580, %v3071
        %v3561 = vmax.f32 %v2581, %v3073
        %v3562 = vmax.f32 %v2582, %v3075
        %v3563 = vmax.f32 %v2583, %v3077
        %v3564 = vmax.f32 %v2584, %v3079
        %v3565 = vmax.f32 %v2585, %v3081
        %v3566 = vmax.f32 %v2586, %v3083
        %v3567 = vmax.f32 %v2587, %v3085
        %v3568 = vmax.f32 %v2588, %v3087
        %v3569 = vmax.f32 %v2589, %v3089
        %v3570 = vmax.f32 %v2590, %v3091
        %v3571 = vmax.f32 %v2591, %v3093
        %v3572 = vmax.f32 %v2592, %v3095
        %v3573 = vmax.f32 %v2593, %v3097
        %v3574 = vmax.f32 %v2594, %v3099
        %v3575 = vmax.f32 %v2595, %v3101
        %v3576 = vmax.f32 %v2596, %v3103
        %v3577 = vmax.f32 %v2597, %v3105
        %v3578 = vmax.f32 %v2598, %v3107
        %v3579 = vmax.f32 %v2599, %v3109
        %v3580 = vmax.f32 %v2600, %v3111
        %v3581 = vmax.f32 %v2601, %v3113
        %v3582 = vmax.f32 %v2602, %v3115
        %v3583 = vmax.f32 %v2603, %v3117
        %v3584 = vmax.f32 %v2604, %v3119
        %v3585 = vmax.f32 %v2605, %v3121
        %v3586 = vmax.f32 %v2606, %v3123
        %v3587 = vmax.f32 %v2607, %v3125
        %v3588 = vmax.f32 %v2608, %v3127
        %v3589 = vmax.f32 %v2609, %v3129
        %v3590 = vmax.f32 %v2610, %v3131
        %v3591 = vmax.f32 %v2611, %v3133
        %v3592 = vmax.f32 %v2612, %v3135
        %v3593 = vmax.f32 %v2613, %v3137
        %v3594 = vmax.f32 %v2614, %v3139
        %v3595 = vmax.f32 %v2615, %v3141
        %v3596 = vmax.f32 %v2616, %v3143
        %v3597 = vmax.f32 %v2617, %v3145
        %v3598 = vmax.f32 %v2618, %v3147
        %v3599 = vmax.f32 %v2619, %v3149
        %v3600 = vmax.f32 %v2620, %v3151
        %v3601 = vmax.f32 %v2621, %v3153
        %v3602 = vmax.f32 %v2622, %v3155
        %v3603 = vmax.f32 %v2623, %v3157
        %v3604 = vmax.f32 %v2624, %v3159
        %v3605 = vmax.f32 %v2625, %v3161
        %v3606 = vmax.f32 %v2626, %v3163
        %v3607 = vmax.f32 %v2627, %v3165
        %v3608 = vmax.f32 %v2628, %v3167
        %v3609 = vmax.f32 %v2629, %v3169
        %v3610 = vmax.f32 %v2630, %v3171
        %v3611 = vmax.f32 %v2631, %v3173
        %v3612 = vmax.f32 %v2632, %v3175
        %v3613 = vmax.f32 %v2633, %v3177
        %v3614 = vmax.f32 %v2634, %v3179
        %v3615 = vmax.f32 %v2635, %v3181
        %v3616 = vmax.f32 %v2636, %v3183
        %v3617 = vmax.f32 %v2637, %v3185
        %v3618 = vmax.f32 %v2638, %v3187
        %v3619 = vmax.f32 %v2639, %v3189
        %v3620 = vmax.f32 %v2640, %v3191
        %v3621 = vmax.f32 %v2641, %v3193
        %v3622 = vmax.f32 %v2642, %v3195
        %v3623 = vmax.f32 %v2643, %v3197
        %v3624 = vmax.f32 %v2644, %v3199
        %v3625 = vmax.f32 %v2645, %v3201
        %v3626 = vmax.f32 %v2646, %v3203
        %v3627 = vmax.f32 %v2647, %v3205
        %v3628 = vmax.f32 %v2648, %v3207
        %v3629 = vmax.f32 %v2649, %v3209
        %v3630 = vmax.f32 %v2650, %v3211
        %v3631 = vmax.f32 %v2651, %v3213
        %v3632 = vmax.f32 %v2652, %v3215
        %v3633 = vmax.f32 %v2653, %v3217
        %v3634 = vmax.f32 %v2654, %v3219
        %v3635 = vmax.f32 %v2655, %v3221
        %v3636 = vmax.f32 %v2656, %v3223
        %v3637 = vmax.f32 %v2657, %v3225
        %v3638 = vmax.f32 %v2658, %v3227
        %v3639 = vmax.f32 %v2659, %v3229
        %v3640 = vmax.f32 %v2660, %v3231
        %v3641 = vmax.f32 %v2661, %v3233
        %v3642 = vmax.f32 %v2662, %v3235
        %v3643 = vmax.f32 %v2663, %v3237
        %v3644 = vmax.f32 %v2664, %v3239
        %v3645 = vmax.f32 %v2665, %v3241
        %v3646 = vmax.f32 %v2666, %v3243
        %v3647 = vmax.f32 %v2667, %v3245
        %v3648 = vmax.f32 %v2668, %v3247
        %v3649 = vmax.f32 %v2669, %v3249
        %v3650 = vmax.f32 %v2670, %v3251
        %v3651 = vmax.f32 %v2671, %v3253
        %v3652 = vmax.f32 %v2672, %v3255
        %v3653 = vmax.f32 %v2673, %v3257
        %v3654 = vmax.f32 %v2674, %v3259
        %v3655 = vmax.f32 %v2675, %v3261
        %v3656 = vmax.f32 %v2676, %v3263
        %v3657 = vmax.f32 %v2677, %v3265
        %v3658 = vld [vmem:[#allocation5] sm:$0x1]
        %v3660 = vperm.slane %v3658, 0
        %v3662 = vadd.f32 %v3462, %v3660
        %v3663 = vadd.f32 %v3463, %v3660
        %v3664 = vadd.f32 %v3464, %v3660
        %v3665 = vadd.f32 %v3465, %v3660
        %v3666 = vadd.f32 %v3466, %v3660
        %v3667 = vadd.f32 %v3467, %v3660
        %v3668 = vadd.f32 %v3468, %v3660
        %v3669 = vadd.f32 %v3469, %v3660
        %v3670 = vadd.f32 %v3470, %v3660
        %v3671 = vadd.f32 %v3471, %v3660
        %v3672 = vadd.f32 %v3472, %v3660
        %v3673 = vadd.f32 %v3473, %v3660
        %v3674 = vadd.f32 %v3474, %v3660
        %v3675 = vadd.f32 %v3475, %v3660
        %v3676 = vadd.f32 %v3476, %v3660
        %v3677 = vadd.f32 %v3477, %v3660
        %v3678 = vadd.f32 %v3478, %v3660
        %v3679 = vadd.f32 %v3479, %v3660
        %v3680 = vadd.f32 %v3480, %v3660
        %v3681 = vadd.f32 %v3481, %v3660
        %v3682 = vadd.f32 %v3482, %v3660
        %v3683 = vadd.f32 %v3483, %v3660
        %v3684 = vadd.f32 %v3484, %v3660
        %v3685 = vadd.f32 %v3485, %v3660
        %v3686 = vadd.f32 %v3486, %v3660
        %v3687 = vadd.f32 %v3487, %v3660
        %v3688 = vadd.f32 %v3488, %v3660
        %v3689 = vadd.f32 %v3489, %v3660
        %v3690 = vadd.f32 %v3490, %v3660
        %v3691 = vadd.f32 %v3491, %v3660
        %v3692 = vadd.f32 %v3492, %v3660
        %v3693 = vadd.f32 %v3493, %v3660
        %v3694 = vadd.f32 %v3494, %v3660
        %v3695 = vadd.f32 %v3495, %v3660
        %v3696 = vadd.f32 %v3496, %v3660
        %v3697 = vadd.f32 %v3497, %v3660
        %v3698 = vadd.f32 %v3498, %v3660
        %v3699 = vadd.f32 %v3499, %v3660
        %v3700 = vadd.f32 %v3500, %v3660
        %v3701 = vadd.f32 %v3501, %v3660
        %v3702 = vadd.f32 %v3502, %v3660
        %v3703 = vadd.f32 %v3503, %v3660
        %v3704 = vadd.f32 %v3504, %v3660
        %v3705 = vadd.f32 %v3505, %v3660
        %v3706 = vadd.f32 %v3506, %v3660
        %v3707 = vadd.f32 %v3507, %v3660
        %v3708 = vadd.f32 %v3508, %v3660
        %v3709 = vadd.f32 %v3509, %v3660
        %v3710 = vadd.f32 %v3510, %v3660
        %v3711 = vadd.f32 %v3511, %v3660
        %v3712 = vadd.f32 %v3512, %v3660
        %v3713 = vadd.f32 %v3513, %v3660
        %v3714 = vadd.f32 %v3514, %v3660
        %v3715 = vadd.f32 %v3515, %v3660
        %v3716 = vadd.f32 %v3516, %v3660
        %v3717 = vadd.f32 %v3517, %v3660
        %v3718 = vadd.f32 %v3518, %v3660
        %v3719 = vadd.f32 %v3519, %v3660
        %v3720 = vadd.f32 %v3520, %v3660
        %v3721 = vadd.f32 %v3521, %v3660
        %v3722 = vadd.f32 %v3522, %v3660
        %v3723 = vadd.f32 %v3523, %v3660
        %v3724 = vadd.f32 %v3524, %v3660
        %v3725 = vadd.f32 %v3525, %v3660
        %v3726 = vadd.f32 %v3526, %v3660
        %v3727 = vadd.f32 %v3527, %v3660
        %v3728 = vadd.f32 %v3528, %v3660
        %v3729 = vadd.f32 %v3529, %v3660
        %v3730 = vadd.f32 %v3530, %v3660
        %v3731 = vadd.f32 %v3531, %v3660
        %v3732 = vadd.f32 %v3532, %v3660
        %v3733 = vadd.f32 %v3533, %v3660
        %v3734 = vadd.f32 %v3534, %v3660
        %v3735 = vadd.f32 %v3535, %v3660
        %v3736 = vadd.f32 %v3536, %v3660
        %v3737 = vadd.f32 %v3537, %v3660
        %v3738 = vadd.f32 %v3538, %v3660
        %v3739 = vadd.f32 %v3539, %v3660
        %v3740 = vadd.f32 %v3540, %v3660
        %v3741 = vadd.f32 %v3541, %v3660
        %v3742 = vadd.f32 %v3542, %v3660
        %v3743 = vadd.f32 %v3543, %v3660
        %v3744 = vadd.f32 %v3544, %v3660
        %v3745 = vadd.f32 %v3545, %v3660
        %v3746 = vadd.f32 %v3546, %v3660
        %v3747 = vadd.f32 %v3547, %v3660
        %v3748 = vadd.f32 %v3548, %v3660
        %v3749 = vadd.f32 %v3549, %v3660
        %v3750 = vadd.f32 %v3550, %v3660
        %v3751 = vadd.f32 %v3551, %v3660
        %v3752 = vadd.f32 %v3552, %v3660
        %v3753 = vadd.f32 %v3553, %v3660
        %v3754 = vadd.f32 %v3554, %v3660
        %v3755 = vadd.f32 %v3555, %v3660
        %v3756 = vadd.f32 %v3556, %v3660
        %v3757 = vadd.f32 %v3557, %v3660
        %v3758 = vadd.f32 %v3558, %v3660
        %v3759 = vadd.f32 %v3559, %v3660
        %v3760 = vadd.f32 %v3560, %v3660
        %v3761 = vadd.f32 %v3561, %v3660
        %v3762 = vadd.f32 %v3562, %v3660
        %v3763 = vadd.f32 %v3563, %v3660
        %v3764 = vadd.f32 %v3564, %v3660
        %v3765 = vadd.f32 %v3565, %v3660
        %v3766 = vadd.f32 %v3566, %v3660
        %v3767 = vadd.f32 %v3567, %v3660
        %v3768 = vadd.f32 %v3568, %v3660
        %v3769 = vadd.f32 %v3569, %v3660
        %v3770 = vadd.f32 %v3570, %v3660
        %v3771 = vadd.f32 %v3571, %v3660
        %v3772 = vadd.f32 %v3572, %v3660
        %v3773 = vadd.f32 %v3573, %v3660
        %v3774 = vadd.f32 %v3574, %v3660
        %v3775 = vadd.f32 %v3575, %v3660
        %v3776 = vadd.f32 %v3576, %v3660
        %v3777 = vadd.f32 %v3577, %v3660
        %v3778 = vadd.f32 %v3578, %v3660
        %v3779 = vadd.f32 %v3579, %v3660
        %v3780 = vadd.f32 %v3580, %v3660
        %v3781 = vadd.f32 %v3581, %v3660
        %v3782 = vadd.f32 %v3582, %v3660
        %v3783 = vadd.f32 %v3583, %v3660
        %v3784 = vadd.f32 %v3584, %v3660
        %v3785 = vadd.f32 %v3585, %v3660
        %v3786 = vadd.f32 %v3586, %v3660
        %v3787 = vadd.f32 %v3587, %v3660
        %v3788 = vadd.f32 %v3588, %v3660
        %v3789 = vadd.f32 %v3589, %v3660
        %v3790 = vadd.f32 %v3590, %v3660
        %v3791 = vadd.f32 %v3591, %v3660
        %v3792 = vadd.f32 %v3592, %v3660
        %v3793 = vadd.f32 %v3593, %v3660
        %v3794 = vadd.f32 %v3594, %v3660
        %v3795 = vadd.f32 %v3595, %v3660
        %v3796 = vadd.f32 %v3596, %v3660
        %v3797 = vadd.f32 %v3597, %v3660
        %v3798 = vadd.f32 %v3598, %v3660
        %v3799 = vadd.f32 %v3599, %v3660
        %v3800 = vadd.f32 %v3600, %v3660
        %v3801 = vadd.f32 %v3601, %v3660
        %v3802 = vadd.f32 %v3602, %v3660
        %v3803 = vadd.f32 %v3603, %v3660
        %v3804 = vadd.f32 %v3604, %v3660
        %v3805 = vadd.f32 %v3605, %v3660
        %v3806 = vadd.f32 %v3606, %v3660
        %v3807 = vadd.f32 %v3607, %v3660
        %v3808 = vadd.f32 %v3608, %v3660
        %v3809 = vadd.f32 %v3609, %v3660
        %v3810 = vadd.f32 %v3610, %v3660
        %v3811 = vadd.f32 %v3611, %v3660
        %v3812 = vadd.f32 %v3612, %v3660
        %v3813 = vadd.f32 %v3613, %v3660
        %v3814 = vadd.f32 %v3614, %v3660
        %v3815 = vadd.f32 %v3615, %v3660
        %v3816 = vadd.f32 %v3616, %v3660
        %v3817 = vadd.f32 %v3617, %v3660
        %v3818 = vadd.f32 %v3618, %v3660
        %v3819 = vadd.f32 %v3619, %v3660
        %v3820 = vadd.f32 %v3620, %v3660
        %v3821 = vadd.f32 %v3621, %v3660
        %v3822 = vadd.f32 %v3622, %v3660
        %v3823 = vadd.f32 %v3623, %v3660
        %v3824 = vadd.f32 %v3624, %v3660
        %v3825 = vadd.f32 %v3625, %v3660
        %v3826 = vadd.f32 %v3626, %v3660
        %v3827 = vadd.f32 %v3627, %v3660
        %v3828 = vadd.f32 %v3628, %v3660
        %v3829 = vadd.f32 %v3629, %v3660
        %v3830 = vadd.f32 %v3630, %v3660
        %v3831 = vadd.f32 %v3631, %v3660
        %v3832 = vadd.f32 %v3632, %v3660
        %v3833 = vadd.f32 %v3633, %v3660
        %v3834 = vadd.f32 %v3634, %v3660
        %v3835 = vadd.f32 %v3635, %v3660
        %v3836 = vadd.f32 %v3636, %v3660
        %v3837 = vadd.f32 %v3637, %v3660
        %v3838 = vadd.f32 %v3638, %v3660
        %v3839 = vadd.f32 %v3639, %v3660
        %v3840 = vadd.f32 %v3640, %v3660
        %v3841 = vadd.f32 %v3641, %v3660
        %v3842 = vadd.f32 %v3642, %v3660
        %v3843 = vadd.f32 %v3643, %v3660
        %v3844 = vadd.f32 %v3644, %v3660
        %v3845 = vadd.f32 %v3645, %v3660
        %v3846 = vadd.f32 %v3646, %v3660
        %v3847 = vadd.f32 %v3647, %v3660
        %v3848 = vadd.f32 %v3648, %v3660
        %v3849 = vadd.f32 %v3649, %v3660
        %v3850 = vadd.f32 %v3650, %v3660
        %v3851 = vadd.f32 %v3651, %v3660
        %v3852 = vadd.f32 %v3652, %v3660
        %v3853 = vadd.f32 %v3653, %v3660
        %v3854 = vadd.f32 %v3654, %v3660
        %v3855 = vadd.f32 %v3655, %v3660
        %v3856 = vadd.f32 %v3656, %v3660
        %v3857 = vadd.f32 %v3657, %v3660
        %v3858 = vmax.f32 %v3662, 0.0
        %v3859 = vmax.f32 %v3663, 0.0
        %v3860 = vmax.f32 %v3664, 0.0
        %v3861 = vmax.f32 %v3665, 0.0
        %v3862 = vmax.f32 %v3666, 0.0
        %v3863 = vmax.f32 %v3667, 0.0
        %v3864 = vmax.f32 %v3668, 0.0
        %v3865 = vmax.f32 %v3669, 0.0
        %v3866 = vmax.f32 %v3670, 0.0
        %v3867 = vmax.f32 %v3671, 0.0
        %v3868 = vmax.f32 %v3672, 0.0
        %v3869 = vmax.f32 %v3673, 0.0
        %v3870 = vmax.f32 %v3674, 0.0
        %v3871 = vmax.f32 %v3675, 0.0
        %v3872 = vmax.f32 %v3676, 0.0
        %v3873 = vmax.f32 %v3677, 0.0
        %v3874 = vmax.f32 %v3678, 0.0
        %v3875 = vmax.f32 %v3679, 0.0
        %v3876 = vmax.f32 %v3680, 0.0
        %v3877 = vmax.f32 %v3681, 0.0
        %v3878 = vmax.f32 %v3682, 0.0
        %v3879 = vmax.f32 %v3683, 0.0
        %v3880 = vmax.f32 %v3684, 0.0
        %v3881 = vmax.f32 %v3685, 0.0
        %v3882 = vmax.f32 %v3686, 0.0
        %v3883 = vmax.f32 %v3687, 0.0
        %v3884 = vmax.f32 %v3688, 0.0
        %v3885 = vmax.f32 %v3689, 0.0
        %v3886 = vmax.f32 %v3690, 0.0
        %v3887 = vmax.f32 %v3691, 0.0
        %v3888 = vmax.f32 %v3692, 0.0
        %v3889 = vmax.f32 %v3693, 0.0
        %v3890 = vmax.f32 %v3694, 0.0
        %v3891 = vmax.f32 %v3695, 0.0
        %v3892 = vmax.f32 %v3696, 0.0
        %v3893 = vmax.f32 %v3697, 0.0
        %v3894 = vmax.f32 %v3698, 0.0
        %v3895 = vmax.f32 %v3699, 0.0
        %v3896 = vmax.f32 %v3700, 0.0
        %v3897 = vmax.f32 %v3701, 0.0
        %v3898 = vmax.f32 %v3702, 0.0
        %v3899 = vmax.f32 %v3703, 0.0
        %v3900 = vmax.f32 %v3704, 0.0
        %v3901 = vmax.f32 %v3705, 0.0
        %v3902 = vmax.f32 %v3706, 0.0
        %v3903 = vmax.f32 %v3707, 0.0
        %v3904 = vmax.f32 %v3708, 0.0
        %v3905 = vmax.f32 %v3709, 0.0
        %v3906 = vmax.f32 %v3710, 0.0
        %v3907 = vmax.f32 %v3711, 0.0
        %v3908 = vmax.f32 %v3712, 0.0
        %v3909 = vmax.f32 %v3713, 0.0
        %v3910 = vmax.f32 %v3714, 0.0
        %v3911 = vmax.f32 %v3715, 0.0
        %v3912 = vmax.f32 %v3716, 0.0
        %v3913 = vmax.f32 %v3717, 0.0
        %v3914 = vmax.f32 %v3718, 0.0
        %v3915 = vmax.f32 %v3719, 0.0
        %v3916 = vmax.f32 %v3720, 0.0
        %v3917 = vmax.f32 %v3721, 0.0
        %v3918 = vmax.f32 %v3722, 0.0
        %v3919 = vmax.f32 %v3723, 0.0
        %v3920 = vmax.f32 %v3724, 0.0
        %v3921 = vmax.f32 %v3725, 0.0
        %v3922 = vmax.f32 %v3726, 0.0
        %v3923 = vmax.f32 %v3727, 0.0
        %v3924 = vmax.f32 %v3728, 0.0
        %v3925 = vmax.f32 %v3729, 0.0
        %v3926 = vmax.f32 %v3730, 0.0
        %v3927 = vmax.f32 %v3731, 0.0
        %v3928 = vmax.f32 %v3732, 0.0
        %v3929 = vmax.f32 %v3733, 0.0
        %v3930 = vmax.f32 %v3734, 0.0
        %v3931 = vmax.f32 %v3735, 0.0
        %v3932 = vmax.f32 %v3736, 0.0
        %v3933 = vmax.f32 %v3737, 0.0
        %v3934 = vmax.f32 %v3738, 0.0
        %v3935 = vmax.f32 %v3739, 0.0
        %v3936 = vmax.f32 %v3740, 0.0
        %v3937 = vmax.f32 %v3741, 0.0
        %v3938 = vmax.f32 %v3742, 0.0
        %v3939 = vmax.f32 %v3743, 0.0
        %v3940 = vmax.f32 %v3744, 0.0
        %v3941 = vmax.f32 %v3745, 0.0
        %v3942 = vmax.f32 %v3746, 0.0
        %v3943 = vmax.f32 %v3747, 0.0
        %v3944 = vmax.f32 %v3748, 0.0
        %v3945 = vmax.f32 %v3749, 0.0
        %v3946 = vmax.f32 %v3750, 0.0
        %v3947 = vmax.f32 %v3751, 0.0
        %v3948 = vmax.f32 %v3752, 0.0
        %v3949 = vmax.f32 %v3753, 0.0
        %v3950 = vmax.f32 %v3754, 0.0
        %v3951 = vmax.f32 %v3755, 0.0
        %v3952 = vmax.f32 %v3756, 0.0
        %v3953 = vmax.f32 %v3757, 0.0
        %v3954 = vmax.f32 %v3758, 0.0
        %v3955 = vmax.f32 %v3759, 0.0
        %v3956 = vmax.f32 %v3760, 0.0
        %v3957 = vmax.f32 %v3761, 0.0
        %v3958 = vmax.f32 %v3762, 0.0
        %v3959 = vmax.f32 %v3763, 0.0
        %v3960 = vmax.f32 %v3764, 0.0
        %v3961 = vmax.f32 %v3765, 0.0
        %v3962 = vmax.f32 %v3766, 0.0
        %v3963 = vmax.f32 %v3767, 0.0
        %v3964 = vmax.f32 %v3768, 0.0
        %v3965 = vmax.f32 %v3769, 0.0
        %v3966 = vmax.f32 %v3770, 0.0
        %v3967 = vmax.f32 %v3771, 0.0
        %v3968 = vmax.f32 %v3772, 0.0
        %v3969 = vmax.f32 %v3773, 0.0
        %v3970 = vmax.f32 %v3774, 0.0
        %v3971 = vmax.f32 %v3775, 0.0
        %v3972 = vmax.f32 %v3776, 0.0
        %v3973 = vmax.f32 %v3777, 0.0
        %v3974 = vmax.f32 %v3778, 0.0
        %v3975 = vmax.f32 %v3779, 0.0
        %v3976 = vmax.f32 %v3780, 0.0
        %v3977 = vmax.f32 %v3781, 0.0
        %v3978 = vmax.f32 %v3782, 0.0
        %v3979 = vmax.f32 %v3783, 0.0
        %v3980 = vmax.f32 %v3784, 0.0
        %v3981 = vmax.f32 %v3785, 0.0
        %v3982 = vmax.f32 %v3786, 0.0
        %v3983 = vmax.f32 %v3787, 0.0
        %v3984 = vmax.f32 %v3788, 0.0
        %v3985 = vmax.f32 %v3789, 0.0
        %v3986 = vmax.f32 %v3790, 0.0
        %v3987 = vmax.f32 %v3791, 0.0
        %v3988 = vmax.f32 %v3792, 0.0
        %v3989 = vmax.f32 %v3793, 0.0
        %v3990 = vmax.f32 %v3794, 0.0
        %v3991 = vmax.f32 %v3795, 0.0
        %v3992 = vmax.f32 %v3796, 0.0
        %v3993 = vmax.f32 %v3797, 0.0
        %v3994 = vmax.f32 %v3798, 0.0
        %v3995 = vmax.f32 %v3799, 0.0
        %v3996 = vmax.f32 %v3800, 0.0
        %v3997 = vmax.f32 %v3801, 0.0
        %v3998 = vmax.f32 %v3802, 0.0
        %v3999 = vmax.f32 %v3803, 0.0
        %v4000 = vmax.f32 %v3804, 0.0
        %v4001 = vmax.f32 %v3805, 0.0
        %v4002 = vmax.f32 %v3806, 0.0
        %v4003 = vmax.f32 %v3807, 0.0
        %v4004 = vmax.f32 %v3808, 0.0
        %v4005 = vmax.f32 %v3809, 0.0
        %v4006 = vmax.f32 %v3810, 0.0
        %v4007 = vmax.f32 %v3811, 0.0
        %v4008 = vmax.f32 %v3812, 0.0
        %v4009 = vmax.f32 %v3813, 0.0
        %v4010 = vmax.f32 %v3814, 0.0
        %v4011 = vmax.f32 %v3815, 0.0
        %v4012 = vmax.f32 %v3816, 0.0
        %v4013 = vmax.f32 %v3817, 0.0
        %v4014 = vmax.f32 %v3818, 0.0
        %v4015 = vmax.f32 %v3819, 0.0
        %v4016 = vmax.f32 %v3820, 0.0
        %v4017 = vmax.f32 %v3821, 0.0
        %v4018 = vmax.f32 %v3822, 0.0
        %v4019 = vmax.f32 %v3823, 0.0
        %v4020 = vmax.f32 %v3824, 0.0
        %v4021 = vmax.f32 %v3825, 0.0
        %v4022 = vmax.f32 %v3826, 0.0
        %v4023 = vmax.f32 %v3827, 0.0
        %v4024 = vmax.f32 %v3828, 0.0
        %v4025 = vmax.f32 %v3829, 0.0
        %v4026 = vmax.f32 %v3830, 0.0
        %v4027 = vmax.f32 %v3831, 0.0
        %v4028 = vmax.f32 %v3832, 0.0
        %v4029 = vmax.f32 %v3833, 0.0
        %v4030 = vmax.f32 %v3834, 0.0
        %v4031 = vmax.f32 %v3835, 0.0
        %v4032 = vmax.f32 %v3836, 0.0
        %v4033 = vmax.f32 %v3837, 0.0
        %v4034 = vmax.f32 %v3838, 0.0
        %v4035 = vmax.f32 %v3839, 0.0
        %v4036 = vmax.f32 %v3840, 0.0
        %v4037 = vmax.f32 %v3841, 0.0
        %v4038 = vmax.f32 %v3842, 0.0
        %v4039 = vmax.f32 %v3843, 0.0
        %v4040 = vmax.f32 %v3844, 0.0
        %v4041 = vmax.f32 %v3845, 0.0
        %v4042 = vmax.f32 %v3846, 0.0
        %v4043 = vmax.f32 %v3847, 0.0
        %v4044 = vmax.f32 %v3848, 0.0
        %v4045 = vmax.f32 %v3849, 0.0
        %v4046 = vmax.f32 %v3850, 0.0
        %v4047 = vmax.f32 %v3851, 0.0
        %v4048 = vmax.f32 %v3852, 0.0
        %v4049 = vmax.f32 %v3853, 0.0
        %v4050 = vmax.f32 %v3854, 0.0
        %v4051 = vmax.f32 %v3855, 0.0
        %v4052 = vmax.f32 %v3856, 0.0
        %v4053 = vmax.f32 %v3857, 0.0
        %v4054 = vld [vmem:[#allocation7] sm:$0xff]
        %v4055 = vld [vmem:[#allocation7 + $0x8] sm:$0xff]
        %v4056 = vld [vmem:[#allocation7 + $0x10] sm:$0xff]
        %v4057 = vld [vmem:[#allocation7 + $0x18] sm:$0xff]
        %v4058 = vld [vmem:[#allocation7 + $0x20] sm:$0xff]
        %v4059 = vld [vmem:[#allocation7 + $0x28] sm:$0xff]
        %v4060 = vld [vmem:[#allocation7 + $0x30] sm:$0xff]
        %v4061 = vld [vmem:[#allocation7 + $0x38] sm:$0xff]
        %v4062 = vld [vmem:[#allocation7 + $0x40] sm:$0xff]
        %v4063 = vld [vmem:[#allocation7 + $0x48] sm:$0xff]
        %v4064 = vld [vmem:[#allocation7 + $0x50] sm:$0xff]
        %v4065 = vld [vmem:[#allocation7 + $0x58] sm:$0xff]
        %v4066 = vld [vmem:[#allocation7 + $0x60] sm:$0xff]
        %v4067 = vld [vmem:[#allocation7 + $0x68] sm:$0xff]
        %v4068 = vld [vmem:[#allocation7 + $0x70] sm:$0xff]
        %v4069 = vld [vmem:[#allocation7 + $0x78] sm:$0xff]
        %v4070 = vld [vmem:[#allocation7 + $0x80] sm:$0xff]
        %v4071 = vld [vmem:[#allocation7 + $0x88] sm:$0xff]
        %v4072 = vld [vmem:[#allocation7 + $0x90] sm:$0xff]
        %v4073 = vld [vmem:[#allocation7 + $0x98] sm:$0xff]
        %v4074 = vld [vmem:[#allocation7 + $0xa0] sm:$0xff]
        %v4075 = vld [vmem:[#allocation7 + $0xa8] sm:$0xff]
        %v4076 = vld [vmem:[#allocation7 + $0xb0] sm:$0xff]
        %v4077 = vld [vmem:[#allocation7 + $0xb8] sm:$0xff]
        %v4078 = vld [vmem:[#allocation7 + $0xc0] sm:$0xff]
        %v4079 = vld [vmem:[#allocation7 + $0xc8] sm:$0xff]
        %v4080 = vld [vmem:[#allocation7 + $0xd0] sm:$0xff]
        %v4081 = vld [vmem:[#allocation7 + $0xd8] sm:$0xff]
        %v4082 = vld [vmem:[#allocation7 + $0xe0] sm:$0xff]
        %v4083 = vld [vmem:[#allocation7 + $0xe8] sm:$0xff]
        %v4084 = vld [vmem:[#allocation7 + $0xf0] sm:$0xff]
        %v4085 = vld [vmem:[#allocation7 + $0xf8] sm:$0xff]
        %v4086 = vld [vmem:[#allocation7 + $0x100] sm:$0xff]
        %v4087 = vld [vmem:[#allocation7 + $0x108] sm:$0xff]
        %v4088 = vld [vmem:[#allocation7 + $0x110] sm:$0xff]
        %v4089 = vld [vmem:[#allocation7 + $0x118] sm:$0xff]
        %v4090 = vld [vmem:[#allocation7 + $0x120] sm:$0xff]
        %v4091 = vld [vmem:[#allocation7 + $0x128] sm:$0xff]
        %v4092 = vld [vmem:[#allocation7 + $0x130] sm:$0xff]
        %v4093 = vld [vmem:[#allocation7 + $0x138] sm:$0xff]
        %v4094 = vld [vmem:[#allocation7 + $0x140] sm:$0xff]
        %v4095 = vld [vmem:[#allocation7 + $0x148] sm:$0xff]
        %v4096 = vld [vmem:[#allocation7 + $0x150] sm:$0xff]
        %v4097 = vld [vmem:[#allocation7 + $0x158] sm:$0xff]
        %v4098 = vld [vmem:[#allocation7 + $0x160] sm:$0xff]
        %v4099 = vld [vmem:[#allocation7 + $0x168] sm:$0xff]
        %v4100 = vld [vmem:[#allocation7 + $0x170] sm:$0xff]
        %v4101 = vld [vmem:[#allocation7 + $0x178] sm:$0xff]
        %v4102 = vld [vmem:[#allocation7 + $0x180] sm:$0xff]
        %v4103 = vld [vmem:[#allocation7 + $0x188] sm:$0xff]
        %v4104 = vld [vmem:[#allocation7 + $0x190] sm:$0xff]
        %v4105 = vld [vmem:[#allocation7 + $0x198] sm:$0xff]
        %v4106 = vld [vmem:[#allocation7 + $0x1a0] sm:$0xff]
        %v4107 = vld [vmem:[#allocation7 + $0x1a8] sm:$0xff]
        %v4108 = vld [vmem:[#allocation7 + $0x1b0] sm:$0xff]
        %v4109 = vld [vmem:[#allocation7 + $0x1b8] sm:$0xff]
        %v4110 = vld [vmem:[#allocation7 + $0x1c0] sm:$0xff]
        %v4111 = vld [vmem:[#allocation7 + $0x1c8] sm:$0xff]
        %v4112 = vld [vmem:[#allocation7 + $0x1d0] sm:$0xff]
        %v4113 = vld [vmem:[#allocation7 + $0x1d8] sm:$0xff]
        %v4114 = vld [vmem:[#allocation7 + $0x1e0] sm:$0xff]
        %v4115 = vld [vmem:[#allocation7 + $0x1e8] sm:$0xff]
        %v4116 = vld [vmem:[#allocation7 + $0x1f0] sm:$0xff]
        %v4117 = vld [vmem:[#allocation7 + $0x1f8] sm:$0xff]
        %v4118 = vld [vmem:[#allocation7 + $0x200] sm:$0xff]
        %v4119 = vld [vmem:[#allocation7 + $0x208] sm:$0xff]
        %v4120 = vld [vmem:[#allocation7 + $0x210] sm:$0xff]
        %v4121 = vld [vmem:[#allocation7 + $0x218] sm:$0xff]
        %v4122 = vld [vmem:[#allocation7 + $0x220] sm:$0xff]
        %v4123 = vld [vmem:[#allocation7 + $0x228] sm:$0xff]
        %v4124 = vld [vmem:[#allocation7 + $0x230] sm:$0xff]
        %v4125 = vld [vmem:[#allocation7 + $0x238] sm:$0xff]
        %v4126 = vld [vmem:[#allocation7 + $0x240] sm:$0xff]
        %v4127 = vld [vmem:[#allocation7 + $0x248] sm:$0xff]
        %v4128 = vld [vmem:[#allocation7 + $0x250] sm:$0xff]
        %v4129 = vld [vmem:[#allocation7 + $0x258] sm:$0xff]
        %v4130 = vld [vmem:[#allocation7 + $0x260] sm:$0xff]
        %v4131 = vld [vmem:[#allocation7 + $0x268] sm:$0xff]
        %v4132 = vld [vmem:[#allocation7 + $0x270] sm:$0xff]
        %v4133 = vld [vmem:[#allocation7 + $0x278] sm:$0xff]
        %v4134 = vld [vmem:[#allocation7 + $0x280] sm:$0xff]
        %v4135 = vld [vmem:[#allocation7 + $0x288] sm:$0xff]
        %v4136 = vld [vmem:[#allocation7 + $0x290] sm:$0xff]
        %v4137 = vld [vmem:[#allocation7 + $0x298] sm:$0xff]
        %v4138 = vld [vmem:[#allocation7 + $0x2a0] sm:$0xff]
        %v4139 = vld [vmem:[#allocation7 + $0x2a8] sm:$0xff]
        %v4140 = vld [vmem:[#allocation7 + $0x2b0] sm:$0xff]
        %v4141 = vld [vmem:[#allocation7 + $0x2b8] sm:$0xff]
        %v4142 = vld [vmem:[#allocation7 + $0x2c0] sm:$0xff]
        %v4143 = vld [vmem:[#allocation7 + $0x2c8] sm:$0xff]
        %v4144 = vld [vmem:[#allocation7 + $0x2d0] sm:$0xff]
        %v4145 = vld [vmem:[#allocation7 + $0x2d8] sm:$0xff]
        %v4146 = vld [vmem:[#allocation7 + $0x2e0] sm:$0xff]
        %v4147 = vld [vmem:[#allocation7 + $0x2e8] sm:$0xff]
        %v4148 = vld [vmem:[#allocation7 + $0x2f0] sm:$0xff]
        %v4149 = vld [vmem:[#allocation7 + $0x2f8] sm:$0xff]
        %v4150 = vld [vmem:[#allocation7 + $0x300] sm:$0xff]
        %v4151 = vld [vmem:[#allocation7 + $0x308] sm:$0xff]
        %v4152 = vld [vmem:[#allocation7 + $0x310] sm:$0xff]
        %v4153 = vld [vmem:[#allocation7 + $0x318] sm:$0xff]
        %v4154 = vld [vmem:[#allocation7 + $0x320] sm:$0xff]
        %v4155 = vld [vmem:[#allocation7 + $0x328] sm:$0xff]
        %v4156 = vld [vmem:[#allocation7 + $0x330] sm:$0xff]
        %v4157 = vld [vmem:[#allocation7 + $0x338] sm:$0xff]
        %v4158 = vld [vmem:[#allocation7 + $0x340] sm:$0xff]
        %v4159 = vld [vmem:[#allocation7 + $0x348] sm:$0xff]
        %v4160 = vld [vmem:[#allocation7 + $0x350] sm:$0xff]
        %v4161 = vld [vmem:[#allocation7 + $0x358] sm:$0xff]
        %v4162 = vld [vmem:[#allocation7 + $0x360] sm:$0xff]
        %v4163 = vld [vmem:[#allocation7 + $0x368] sm:$0xff]
        %v4164 = vld [vmem:[#allocation7 + $0x370] sm:$0xff]
        %v4165 = vld [vmem:[#allocation7 + $0x378] sm:$0xff]
        %v4166 = vld [vmem:[#allocation7 + $0x380] sm:$0xff]
        %v4167 = vld [vmem:[#allocation7 + $0x388] sm:$0xff]
        %v4168 = vld [vmem:[#allocation7 + $0x390] sm:$0xff]
        %v4169 = vld [vmem:[#allocation7 + $0x398] sm:$0xff]
        %v4170 = vld [vmem:[#allocation7 + $0x3a0] sm:$0xff]
        %v4171 = vld [vmem:[#allocation7 + $0x3a8] sm:$0xff]
        %v4172 = vld [vmem:[#allocation7 + $0x3b0] sm:$0xff]
        %v4173 = vld [vmem:[#allocation7 + $0x3b8] sm:$0xff]
        %v4174 = vld [vmem:[#allocation7 + $0x3c0] sm:$0xff]
        %v4175 = vld [vmem:[#allocation7 + $0x3c8] sm:$0xff]
        %v4176 = vld [vmem:[#allocation7 + $0x3d0] sm:$0xff]
        %v4177 = vld [vmem:[#allocation7 + $0x3d8] sm:$0xff]
        %v4178 = vld [vmem:[#allocation7 + $0x3e0] sm:$0xff]
        %v4179 = vld [vmem:[#allocation7 + $0x3e8] sm:$0xff]
        %v4180 = vld [vmem:[#allocation7 + $0x3f0] sm:$0xff]
        %v4181 = vld [vmem:[#allocation7 + $0x3f8] sm:$0xff]
        %v4182 = vld [vmem:[#allocation7 + $0x400] sm:$0xff]
        %v4183 = vld [vmem:[#allocation7 + $0x408] sm:$0xff]
        %v4184 = vld [vmem:[#allocation7 + $0x410] sm:$0xff]
        %v4185 = vld [vmem:[#allocation7 + $0x418] sm:$0xff]
        %v4186 = vld [vmem:[#allocation7 + $0x420] sm:$0xff]
        %v4187 = vld [vmem:[#allocation7 + $0x428] sm:$0xff]
        %v4188 = vld [vmem:[#allocation7 + $0x430] sm:$0xff]
        %v4189 = vld [vmem:[#allocation7 + $0x438] sm:$0xff]
        %v4190 = vld [vmem:[#allocation7 + $0x440] sm:$0xff]
        %v4191 = vld [vmem:[#allocation7 + $0x448] sm:$0xff]
        %v4192 = vld [vmem:[#allocation7 + $0x450] sm:$0xff]
        %v4193 = vld [vmem:[#allocation7 + $0x458] sm:$0xff]
        %v4194 = vld [vmem:[#allocation7 + $0x460] sm:$0xff]
        %v4195 = vld [vmem:[#allocation7 + $0x468] sm:$0xff]
        %v4196 = vld [vmem:[#allocation7 + $0x470] sm:$0xff]
        %v4197 = vld [vmem:[#allocation7 + $0x478] sm:$0xff]
        %v4198 = vld [vmem:[#allocation7 + $0x480] sm:$0xff]
        %v4199 = vld [vmem:[#allocation7 + $0x488] sm:$0xff]
        %v4200 = vld [vmem:[#allocation7 + $0x490] sm:$0xff]
        %v4201 = vld [vmem:[#allocation7 + $0x498] sm:$0xff]
        %v4202 = vld [vmem:[#allocation7 + $0x4a0] sm:$0xff]
        %v4203 = vld [vmem:[#allocation7 + $0x4a8] sm:$0xff]
        %v4204 = vld [vmem:[#allocation7 + $0x4b0] sm:$0xff]
        %v4205 = vld [vmem:[#allocation7 + $0x4b8] sm:$0xff]
        %v4206 = vld [vmem:[#allocation7 + $0x4c0] sm:$0xff]
        %v4207 = vld [vmem:[#allocation7 + $0x4c8] sm:$0xff]
        %v4208 = vld [vmem:[#allocation7 + $0x4d0] sm:$0xff]
        %v4209 = vld [vmem:[#allocation7 + $0x4d8] sm:$0xff]
        %v4210 = vld [vmem:[#allocation7 + $0x4e0] sm:$0xff]
        %v4211 = vld [vmem:[#allocation7 + $0x4e8] sm:$0xff]
        %v4212 = vld [vmem:[#allocation7 + $0x4f0] sm:$0xff]
        %v4213 = vld [vmem:[#allocation7 + $0x4f8] sm:$0xff]
        %v4214 = vld [vmem:[#allocation7 + $0x500] sm:$0xff]
        %v4215 = vld [vmem:[#allocation7 + $0x508] sm:$0xff]
        %v4216 = vld [vmem:[#allocation7 + $0x510] sm:$0xff]
        %v4217 = vld [vmem:[#allocation7 + $0x518] sm:$0xff]
        %v4218 = vld [vmem:[#allocation7 + $0x520] sm:$0xff]
        %v4219 = vld [vmem:[#allocation7 + $0x528] sm:$0xff]
        %v4220 = vld [vmem:[#allocation7 + $0x530] sm:$0xff]
        %v4221 = vld [vmem:[#allocation7 + $0x538] sm:$0xff]
        %v4222 = vld [vmem:[#allocation7 + $0x540] sm:$0xff]
        %v4223 = vld [vmem:[#allocation7 + $0x548] sm:$0xff]
        %v4224 = vld [vmem:[#allocation7 + $0x550] sm:$0xff]
        %v4225 = vld [vmem:[#allocation7 + $0x558] sm:$0xff]
        %v4226 = vld [vmem:[#allocation7 + $0x560] sm:$0xff]
        %v4227 = vld [vmem:[#allocation7 + $0x568] sm:$0xff]
        %v4228 = vld [vmem:[#allocation7 + $0x570] sm:$0xff]
        %v4229 = vld [vmem:[#allocation7 + $0x578] sm:$0xff]
        %v4230 = vld [vmem:[#allocation7 + $0x580] sm:$0xff]
        %v4231 = vld [vmem:[#allocation7 + $0x588] sm:$0xff]
        %v4232 = vld [vmem:[#allocation7 + $0x590] sm:$0xff]
        %v4233 = vld [vmem:[#allocation7 + $0x598] sm:$0xff]
        %v4234 = vld [vmem:[#allocation7 + $0x5a0] sm:$0xff]
        %v4235 = vld [vmem:[#allocation7 + $0x5a8] sm:$0xff]
        %v4236 = vld [vmem:[#allocation7 + $0x5b0] sm:$0xff]
        %v4237 = vld [vmem:[#allocation7 + $0x5b8] sm:$0xff]
        %v4238 = vld [vmem:[#allocation7 + $0x5c0] sm:$0xff]
        %v4239 = vld [vmem:[#allocation7 + $0x5c8] sm:$0xff]
        %v4240 = vld [vmem:[#allocation7 + $0x5d0] sm:$0xff]
        %v4241 = vld [vmem:[#allocation7 + $0x5d8] sm:$0xff]
        %v4242 = vld [vmem:[#allocation7 + $0x5e0] sm:$0xff]
        %v4243 = vld [vmem:[#allocation7 + $0x5e8] sm:$0xff]
        %v4244 = vld [vmem:[#allocation7 + $0x5f0] sm:$0xff]
        %v4245 = vld [vmem:[#allocation7 + $0x5f8] sm:$0xff]
        %v4246 = vld [vmem:[#allocation7 + $0x600] sm:$0xff]
        %v4247 = vld [vmem:[#allocation7 + $0x608] sm:$0xff]
        %v4248 = vld [vmem:[#allocation7 + $0x610] sm:$0xff]
        %v4249 = vld [vmem:[#allocation7 + $0x618] sm:$0xff]
        %vm4250 = vcmask 64512
        %v4252 = vsel %vm4250, %v3858, 0
        %4254 = vmatpush.msra.mxu0 0.0
        %4255 = vmatpush.msra.mxu0 0.0
        %4256 = vmatpush.msra.mxu0 0.0
        %4257 = vmatpush.msra.mxu0 0.0
        %4258 = vmatpush.msra.mxu0 0.0
        %4259 = vmatpush.msra.mxu0 0.0
        %4260 = vmatpush.msra.mxu0 0.0
        %4261 = vmatpush.msra.mxu0 0.0
        %4262 = vmatpush.msra.mxu0 0.0
        %4263 = vmatpush.msra.mxu0 0.0
        %4264 = vmatpush.msra.mxu0 0.0
        %4265 = vmatpush.msra.mxu0 0.0
        %4266 = vmatpush.msra.mxu0 0.0
        %4267 = vmatpush.msra.mxu0 0.0
        %4268 = vmatpush.msra.mxu0 0.0
        %4269 = vmatpush.msra.mxu0 %v4054
        %4270 = vmatmul.f32.gmra.mxu0 %v4252
        %v4271 = vpop.f32.mrf.mxu0
        %v4272 = vadd.f32 0.0, %v4271
        %4273 = vdwg.mxu0
        %v4275 = vsel %vm4250, %v3859, 0
        %4277 = vmatpush.msra.mxu0 0.0
        %4278 = vmatpush.msra.mxu0 0.0
        %4279 = vmatpush.msra.mxu0 0.0
        %4280 = vmatpush.msra.mxu0 0.0
        %4281 = vmatpush.msra.mxu0 0.0
        %4282 = vmatpush.msra.mxu0 0.0
        %4283 = vmatpush.msra.mxu0 0.0
        %4284 = vmatpush.msra.mxu0 0.0
        %4285 = vmatpush.msra.mxu0 0.0
        %4286 = vmatpush.msra.mxu0 0.0
        %4287 = vmatpush.msra.mxu0 0.0
        %4288 = vmatpush.msra.mxu0 0.0
        %4289 = vmatpush.msra.mxu0 0.0
        %4290 = vmatpush.msra.mxu0 0.0
        %4291 = vmatpush.msra.mxu0 0.0
        %4292 = vmatpush.msra.mxu0 %v4055
        %4293 = vmatmul.f32.gmra.mxu0 %v4275
        %v4294 = vpop.f32.mrf.mxu0
        %v4295 = vadd.f32 0.0, %v4294
        %4296 = vdwg.mxu0
        %v4298 = vsel %vm4250, %v3860, 0
        %4300 = vmatpush.msra.mxu0 0.0
        %4301 = vmatpush.msra.mxu0 0.0
        %4302 = vmatpush.msra.mxu0 0.0
        %4303 = vmatpush.msra.mxu0 0.0
        %4304 = vmatpush.msra.mxu0 0.0
        %4305 = vmatpush.msra.mxu0 0.0
        %4306 = vmatpush.msra.mxu0 0.0
        %4307 = vmatpush.msra.mxu0 0.0
        %4308 = vmatpush.msra.mxu0 0.0
        %4309 = vmatpush.msra.mxu0 0.0
        %4310 = vmatpush.msra.mxu0 0.0
        %4311 = vmatpush.msra.mxu0 0.0
        %4312 = vmatpush.msra.mxu0 0.0
        %4313 = vmatpush.msra.mxu0 0.0
        %4314 = vmatpush.msra.mxu0 0.0
        %4315 = vmatpush.msra.mxu0 %v4056
        %4316 = vmatmul.f32.gmra.mxu0 %v4298
        %v4317 = vpop.f32.mrf.mxu0
        %v4318 = vadd.f32 0.0, %v4317
        %4319 = vdwg.mxu0
        %v4321 = vsel %vm4250, %v3861, 0
        %4323 = vmatpush.msra.mxu0 0.0
        %4324 = vmatpush.msra.mxu0 0.0
        %4325 = vmatpush.msra.mxu0 0.0
        %4326 = vmatpush.msra.mxu0 0.0
        %4327 = vmatpush.msra.mxu0 0.0
        %4328 = vmatpush.msra.mxu0 0.0
        %4329 = vmatpush.msra.mxu0 0.0
        %4330 = vmatpush.msra.mxu0 0.0
        %4331 = vmatpush.msra.mxu0 0.0
        %4332 = vmatpush.msra.mxu0 0.0
        %4333 = vmatpush.msra.mxu0 0.0
        %4334 = vmatpush.msra.mxu0 0.0
        %4335 = vmatpush.msra.mxu0 0.0
        %4336 = vmatpush.msra.mxu0 0.0
        %4337 = vmatpush.msra.mxu0 0.0
        %4338 = vmatpush.msra.mxu0 %v4057
        %4339 = vmatmul.f32.gmra.mxu0 %v4321
        %v4340 = vpop.f32.mrf.mxu0
        %v4341 = vadd.f32 0.0, %v4340
        %4342 = vdwg.mxu0
        %v4344 = vsel %vm4250, %v3862, 0
        %4346 = vmatpush.msra.mxu0 0.0
        %4347 = vmatpush.msra.mxu0 0.0
        %4348 = vmatpush.msra.mxu0 0.0
        %4349 = vmatpush.msra.mxu0 0.0
        %4350 = vmatpush.msra.mxu0 0.0
        %4351 = vmatpush.msra.mxu0 0.0
        %4352 = vmatpush.msra.mxu0 0.0
        %4353 = vmatpush.msra.mxu0 0.0
        %4354 = vmatpush.msra.mxu0 0.0
        %4355 = vmatpush.msra.mxu0 0.0
        %4356 = vmatpush.msra.mxu0 0.0
        %4357 = vmatpush.msra.mxu0 0.0
        %4358 = vmatpush.msra.mxu0 0.0
        %4359 = vmatpush.msra.mxu0 0.0
        %4360 = vmatpush.msra.mxu0 0.0
        %4361 = vmatpush.msra.mxu0 %v4058
        %4362 = vmatmul.f32.gmra.mxu0 %v4344
        %v4363 = vpop.f32.mrf.mxu0
        %v4364 = vadd.f32 0.0, %v4363
        %4365 = vdwg.mxu0
        %v4367 = vsel %vm4250, %v3863, 0
        %4369 = vmatpush.msra.mxu0 0.0
        %4370 = vmatpush.msra.mxu0 0.0
        %4371 = vmatpush.msra.mxu0 0.0
        %4372 = vmatpush.msra.mxu0 0.0
        %4373 = vmatpush.msra.mxu0 0.0
        %4374 = vmatpush.msra.mxu0 0.0
        %4375 = vmatpush.msra.mxu0 0.0
        %4376 = vmatpush.msra.mxu0 0.0
        %4377 = vmatpush.msra.mxu0 0.0
        %4378 = vmatpush.msra.mxu0 0.0
        %4379 = vmatpush.msra.mxu0 0.0
        %4380 = vmatpush.msra.mxu0 0.0
        %4381 = vmatpush.msra.mxu0 0.0
        %4382 = vmatpush.msra.mxu0 0.0
        %4383 = vmatpush.msra.mxu0 0.0
        %4384 = vmatpush.msra.mxu0 %v4059
        %4385 = vmatmul.f32.gmra.mxu0 %v4367
        %v4386 = vpop.f32.mrf.mxu0
        %v4387 = vadd.f32 0.0, %v4386
        %4388 = vdwg.mxu0
        %v4390 = vsel %vm4250, %v3864, 0
        %4392 = vmatpush.msra.mxu0 0.0
        %4393 = vmatpush.msra.mxu0 0.0
        %4394 = vmatpush.msra.mxu0 0.0
        %4395 = vmatpush.msra.mxu0 0.0
        %4396 = vmatpush.msra.mxu0 0.0
        %4397 = vmatpush.msra.mxu0 0.0
        %4398 = vmatpush.msra.mxu0 0.0
        %4399 = vmatpush.msra.mxu0 0.0
        %4400 = vmatpush.msra.mxu0 0.0
        %4401 = vmatpush.msra.mxu0 0.0
        %4402 = vmatpush.msra.mxu0 0.0
        %4403 = vmatpush.msra.mxu0 0.0
        %4404 = vmatpush.msra.mxu0 0.0
        %4405 = vmatpush.msra.mxu0 0.0
        %4406 = vmatpush.msra.mxu0 0.0
        %4407 = vmatpush.msra.mxu0 %v4060
        %4408 = vmatmul.f32.gmra.mxu0 %v4390
        %v4409 = vpop.f32.mrf.mxu0
        %v4410 = vadd.f32 0.0, %v4409
        %4411 = vdwg.mxu0
        %v4413 = vsel %vm4250, %v3865, 0
        %4415 = vmatpush.msra.mxu0 0.0
        %4416 = vmatpush.msra.mxu0 0.0
        %4417 = vmatpush.msra.mxu0 0.0
        %4418 = vmatpush.msra.mxu0 0.0
        %4419 = vmatpush.msra.mxu0 0.0
        %4420 = vmatpush.msra.mxu0 0.0
        %4421 = vmatpush.msra.mxu0 0.0
        %4422 = vmatpush.msra.mxu0 0.0
        %4423 = vmatpush.msra.mxu0 0.0
        %4424 = vmatpush.msra.mxu0 0.0
        %4425 = vmatpush.msra.mxu0 0.0
        %4426 = vmatpush.msra.mxu0 0.0
        %4427 = vmatpush.msra.mxu0 0.0
        %4428 = vmatpush.msra.mxu0 0.0
        %4429 = vmatpush.msra.mxu0 0.0
        %4430 = vmatpush.msra.mxu0 %v4061
        %4431 = vmatmul.f32.gmra.mxu0 %v4413
        %v4432 = vpop.f32.mrf.mxu0
        %v4433 = vadd.f32 0.0, %v4432
        %4434 = vdwg.mxu0
        %v4436 = vsel %vm4250, %v3866, 0
        %4438 = vmatpush.msra.mxu0 0.0
        %4439 = vmatpush.msra.mxu0 0.0
        %4440 = vmatpush.msra.mxu0 0.0
        %4441 = vmatpush.msra.mxu0 0.0
        %4442 = vmatpush.msra.mxu0 0.0
        %4443 = vmatpush.msra.mxu0 0.0
        %4444 = vmatpush.msra.mxu0 0.0
        %4445 = vmatpush.msra.mxu0 0.0
        %4446 = vmatpush.msra.mxu0 0.0
        %4447 = vmatpush.msra.mxu0 0.0
        %4448 = vmatpush.msra.mxu0 0.0
        %4449 = vmatpush.msra.mxu0 0.0
        %4450 = vmatpush.msra.mxu0 0.0
        %4451 = vmatpush.msra.mxu0 0.0
        %4452 = vmatpush.msra.mxu0 0.0
        %4453 = vmatpush.msra.mxu0 %v4062
        %4454 = vmatmul.f32.gmra.mxu0 %v4436
        %v4455 = vpop.f32.mrf.mxu0
        %v4456 = vadd.f32 0.0, %v4455
        %4457 = vdwg.mxu0
        %v4459 = vsel %vm4250, %v3867, 0
        %4461 = vmatpush.msra.mxu0 0.0
        %4462 = vmatpush.msra.mxu0 0.0
        %4463 = vmatpush.msra.mxu0 0.0
        %4464 = vmatpush.msra.mxu0 0.0
        %4465 = vmatpush.msra.mxu0 0.0
        %4466 = vmatpush.msra.mxu0 0.0
        %4467 = vmatpush.msra.mxu0 0.0
        %4468 = vmatpush.msra.mxu0 0.0
        %4469 = vmatpush.msra.mxu0 0.0
        %4470 = vmatpush.msra.mxu0 0.0
        %4471 = vmatpush.msra.mxu0 0.0
        %4472 = vmatpush.msra.mxu0 0.0
        %4473 = vmatpush.msra.mxu0 0.0
        %4474 = vmatpush.msra.mxu0 0.0
        %4475 = vmatpush.msra.mxu0 0.0
        %4476 = vmatpush.msra.mxu0 %v4063
        %4477 = vmatmul.f32.gmra.mxu0 %v4459
        %v4478 = vpop.f32.mrf.mxu0
        %v4479 = vadd.f32 0.0, %v4478
        %4480 = vdwg.mxu0
        %v4482 = vsel %vm4250, %v3868, 0
        %4484 = vmatpush.msra.mxu0 0.0
        %4485 = vmatpush.msra.mxu0 0.0
        %4486 = vmatpush.msra.mxu0 0.0
        %4487 = vmatpush.msra.mxu0 0.0
        %4488 = vmatpush.msra.mxu0 0.0
        %4489 = vmatpush.msra.mxu0 0.0
        %4490 = vmatpush.msra.mxu0 0.0
        %4491 = vmatpush.msra.mxu0 0.0
        %4492 = vmatpush.msra.mxu0 0.0
        %4493 = vmatpush.msra.mxu0 0.0
        %4494 = vmatpush.msra.mxu0 0.0
        %4495 = vmatpush.msra.mxu0 0.0
        %4496 = vmatpush.msra.mxu0 0.0
        %4497 = vmatpush.msra.mxu0 0.0
        %4498 = vmatpush.msra.mxu0 0.0
        %4499 = vmatpush.msra.mxu0 %v4064
        %4500 = vmatmul.f32.gmra.mxu0 %v4482
        %v4501 = vpop.f32.mrf.mxu0
        %v4502 = vadd.f32 0.0, %v4501
        %4503 = vdwg.mxu0
        %v4505 = vsel %vm4250, %v3869, 0
        %4507 = vmatpush.msra.mxu0 0.0
        %4508 = vmatpush.msra.mxu0 0.0
        %4509 = vmatpush.msra.mxu0 0.0
        %4510 = vmatpush.msra.mxu0 0.0
        %4511 = vmatpush.msra.mxu0 0.0
        %4512 = vmatpush.msra.mxu0 0.0
        %4513 = vmatpush.msra.mxu0 0.0
        %4514 = vmatpush.msra.mxu0 0.0
        %4515 = vmatpush.msra.mxu0 0.0
        %4516 = vmatpush.msra.mxu0 0.0
        %4517 = vmatpush.msra.mxu0 0.0
        %4518 = vmatpush.msra.mxu0 0.0
        %4519 = vmatpush.msra.mxu0 0.0
        %4520 = vmatpush.msra.mxu0 0.0
        %4521 = vmatpush.msra.mxu0 0.0
        %4522 = vmatpush.msra.mxu0 %v4065
        %4523 = vmatmul.f32.gmra.mxu0 %v4505
        %v4524 = vpop.f32.mrf.mxu0
        %v4525 = vadd.f32 0.0, %v4524
        %4526 = vdwg.mxu0
        %v4528 = vsel %vm4250, %v3870, 0
        %4530 = vmatpush.msra.mxu0 0.0
        %4531 = vmatpush.msra.mxu0 0.0
        %4532 = vmatpush.msra.mxu0 0.0
        %4533 = vmatpush.msra.mxu0 0.0
        %4534 = vmatpush.msra.mxu0 0.0
        %4535 = vmatpush.msra.mxu0 0.0
        %4536 = vmatpush.msra.mxu0 0.0
        %4537 = vmatpush.msra.mxu0 0.0
        %4538 = vmatpush.msra.mxu0 0.0
        %4539 = vmatpush.msra.mxu0 0.0
        %4540 = vmatpush.msra.mxu0 0.0
        %4541 = vmatpush.msra.mxu0 0.0
        %4542 = vmatpush.msra.mxu0 0.0
        %4543 = vmatpush.msra.mxu0 0.0
        %4544 = vmatpush.msra.mxu0 0.0
        %4545 = vmatpush.msra.mxu0 %v4066
        %4546 = vmatmul.f32.gmra.mxu0 %v4528
        %v4547 = vpop.f32.mrf.mxu0
        %v4548 = vadd.f32 0.0, %v4547
        %4549 = vdwg.mxu0
        %v4551 = vsel %vm4250, %v3871, 0
        %4553 = vmatpush.msra.mxu0 0.0
        %4554 = vmatpush.msra.mxu0 0.0
        %4555 = vmatpush.msra.mxu0 0.0
        %4556 = vmatpush.msra.mxu0 0.0
        %4557 = vmatpush.msra.mxu0 0.0
        %4558 = vmatpush.msra.mxu0 0.0
        %4559 = vmatpush.msra.mxu0 0.0
        %4560 = vmatpush.msra.mxu0 0.0
        %4561 = vmatpush.msra.mxu0 0.0
        %4562 = vmatpush.msra.mxu0 0.0
        %4563 = vmatpush.msra.mxu0 0.0
        %4564 = vmatpush.msra.mxu0 0.0
        %4565 = vmatpush.msra.mxu0 0.0
        %4566 = vmatpush.msra.mxu0 0.0
        %4567 = vmatpush.msra.mxu0 0.0
        %4568 = vmatpush.msra.mxu0 %v4067
        %4569 = vmatmul.f32.gmra.mxu0 %v4551
        %v4570 = vpop.f32.mrf.mxu0
        %v4571 = vadd.f32 0.0, %v4570
        %4572 = vdwg.mxu0
        %v4574 = vsel %vm4250, %v3872, 0
        %4576 = vmatpush.msra.mxu0 0.0
        %4577 = vmatpush.msra.mxu0 0.0
        %4578 = vmatpush.msra.mxu0 0.0
        %4579 = vmatpush.msra.mxu0 0.0
        %4580 = vmatpush.msra.mxu0 0.0
        %4581 = vmatpush.msra.mxu0 0.0
        %4582 = vmatpush.msra.mxu0 0.0
        %4583 = vmatpush.msra.mxu0 0.0
        %4584 = vmatpush.msra.mxu0 0.0
        %4585 = vmatpush.msra.mxu0 0.0
        %4586 = vmatpush.msra.mxu0 0.0
        %4587 = vmatpush.msra.mxu0 0.0
        %4588 = vmatpush.msra.mxu0 0.0
        %4589 = vmatpush.msra.mxu0 0.0
        %4590 = vmatpush.msra.mxu0 0.0
        %4591 = vmatpush.msra.mxu0 %v4068
        %4592 = vmatmul.f32.gmra.mxu0 %v4574
        %v4593 = vpop.f32.mrf.mxu0
        %v4594 = vadd.f32 0.0, %v4593
        %4595 = vdwg.mxu0
        %v4597 = vsel %vm4250, %v3873, 0
        %4599 = vmatpush.msra.mxu0 0.0
        %4600 = vmatpush.msra.mxu0 0.0
        %4601 = vmatpush.msra.mxu0 0.0
        %4602 = vmatpush.msra.mxu0 0.0
        %4603 = vmatpush.msra.mxu0 0.0
        %4604 = vmatpush.msra.mxu0 0.0
        %4605 = vmatpush.msra.mxu0 0.0
        %4606 = vmatpush.msra.mxu0 0.0
        %4607 = vmatpush.msra.mxu0 0.0
        %4608 = vmatpush.msra.mxu0 0.0
        %4609 = vmatpush.msra.mxu0 0.0
        %4610 = vmatpush.msra.mxu0 0.0
        %4611 = vmatpush.msra.mxu0 0.0
        %4612 = vmatpush.msra.mxu0 0.0
        %4613 = vmatpush.msra.mxu0 0.0
        %4614 = vmatpush.msra.mxu0 %v4069
        %4615 = vmatmul.f32.gmra.mxu0 %v4597
        %v4616 = vpop.f32.mrf.mxu0
        %v4617 = vadd.f32 0.0, %v4616
        %4618 = vdwg.mxu0
        %v4620 = vsel %vm4250, %v3874, 0
        %4622 = vmatpush.msra.mxu0 0.0
        %4623 = vmatpush.msra.mxu0 0.0
        %4624 = vmatpush.msra.mxu0 0.0
        %4625 = vmatpush.msra.mxu0 0.0
        %4626 = vmatpush.msra.mxu0 0.0
        %4627 = vmatpush.msra.mxu0 0.0
        %4628 = vmatpush.msra.mxu0 0.0
        %4629 = vmatpush.msra.mxu0 0.0
        %4630 = vmatpush.msra.mxu0 0.0
        %4631 = vmatpush.msra.mxu0 0.0
        %4632 = vmatpush.msra.mxu0 0.0
        %4633 = vmatpush.msra.mxu0 0.0
        %4634 = vmatpush.msra.mxu0 0.0
        %4635 = vmatpush.msra.mxu0 0.0
        %4636 = vmatpush.msra.mxu0 0.0
        %4637 = vmatpush.msra.mxu0 %v4070
        %4638 = vmatmul.f32.gmra.mxu0 %v4620
        %v4639 = vpop.f32.mrf.mxu0
        %v4640 = vadd.f32 0.0, %v4639
        %4641 = vdwg.mxu0
        %v4643 = vsel %vm4250, %v3875, 0
        %4645 = vmatpush.msra.mxu0 0.0
        %4646 = vmatpush.msra.mxu0 0.0
        %4647 = vmatpush.msra.mxu0 0.0
        %4648 = vmatpush.msra.mxu0 0.0
        %4649 = vmatpush.msra.mxu0 0.0
        %4650 = vmatpush.msra.mxu0 0.0
        %4651 = vmatpush.msra.mxu0 0.0
        %4652 = vmatpush.msra.mxu0 0.0
        %4653 = vmatpush.msra.mxu0 0.0
        %4654 = vmatpush.msra.mxu0 0.0
        %4655 = vmatpush.msra.mxu0 0.0
        %4656 = vmatpush.msra.mxu0 0.0
        %4657 = vmatpush.msra.mxu0 0.0
        %4658 = vmatpush.msra.mxu0 0.0
        %4659 = vmatpush.msra.mxu0 0.0
        %4660 = vmatpush.msra.mxu0 %v4071
        %4661 = vmatmul.f32.gmra.mxu0 %v4643
        %v4662 = vpop.f32.mrf.mxu0
        %v4663 = vadd.f32 0.0, %v4662
        %4664 = vdwg.mxu0
        %v4666 = vsel %vm4250, %v3876, 0
        %4668 = vmatpush.msra.mxu0 0.0
        %4669 = vmatpush.msra.mxu0 0.0
        %4670 = vmatpush.msra.mxu0 0.0
        %4671 = vmatpush.msra.mxu0 0.0
        %4672 = vmatpush.msra.mxu0 0.0
        %4673 = vmatpush.msra.mxu0 0.0
        %4674 = vmatpush.msra.mxu0 0.0
        %4675 = vmatpush.msra.mxu0 0.0
        %4676 = vmatpush.msra.mxu0 0.0
        %4677 = vmatpush.msra.mxu0 0.0
        %4678 = vmatpush.msra.mxu0 0.0
        %4679 = vmatpush.msra.mxu0 0.0
        %4680 = vmatpush.msra.mxu0 0.0
        %4681 = vmatpush.msra.mxu0 0.0
        %4682 = vmatpush.msra.mxu0 0.0
        %4683 = vmatpush.msra.mxu0 %v4072
        %4684 = vmatmul.f32.gmra.mxu0 %v4666
        %v4685 = vpop.f32.mrf.mxu0
        %v4686 = vadd.f32 0.0, %v4685
        %4687 = vdwg.mxu0
        %v4689 = vsel %vm4250, %v3877, 0
        %4691 = vmatpush.msra.mxu0 0.0
        %4692 = vmatpush.msra.mxu0 0.0
        %4693 = vmatpush.msra.mxu0 0.0
        %4694 = vmatpush.msra.mxu0 0.0
        %4695 = vmatpush.msra.mxu0 0.0
        %4696 = vmatpush.msra.mxu0 0.0
        %4697 = vmatpush.msra.mxu0 0.0
        %4698 = vmatpush.msra.mxu0 0.0
        %4699 = vmatpush.msra.mxu0 0.0
        %4700 = vmatpush.msra.mxu0 0.0
        %4701 = vmatpush.msra.mxu0 0.0
        %4702 = vmatpush.msra.mxu0 0.0
        %4703 = vmatpush.msra.mxu0 0.0
        %4704 = vmatpush.msra.mxu0 0.0
        %4705 = vmatpush.msra.mxu0 0.0
        %4706 = vmatpush.msra.mxu0 %v4073
        %4707 = vmatmul.f32.gmra.mxu0 %v4689
        %v4708 = vpop.f32.mrf.mxu0
        %v4709 = vadd.f32 0.0, %v4708
        %4710 = vdwg.mxu0
        %v4712 = vsel %vm4250, %v3878, 0
        %4714 = vmatpush.msra.mxu0 0.0
        %4715 = vmatpush.msra.mxu0 0.0
        %4716 = vmatpush.msra.mxu0 0.0
        %4717 = vmatpush.msra.mxu0 0.0
        %4718 = vmatpush.msra.mxu0 0.0
        %4719 = vmatpush.msra.mxu0 0.0
        %4720 = vmatpush.msra.mxu0 0.0
        %4721 = vmatpush.msra.mxu0 0.0
        %4722 = vmatpush.msra.mxu0 0.0
        %4723 = vmatpush.msra.mxu0 0.0
        %4724 = vmatpush.msra.mxu0 0.0
        %4725 = vmatpush.msra.mxu0 0.0
        %4726 = vmatpush.msra.mxu0 0.0
        %4727 = vmatpush.msra.mxu0 0.0
        %4728 = vmatpush.msra.mxu0 0.0
        %4729 = vmatpush.msra.mxu0 %v4074
        %4730 = vmatmul.f32.gmra.mxu0 %v4712
        %v4731 = vpop.f32.mrf.mxu0
        %v4732 = vadd.f32 0.0, %v4731
        %4733 = vdwg.mxu0
        %v4735 = vsel %vm4250, %v3879, 0
        %4737 = vmatpush.msra.mxu0 0.0
        %4738 = vmatpush.msra.mxu0 0.0
        %4739 = vmatpush.msra.mxu0 0.0
        %4740 = vmatpush.msra.mxu0 0.0
        %4741 = vmatpush.msra.mxu0 0.0
        %4742 = vmatpush.msra.mxu0 0.0
        %4743 = vmatpush.msra.mxu0 0.0
        %4744 = vmatpush.msra.mxu0 0.0
        %4745 = vmatpush.msra.mxu0 0.0
        %4746 = vmatpush.msra.mxu0 0.0
        %4747 = vmatpush.msra.mxu0 0.0
        %4748 = vmatpush.msra.mxu0 0.0
        %4749 = vmatpush.msra.mxu0 0.0
        %4750 = vmatpush.msra.mxu0 0.0
        %4751 = vmatpush.msra.mxu0 0.0
        %4752 = vmatpush.msra.mxu0 %v4075
        %4753 = vmatmul.f32.gmra.mxu0 %v4735
        %v4754 = vpop.f32.mrf.mxu0
        %v4755 = vadd.f32 0.0, %v4754
        %4756 = vdwg.mxu0
        %v4758 = vsel %vm4250, %v3880, 0
        %4760 = vmatpush.msra.mxu0 0.0
        %4761 = vmatpush.msra.mxu0 0.0
        %4762 = vmatpush.msra.mxu0 0.0
        %4763 = vmatpush.msra.mxu0 0.0
        %4764 = vmatpush.msra.mxu0 0.0
        %4765 = vmatpush.msra.mxu0 0.0
        %4766 = vmatpush.msra.mxu0 0.0
        %4767 = vmatpush.msra.mxu0 0.0
        %4768 = vmatpush.msra.mxu0 0.0
        %4769 = vmatpush.msra.mxu0 0.0
        %4770 = vmatpush.msra.mxu0 0.0
        %4771 = vmatpush.msra.mxu0 0.0
        %4772 = vmatpush.msra.mxu0 0.0
        %4773 = vmatpush.msra.mxu0 0.0
        %4774 = vmatpush.msra.mxu0 0.0
        %4775 = vmatpush.msra.mxu0 %v4076
        %4776 = vmatmul.f32.gmra.mxu0 %v4758
        %v4777 = vpop.f32.mrf.mxu0
        %v4778 = vadd.f32 0.0, %v4777
        %4779 = vdwg.mxu0
        %v4781 = vsel %vm4250, %v3881, 0
        %4783 = vmatpush.msra.mxu0 0.0
        %4784 = vmatpush.msra.mxu0 0.0
        %4785 = vmatpush.msra.mxu0 0.0
        %4786 = vmatpush.msra.mxu0 0.0
        %4787 = vmatpush.msra.mxu0 0.0
        %4788 = vmatpush.msra.mxu0 0.0
        %4789 = vmatpush.msra.mxu0 0.0
        %4790 = vmatpush.msra.mxu0 0.0
        %4791 = vmatpush.msra.mxu0 0.0
        %4792 = vmatpush.msra.mxu0 0.0
        %4793 = vmatpush.msra.mxu0 0.0
        %4794 = vmatpush.msra.mxu0 0.0
        %4795 = vmatpush.msra.mxu0 0.0
        %4796 = vmatpush.msra.mxu0 0.0
        %4797 = vmatpush.msra.mxu0 0.0
        %4798 = vmatpush.msra.mxu0 %v4077
        %4799 = vmatmul.f32.gmra.mxu0 %v4781
        %v4800 = vpop.f32.mrf.mxu0
        %v4801 = vadd.f32 0.0, %v4800
        %4802 = vdwg.mxu0
        %v4804 = vsel %vm4250, %v3882, 0
        %4806 = vmatpush.msra.mxu0 0.0
        %4807 = vmatpush.msra.mxu0 0.0
        %4808 = vmatpush.msra.mxu0 0.0
        %4809 = vmatpush.msra.mxu0 0.0
        %4810 = vmatpush.msra.mxu0 0.0
        %4811 = vmatpush.msra.mxu0 0.0
        %4812 = vmatpush.msra.mxu0 0.0
        %4813 = vmatpush.msra.mxu0 0.0
        %4814 = vmatpush.msra.mxu0 0.0
        %4815 = vmatpush.msra.mxu0 0.0
        %4816 = vmatpush.msra.mxu0 0.0
        %4817 = vmatpush.msra.mxu0 0.0
        %4818 = vmatpush.msra.mxu0 0.0
        %4819 = vmatpush.msra.mxu0 0.0
        %4820 = vmatpush.msra.mxu0 0.0
        %4821 = vmatpush.msra.mxu0 %v4078
        %4822 = vmatmul.f32.gmra.mxu0 %v4804
        %v4823 = vpop.f32.mrf.mxu0
        %v4824 = vadd.f32 0.0, %v4823
        %4825 = vdwg.mxu0
        %v4827 = vsel %vm4250, %v3883, 0
        %4829 = vmatpush.msra.mxu0 0.0
        %4830 = vmatpush.msra.mxu0 0.0
        %4831 = vmatpush.msra.mxu0 0.0
        %4832 = vmatpush.msra.mxu0 0.0
        %4833 = vmatpush.msra.mxu0 0.0
        %4834 = vmatpush.msra.mxu0 0.0
        %4835 = vmatpush.msra.mxu0 0.0
        %4836 = vmatpush.msra.mxu0 0.0
        %4837 = vmatpush.msra.mxu0 0.0
        %4838 = vmatpush.msra.mxu0 0.0
        %4839 = vmatpush.msra.mxu0 0.0
        %4840 = vmatpush.msra.mxu0 0.0
        %4841 = vmatpush.msra.mxu0 0.0
        %4842 = vmatpush.msra.mxu0 0.0
        %4843 = vmatpush.msra.mxu0 0.0
        %4844 = vmatpush.msra.mxu0 %v4079
        %4845 = vmatmul.f32.gmra.mxu0 %v4827
        %v4846 = vpop.f32.mrf.mxu0
        %v4847 = vadd.f32 0.0, %v4846
        %4848 = vdwg.mxu0
        %v4850 = vsel %vm4250, %v3884, 0
        %4852 = vmatpush.msra.mxu0 0.0
        %4853 = vmatpush.msra.mxu0 0.0
        %4854 = vmatpush.msra.mxu0 0.0
        %4855 = vmatpush.msra.mxu0 0.0
        %4856 = vmatpush.msra.mxu0 0.0
        %4857 = vmatpush.msra.mxu0 0.0
        %4858 = vmatpush.msra.mxu0 0.0
        %4859 = vmatpush.msra.mxu0 0.0
        %4860 = vmatpush.msra.mxu0 0.0
        %4861 = vmatpush.msra.mxu0 0.0
        %4862 = vmatpush.msra.mxu0 0.0
        %4863 = vmatpush.msra.mxu0 0.0
        %4864 = vmatpush.msra.mxu0 0.0
        %4865 = vmatpush.msra.mxu0 0.0
        %4866 = vmatpush.msra.mxu0 0.0
        %4867 = vmatpush.msra.mxu0 %v4080
        %4868 = vmatmul.f32.gmra.mxu0 %v4850
        %v4869 = vpop.f32.mrf.mxu0
        %v4870 = vadd.f32 0.0, %v4869
        %4871 = vdwg.mxu0
        %v4873 = vsel %vm4250, %v3885, 0
        %4875 = vmatpush.msra.mxu0 0.0
        %4876 = vmatpush.msra.mxu0 0.0
        %4877 = vmatpush.msra.mxu0 0.0
        %4878 = vmatpush.msra.mxu0 0.0
        %4879 = vmatpush.msra.mxu0 0.0
        %4880 = vmatpush.msra.mxu0 0.0
        %4881 = vmatpush.msra.mxu0 0.0
        %4882 = vmatpush.msra.mxu0 0.0
        %4883 = vmatpush.msra.mxu0 0.0
        %4884 = vmatpush.msra.mxu0 0.0
        %4885 = vmatpush.msra.mxu0 0.0
        %4886 = vmatpush.msra.mxu0 0.0
        %4887 = vmatpush.msra.mxu0 0.0
        %4888 = vmatpush.msra.mxu0 0.0
        %4889 = vmatpush.msra.mxu0 0.0
        %4890 = vmatpush.msra.mxu0 %v4081
        %4891 = vmatmul.f32.gmra.mxu0 %v4873
        %v4892 = vpop.f32.mrf.mxu0
        %v4893 = vadd.f32 0.0, %v4892
        %4894 = vdwg.mxu0
        %v4896 = vsel %vm4250, %v3886, 0
        %4898 = vmatpush.msra.mxu0 0.0
        %4899 = vmatpush.msra.mxu0 0.0
        %4900 = vmatpush.msra.mxu0 0.0
        %4901 = vmatpush.msra.mxu0 0.0
        %4902 = vmatpush.msra.mxu0 0.0
        %4903 = vmatpush.msra.mxu0 0.0
        %4904 = vmatpush.msra.mxu0 0.0
        %4905 = vmatpush.msra.mxu0 0.0
        %4906 = vmatpush.msra.mxu0 0.0
        %4907 = vmatpush.msra.mxu0 0.0
        %4908 = vmatpush.msra.mxu0 0.0
        %4909 = vmatpush.msra.mxu0 0.0
        %4910 = vmatpush.msra.mxu0 0.0
        %4911 = vmatpush.msra.mxu0 0.0
        %4912 = vmatpush.msra.mxu0 0.0
        %4913 = vmatpush.msra.mxu0 %v4082
        %4914 = vmatmul.f32.gmra.mxu0 %v4896
        %v4915 = vpop.f32.mrf.mxu0
        %v4916 = vadd.f32 0.0, %v4915
        %4917 = vdwg.mxu0
        %v4919 = vsel %vm4250, %v3887, 0
        %4921 = vmatpush.msra.mxu0 0.0
        %4922 = vmatpush.msra.mxu0 0.0
        %4923 = vmatpush.msra.mxu0 0.0
        %4924 = vmatpush.msra.mxu0 0.0
        %4925 = vmatpush.msra.mxu0 0.0
        %4926 = vmatpush.msra.mxu0 0.0
        %4927 = vmatpush.msra.mxu0 0.0
        %4928 = vmatpush.msra.mxu0 0.0
        %4929 = vmatpush.msra.mxu0 0.0
        %4930 = vmatpush.msra.mxu0 0.0
        %4931 = vmatpush.msra.mxu0 0.0
        %4932 = vmatpush.msra.mxu0 0.0
        %4933 = vmatpush.msra.mxu0 0.0
        %4934 = vmatpush.msra.mxu0 0.0
        %4935 = vmatpush.msra.mxu0 0.0
        %4936 = vmatpush.msra.mxu0 %v4083
        %4937 = vmatmul.f32.gmra.mxu0 %v4919
        %v4938 = vpop.f32.mrf.mxu0
        %v4939 = vadd.f32 0.0, %v4938
        %4940 = vdwg.mxu0
        %v4942 = vsel %vm4250, %v3888, 0
        %4944 = vmatpush.msra.mxu0 0.0
        %4945 = vmatpush.msra.mxu0 0.0
        %4946 = vmatpush.msra.mxu0 0.0
        %4947 = vmatpush.msra.mxu0 0.0
        %4948 = vmatpush.msra.mxu0 0.0
        %4949 = vmatpush.msra.mxu0 0.0
        %4950 = vmatpush.msra.mxu0 0.0
        %4951 = vmatpush.msra.mxu0 0.0
        %4952 = vmatpush.msra.mxu0 0.0
        %4953 = vmatpush.msra.mxu0 0.0
        %4954 = vmatpush.msra.mxu0 0.0
        %4955 = vmatpush.msra.mxu0 0.0
        %4956 = vmatpush.msra.mxu0 0.0
        %4957 = vmatpush.msra.mxu0 0.0
        %4958 = vmatpush.msra.mxu0 0.0
        %4959 = vmatpush.msra.mxu0 %v4084
        %4960 = vmatmul.f32.gmra.mxu0 %v4942
        %v4961 = vpop.f32.mrf.mxu0
        %v4962 = vadd.f32 0.0, %v4961
        %4963 = vdwg.mxu0
        %v4965 = vsel %vm4250, %v3889, 0
        %4967 = vmatpush.msra.mxu0 0.0
        %4968 = vmatpush.msra.mxu0 0.0
        %4969 = vmatpush.msra.mxu0 0.0
        %4970 = vmatpush.msra.mxu0 0.0
        %4971 = vmatpush.msra.mxu0 0.0
        %4972 = vmatpush.msra.mxu0 0.0
        %4973 = vmatpush.msra.mxu0 0.0
        %4974 = vmatpush.msra.mxu0 0.0
        %4975 = vmatpush.msra.mxu0 0.0
        %4976 = vmatpush.msra.mxu0 0.0
        %4977 = vmatpush.msra.mxu0 0.0
        %4978 = vmatpush.msra.mxu0 0.0
        %4979 = vmatpush.msra.mxu0 0.0
        %4980 = vmatpush.msra.mxu0 0.0
        %4981 = vmatpush.msra.mxu0 0.0
        %4982 = vmatpush.msra.mxu0 %v4085
        %4983 = vmatmul.f32.gmra.mxu0 %v4965
        %v4984 = vpop.f32.mrf.mxu0
        %v4985 = vadd.f32 0.0, %v4984
        %4986 = vdwg.mxu0
        %v4988 = vsel %vm4250, %v3890, 0
        %4990 = vmatpush.msra.mxu0 0.0
        %4991 = vmatpush.msra.mxu0 0.0
        %4992 = vmatpush.msra.mxu0 0.0
        %4993 = vmatpush.msra.mxu0 0.0
        %4994 = vmatpush.msra.mxu0 0.0
        %4995 = vmatpush.msra.mxu0 0.0
        %4996 = vmatpush.msra.mxu0 0.0
        %4997 = vmatpush.msra.mxu0 0.0
        %4998 = vmatpush.msra.mxu0 0.0
        %4999 = vmatpush.msra.mxu0 0.0
        %5000 = vmatpush.msra.mxu0 0.0
        %5001 = vmatpush.msra.mxu0 0.0
        %5002 = vmatpush.msra.mxu0 0.0
        %5003 = vmatpush.msra.mxu0 0.0
        %5004 = vmatpush.msra.mxu0 0.0
        %5005 = vmatpush.msra.mxu0 %v4086
        %5006 = vmatmul.f32.gmra.mxu0 %v4988
        %v5007 = vpop.f32.mrf.mxu0
        %v5008 = vadd.f32 0.0, %v5007
        %5009 = vdwg.mxu0
        %v5011 = vsel %vm4250, %v3891, 0
        %5013 = vmatpush.msra.mxu0 0.0
        %5014 = vmatpush.msra.mxu0 0.0
        %5015 = vmatpush.msra.mxu0 0.0
        %5016 = vmatpush.msra.mxu0 0.0
        %5017 = vmatpush.msra.mxu0 0.0
        %5018 = vmatpush.msra.mxu0 0.0
        %5019 = vmatpush.msra.mxu0 0.0
        %5020 = vmatpush.msra.mxu0 0.0
        %5021 = vmatpush.msra.mxu0 0.0
        %5022 = vmatpush.msra.mxu0 0.0
        %5023 = vmatpush.msra.mxu0 0.0
        %5024 = vmatpush.msra.mxu0 0.0
        %5025 = vmatpush.msra.mxu0 0.0
        %5026 = vmatpush.msra.mxu0 0.0
        %5027 = vmatpush.msra.mxu0 0.0
        %5028 = vmatpush.msra.mxu0 %v4087
        %5029 = vmatmul.f32.gmra.mxu0 %v5011
        %v5030 = vpop.f32.mrf.mxu0
        %v5031 = vadd.f32 0.0, %v5030
        %5032 = vdwg.mxu0
        %v5034 = vsel %vm4250, %v3892, 0
        %5036 = vmatpush.msra.mxu0 0.0
        %5037 = vmatpush.msra.mxu0 0.0
        %5038 = vmatpush.msra.mxu0 0.0
        %5039 = vmatpush.msra.mxu0 0.0
        %5040 = vmatpush.msra.mxu0 0.0
        %5041 = vmatpush.msra.mxu0 0.0
        %5042 = vmatpush.msra.mxu0 0.0
        %5043 = vmatpush.msra.mxu0 0.0
        %5044 = vmatpush.msra.mxu0 0.0
        %5045 = vmatpush.msra.mxu0 0.0
        %5046 = vmatpush.msra.mxu0 0.0
        %5047 = vmatpush.msra.mxu0 0.0
        %5048 = vmatpush.msra.mxu0 0.0
        %5049 = vmatpush.msra.mxu0 0.0
        %5050 = vmatpush.msra.mxu0 0.0
        %5051 = vmatpush.msra.mxu0 %v4088
        %5052 = vmatmul.f32.gmra.mxu0 %v5034
        %v5053 = vpop.f32.mrf.mxu0
        %v5054 = vadd.f32 0.0, %v5053
        %5055 = vdwg.mxu0
        %v5057 = vsel %vm4250, %v3893, 0
        %5059 = vmatpush.msra.mxu0 0.0
        %5060 = vmatpush.msra.mxu0 0.0
        %5061 = vmatpush.msra.mxu0 0.0
        %5062 = vmatpush.msra.mxu0 0.0
        %5063 = vmatpush.msra.mxu0 0.0
        %5064 = vmatpush.msra.mxu0 0.0
        %5065 = vmatpush.msra.mxu0 0.0
        %5066 = vmatpush.msra.mxu0 0.0
        %5067 = vmatpush.msra.mxu0 0.0
        %5068 = vmatpush.msra.mxu0 0.0
        %5069 = vmatpush.msra.mxu0 0.0
        %5070 = vmatpush.msra.mxu0 0.0
        %5071 = vmatpush.msra.mxu0 0.0
        %5072 = vmatpush.msra.mxu0 0.0
        %5073 = vmatpush.msra.mxu0 0.0
        %5074 = vmatpush.msra.mxu0 %v4089
        %5075 = vmatmul.f32.gmra.mxu0 %v5057
        %v5076 = vpop.f32.mrf.mxu0
        %v5077 = vadd.f32 0.0, %v5076
        %5078 = vdwg.mxu0
        %v5080 = vsel %vm4250, %v3894, 0
        %5082 = vmatpush.msra.mxu0 0.0
        %5083 = vmatpush.msra.mxu0 0.0
        %5084 = vmatpush.msra.mxu0 0.0
        %5085 = vmatpush.msra.mxu0 0.0
        %5086 = vmatpush.msra.mxu0 0.0
        %5087 = vmatpush.msra.mxu0 0.0
        %5088 = vmatpush.msra.mxu0 0.0
        %5089 = vmatpush.msra.mxu0 0.0
        %5090 = vmatpush.msra.mxu0 0.0
        %5091 = vmatpush.msra.mxu0 0.0
        %5092 = vmatpush.msra.mxu0 0.0
        %5093 = vmatpush.msra.mxu0 0.0
        %5094 = vmatpush.msra.mxu0 0.0
        %5095 = vmatpush.msra.mxu0 0.0
        %5096 = vmatpush.msra.mxu0 0.0
        %5097 = vmatpush.msra.mxu0 %v4090
        %5098 = vmatmul.f32.gmra.mxu0 %v5080
        %v5099 = vpop.f32.mrf.mxu0
        %v5100 = vadd.f32 0.0, %v5099
        %5101 = vdwg.mxu0
        %v5103 = vsel %vm4250, %v3895, 0
        %5105 = vmatpush.msra.mxu0 0.0
        %5106 = vmatpush.msra.mxu0 0.0
        %5107 = vmatpush.msra.mxu0 0.0
        %5108 = vmatpush.msra.mxu0 0.0
        %5109 = vmatpush.msra.mxu0 0.0
        %5110 = vmatpush.msra.mxu0 0.0
        %5111 = vmatpush.msra.mxu0 0.0
        %5112 = vmatpush.msra.mxu0 0.0
        %5113 = vmatpush.msra.mxu0 0.0
        %5114 = vmatpush.msra.mxu0 0.0
        %5115 = vmatpush.msra.mxu0 0.0
        %5116 = vmatpush.msra.mxu0 0.0
        %5117 = vmatpush.msra.mxu0 0.0
        %5118 = vmatpush.msra.mxu0 0.0
        %5119 = vmatpush.msra.mxu0 0.0
        %5120 = vmatpush.msra.mxu0 %v4091
        %5121 = vmatmul.f32.gmra.mxu0 %v5103
        %v5122 = vpop.f32.mrf.mxu0
        %v5123 = vadd.f32 0.0, %v5122
        %5124 = vdwg.mxu0
        %v5126 = vsel %vm4250, %v3896, 0
        %5128 = vmatpush.msra.mxu0 0.0
        %5129 = vmatpush.msra.mxu0 0.0
        %5130 = vmatpush.msra.mxu0 0.0
        %5131 = vmatpush.msra.mxu0 0.0
        %5132 = vmatpush.msra.mxu0 0.0
        %5133 = vmatpush.msra.mxu0 0.0
        %5134 = vmatpush.msra.mxu0 0.0
        %5135 = vmatpush.msra.mxu0 0.0
        %5136 = vmatpush.msra.mxu0 0.0
        %5137 = vmatpush.msra.mxu0 0.0
        %5138 = vmatpush.msra.mxu0 0.0
        %5139 = vmatpush.msra.mxu0 0.0
        %5140 = vmatpush.msra.mxu0 0.0
        %5141 = vmatpush.msra.mxu0 0.0
        %5142 = vmatpush.msra.mxu0 0.0
        %5143 = vmatpush.msra.mxu0 %v4092
        %5144 = vmatmul.f32.gmra.mxu0 %v5126
        %v5145 = vpop.f32.mrf.mxu0
        %v5146 = vadd.f32 0.0, %v5145
        %5147 = vdwg.mxu0
        %v5149 = vsel %vm4250, %v3897, 0
        %5151 = vmatpush.msra.mxu0 0.0
        %5152 = vmatpush.msra.mxu0 0.0
        %5153 = vmatpush.msra.mxu0 0.0
        %5154 = vmatpush.msra.mxu0 0.0
        %5155 = vmatpush.msra.mxu0 0.0
        %5156 = vmatpush.msra.mxu0 0.0
        %5157 = vmatpush.msra.mxu0 0.0
        %5158 = vmatpush.msra.mxu0 0.0
        %5159 = vmatpush.msra.mxu0 0.0
        %5160 = vmatpush.msra.mxu0 0.0
        %5161 = vmatpush.msra.mxu0 0.0
        %5162 = vmatpush.msra.mxu0 0.0
        %5163 = vmatpush.msra.mxu0 0.0
        %5164 = vmatpush.msra.mxu0 0.0
        %5165 = vmatpush.msra.mxu0 0.0
        %5166 = vmatpush.msra.mxu0 %v4093
        %5167 = vmatmul.f32.gmra.mxu0 %v5149
        %v5168 = vpop.f32.mrf.mxu0
        %v5169 = vadd.f32 0.0, %v5168
        %5170 = vdwg.mxu0
        %v5172 = vsel %vm4250, %v3898, 0
        %5174 = vmatpush.msra.mxu0 0.0
        %5175 = vmatpush.msra.mxu0 0.0
        %5176 = vmatpush.msra.mxu0 0.0
        %5177 = vmatpush.msra.mxu0 0.0
        %5178 = vmatpush.msra.mxu0 0.0
        %5179 = vmatpush.msra.mxu0 0.0
        %5180 = vmatpush.msra.mxu0 0.0
        %5181 = vmatpush.msra.mxu0 0.0
        %5182 = vmatpush.msra.mxu0 0.0
        %5183 = vmatpush.msra.mxu0 0.0
        %5184 = vmatpush.msra.mxu0 0.0
        %5185 = vmatpush.msra.mxu0 0.0
        %5186 = vmatpush.msra.mxu0 0.0
        %5187 = vmatpush.msra.mxu0 0.0
        %5188 = vmatpush.msra.mxu0 0.0
        %5189 = vmatpush.msra.mxu0 %v4094
        %5190 = vmatmul.f32.gmra.mxu0 %v5172
        %v5191 = vpop.f32.mrf.mxu0
        %v5192 = vadd.f32 0.0, %v5191
        %5193 = vdwg.mxu0
        %v5195 = vsel %vm4250, %v3899, 0
        %5197 = vmatpush.msra.mxu0 0.0
        %5198 = vmatpush.msra.mxu0 0.0
        %5199 = vmatpush.msra.mxu0 0.0
        %5200 = vmatpush.msra.mxu0 0.0
        %5201 = vmatpush.msra.mxu0 0.0
        %5202 = vmatpush.msra.mxu0 0.0
        %5203 = vmatpush.msra.mxu0 0.0
        %5204 = vmatpush.msra.mxu0 0.0
        %5205 = vmatpush.msra.mxu0 0.0
        %5206 = vmatpush.msra.mxu0 0.0
        %5207 = vmatpush.msra.mxu0 0.0
        %5208 = vmatpush.msra.mxu0 0.0
        %5209 = vmatpush.msra.mxu0 0.0
        %5210 = vmatpush.msra.mxu0 0.0
        %5211 = vmatpush.msra.mxu0 0.0
        %5212 = vmatpush.msra.mxu0 %v4095
        %5213 = vmatmul.f32.gmra.mxu0 %v5195
        %v5214 = vpop.f32.mrf.mxu0
        %v5215 = vadd.f32 0.0, %v5214
        %5216 = vdwg.mxu0
        %v5218 = vsel %vm4250, %v3900, 0
        %5220 = vmatpush.msra.mxu0 0.0
        %5221 = vmatpush.msra.mxu0 0.0
        %5222 = vmatpush.msra.mxu0 0.0
        %5223 = vmatpush.msra.mxu0 0.0
        %5224 = vmatpush.msra.mxu0 0.0
        %5225 = vmatpush.msra.mxu0 0.0
        %5226 = vmatpush.msra.mxu0 0.0
        %5227 = vmatpush.msra.mxu0 0.0
        %5228 = vmatpush.msra.mxu0 0.0
        %5229 = vmatpush.msra.mxu0 0.0
        %5230 = vmatpush.msra.mxu0 0.0
        %5231 = vmatpush.msra.mxu0 0.0
        %5232 = vmatpush.msra.mxu0 0.0
        %5233 = vmatpush.msra.mxu0 0.0
        %5234 = vmatpush.msra.mxu0 0.0
        %5235 = vmatpush.msra.mxu0 %v4096
        %5236 = vmatmul.f32.gmra.mxu0 %v5218
        %v5237 = vpop.f32.mrf.mxu0
        %v5238 = vadd.f32 0.0, %v5237
        %5239 = vdwg.mxu0
        %v5241 = vsel %vm4250, %v3901, 0
        %5243 = vmatpush.msra.mxu0 0.0
        %5244 = vmatpush.msra.mxu0 0.0
        %5245 = vmatpush.msra.mxu0 0.0
        %5246 = vmatpush.msra.mxu0 0.0
        %5247 = vmatpush.msra.mxu0 0.0
        %5248 = vmatpush.msra.mxu0 0.0
        %5249 = vmatpush.msra.mxu0 0.0
        %5250 = vmatpush.msra.mxu0 0.0
        %5251 = vmatpush.msra.mxu0 0.0
        %5252 = vmatpush.msra.mxu0 0.0
        %5253 = vmatpush.msra.mxu0 0.0
        %5254 = vmatpush.msra.mxu0 0.0
        %5255 = vmatpush.msra.mxu0 0.0
        %5256 = vmatpush.msra.mxu0 0.0
        %5257 = vmatpush.msra.mxu0 0.0
        %5258 = vmatpush.msra.mxu0 %v4097
        %5259 = vmatmul.f32.gmra.mxu0 %v5241
        %v5260 = vpop.f32.mrf.mxu0
        %v5261 = vadd.f32 0.0, %v5260
        %5262 = vdwg.mxu0
        %v5264 = vsel %vm4250, %v3902, 0
        %5266 = vmatpush.msra.mxu0 0.0
        %5267 = vmatpush.msra.mxu0 0.0
        %5268 = vmatpush.msra.mxu0 0.0
        %5269 = vmatpush.msra.mxu0 0.0
        %5270 = vmatpush.msra.mxu0 0.0
        %5271 = vmatpush.msra.mxu0 0.0
        %5272 = vmatpush.msra.mxu0 0.0
        %5273 = vmatpush.msra.mxu0 0.0
        %5274 = vmatpush.msra.mxu0 0.0
        %5275 = vmatpush.msra.mxu0 0.0
        %5276 = vmatpush.msra.mxu0 0.0
        %5277 = vmatpush.msra.mxu0 0.0
        %5278 = vmatpush.msra.mxu0 0.0
        %5279 = vmatpush.msra.mxu0 0.0
        %5280 = vmatpush.msra.mxu0 0.0
        %5281 = vmatpush.msra.mxu0 %v4098
        %5282 = vmatmul.f32.gmra.mxu0 %v5264
        %v5283 = vpop.f32.mrf.mxu0
        %v5284 = vadd.f32 0.0, %v5283
        %5285 = vdwg.mxu0
        %v5287 = vsel %vm4250, %v3903, 0
        %5289 = vmatpush.msra.mxu0 0.0
        %5290 = vmatpush.msra.mxu0 0.0
        %5291 = vmatpush.msra.mxu0 0.0
        %5292 = vmatpush.msra.mxu0 0.0
        %5293 = vmatpush.msra.mxu0 0.0
        %5294 = vmatpush.msra.mxu0 0.0
        %5295 = vmatpush.msra.mxu0 0.0
        %5296 = vmatpush.msra.mxu0 0.0
        %5297 = vmatpush.msra.mxu0 0.0
        %5298 = vmatpush.msra.mxu0 0.0
        %5299 = vmatpush.msra.mxu0 0.0
        %5300 = vmatpush.msra.mxu0 0.0
        %5301 = vmatpush.msra.mxu0 0.0
        %5302 = vmatpush.msra.mxu0 0.0
        %5303 = vmatpush.msra.mxu0 0.0
        %5304 = vmatpush.msra.mxu0 %v4099
        %5305 = vmatmul.f32.gmra.mxu0 %v5287
        %v5306 = vpop.f32.mrf.mxu0
        %v5307 = vadd.f32 0.0, %v5306
        %5308 = vdwg.mxu0
        %v5310 = vsel %vm4250, %v3904, 0
        %5312 = vmatpush.msra.mxu0 0.0
        %5313 = vmatpush.msra.mxu0 0.0
        %5314 = vmatpush.msra.mxu0 0.0
        %5315 = vmatpush.msra.mxu0 0.0
        %5316 = vmatpush.msra.mxu0 0.0
        %5317 = vmatpush.msra.mxu0 0.0
        %5318 = vmatpush.msra.mxu0 0.0
        %5319 = vmatpush.msra.mxu0 0.0
        %5320 = vmatpush.msra.mxu0 0.0
        %5321 = vmatpush.msra.mxu0 0.0
        %5322 = vmatpush.msra.mxu0 0.0
        %5323 = vmatpush.msra.mxu0 0.0
        %5324 = vmatpush.msra.mxu0 0.0
        %5325 = vmatpush.msra.mxu0 0.0
        %5326 = vmatpush.msra.mxu0 0.0
        %5327 = vmatpush.msra.mxu0 %v4100
        %5328 = vmatmul.f32.gmra.mxu0 %v5310
        %v5329 = vpop.f32.mrf.mxu0
        %v5330 = vadd.f32 0.0, %v5329
        %5331 = vdwg.mxu0
        %v5333 = vsel %vm4250, %v3905, 0
        %5335 = vmatpush.msra.mxu0 0.0
        %5336 = vmatpush.msra.mxu0 0.0
        %5337 = vmatpush.msra.mxu0 0.0
        %5338 = vmatpush.msra.mxu0 0.0
        %5339 = vmatpush.msra.mxu0 0.0
        %5340 = vmatpush.msra.mxu0 0.0
        %5341 = vmatpush.msra.mxu0 0.0
        %5342 = vmatpush.msra.mxu0 0.0
        %5343 = vmatpush.msra.mxu0 0.0
        %5344 = vmatpush.msra.mxu0 0.0
        %5345 = vmatpush.msra.mxu0 0.0
        %5346 = vmatpush.msra.mxu0 0.0
        %5347 = vmatpush.msra.mxu0 0.0
        %5348 = vmatpush.msra.mxu0 0.0
        %5349 = vmatpush.msra.mxu0 0.0
        %5350 = vmatpush.msra.mxu0 %v4101
        %5351 = vmatmul.f32.gmra.mxu0 %v5333
        %v5352 = vpop.f32.mrf.mxu0
        %v5353 = vadd.f32 0.0, %v5352
        %5354 = vdwg.mxu0
        %v5356 = vsel %vm4250, %v3906, 0
        %5358 = vmatpush.msra.mxu0 0.0
        %5359 = vmatpush.msra.mxu0 0.0
        %5360 = vmatpush.msra.mxu0 0.0
        %5361 = vmatpush.msra.mxu0 0.0
        %5362 = vmatpush.msra.mxu0 0.0
        %5363 = vmatpush.msra.mxu0 0.0
        %5364 = vmatpush.msra.mxu0 0.0
        %5365 = vmatpush.msra.mxu0 0.0
        %5366 = vmatpush.msra.mxu0 0.0
        %5367 = vmatpush.msra.mxu0 0.0
        %5368 = vmatpush.msra.mxu0 0.0
        %5369 = vmatpush.msra.mxu0 0.0
        %5370 = vmatpush.msra.mxu0 0.0
        %5371 = vmatpush.msra.mxu0 0.0
        %5372 = vmatpush.msra.mxu0 0.0
        %5373 = vmatpush.msra.mxu0 %v4102
        %5374 = vmatmul.f32.gmra.mxu0 %v5356
        %v5375 = vpop.f32.mrf.mxu0
        %v5376 = vadd.f32 0.0, %v5375
        %5377 = vdwg.mxu0
        %v5379 = vsel %vm4250, %v3907, 0
        %5381 = vmatpush.msra.mxu0 0.0
        %5382 = vmatpush.msra.mxu0 0.0
        %5383 = vmatpush.msra.mxu0 0.0
        %5384 = vmatpush.msra.mxu0 0.0
        %5385 = vmatpush.msra.mxu0 0.0
        %5386 = vmatpush.msra.mxu0 0.0
        %5387 = vmatpush.msra.mxu0 0.0
        %5388 = vmatpush.msra.mxu0 0.0
        %5389 = vmatpush.msra.mxu0 0.0
        %5390 = vmatpush.msra.mxu0 0.0
        %5391 = vmatpush.msra.mxu0 0.0
        %5392 = vmatpush.msra.mxu0 0.0
        %5393 = vmatpush.msra.mxu0 0.0
        %5394 = vmatpush.msra.mxu0 0.0
        %5395 = vmatpush.msra.mxu0 0.0
        %5396 = vmatpush.msra.mxu0 %v4103
        %5397 = vmatmul.f32.gmra.mxu0 %v5379
        %v5398 = vpop.f32.mrf.mxu0
        %v5399 = vadd.f32 0.0, %v5398
        %5400 = vdwg.mxu0
        %v5402 = vsel %vm4250, %v3908, 0
        %5404 = vmatpush.msra.mxu0 0.0
        %5405 = vmatpush.msra.mxu0 0.0
        %5406 = vmatpush.msra.mxu0 0.0
        %5407 = vmatpush.msra.mxu0 0.0
        %5408 = vmatpush.msra.mxu0 0.0
        %5409 = vmatpush.msra.mxu0 0.0
        %5410 = vmatpush.msra.mxu0 0.0
        %5411 = vmatpush.msra.mxu0 0.0
        %5412 = vmatpush.msra.mxu0 0.0
        %5413 = vmatpush.msra.mxu0 0.0
        %5414 = vmatpush.msra.mxu0 0.0
        %5415 = vmatpush.msra.mxu0 0.0
        %5416 = vmatpush.msra.mxu0 0.0
        %5417 = vmatpush.msra.mxu0 0.0
        %5418 = vmatpush.msra.mxu0 0.0
        %5419 = vmatpush.msra.mxu0 %v4104
        %5420 = vmatmul.f32.gmra.mxu0 %v5402
        %v5421 = vpop.f32.mrf.mxu0
        %v5422 = vadd.f32 0.0, %v5421
        %5423 = vdwg.mxu0
        %v5425 = vsel %vm4250, %v3909, 0
        %5427 = vmatpush.msra.mxu0 0.0
        %5428 = vmatpush.msra.mxu0 0.0
        %5429 = vmatpush.msra.mxu0 0.0
        %5430 = vmatpush.msra.mxu0 0.0
        %5431 = vmatpush.msra.mxu0 0.0
        %5432 = vmatpush.msra.mxu0 0.0
        %5433 = vmatpush.msra.mxu0 0.0
        %5434 = vmatpush.msra.mxu0 0.0
        %5435 = vmatpush.msra.mxu0 0.0
        %5436 = vmatpush.msra.mxu0 0.0
        %5437 = vmatpush.msra.mxu0 0.0
        %5438 = vmatpush.msra.mxu0 0.0
        %5439 = vmatpush.msra.mxu0 0.0
        %5440 = vmatpush.msra.mxu0 0.0
        %5441 = vmatpush.msra.mxu0 0.0
        %5442 = vmatpush.msra.mxu0 %v4105
        %5443 = vmatmul.f32.gmra.mxu0 %v5425
        %v5444 = vpop.f32.mrf.mxu0
        %v5445 = vadd.f32 0.0, %v5444
        %5446 = vdwg.mxu0
        %v5448 = vsel %vm4250, %v3910, 0
        %5450 = vmatpush.msra.mxu0 0.0
        %5451 = vmatpush.msra.mxu0 0.0
        %5452 = vmatpush.msra.mxu0 0.0
        %5453 = vmatpush.msra.mxu0 0.0
        %5454 = vmatpush.msra.mxu0 0.0
        %5455 = vmatpush.msra.mxu0 0.0
        %5456 = vmatpush.msra.mxu0 0.0
        %5457 = vmatpush.msra.mxu0 0.0
        %5458 = vmatpush.msra.mxu0 0.0
        %5459 = vmatpush.msra.mxu0 0.0
        %5460 = vmatpush.msra.mxu0 0.0
        %5461 = vmatpush.msra.mxu0 0.0
        %5462 = vmatpush.msra.mxu0 0.0
        %5463 = vmatpush.msra.mxu0 0.0
        %5464 = vmatpush.msra.mxu0 0.0
        %5465 = vmatpush.msra.mxu0 %v4106
        %5466 = vmatmul.f32.gmra.mxu0 %v5448
        %v5467 = vpop.f32.mrf.mxu0
        %v5468 = vadd.f32 0.0, %v5467
        %5469 = vdwg.mxu0
        %v5471 = vsel %vm4250, %v3911, 0
        %5473 = vmatpush.msra.mxu0 0.0
        %5474 = vmatpush.msra.mxu0 0.0
        %5475 = vmatpush.msra.mxu0 0.0
        %5476 = vmatpush.msra.mxu0 0.0
        %5477 = vmatpush.msra.mxu0 0.0
        %5478 = vmatpush.msra.mxu0 0.0
        %5479 = vmatpush.msra.mxu0 0.0
        %5480 = vmatpush.msra.mxu0 0.0
        %5481 = vmatpush.msra.mxu0 0.0
        %5482 = vmatpush.msra.mxu0 0.0
        %5483 = vmatpush.msra.mxu0 0.0
        %5484 = vmatpush.msra.mxu0 0.0
        %5485 = vmatpush.msra.mxu0 0.0
        %5486 = vmatpush.msra.mxu0 0.0
        %5487 = vmatpush.msra.mxu0 0.0
        %5488 = vmatpush.msra.mxu0 %v4107
        %5489 = vmatmul.f32.gmra.mxu0 %v5471
        %v5490 = vpop.f32.mrf.mxu0
        %v5491 = vadd.f32 0.0, %v5490
        %5492 = vdwg.mxu0
        %v5494 = vsel %vm4250, %v3912, 0
        %5496 = vmatpush.msra.mxu0 0.0
        %5497 = vmatpush.msra.mxu0 0.0
        %5498 = vmatpush.msra.mxu0 0.0
        %5499 = vmatpush.msra.mxu0 0.0
        %5500 = vmatpush.msra.mxu0 0.0
        %5501 = vmatpush.msra.mxu0 0.0
        %5502 = vmatpush.msra.mxu0 0.0
        %5503 = vmatpush.msra.mxu0 0.0
        %5504 = vmatpush.msra.mxu0 0.0
        %5505 = vmatpush.msra.mxu0 0.0
        %5506 = vmatpush.msra.mxu0 0.0
        %5507 = vmatpush.msra.mxu0 0.0
        %5508 = vmatpush.msra.mxu0 0.0
        %5509 = vmatpush.msra.mxu0 0.0
        %5510 = vmatpush.msra.mxu0 0.0
        %5511 = vmatpush.msra.mxu0 %v4108
        %5512 = vmatmul.f32.gmra.mxu0 %v5494
        %v5513 = vpop.f32.mrf.mxu0
        %v5514 = vadd.f32 0.0, %v5513
        %5515 = vdwg.mxu0
        %v5517 = vsel %vm4250, %v3913, 0
        %5519 = vmatpush.msra.mxu0 0.0
        %5520 = vmatpush.msra.mxu0 0.0
        %5521 = vmatpush.msra.mxu0 0.0
        %5522 = vmatpush.msra.mxu0 0.0
        %5523 = vmatpush.msra.mxu0 0.0
        %5524 = vmatpush.msra.mxu0 0.0
        %5525 = vmatpush.msra.mxu0 0.0
        %5526 = vmatpush.msra.mxu0 0.0
        %5527 = vmatpush.msra.mxu0 0.0
        %5528 = vmatpush.msra.mxu0 0.0
        %5529 = vmatpush.msra.mxu0 0.0
        %5530 = vmatpush.msra.mxu0 0.0
        %5531 = vmatpush.msra.mxu0 0.0
        %5532 = vmatpush.msra.mxu0 0.0
        %5533 = vmatpush.msra.mxu0 0.0
        %5534 = vmatpush.msra.mxu0 %v4109
        %5535 = vmatmul.f32.gmra.mxu0 %v5517
        %v5536 = vpop.f32.mrf.mxu0
        %v5537 = vadd.f32 0.0, %v5536
        %5538 = vdwg.mxu0
        %v5540 = vsel %vm4250, %v3914, 0
        %5542 = vmatpush.msra.mxu0 0.0
        %5543 = vmatpush.msra.mxu0 0.0
        %5544 = vmatpush.msra.mxu0 0.0
        %5545 = vmatpush.msra.mxu0 0.0
        %5546 = vmatpush.msra.mxu0 0.0
        %5547 = vmatpush.msra.mxu0 0.0
        %5548 = vmatpush.msra.mxu0 0.0
        %5549 = vmatpush.msra.mxu0 0.0
        %5550 = vmatpush.msra.mxu0 0.0
        %5551 = vmatpush.msra.mxu0 0.0
        %5552 = vmatpush.msra.mxu0 0.0
        %5553 = vmatpush.msra.mxu0 0.0
        %5554 = vmatpush.msra.mxu0 0.0
        %5555 = vmatpush.msra.mxu0 0.0
        %5556 = vmatpush.msra.mxu0 0.0
        %5557 = vmatpush.msra.mxu0 %v4110
        %5558 = vmatmul.f32.gmra.mxu0 %v5540
        %v5559 = vpop.f32.mrf.mxu0
        %v5560 = vadd.f32 0.0, %v5559
        %5561 = vdwg.mxu0
        %v5563 = vsel %vm4250, %v3915, 0
        %5565 = vmatpush.msra.mxu0 0.0
        %5566 = vmatpush.msra.mxu0 0.0
        %5567 = vmatpush.msra.mxu0 0.0
        %5568 = vmatpush.msra.mxu0 0.0
        %5569 = vmatpush.msra.mxu0 0.0
        %5570 = vmatpush.msra.mxu0 0.0
        %5571 = vmatpush.msra.mxu0 0.0
        %5572 = vmatpush.msra.mxu0 0.0
        %5573 = vmatpush.msra.mxu0 0.0
        %5574 = vmatpush.msra.mxu0 0.0
        %5575 = vmatpush.msra.mxu0 0.0
        %5576 = vmatpush.msra.mxu0 0.0
        %5577 = vmatpush.msra.mxu0 0.0
        %5578 = vmatpush.msra.mxu0 0.0
        %5579 = vmatpush.msra.mxu0 0.0
        %5580 = vmatpush.msra.mxu0 %v4111
        %5581 = vmatmul.f32.gmra.mxu0 %v5563
        %v5582 = vpop.f32.mrf.mxu0
        %v5583 = vadd.f32 0.0, %v5582
        %5584 = vdwg.mxu0
        %v5586 = vsel %vm4250, %v3916, 0
        %5588 = vmatpush.msra.mxu0 0.0
        %5589 = vmatpush.msra.mxu0 0.0
        %5590 = vmatpush.msra.mxu0 0.0
        %5591 = vmatpush.msra.mxu0 0.0
        %5592 = vmatpush.msra.mxu0 0.0
        %5593 = vmatpush.msra.mxu0 0.0
        %5594 = vmatpush.msra.mxu0 0.0
        %5595 = vmatpush.msra.mxu0 0.0
        %5596 = vmatpush.msra.mxu0 0.0
        %5597 = vmatpush.msra.mxu0 0.0
        %5598 = vmatpush.msra.mxu0 0.0
        %5599 = vmatpush.msra.mxu0 0.0
        %5600 = vmatpush.msra.mxu0 0.0
        %5601 = vmatpush.msra.mxu0 0.0
        %5602 = vmatpush.msra.mxu0 0.0
        %5603 = vmatpush.msra.mxu0 %v4112
        %5604 = vmatmul.f32.gmra.mxu0 %v5586
        %v5605 = vpop.f32.mrf.mxu0
        %v5606 = vadd.f32 0.0, %v5605
        %5607 = vdwg.mxu0
        %v5609 = vsel %vm4250, %v3917, 0
        %5611 = vmatpush.msra.mxu0 0.0
        %5612 = vmatpush.msra.mxu0 0.0
        %5613 = vmatpush.msra.mxu0 0.0
        %5614 = vmatpush.msra.mxu0 0.0
        %5615 = vmatpush.msra.mxu0 0.0
        %5616 = vmatpush.msra.mxu0 0.0
        %5617 = vmatpush.msra.mxu0 0.0
        %5618 = vmatpush.msra.mxu0 0.0
        %5619 = vmatpush.msra.mxu0 0.0
        %5620 = vmatpush.msra.mxu0 0.0
        %5621 = vmatpush.msra.mxu0 0.0
        %5622 = vmatpush.msra.mxu0 0.0
        %5623 = vmatpush.msra.mxu0 0.0
        %5624 = vmatpush.msra.mxu0 0.0
        %5625 = vmatpush.msra.mxu0 0.0
        %5626 = vmatpush.msra.mxu0 %v4113
        %5627 = vmatmul.f32.gmra.mxu0 %v5609
        %v5628 = vpop.f32.mrf.mxu0
        %v5629 = vadd.f32 0.0, %v5628
        %5630 = vdwg.mxu0
        %v5632 = vsel %vm4250, %v3918, 0
        %5634 = vmatpush.msra.mxu0 0.0
        %5635 = vmatpush.msra.mxu0 0.0
        %5636 = vmatpush.msra.mxu0 0.0
        %5637 = vmatpush.msra.mxu0 0.0
        %5638 = vmatpush.msra.mxu0 0.0
        %5639 = vmatpush.msra.mxu0 0.0
        %5640 = vmatpush.msra.mxu0 0.0
        %5641 = vmatpush.msra.mxu0 0.0
        %5642 = vmatpush.msra.mxu0 0.0
        %5643 = vmatpush.msra.mxu0 0.0
        %5644 = vmatpush.msra.mxu0 0.0
        %5645 = vmatpush.msra.mxu0 0.0
        %5646 = vmatpush.msra.mxu0 0.0
        %5647 = vmatpush.msra.mxu0 0.0
        %5648 = vmatpush.msra.mxu0 0.0
        %5649 = vmatpush.msra.mxu0 %v4114
        %5650 = vmatmul.f32.gmra.mxu0 %v5632
        %v5651 = vpop.f32.mrf.mxu0
        %v5652 = vadd.f32 0.0, %v5651
        %5653 = vdwg.mxu0
        %v5655 = vsel %vm4250, %v3919, 0
        %5657 = vmatpush.msra.mxu0 0.0
        %5658 = vmatpush.msra.mxu0 0.0
        %5659 = vmatpush.msra.mxu0 0.0
        %5660 = vmatpush.msra.mxu0 0.0
        %5661 = vmatpush.msra.mxu0 0.0
        %5662 = vmatpush.msra.mxu0 0.0
        %5663 = vmatpush.msra.mxu0 0.0
        %5664 = vmatpush.msra.mxu0 0.0
        %5665 = vmatpush.msra.mxu0 0.0
        %5666 = vmatpush.msra.mxu0 0.0
        %5667 = vmatpush.msra.mxu0 0.0
        %5668 = vmatpush.msra.mxu0 0.0
        %5669 = vmatpush.msra.mxu0 0.0
        %5670 = vmatpush.msra.mxu0 0.0
        %5671 = vmatpush.msra.mxu0 0.0
        %5672 = vmatpush.msra.mxu0 %v4115
        %5673 = vmatmul.f32.gmra.mxu0 %v5655
        %v5674 = vpop.f32.mrf.mxu0
        %v5675 = vadd.f32 0.0, %v5674
        %5676 = vdwg.mxu0
        %v5678 = vsel %vm4250, %v3920, 0
        %5680 = vmatpush.msra.mxu0 0.0
        %5681 = vmatpush.msra.mxu0 0.0
        %5682 = vmatpush.msra.mxu0 0.0
        %5683 = vmatpush.msra.mxu0 0.0
        %5684 = vmatpush.msra.mxu0 0.0
        %5685 = vmatpush.msra.mxu0 0.0
        %5686 = vmatpush.msra.mxu0 0.0
        %5687 = vmatpush.msra.mxu0 0.0
        %5688 = vmatpush.msra.mxu0 0.0
        %5689 = vmatpush.msra.mxu0 0.0
        %5690 = vmatpush.msra.mxu0 0.0
        %5691 = vmatpush.msra.mxu0 0.0
        %5692 = vmatpush.msra.mxu0 0.0
        %5693 = vmatpush.msra.mxu0 0.0
        %5694 = vmatpush.msra.mxu0 0.0
        %5695 = vmatpush.msra.mxu0 %v4116
        %5696 = vmatmul.f32.gmra.mxu0 %v5678
        %v5697 = vpop.f32.mrf.mxu0
        %v5698 = vadd.f32 0.0, %v5697
        %5699 = vdwg.mxu0
        %v5701 = vsel %vm4250, %v3921, 0
        %5703 = vmatpush.msra.mxu0 0.0
        %5704 = vmatpush.msra.mxu0 0.0
        %5705 = vmatpush.msra.mxu0 0.0
        %5706 = vmatpush.msra.mxu0 0.0
        %5707 = vmatpush.msra.mxu0 0.0
        %5708 = vmatpush.msra.mxu0 0.0
        %5709 = vmatpush.msra.mxu0 0.0
        %5710 = vmatpush.msra.mxu0 0.0
        %5711 = vmatpush.msra.mxu0 0.0
        %5712 = vmatpush.msra.mxu0 0.0
        %5713 = vmatpush.msra.mxu0 0.0
        %5714 = vmatpush.msra.mxu0 0.0
        %5715 = vmatpush.msra.mxu0 0.0
        %5716 = vmatpush.msra.mxu0 0.0
        %5717 = vmatpush.msra.mxu0 0.0
        %5718 = vmatpush.msra.mxu0 %v4117
        %5719 = vmatmul.f32.gmra.mxu0 %v5701
        %v5720 = vpop.f32.mrf.mxu0
        %v5721 = vadd.f32 0.0, %v5720
        %5722 = vdwg.mxu0
        %v5724 = vsel %vm4250, %v3922, 0
        %5726 = vmatpush.msra.mxu0 0.0
        %5727 = vmatpush.msra.mxu0 0.0
        %5728 = vmatpush.msra.mxu0 0.0
        %5729 = vmatpush.msra.mxu0 0.0
        %5730 = vmatpush.msra.mxu0 0.0
        %5731 = vmatpush.msra.mxu0 0.0
        %5732 = vmatpush.msra.mxu0 0.0
        %5733 = vmatpush.msra.mxu0 0.0
        %5734 = vmatpush.msra.mxu0 0.0
        %5735 = vmatpush.msra.mxu0 0.0
        %5736 = vmatpush.msra.mxu0 0.0
        %5737 = vmatpush.msra.mxu0 0.0
        %5738 = vmatpush.msra.mxu0 0.0
        %5739 = vmatpush.msra.mxu0 0.0
        %5740 = vmatpush.msra.mxu0 0.0
        %5741 = vmatpush.msra.mxu0 %v4118
        %5742 = vmatmul.f32.gmra.mxu0 %v5724
        %v5743 = vpop.f32.mrf.mxu0
        %v5744 = vadd.f32 0.0, %v5743
        %5745 = vdwg.mxu0
        %v5747 = vsel %vm4250, %v3923, 0
        %5749 = vmatpush.msra.mxu0 0.0
        %5750 = vmatpush.msra.mxu0 0.0
        %5751 = vmatpush.msra.mxu0 0.0
        %5752 = vmatpush.msra.mxu0 0.0
        %5753 = vmatpush.msra.mxu0 0.0
        %5754 = vmatpush.msra.mxu0 0.0
        %5755 = vmatpush.msra.mxu0 0.0
        %5756 = vmatpush.msra.mxu0 0.0
        %5757 = vmatpush.msra.mxu0 0.0
        %5758 = vmatpush.msra.mxu0 0.0
        %5759 = vmatpush.msra.mxu0 0.0
        %5760 = vmatpush.msra.mxu0 0.0
        %5761 = vmatpush.msra.mxu0 0.0
        %5762 = vmatpush.msra.mxu0 0.0
        %5763 = vmatpush.msra.mxu0 0.0
        %5764 = vmatpush.msra.mxu0 %v4119
        %5765 = vmatmul.f32.gmra.mxu0 %v5747
        %v5766 = vpop.f32.mrf.mxu0
        %v5767 = vadd.f32 0.0, %v5766
        %5768 = vdwg.mxu0
        %v5770 = vsel %vm4250, %v3924, 0
        %5772 = vmatpush.msra.mxu0 0.0
        %5773 = vmatpush.msra.mxu0 0.0
        %5774 = vmatpush.msra.mxu0 0.0
        %5775 = vmatpush.msra.mxu0 0.0
        %5776 = vmatpush.msra.mxu0 0.0
        %5777 = vmatpush.msra.mxu0 0.0
        %5778 = vmatpush.msra.mxu0 0.0
        %5779 = vmatpush.msra.mxu0 0.0
        %5780 = vmatpush.msra.mxu0 0.0
        %5781 = vmatpush.msra.mxu0 0.0
        %5782 = vmatpush.msra.mxu0 0.0
        %5783 = vmatpush.msra.mxu0 0.0
        %5784 = vmatpush.msra.mxu0 0.0
        %5785 = vmatpush.msra.mxu0 0.0
        %5786 = vmatpush.msra.mxu0 0.0
        %5787 = vmatpush.msra.mxu0 %v4120
        %5788 = vmatmul.f32.gmra.mxu0 %v5770
        %v5789 = vpop.f32.mrf.mxu0
        %v5790 = vadd.f32 0.0, %v5789
        %5791 = vdwg.mxu0
        %v5793 = vsel %vm4250, %v3925, 0
        %5795 = vmatpush.msra.mxu0 0.0
        %5796 = vmatpush.msra.mxu0 0.0
        %5797 = vmatpush.msra.mxu0 0.0
        %5798 = vmatpush.msra.mxu0 0.0
        %5799 = vmatpush.msra.mxu0 0.0
        %5800 = vmatpush.msra.mxu0 0.0
        %5801 = vmatpush.msra.mxu0 0.0
        %5802 = vmatpush.msra.mxu0 0.0
        %5803 = vmatpush.msra.mxu0 0.0
        %5804 = vmatpush.msra.mxu0 0.0
        %5805 = vmatpush.msra.mxu0 0.0
        %5806 = vmatpush.msra.mxu0 0.0
        %5807 = vmatpush.msra.mxu0 0.0
        %5808 = vmatpush.msra.mxu0 0.0
        %5809 = vmatpush.msra.mxu0 0.0
        %5810 = vmatpush.msra.mxu0 %v4121
        %5811 = vmatmul.f32.gmra.mxu0 %v5793
        %v5812 = vpop.f32.mrf.mxu0
        %v5813 = vadd.f32 0.0, %v5812
        %5814 = vdwg.mxu0
        %v5816 = vsel %vm4250, %v3926, 0
        %5818 = vmatpush.msra.mxu0 0.0
        %5819 = vmatpush.msra.mxu0 0.0
        %5820 = vmatpush.msra.mxu0 0.0
        %5821 = vmatpush.msra.mxu0 0.0
        %5822 = vmatpush.msra.mxu0 0.0
        %5823 = vmatpush.msra.mxu0 0.0
        %5824 = vmatpush.msra.mxu0 0.0
        %5825 = vmatpush.msra.mxu0 0.0
        %5826 = vmatpush.msra.mxu0 0.0
        %5827 = vmatpush.msra.mxu0 0.0
        %5828 = vmatpush.msra.mxu0 0.0
        %5829 = vmatpush.msra.mxu0 0.0
        %5830 = vmatpush.msra.mxu0 0.0
        %5831 = vmatpush.msra.mxu0 0.0
        %5832 = vmatpush.msra.mxu0 0.0
        %5833 = vmatpush.msra.mxu0 %v4122
        %5834 = vmatmul.f32.gmra.mxu0 %v5816
        %v5835 = vpop.f32.mrf.mxu0
        %v5836 = vadd.f32 0.0, %v5835
        %5837 = vdwg.mxu0
        %v5839 = vsel %vm4250, %v3927, 0
        %5841 = vmatpush.msra.mxu0 0.0
        %5842 = vmatpush.msra.mxu0 0.0
        %5843 = vmatpush.msra.mxu0 0.0
        %5844 = vmatpush.msra.mxu0 0.0
        %5845 = vmatpush.msra.mxu0 0.0
        %5846 = vmatpush.msra.mxu0 0.0
        %5847 = vmatpush.msra.mxu0 0.0
        %5848 = vmatpush.msra.mxu0 0.0
        %5849 = vmatpush.msra.mxu0 0.0
        %5850 = vmatpush.msra.mxu0 0.0
        %5851 = vmatpush.msra.mxu0 0.0
        %5852 = vmatpush.msra.mxu0 0.0
        %5853 = vmatpush.msra.mxu0 0.0
        %5854 = vmatpush.msra.mxu0 0.0
        %5855 = vmatpush.msra.mxu0 0.0
        %5856 = vmatpush.msra.mxu0 %v4123
        %5857 = vmatmul.f32.gmra.mxu0 %v5839
        %v5858 = vpop.f32.mrf.mxu0
        %v5859 = vadd.f32 0.0, %v5858
        %5860 = vdwg.mxu0
        %v5862 = vsel %vm4250, %v3928, 0
        %5864 = vmatpush.msra.mxu0 0.0
        %5865 = vmatpush.msra.mxu0 0.0
        %5866 = vmatpush.msra.mxu0 0.0
        %5867 = vmatpush.msra.mxu0 0.0
        %5868 = vmatpush.msra.mxu0 0.0
        %5869 = vmatpush.msra.mxu0 0.0
        %5870 = vmatpush.msra.mxu0 0.0
        %5871 = vmatpush.msra.mxu0 0.0
        %5872 = vmatpush.msra.mxu0 0.0
        %5873 = vmatpush.msra.mxu0 0.0
        %5874 = vmatpush.msra.mxu0 0.0
        %5875 = vmatpush.msra.mxu0 0.0
        %5876 = vmatpush.msra.mxu0 0.0
        %5877 = vmatpush.msra.mxu0 0.0
        %5878 = vmatpush.msra.mxu0 0.0
        %5879 = vmatpush.msra.mxu0 %v4124
        %5880 = vmatmul.f32.gmra.mxu0 %v5862
        %v5881 = vpop.f32.mrf.mxu0
        %v5882 = vadd.f32 0.0, %v5881
        %5883 = vdwg.mxu0
        %v5885 = vsel %vm4250, %v3929, 0
        %5887 = vmatpush.msra.mxu0 0.0
        %5888 = vmatpush.msra.mxu0 0.0
        %5889 = vmatpush.msra.mxu0 0.0
        %5890 = vmatpush.msra.mxu0 0.0
        %5891 = vmatpush.msra.mxu0 0.0
        %5892 = vmatpush.msra.mxu0 0.0
        %5893 = vmatpush.msra.mxu0 0.0
        %5894 = vmatpush.msra.mxu0 0.0
        %5895 = vmatpush.msra.mxu0 0.0
        %5896 = vmatpush.msra.mxu0 0.0
        %5897 = vmatpush.msra.mxu0 0.0
        %5898 = vmatpush.msra.mxu0 0.0
        %5899 = vmatpush.msra.mxu0 0.0
        %5900 = vmatpush.msra.mxu0 0.0
        %5901 = vmatpush.msra.mxu0 0.0
        %5902 = vmatpush.msra.mxu0 %v4125
        %5903 = vmatmul.f32.gmra.mxu0 %v5885
        %v5904 = vpop.f32.mrf.mxu0
        %v5905 = vadd.f32 0.0, %v5904
        %5906 = vdwg.mxu0
        %v5908 = vsel %vm4250, %v3930, 0
        %5910 = vmatpush.msra.mxu0 0.0
        %5911 = vmatpush.msra.mxu0 0.0
        %5912 = vmatpush.msra.mxu0 0.0
        %5913 = vmatpush.msra.mxu0 0.0
        %5914 = vmatpush.msra.mxu0 0.0
        %5915 = vmatpush.msra.mxu0 0.0
        %5916 = vmatpush.msra.mxu0 0.0
        %5917 = vmatpush.msra.mxu0 0.0
        %5918 = vmatpush.msra.mxu0 0.0
        %5919 = vmatpush.msra.mxu0 0.0
        %5920 = vmatpush.msra.mxu0 0.0
        %5921 = vmatpush.msra.mxu0 0.0
        %5922 = vmatpush.msra.mxu0 0.0
        %5923 = vmatpush.msra.mxu0 0.0
        %5924 = vmatpush.msra.mxu0 0.0
        %5925 = vmatpush.msra.mxu0 %v4126
        %5926 = vmatmul.f32.gmra.mxu0 %v5908
        %v5927 = vpop.f32.mrf.mxu0
        %v5928 = vadd.f32 0.0, %v5927
        %5929 = vdwg.mxu0
        %v5931 = vsel %vm4250, %v3931, 0
        %5933 = vmatpush.msra.mxu0 0.0
        %5934 = vmatpush.msra.mxu0 0.0
        %5935 = vmatpush.msra.mxu0 0.0
        %5936 = vmatpush.msra.mxu0 0.0
        %5937 = vmatpush.msra.mxu0 0.0
        %5938 = vmatpush.msra.mxu0 0.0
        %5939 = vmatpush.msra.mxu0 0.0
        %5940 = vmatpush.msra.mxu0 0.0
        %5941 = vmatpush.msra.mxu0 0.0
        %5942 = vmatpush.msra.mxu0 0.0
        %5943 = vmatpush.msra.mxu0 0.0
        %5944 = vmatpush.msra.mxu0 0.0
        %5945 = vmatpush.msra.mxu0 0.0
        %5946 = vmatpush.msra.mxu0 0.0
        %5947 = vmatpush.msra.mxu0 0.0
        %5948 = vmatpush.msra.mxu0 %v4127
        %5949 = vmatmul.f32.gmra.mxu0 %v5931
        %v5950 = vpop.f32.mrf.mxu0
        %v5951 = vadd.f32 0.0, %v5950
        %5952 = vdwg.mxu0
        %v5954 = vsel %vm4250, %v3932, 0
        %5956 = vmatpush.msra.mxu0 0.0
        %5957 = vmatpush.msra.mxu0 0.0
        %5958 = vmatpush.msra.mxu0 0.0
        %5959 = vmatpush.msra.mxu0 0.0
        %5960 = vmatpush.msra.mxu0 0.0
        %5961 = vmatpush.msra.mxu0 0.0
        %5962 = vmatpush.msra.mxu0 0.0
        %5963 = vmatpush.msra.mxu0 0.0
        %5964 = vmatpush.msra.mxu0 0.0
        %5965 = vmatpush.msra.mxu0 0.0
        %5966 = vmatpush.msra.mxu0 0.0
        %5967 = vmatpush.msra.mxu0 0.0
        %5968 = vmatpush.msra.mxu0 0.0
        %5969 = vmatpush.msra.mxu0 0.0
        %5970 = vmatpush.msra.mxu0 0.0
        %5971 = vmatpush.msra.mxu0 %v4128
        %5972 = vmatmul.f32.gmra.mxu0 %v5954
        %v5973 = vpop.f32.mrf.mxu0
        %v5974 = vadd.f32 0.0, %v5973
        %5975 = vdwg.mxu0
        %v5977 = vsel %vm4250, %v3933, 0
        %5979 = vmatpush.msra.mxu0 0.0
        %5980 = vmatpush.msra.mxu0 0.0
        %5981 = vmatpush.msra.mxu0 0.0
        %5982 = vmatpush.msra.mxu0 0.0
        %5983 = vmatpush.msra.mxu0 0.0
        %5984 = vmatpush.msra.mxu0 0.0
        %5985 = vmatpush.msra.mxu0 0.0
        %5986 = vmatpush.msra.mxu0 0.0
        %5987 = vmatpush.msra.mxu0 0.0
        %5988 = vmatpush.msra.mxu0 0.0
        %5989 = vmatpush.msra.mxu0 0.0
        %5990 = vmatpush.msra.mxu0 0.0
        %5991 = vmatpush.msra.mxu0 0.0
        %5992 = vmatpush.msra.mxu0 0.0
        %5993 = vmatpush.msra.mxu0 0.0
        %5994 = vmatpush.msra.mxu0 %v4129
        %5995 = vmatmul.f32.gmra.mxu0 %v5977
        %v5996 = vpop.f32.mrf.mxu0
        %v5997 = vadd.f32 0.0, %v5996
        %5998 = vdwg.mxu0
        %v6000 = vsel %vm4250, %v3934, 0
        %6002 = vmatpush.msra.mxu0 0.0
        %6003 = vmatpush.msra.mxu0 0.0
        %6004 = vmatpush.msra.mxu0 0.0
        %6005 = vmatpush.msra.mxu0 0.0
        %6006 = vmatpush.msra.mxu0 0.0
        %6007 = vmatpush.msra.mxu0 0.0
        %6008 = vmatpush.msra.mxu0 0.0
        %6009 = vmatpush.msra.mxu0 0.0
        %6010 = vmatpush.msra.mxu0 0.0
        %6011 = vmatpush.msra.mxu0 0.0
        %6012 = vmatpush.msra.mxu0 0.0
        %6013 = vmatpush.msra.mxu0 0.0
        %6014 = vmatpush.msra.mxu0 0.0
        %6015 = vmatpush.msra.mxu0 0.0
        %6016 = vmatpush.msra.mxu0 0.0
        %6017 = vmatpush.msra.mxu0 %v4130
        %6018 = vmatmul.f32.gmra.mxu0 %v6000
        %v6019 = vpop.f32.mrf.mxu0
        %v6020 = vadd.f32 0.0, %v6019
        %6021 = vdwg.mxu0
        %v6023 = vsel %vm4250, %v3935, 0
        %6025 = vmatpush.msra.mxu0 0.0
        %6026 = vmatpush.msra.mxu0 0.0
        %6027 = vmatpush.msra.mxu0 0.0
        %6028 = vmatpush.msra.mxu0 0.0
        %6029 = vmatpush.msra.mxu0 0.0
        %6030 = vmatpush.msra.mxu0 0.0
        %6031 = vmatpush.msra.mxu0 0.0
        %6032 = vmatpush.msra.mxu0 0.0
        %6033 = vmatpush.msra.mxu0 0.0
        %6034 = vmatpush.msra.mxu0 0.0
        %6035 = vmatpush.msra.mxu0 0.0
        %6036 = vmatpush.msra.mxu0 0.0
        %6037 = vmatpush.msra.mxu0 0.0
        %6038 = vmatpush.msra.mxu0 0.0
        %6039 = vmatpush.msra.mxu0 0.0
        %6040 = vmatpush.msra.mxu0 %v4131
        %6041 = vmatmul.f32.gmra.mxu0 %v6023
        %v6042 = vpop.f32.mrf.mxu0
        %v6043 = vadd.f32 0.0, %v6042
        %6044 = vdwg.mxu0
        %v6046 = vsel %vm4250, %v3936, 0
        %6048 = vmatpush.msra.mxu0 0.0
        %6049 = vmatpush.msra.mxu0 0.0
        %6050 = vmatpush.msra.mxu0 0.0
        %6051 = vmatpush.msra.mxu0 0.0
        %6052 = vmatpush.msra.mxu0 0.0
        %6053 = vmatpush.msra.mxu0 0.0
        %6054 = vmatpush.msra.mxu0 0.0
        %6055 = vmatpush.msra.mxu0 0.0
        %6056 = vmatpush.msra.mxu0 0.0
        %6057 = vmatpush.msra.mxu0 0.0
        %6058 = vmatpush.msra.mxu0 0.0
        %6059 = vmatpush.msra.mxu0 0.0
        %6060 = vmatpush.msra.mxu0 0.0
        %6061 = vmatpush.msra.mxu0 0.0
        %6062 = vmatpush.msra.mxu0 0.0
        %6063 = vmatpush.msra.mxu0 %v4132
        %6064 = vmatmul.f32.gmra.mxu0 %v6046
        %v6065 = vpop.f32.mrf.mxu0
        %v6066 = vadd.f32 0.0, %v6065
        %6067 = vdwg.mxu0
        %v6069 = vsel %vm4250, %v3937, 0
        %6071 = vmatpush.msra.mxu0 0.0
        %6072 = vmatpush.msra.mxu0 0.0
        %6073 = vmatpush.msra.mxu0 0.0
        %6074 = vmatpush.msra.mxu0 0.0
        %6075 = vmatpush.msra.mxu0 0.0
        %6076 = vmatpush.msra.mxu0 0.0
        %6077 = vmatpush.msra.mxu0 0.0
        %6078 = vmatpush.msra.mxu0 0.0
        %6079 = vmatpush.msra.mxu0 0.0
        %6080 = vmatpush.msra.mxu0 0.0
        %6081 = vmatpush.msra.mxu0 0.0
        %6082 = vmatpush.msra.mxu0 0.0
        %6083 = vmatpush.msra.mxu0 0.0
        %6084 = vmatpush.msra.mxu0 0.0
        %6085 = vmatpush.msra.mxu0 0.0
        %6086 = vmatpush.msra.mxu0 %v4133
        %6087 = vmatmul.f32.gmra.mxu0 %v6069
        %v6088 = vpop.f32.mrf.mxu0
        %v6089 = vadd.f32 0.0, %v6088
        %6090 = vdwg.mxu0
        %v6092 = vsel %vm4250, %v3938, 0
        %6094 = vmatpush.msra.mxu0 0.0
        %6095 = vmatpush.msra.mxu0 0.0
        %6096 = vmatpush.msra.mxu0 0.0
        %6097 = vmatpush.msra.mxu0 0.0
        %6098 = vmatpush.msra.mxu0 0.0
        %6099 = vmatpush.msra.mxu0 0.0
        %6100 = vmatpush.msra.mxu0 0.0
        %6101 = vmatpush.msra.mxu0 0.0
        %6102 = vmatpush.msra.mxu0 0.0
        %6103 = vmatpush.msra.mxu0 0.0
        %6104 = vmatpush.msra.mxu0 0.0
        %6105 = vmatpush.msra.mxu0 0.0
        %6106 = vmatpush.msra.mxu0 0.0
        %6107 = vmatpush.msra.mxu0 0.0
        %6108 = vmatpush.msra.mxu0 0.0
        %6109 = vmatpush.msra.mxu0 %v4134
        %6110 = vmatmul.f32.gmra.mxu0 %v6092
        %v6111 = vpop.f32.mrf.mxu0
        %v6112 = vadd.f32 0.0, %v6111
        %6113 = vdwg.mxu0
        %v6115 = vsel %vm4250, %v3939, 0
        %6117 = vmatpush.msra.mxu0 0.0
        %6118 = vmatpush.msra.mxu0 0.0
        %6119 = vmatpush.msra.mxu0 0.0
        %6120 = vmatpush.msra.mxu0 0.0
        %6121 = vmatpush.msra.mxu0 0.0
        %6122 = vmatpush.msra.mxu0 0.0
        %6123 = vmatpush.msra.mxu0 0.0
        %6124 = vmatpush.msra.mxu0 0.0
        %6125 = vmatpush.msra.mxu0 0.0
        %6126 = vmatpush.msra.mxu0 0.0
        %6127 = vmatpush.msra.mxu0 0.0
        %6128 = vmatpush.msra.mxu0 0.0
        %6129 = vmatpush.msra.mxu0 0.0
        %6130 = vmatpush.msra.mxu0 0.0
        %6131 = vmatpush.msra.mxu0 0.0
        %6132 = vmatpush.msra.mxu0 %v4135
        %6133 = vmatmul.f32.gmra.mxu0 %v6115
        %v6134 = vpop.f32.mrf.mxu0
        %v6135 = vadd.f32 0.0, %v6134
        %6136 = vdwg.mxu0
        %v6138 = vsel %vm4250, %v3940, 0
        %6140 = vmatpush.msra.mxu0 0.0
        %6141 = vmatpush.msra.mxu0 0.0
        %6142 = vmatpush.msra.mxu0 0.0
        %6143 = vmatpush.msra.mxu0 0.0
        %6144 = vmatpush.msra.mxu0 0.0
        %6145 = vmatpush.msra.mxu0 0.0
        %6146 = vmatpush.msra.mxu0 0.0
        %6147 = vmatpush.msra.mxu0 0.0
        %6148 = vmatpush.msra.mxu0 0.0
        %6149 = vmatpush.msra.mxu0 0.0
        %6150 = vmatpush.msra.mxu0 0.0
        %6151 = vmatpush.msra.mxu0 0.0
        %6152 = vmatpush.msra.mxu0 0.0
        %6153 = vmatpush.msra.mxu0 0.0
        %6154 = vmatpush.msra.mxu0 0.0
        %6155 = vmatpush.msra.mxu0 %v4136
        %6156 = vmatmul.f32.gmra.mxu0 %v6138
        %v6157 = vpop.f32.mrf.mxu0
        %v6158 = vadd.f32 0.0, %v6157
        %6159 = vdwg.mxu0
        %v6161 = vsel %vm4250, %v3941, 0
        %6163 = vmatpush.msra.mxu0 0.0
        %6164 = vmatpush.msra.mxu0 0.0
        %6165 = vmatpush.msra.mxu0 0.0
        %6166 = vmatpush.msra.mxu0 0.0
        %6167 = vmatpush.msra.mxu0 0.0
        %6168 = vmatpush.msra.mxu0 0.0
        %6169 = vmatpush.msra.mxu0 0.0
        %6170 = vmatpush.msra.mxu0 0.0
        %6171 = vmatpush.msra.mxu0 0.0
        %6172 = vmatpush.msra.mxu0 0.0
        %6173 = vmatpush.msra.mxu0 0.0
        %6174 = vmatpush.msra.mxu0 0.0
        %6175 = vmatpush.msra.mxu0 0.0
        %6176 = vmatpush.msra.mxu0 0.0
        %6177 = vmatpush.msra.mxu0 0.0
        %6178 = vmatpush.msra.mxu0 %v4137
        %6179 = vmatmul.f32.gmra.mxu0 %v6161
        %v6180 = vpop.f32.mrf.mxu0
        %v6181 = vadd.f32 0.0, %v6180
        %6182 = vdwg.mxu0
        %v6184 = vsel %vm4250, %v3942, 0
        %6186 = vmatpush.msra.mxu0 0.0
        %6187 = vmatpush.msra.mxu0 0.0
        %6188 = vmatpush.msra.mxu0 0.0
        %6189 = vmatpush.msra.mxu0 0.0
        %6190 = vmatpush.msra.mxu0 0.0
        %6191 = vmatpush.msra.mxu0 0.0
        %6192 = vmatpush.msra.mxu0 0.0
        %6193 = vmatpush.msra.mxu0 0.0
        %6194 = vmatpush.msra.mxu0 0.0
        %6195 = vmatpush.msra.mxu0 0.0
        %6196 = vmatpush.msra.mxu0 0.0
        %6197 = vmatpush.msra.mxu0 0.0
        %6198 = vmatpush.msra.mxu0 0.0
        %6199 = vmatpush.msra.mxu0 0.0
        %6200 = vmatpush.msra.mxu0 0.0
        %6201 = vmatpush.msra.mxu0 %v4138
        %6202 = vmatmul.f32.gmra.mxu0 %v6184
        %v6203 = vpop.f32.mrf.mxu0
        %v6204 = vadd.f32 0.0, %v6203
        %6205 = vdwg.mxu0
        %v6207 = vsel %vm4250, %v3943, 0
        %6209 = vmatpush.msra.mxu0 0.0
        %6210 = vmatpush.msra.mxu0 0.0
        %6211 = vmatpush.msra.mxu0 0.0
        %6212 = vmatpush.msra.mxu0 0.0
        %6213 = vmatpush.msra.mxu0 0.0
        %6214 = vmatpush.msra.mxu0 0.0
        %6215 = vmatpush.msra.mxu0 0.0
        %6216 = vmatpush.msra.mxu0 0.0
        %6217 = vmatpush.msra.mxu0 0.0
        %6218 = vmatpush.msra.mxu0 0.0
        %6219 = vmatpush.msra.mxu0 0.0
        %6220 = vmatpush.msra.mxu0 0.0
        %6221 = vmatpush.msra.mxu0 0.0
        %6222 = vmatpush.msra.mxu0 0.0
        %6223 = vmatpush.msra.mxu0 0.0
        %6224 = vmatpush.msra.mxu0 %v4139
        %6225 = vmatmul.f32.gmra.mxu0 %v6207
        %v6226 = vpop.f32.mrf.mxu0
        %v6227 = vadd.f32 0.0, %v6226
        %6228 = vdwg.mxu0
        %v6230 = vsel %vm4250, %v3944, 0
        %6232 = vmatpush.msra.mxu0 0.0
        %6233 = vmatpush.msra.mxu0 0.0
        %6234 = vmatpush.msra.mxu0 0.0
        %6235 = vmatpush.msra.mxu0 0.0
        %6236 = vmatpush.msra.mxu0 0.0
        %6237 = vmatpush.msra.mxu0 0.0
        %6238 = vmatpush.msra.mxu0 0.0
        %6239 = vmatpush.msra.mxu0 0.0
        %6240 = vmatpush.msra.mxu0 0.0
        %6241 = vmatpush.msra.mxu0 0.0
        %6242 = vmatpush.msra.mxu0 0.0
        %6243 = vmatpush.msra.mxu0 0.0
        %6244 = vmatpush.msra.mxu0 0.0
        %6245 = vmatpush.msra.mxu0 0.0
        %6246 = vmatpush.msra.mxu0 0.0
        %6247 = vmatpush.msra.mxu0 %v4140
        %6248 = vmatmul.f32.gmra.mxu0 %v6230
        %v6249 = vpop.f32.mrf.mxu0
        %v6250 = vadd.f32 0.0, %v6249
        %6251 = vdwg.mxu0
        %v6253 = vsel %vm4250, %v3945, 0
        %6255 = vmatpush.msra.mxu0 0.0
        %6256 = vmatpush.msra.mxu0 0.0
        %6257 = vmatpush.msra.mxu0 0.0
        %6258 = vmatpush.msra.mxu0 0.0
        %6259 = vmatpush.msra.mxu0 0.0
        %6260 = vmatpush.msra.mxu0 0.0
        %6261 = vmatpush.msra.mxu0 0.0
        %6262 = vmatpush.msra.mxu0 0.0
        %6263 = vmatpush.msra.mxu0 0.0
        %6264 = vmatpush.msra.mxu0 0.0
        %6265 = vmatpush.msra.mxu0 0.0
        %6266 = vmatpush.msra.mxu0 0.0
        %6267 = vmatpush.msra.mxu0 0.0
        %6268 = vmatpush.msra.mxu0 0.0
        %6269 = vmatpush.msra.mxu0 0.0
        %6270 = vmatpush.msra.mxu0 %v4141
        %6271 = vmatmul.f32.gmra.mxu0 %v6253
        %v6272 = vpop.f32.mrf.mxu0
        %v6273 = vadd.f32 0.0, %v6272
        %6274 = vdwg.mxu0
        %v6276 = vsel %vm4250, %v3946, 0
        %6278 = vmatpush.msra.mxu0 0.0
        %6279 = vmatpush.msra.mxu0 0.0
        %6280 = vmatpush.msra.mxu0 0.0
        %6281 = vmatpush.msra.mxu0 0.0
        %6282 = vmatpush.msra.mxu0 0.0
        %6283 = vmatpush.msra.mxu0 0.0
        %6284 = vmatpush.msra.mxu0 0.0
        %6285 = vmatpush.msra.mxu0 0.0
        %6286 = vmatpush.msra.mxu0 0.0
        %6287 = vmatpush.msra.mxu0 0.0
        %6288 = vmatpush.msra.mxu0 0.0
        %6289 = vmatpush.msra.mxu0 0.0
        %6290 = vmatpush.msra.mxu0 0.0
        %6291 = vmatpush.msra.mxu0 0.0
        %6292 = vmatpush.msra.mxu0 0.0
        %6293 = vmatpush.msra.mxu0 %v4142
        %6294 = vmatmul.f32.gmra.mxu0 %v6276
        %v6295 = vpop.f32.mrf.mxu0
        %v6296 = vadd.f32 0.0, %v6295
        %6297 = vdwg.mxu0
        %v6299 = vsel %vm4250, %v3947, 0
        %6301 = vmatpush.msra.mxu0 0.0
        %6302 = vmatpush.msra.mxu0 0.0
        %6303 = vmatpush.msra.mxu0 0.0
        %6304 = vmatpush.msra.mxu0 0.0
        %6305 = vmatpush.msra.mxu0 0.0
        %6306 = vmatpush.msra.mxu0 0.0
        %6307 = vmatpush.msra.mxu0 0.0
        %6308 = vmatpush.msra.mxu0 0.0
        %6309 = vmatpush.msra.mxu0 0.0
        %6310 = vmatpush.msra.mxu0 0.0
        %6311 = vmatpush.msra.mxu0 0.0
        %6312 = vmatpush.msra.mxu0 0.0
        %6313 = vmatpush.msra.mxu0 0.0
        %6314 = vmatpush.msra.mxu0 0.0
        %6315 = vmatpush.msra.mxu0 0.0
        %6316 = vmatpush.msra.mxu0 %v4143
        %6317 = vmatmul.f32.gmra.mxu0 %v6299
        %v6318 = vpop.f32.mrf.mxu0
        %v6319 = vadd.f32 0.0, %v6318
        %6320 = vdwg.mxu0
        %v6322 = vsel %vm4250, %v3948, 0
        %6324 = vmatpush.msra.mxu0 0.0
        %6325 = vmatpush.msra.mxu0 0.0
        %6326 = vmatpush.msra.mxu0 0.0
        %6327 = vmatpush.msra.mxu0 0.0
        %6328 = vmatpush.msra.mxu0 0.0
        %6329 = vmatpush.msra.mxu0 0.0
        %6330 = vmatpush.msra.mxu0 0.0
        %6331 = vmatpush.msra.mxu0 0.0
        %6332 = vmatpush.msra.mxu0 0.0
        %6333 = vmatpush.msra.mxu0 0.0
        %6334 = vmatpush.msra.mxu0 0.0
        %6335 = vmatpush.msra.mxu0 0.0
        %6336 = vmatpush.msra.mxu0 0.0
        %6337 = vmatpush.msra.mxu0 0.0
        %6338 = vmatpush.msra.mxu0 0.0
        %6339 = vmatpush.msra.mxu0 %v4144
        %6340 = vmatmul.f32.gmra.mxu0 %v6322
        %v6341 = vpop.f32.mrf.mxu0
        %v6342 = vadd.f32 0.0, %v6341
        %6343 = vdwg.mxu0
        %v6345 = vsel %vm4250, %v3949, 0
        %6347 = vmatpush.msra.mxu0 0.0
        %6348 = vmatpush.msra.mxu0 0.0
        %6349 = vmatpush.msra.mxu0 0.0
        %6350 = vmatpush.msra.mxu0 0.0
        %6351 = vmatpush.msra.mxu0 0.0
        %6352 = vmatpush.msra.mxu0 0.0
        %6353 = vmatpush.msra.mxu0 0.0
        %6354 = vmatpush.msra.mxu0 0.0
        %6355 = vmatpush.msra.mxu0 0.0
        %6356 = vmatpush.msra.mxu0 0.0
        %6357 = vmatpush.msra.mxu0 0.0
        %6358 = vmatpush.msra.mxu0 0.0
        %6359 = vmatpush.msra.mxu0 0.0
        %6360 = vmatpush.msra.mxu0 0.0
        %6361 = vmatpush.msra.mxu0 0.0
        %6362 = vmatpush.msra.mxu0 %v4145
        %6363 = vmatmul.f32.gmra.mxu0 %v6345
        %v6364 = vpop.f32.mrf.mxu0
        %v6365 = vadd.f32 0.0, %v6364
        %6366 = vdwg.mxu0
        %v6368 = vsel %vm4250, %v3950, 0
        %6370 = vmatpush.msra.mxu0 0.0
        %6371 = vmatpush.msra.mxu0 0.0
        %6372 = vmatpush.msra.mxu0 0.0
        %6373 = vmatpush.msra.mxu0 0.0
        %6374 = vmatpush.msra.mxu0 0.0
        %6375 = vmatpush.msra.mxu0 0.0
        %6376 = vmatpush.msra.mxu0 0.0
        %6377 = vmatpush.msra.mxu0 0.0
        %6378 = vmatpush.msra.mxu0 0.0
        %6379 = vmatpush.msra.mxu0 0.0
        %6380 = vmatpush.msra.mxu0 0.0
        %6381 = vmatpush.msra.mxu0 0.0
        %6382 = vmatpush.msra.mxu0 0.0
        %6383 = vmatpush.msra.mxu0 0.0
        %6384 = vmatpush.msra.mxu0 0.0
        %6385 = vmatpush.msra.mxu0 %v4146
        %6386 = vmatmul.f32.gmra.mxu0 %v6368
        %v6387 = vpop.f32.mrf.mxu0
        %v6388 = vadd.f32 0.0, %v6387
        %6389 = vdwg.mxu0
        %v6391 = vsel %vm4250, %v3951, 0
        %6393 = vmatpush.msra.mxu0 0.0
        %6394 = vmatpush.msra.mxu0 0.0
        %6395 = vmatpush.msra.mxu0 0.0
        %6396 = vmatpush.msra.mxu0 0.0
        %6397 = vmatpush.msra.mxu0 0.0
        %6398 = vmatpush.msra.mxu0 0.0
        %6399 = vmatpush.msra.mxu0 0.0
        %6400 = vmatpush.msra.mxu0 0.0
        %6401 = vmatpush.msra.mxu0 0.0
        %6402 = vmatpush.msra.mxu0 0.0
        %6403 = vmatpush.msra.mxu0 0.0
        %6404 = vmatpush.msra.mxu0 0.0
        %6405 = vmatpush.msra.mxu0 0.0
        %6406 = vmatpush.msra.mxu0 0.0
        %6407 = vmatpush.msra.mxu0 0.0
        %6408 = vmatpush.msra.mxu0 %v4147
        %6409 = vmatmul.f32.gmra.mxu0 %v6391
        %v6410 = vpop.f32.mrf.mxu0
        %v6411 = vadd.f32 0.0, %v6410
        %6412 = vdwg.mxu0
        %v6414 = vsel %vm4250, %v3952, 0
        %6416 = vmatpush.msra.mxu0 0.0
        %6417 = vmatpush.msra.mxu0 0.0
        %6418 = vmatpush.msra.mxu0 0.0
        %6419 = vmatpush.msra.mxu0 0.0
        %6420 = vmatpush.msra.mxu0 0.0
        %6421 = vmatpush.msra.mxu0 0.0
        %6422 = vmatpush.msra.mxu0 0.0
        %6423 = vmatpush.msra.mxu0 0.0
        %6424 = vmatpush.msra.mxu0 0.0
        %6425 = vmatpush.msra.mxu0 0.0
        %6426 = vmatpush.msra.mxu0 0.0
        %6427 = vmatpush.msra.mxu0 0.0
        %6428 = vmatpush.msra.mxu0 0.0
        %6429 = vmatpush.msra.mxu0 0.0
        %6430 = vmatpush.msra.mxu0 0.0
        %6431 = vmatpush.msra.mxu0 %v4148
        %6432 = vmatmul.f32.gmra.mxu0 %v6414
        %v6433 = vpop.f32.mrf.mxu0
        %v6434 = vadd.f32 0.0, %v6433
        %6435 = vdwg.mxu0
        %v6437 = vsel %vm4250, %v3953, 0
        %6439 = vmatpush.msra.mxu0 0.0
        %6440 = vmatpush.msra.mxu0 0.0
        %6441 = vmatpush.msra.mxu0 0.0
        %6442 = vmatpush.msra.mxu0 0.0
        %6443 = vmatpush.msra.mxu0 0.0
        %6444 = vmatpush.msra.mxu0 0.0
        %6445 = vmatpush.msra.mxu0 0.0
        %6446 = vmatpush.msra.mxu0 0.0
        %6447 = vmatpush.msra.mxu0 0.0
        %6448 = vmatpush.msra.mxu0 0.0
        %6449 = vmatpush.msra.mxu0 0.0
        %6450 = vmatpush.msra.mxu0 0.0
        %6451 = vmatpush.msra.mxu0 0.0
        %6452 = vmatpush.msra.mxu0 0.0
        %6453 = vmatpush.msra.mxu0 0.0
        %6454 = vmatpush.msra.mxu0 %v4149
        %6455 = vmatmul.f32.gmra.mxu0 %v6437
        %v6456 = vpop.f32.mrf.mxu0
        %v6457 = vadd.f32 0.0, %v6456
        %6458 = vdwg.mxu0
        %v6460 = vsel %vm4250, %v3954, 0
        %6462 = vmatpush.msra.mxu0 0.0
        %6463 = vmatpush.msra.mxu0 0.0
        %6464 = vmatpush.msra.mxu0 0.0
        %6465 = vmatpush.msra.mxu0 0.0
        %6466 = vmatpush.msra.mxu0 0.0
        %6467 = vmatpush.msra.mxu0 0.0
        %6468 = vmatpush.msra.mxu0 0.0
        %6469 = vmatpush.msra.mxu0 0.0
        %6470 = vmatpush.msra.mxu0 0.0
        %6471 = vmatpush.msra.mxu0 0.0
        %6472 = vmatpush.msra.mxu0 0.0
        %6473 = vmatpush.msra.mxu0 0.0
        %6474 = vmatpush.msra.mxu0 0.0
        %6475 = vmatpush.msra.mxu0 0.0
        %6476 = vmatpush.msra.mxu0 0.0
        %6477 = vmatpush.msra.mxu0 %v4150
        %6478 = vmatmul.f32.gmra.mxu0 %v6460
        %v6479 = vpop.f32.mrf.mxu0
        %v6480 = vadd.f32 0.0, %v6479
        %6481 = vdwg.mxu0
        %v6483 = vsel %vm4250, %v3955, 0
        %6485 = vmatpush.msra.mxu0 0.0
        %6486 = vmatpush.msra.mxu0 0.0
        %6487 = vmatpush.msra.mxu0 0.0
        %6488 = vmatpush.msra.mxu0 0.0
        %6489 = vmatpush.msra.mxu0 0.0
        %6490 = vmatpush.msra.mxu0 0.0
        %6491 = vmatpush.msra.mxu0 0.0
        %6492 = vmatpush.msra.mxu0 0.0
        %6493 = vmatpush.msra.mxu0 0.0
        %6494 = vmatpush.msra.mxu0 0.0
        %6495 = vmatpush.msra.mxu0 0.0
        %6496 = vmatpush.msra.mxu0 0.0
        %6497 = vmatpush.msra.mxu0 0.0
        %6498 = vmatpush.msra.mxu0 0.0
        %6499 = vmatpush.msra.mxu0 0.0
        %6500 = vmatpush.msra.mxu0 %v4151
        %6501 = vmatmul.f32.gmra.mxu0 %v6483
        %v6502 = vpop.f32.mrf.mxu0
        %v6503 = vadd.f32 0.0, %v6502
        %6504 = vdwg.mxu0
        %v6506 = vsel %vm4250, %v3956, 0
        %6508 = vmatpush.msra.mxu0 0.0
        %6509 = vmatpush.msra.mxu0 0.0
        %6510 = vmatpush.msra.mxu0 0.0
        %6511 = vmatpush.msra.mxu0 0.0
        %6512 = vmatpush.msra.mxu0 0.0
        %6513 = vmatpush.msra.mxu0 0.0
        %6514 = vmatpush.msra.mxu0 0.0
        %6515 = vmatpush.msra.mxu0 0.0
        %6516 = vmatpush.msra.mxu0 0.0
        %6517 = vmatpush.msra.mxu0 0.0
        %6518 = vmatpush.msra.mxu0 0.0
        %6519 = vmatpush.msra.mxu0 0.0
        %6520 = vmatpush.msra.mxu0 0.0
        %6521 = vmatpush.msra.mxu0 0.0
        %6522 = vmatpush.msra.mxu0 0.0
        %6523 = vmatpush.msra.mxu0 %v4152
        %6524 = vmatmul.f32.gmra.mxu0 %v6506
        %v6525 = vpop.f32.mrf.mxu0
        %v6526 = vadd.f32 0.0, %v6525
        %6527 = vdwg.mxu0
        %v6529 = vsel %vm4250, %v3957, 0
        %6531 = vmatpush.msra.mxu0 0.0
        %6532 = vmatpush.msra.mxu0 0.0
        %6533 = vmatpush.msra.mxu0 0.0
        %6534 = vmatpush.msra.mxu0 0.0
        %6535 = vmatpush.msra.mxu0 0.0
        %6536 = vmatpush.msra.mxu0 0.0
        %6537 = vmatpush.msra.mxu0 0.0
        %6538 = vmatpush.msra.mxu0 0.0
        %6539 = vmatpush.msra.mxu0 0.0
        %6540 = vmatpush.msra.mxu0 0.0
        %6541 = vmatpush.msra.mxu0 0.0
        %6542 = vmatpush.msra.mxu0 0.0
        %6543 = vmatpush.msra.mxu0 0.0
        %6544 = vmatpush.msra.mxu0 0.0
        %6545 = vmatpush.msra.mxu0 0.0
        %6546 = vmatpush.msra.mxu0 %v4153
        %6547 = vmatmul.f32.gmra.mxu0 %v6529
        %v6548 = vpop.f32.mrf.mxu0
        %v6549 = vadd.f32 0.0, %v6548
        %6550 = vdwg.mxu0
        %v6552 = vsel %vm4250, %v3958, 0
        %6554 = vmatpush.msra.mxu0 0.0
        %6555 = vmatpush.msra.mxu0 0.0
        %6556 = vmatpush.msra.mxu0 0.0
        %6557 = vmatpush.msra.mxu0 0.0
        %6558 = vmatpush.msra.mxu0 0.0
        %6559 = vmatpush.msra.mxu0 0.0
        %6560 = vmatpush.msra.mxu0 0.0
        %6561 = vmatpush.msra.mxu0 0.0
        %6562 = vmatpush.msra.mxu0 0.0
        %6563 = vmatpush.msra.mxu0 0.0
        %6564 = vmatpush.msra.mxu0 0.0
        %6565 = vmatpush.msra.mxu0 0.0
        %6566 = vmatpush.msra.mxu0 0.0
        %6567 = vmatpush.msra.mxu0 0.0
        %6568 = vmatpush.msra.mxu0 0.0
        %6569 = vmatpush.msra.mxu0 %v4154
        %6570 = vmatmul.f32.gmra.mxu0 %v6552
        %v6571 = vpop.f32.mrf.mxu0
        %v6572 = vadd.f32 0.0, %v6571
        %6573 = vdwg.mxu0
        %v6575 = vsel %vm4250, %v3959, 0
        %6577 = vmatpush.msra.mxu0 0.0
        %6578 = vmatpush.msra.mxu0 0.0
        %6579 = vmatpush.msra.mxu0 0.0
        %6580 = vmatpush.msra.mxu0 0.0
        %6581 = vmatpush.msra.mxu0 0.0
        %6582 = vmatpush.msra.mxu0 0.0
        %6583 = vmatpush.msra.mxu0 0.0
        %6584 = vmatpush.msra.mxu0 0.0
        %6585 = vmatpush.msra.mxu0 0.0
        %6586 = vmatpush.msra.mxu0 0.0
        %6587 = vmatpush.msra.mxu0 0.0
        %6588 = vmatpush.msra.mxu0 0.0
        %6589 = vmatpush.msra.mxu0 0.0
        %6590 = vmatpush.msra.mxu0 0.0
        %6591 = vmatpush.msra.mxu0 0.0
        %6592 = vmatpush.msra.mxu0 %v4155
        %6593 = vmatmul.f32.gmra.mxu0 %v6575
        %v6594 = vpop.f32.mrf.mxu0
        %v6595 = vadd.f32 0.0, %v6594
        %6596 = vdwg.mxu0
        %v6598 = vsel %vm4250, %v3960, 0
        %6600 = vmatpush.msra.mxu0 0.0
        %6601 = vmatpush.msra.mxu0 0.0
        %6602 = vmatpush.msra.mxu0 0.0
        %6603 = vmatpush.msra.mxu0 0.0
        %6604 = vmatpush.msra.mxu0 0.0
        %6605 = vmatpush.msra.mxu0 0.0
        %6606 = vmatpush.msra.mxu0 0.0
        %6607 = vmatpush.msra.mxu0 0.0
        %6608 = vmatpush.msra.mxu0 0.0
        %6609 = vmatpush.msra.mxu0 0.0
        %6610 = vmatpush.msra.mxu0 0.0
        %6611 = vmatpush.msra.mxu0 0.0
        %6612 = vmatpush.msra.mxu0 0.0
        %6613 = vmatpush.msra.mxu0 0.0
        %6614 = vmatpush.msra.mxu0 0.0
        %6615 = vmatpush.msra.mxu0 %v4156
        %6616 = vmatmul.f32.gmra.mxu0 %v6598
        %v6617 = vpop.f32.mrf.mxu0
        %v6618 = vadd.f32 0.0, %v6617
        %6619 = vdwg.mxu0
        %v6621 = vsel %vm4250, %v3961, 0
        %6623 = vmatpush.msra.mxu0 0.0
        %6624 = vmatpush.msra.mxu0 0.0
        %6625 = vmatpush.msra.mxu0 0.0
        %6626 = vmatpush.msra.mxu0 0.0
        %6627 = vmatpush.msra.mxu0 0.0
        %6628 = vmatpush.msra.mxu0 0.0
        %6629 = vmatpush.msra.mxu0 0.0
        %6630 = vmatpush.msra.mxu0 0.0
        %6631 = vmatpush.msra.mxu0 0.0
        %6632 = vmatpush.msra.mxu0 0.0
        %6633 = vmatpush.msra.mxu0 0.0
        %6634 = vmatpush.msra.mxu0 0.0
        %6635 = vmatpush.msra.mxu0 0.0
        %6636 = vmatpush.msra.mxu0 0.0
        %6637 = vmatpush.msra.mxu0 0.0
        %6638 = vmatpush.msra.mxu0 %v4157
        %6639 = vmatmul.f32.gmra.mxu0 %v6621
        %v6640 = vpop.f32.mrf.mxu0
        %v6641 = vadd.f32 0.0, %v6640
        %6642 = vdwg.mxu0
        %v6644 = vsel %vm4250, %v3962, 0
        %6646 = vmatpush.msra.mxu0 0.0
        %6647 = vmatpush.msra.mxu0 0.0
        %6648 = vmatpush.msra.mxu0 0.0
        %6649 = vmatpush.msra.mxu0 0.0
        %6650 = vmatpush.msra.mxu0 0.0
        %6651 = vmatpush.msra.mxu0 0.0
        %6652 = vmatpush.msra.mxu0 0.0
        %6653 = vmatpush.msra.mxu0 0.0
        %6654 = vmatpush.msra.mxu0 0.0
        %6655 = vmatpush.msra.mxu0 0.0
        %6656 = vmatpush.msra.mxu0 0.0
        %6657 = vmatpush.msra.mxu0 0.0
        %6658 = vmatpush.msra.mxu0 0.0
        %6659 = vmatpush.msra.mxu0 0.0
        %6660 = vmatpush.msra.mxu0 0.0
        %6661 = vmatpush.msra.mxu0 %v4158
        %6662 = vmatmul.f32.gmra.mxu0 %v6644
        %v6663 = vpop.f32.mrf.mxu0
        %v6664 = vadd.f32 0.0, %v6663
        %6665 = vdwg.mxu0
        %v6667 = vsel %vm4250, %v3963, 0
        %6669 = vmatpush.msra.mxu0 0.0
        %6670 = vmatpush.msra.mxu0 0.0
        %6671 = vmatpush.msra.mxu0 0.0
        %6672 = vmatpush.msra.mxu0 0.0
        %6673 = vmatpush.msra.mxu0 0.0
        %6674 = vmatpush.msra.mxu0 0.0
        %6675 = vmatpush.msra.mxu0 0.0
        %6676 = vmatpush.msra.mxu0 0.0
        %6677 = vmatpush.msra.mxu0 0.0
        %6678 = vmatpush.msra.mxu0 0.0
        %6679 = vmatpush.msra.mxu0 0.0
        %6680 = vmatpush.msra.mxu0 0.0
        %6681 = vmatpush.msra.mxu0 0.0
        %6682 = vmatpush.msra.mxu0 0.0
        %6683 = vmatpush.msra.mxu0 0.0
        %6684 = vmatpush.msra.mxu0 %v4159
        %6685 = vmatmul.f32.gmra.mxu0 %v6667
        %v6686 = vpop.f32.mrf.mxu0
        %v6687 = vadd.f32 0.0, %v6686
        %6688 = vdwg.mxu0
        %v6690 = vsel %vm4250, %v3964, 0
        %6692 = vmatpush.msra.mxu0 0.0
        %6693 = vmatpush.msra.mxu0 0.0
        %6694 = vmatpush.msra.mxu0 0.0
        %6695 = vmatpush.msra.mxu0 0.0
        %6696 = vmatpush.msra.mxu0 0.0
        %6697 = vmatpush.msra.mxu0 0.0
        %6698 = vmatpush.msra.mxu0 0.0
        %6699 = vmatpush.msra.mxu0 0.0
        %6700 = vmatpush.msra.mxu0 0.0
        %6701 = vmatpush.msra.mxu0 0.0
        %6702 = vmatpush.msra.mxu0 0.0
        %6703 = vmatpush.msra.mxu0 0.0
        %6704 = vmatpush.msra.mxu0 0.0
        %6705 = vmatpush.msra.mxu0 0.0
        %6706 = vmatpush.msra.mxu0 0.0
        %6707 = vmatpush.msra.mxu0 %v4160
        %6708 = vmatmul.f32.gmra.mxu0 %v6690
        %v6709 = vpop.f32.mrf.mxu0
        %v6710 = vadd.f32 0.0, %v6709
        %6711 = vdwg.mxu0
        %v6713 = vsel %vm4250, %v3965, 0
        %6715 = vmatpush.msra.mxu0 0.0
        %6716 = vmatpush.msra.mxu0 0.0
        %6717 = vmatpush.msra.mxu0 0.0
        %6718 = vmatpush.msra.mxu0 0.0
        %6719 = vmatpush.msra.mxu0 0.0
        %6720 = vmatpush.msra.mxu0 0.0
        %6721 = vmatpush.msra.mxu0 0.0
        %6722 = vmatpush.msra.mxu0 0.0
        %6723 = vmatpush.msra.mxu0 0.0
        %6724 = vmatpush.msra.mxu0 0.0
        %6725 = vmatpush.msra.mxu0 0.0
        %6726 = vmatpush.msra.mxu0 0.0
        %6727 = vmatpush.msra.mxu0 0.0
        %6728 = vmatpush.msra.mxu0 0.0
        %6729 = vmatpush.msra.mxu0 0.0
        %6730 = vmatpush.msra.mxu0 %v4161
        %6731 = vmatmul.f32.gmra.mxu0 %v6713
        %v6732 = vpop.f32.mrf.mxu0
        %v6733 = vadd.f32 0.0, %v6732
        %6734 = vdwg.mxu0
        %v6736 = vsel %vm4250, %v3966, 0
        %6738 = vmatpush.msra.mxu0 0.0
        %6739 = vmatpush.msra.mxu0 0.0
        %6740 = vmatpush.msra.mxu0 0.0
        %6741 = vmatpush.msra.mxu0 0.0
        %6742 = vmatpush.msra.mxu0 0.0
        %6743 = vmatpush.msra.mxu0 0.0
        %6744 = vmatpush.msra.mxu0 0.0
        %6745 = vmatpush.msra.mxu0 0.0
        %6746 = vmatpush.msra.mxu0 0.0
        %6747 = vmatpush.msra.mxu0 0.0
        %6748 = vmatpush.msra.mxu0 0.0
        %6749 = vmatpush.msra.mxu0 0.0
        %6750 = vmatpush.msra.mxu0 0.0
        %6751 = vmatpush.msra.mxu0 0.0
        %6752 = vmatpush.msra.mxu0 0.0
        %6753 = vmatpush.msra.mxu0 %v4162
        %6754 = vmatmul.f32.gmra.mxu0 %v6736
        %v6755 = vpop.f32.mrf.mxu0
        %v6756 = vadd.f32 0.0, %v6755
        %6757 = vdwg.mxu0
        %v6759 = vsel %vm4250, %v3967, 0
        %6761 = vmatpush.msra.mxu0 0.0
        %6762 = vmatpush.msra.mxu0 0.0
        %6763 = vmatpush.msra.mxu0 0.0
        %6764 = vmatpush.msra.mxu0 0.0
        %6765 = vmatpush.msra.mxu0 0.0
        %6766 = vmatpush.msra.mxu0 0.0
        %6767 = vmatpush.msra.mxu0 0.0
        %6768 = vmatpush.msra.mxu0 0.0
        %6769 = vmatpush.msra.mxu0 0.0
        %6770 = vmatpush.msra.mxu0 0.0
        %6771 = vmatpush.msra.mxu0 0.0
        %6772 = vmatpush.msra.mxu0 0.0
        %6773 = vmatpush.msra.mxu0 0.0
        %6774 = vmatpush.msra.mxu0 0.0
        %6775 = vmatpush.msra.mxu0 0.0
        %6776 = vmatpush.msra.mxu0 %v4163
        %6777 = vmatmul.f32.gmra.mxu0 %v6759
        %v6778 = vpop.f32.mrf.mxu0
        %v6779 = vadd.f32 0.0, %v6778
        %6780 = vdwg.mxu0
        %v6782 = vsel %vm4250, %v3968, 0
        %6784 = vmatpush.msra.mxu0 0.0
        %6785 = vmatpush.msra.mxu0 0.0
        %6786 = vmatpush.msra.mxu0 0.0
        %6787 = vmatpush.msra.mxu0 0.0
        %6788 = vmatpush.msra.mxu0 0.0
        %6789 = vmatpush.msra.mxu0 0.0
        %6790 = vmatpush.msra.mxu0 0.0
        %6791 = vmatpush.msra.mxu0 0.0
        %6792 = vmatpush.msra.mxu0 0.0
        %6793 = vmatpush.msra.mxu0 0.0
        %6794 = vmatpush.msra.mxu0 0.0
        %6795 = vmatpush.msra.mxu0 0.0
        %6796 = vmatpush.msra.mxu0 0.0
        %6797 = vmatpush.msra.mxu0 0.0
        %6798 = vmatpush.msra.mxu0 0.0
        %6799 = vmatpush.msra.mxu0 %v4164
        %6800 = vmatmul.f32.gmra.mxu0 %v6782
        %v6801 = vpop.f32.mrf.mxu0
        %v6802 = vadd.f32 0.0, %v6801
        %6803 = vdwg.mxu0
        %v6805 = vsel %vm4250, %v3969, 0
        %6807 = vmatpush.msra.mxu0 0.0
        %6808 = vmatpush.msra.mxu0 0.0
        %6809 = vmatpush.msra.mxu0 0.0
        %6810 = vmatpush.msra.mxu0 0.0
        %6811 = vmatpush.msra.mxu0 0.0
        %6812 = vmatpush.msra.mxu0 0.0
        %6813 = vmatpush.msra.mxu0 0.0
        %6814 = vmatpush.msra.mxu0 0.0
        %6815 = vmatpush.msra.mxu0 0.0
        %6816 = vmatpush.msra.mxu0 0.0
        %6817 = vmatpush.msra.mxu0 0.0
        %6818 = vmatpush.msra.mxu0 0.0
        %6819 = vmatpush.msra.mxu0 0.0
        %6820 = vmatpush.msra.mxu0 0.0
        %6821 = vmatpush.msra.mxu0 0.0
        %6822 = vmatpush.msra.mxu0 %v4165
        %6823 = vmatmul.f32.gmra.mxu0 %v6805
        %v6824 = vpop.f32.mrf.mxu0
        %v6825 = vadd.f32 0.0, %v6824
        %6826 = vdwg.mxu0
        %v6828 = vsel %vm4250, %v3970, 0
        %6830 = vmatpush.msra.mxu0 0.0
        %6831 = vmatpush.msra.mxu0 0.0
        %6832 = vmatpush.msra.mxu0 0.0
        %6833 = vmatpush.msra.mxu0 0.0
        %6834 = vmatpush.msra.mxu0 0.0
        %6835 = vmatpush.msra.mxu0 0.0
        %6836 = vmatpush.msra.mxu0 0.0
        %6837 = vmatpush.msra.mxu0 0.0
        %6838 = vmatpush.msra.mxu0 0.0
        %6839 = vmatpush.msra.mxu0 0.0
        %6840 = vmatpush.msra.mxu0 0.0
        %6841 = vmatpush.msra.mxu0 0.0
        %6842 = vmatpush.msra.mxu0 0.0
        %6843 = vmatpush.msra.mxu0 0.0
        %6844 = vmatpush.msra.mxu0 0.0
        %6845 = vmatpush.msra.mxu0 %v4166
        %6846 = vmatmul.f32.gmra.mxu0 %v6828
        %v6847 = vpop.f32.mrf.mxu0
        %v6848 = vadd.f32 0.0, %v6847
        %6849 = vdwg.mxu0
        %v6851 = vsel %vm4250, %v3971, 0
        %6853 = vmatpush.msra.mxu0 0.0
        %6854 = vmatpush.msra.mxu0 0.0
        %6855 = vmatpush.msra.mxu0 0.0
        %6856 = vmatpush.msra.mxu0 0.0
        %6857 = vmatpush.msra.mxu0 0.0
        %6858 = vmatpush.msra.mxu0 0.0
        %6859 = vmatpush.msra.mxu0 0.0
        %6860 = vmatpush.msra.mxu0 0.0
        %6861 = vmatpush.msra.mxu0 0.0
        %6862 = vmatpush.msra.mxu0 0.0
        %6863 = vmatpush.msra.mxu0 0.0
        %6864 = vmatpush.msra.mxu0 0.0
        %6865 = vmatpush.msra.mxu0 0.0
        %6866 = vmatpush.msra.mxu0 0.0
        %6867 = vmatpush.msra.mxu0 0.0
        %6868 = vmatpush.msra.mxu0 %v4167
        %6869 = vmatmul.f32.gmra.mxu0 %v6851
        %v6870 = vpop.f32.mrf.mxu0
        %v6871 = vadd.f32 0.0, %v6870
        %6872 = vdwg.mxu0
        %v6874 = vsel %vm4250, %v3972, 0
        %6876 = vmatpush.msra.mxu0 0.0
        %6877 = vmatpush.msra.mxu0 0.0
        %6878 = vmatpush.msra.mxu0 0.0
        %6879 = vmatpush.msra.mxu0 0.0
        %6880 = vmatpush.msra.mxu0 0.0
        %6881 = vmatpush.msra.mxu0 0.0
        %6882 = vmatpush.msra.mxu0 0.0
        %6883 = vmatpush.msra.mxu0 0.0
        %6884 = vmatpush.msra.mxu0 0.0
        %6885 = vmatpush.msra.mxu0 0.0
        %6886 = vmatpush.msra.mxu0 0.0
        %6887 = vmatpush.msra.mxu0 0.0
        %6888 = vmatpush.msra.mxu0 0.0
        %6889 = vmatpush.msra.mxu0 0.0
        %6890 = vmatpush.msra.mxu0 0.0
        %6891 = vmatpush.msra.mxu0 %v4168
        %6892 = vmatmul.f32.gmra.mxu0 %v6874
        %v6893 = vpop.f32.mrf.mxu0
        %v6894 = vadd.f32 0.0, %v6893
        %6895 = vdwg.mxu0
        %v6897 = vsel %vm4250, %v3973, 0
        %6899 = vmatpush.msra.mxu0 0.0
        %6900 = vmatpush.msra.mxu0 0.0
        %6901 = vmatpush.msra.mxu0 0.0
        %6902 = vmatpush.msra.mxu0 0.0
        %6903 = vmatpush.msra.mxu0 0.0
        %6904 = vmatpush.msra.mxu0 0.0
        %6905 = vmatpush.msra.mxu0 0.0
        %6906 = vmatpush.msra.mxu0 0.0
        %6907 = vmatpush.msra.mxu0 0.0
        %6908 = vmatpush.msra.mxu0 0.0
        %6909 = vmatpush.msra.mxu0 0.0
        %6910 = vmatpush.msra.mxu0 0.0
        %6911 = vmatpush.msra.mxu0 0.0
        %6912 = vmatpush.msra.mxu0 0.0
        %6913 = vmatpush.msra.mxu0 0.0
        %6914 = vmatpush.msra.mxu0 %v4169
        %6915 = vmatmul.f32.gmra.mxu0 %v6897
        %v6916 = vpop.f32.mrf.mxu0
        %v6917 = vadd.f32 0.0, %v6916
        %6918 = vdwg.mxu0
        %v6920 = vsel %vm4250, %v3974, 0
        %6922 = vmatpush.msra.mxu0 0.0
        %6923 = vmatpush.msra.mxu0 0.0
        %6924 = vmatpush.msra.mxu0 0.0
        %6925 = vmatpush.msra.mxu0 0.0
        %6926 = vmatpush.msra.mxu0 0.0
        %6927 = vmatpush.msra.mxu0 0.0
        %6928 = vmatpush.msra.mxu0 0.0
        %6929 = vmatpush.msra.mxu0 0.0
        %6930 = vmatpush.msra.mxu0 0.0
        %6931 = vmatpush.msra.mxu0 0.0
        %6932 = vmatpush.msra.mxu0 0.0
        %6933 = vmatpush.msra.mxu0 0.0
        %6934 = vmatpush.msra.mxu0 0.0
        %6935 = vmatpush.msra.mxu0 0.0
        %6936 = vmatpush.msra.mxu0 0.0
        %6937 = vmatpush.msra.mxu0 %v4170
        %6938 = vmatmul.f32.gmra.mxu0 %v6920
        %v6939 = vpop.f32.mrf.mxu0
        %v6940 = vadd.f32 0.0, %v6939
        %6941 = vdwg.mxu0
        %v6943 = vsel %vm4250, %v3975, 0
        %6945 = vmatpush.msra.mxu0 0.0
        %6946 = vmatpush.msra.mxu0 0.0
        %6947 = vmatpush.msra.mxu0 0.0
        %6948 = vmatpush.msra.mxu0 0.0
        %6949 = vmatpush.msra.mxu0 0.0
        %6950 = vmatpush.msra.mxu0 0.0
        %6951 = vmatpush.msra.mxu0 0.0
        %6952 = vmatpush.msra.mxu0 0.0
        %6953 = vmatpush.msra.mxu0 0.0
        %6954 = vmatpush.msra.mxu0 0.0
        %6955 = vmatpush.msra.mxu0 0.0
        %6956 = vmatpush.msra.mxu0 0.0
        %6957 = vmatpush.msra.mxu0 0.0
        %6958 = vmatpush.msra.mxu0 0.0
        %6959 = vmatpush.msra.mxu0 0.0
        %6960 = vmatpush.msra.mxu0 %v4171
        %6961 = vmatmul.f32.gmra.mxu0 %v6943
        %v6962 = vpop.f32.mrf.mxu0
        %v6963 = vadd.f32 0.0, %v6962
        %6964 = vdwg.mxu0
        %v6966 = vsel %vm4250, %v3976, 0
        %6968 = vmatpush.msra.mxu0 0.0
        %6969 = vmatpush.msra.mxu0 0.0
        %6970 = vmatpush.msra.mxu0 0.0
        %6971 = vmatpush.msra.mxu0 0.0
        %6972 = vmatpush.msra.mxu0 0.0
        %6973 = vmatpush.msra.mxu0 0.0
        %6974 = vmatpush.msra.mxu0 0.0
        %6975 = vmatpush.msra.mxu0 0.0
        %6976 = vmatpush.msra.mxu0 0.0
        %6977 = vmatpush.msra.mxu0 0.0
        %6978 = vmatpush.msra.mxu0 0.0
        %6979 = vmatpush.msra.mxu0 0.0
        %6980 = vmatpush.msra.mxu0 0.0
        %6981 = vmatpush.msra.mxu0 0.0
        %6982 = vmatpush.msra.mxu0 0.0
        %6983 = vmatpush.msra.mxu0 %v4172
        %6984 = vmatmul.f32.gmra.mxu0 %v6966
        %v6985 = vpop.f32.mrf.mxu0
        %v6986 = vadd.f32 0.0, %v6985
        %6987 = vdwg.mxu0
        %v6989 = vsel %vm4250, %v3977, 0
        %6991 = vmatpush.msra.mxu0 0.0
        %6992 = vmatpush.msra.mxu0 0.0
        %6993 = vmatpush.msra.mxu0 0.0
        %6994 = vmatpush.msra.mxu0 0.0
        %6995 = vmatpush.msra.mxu0 0.0
        %6996 = vmatpush.msra.mxu0 0.0
        %6997 = vmatpush.msra.mxu0 0.0
        %6998 = vmatpush.msra.mxu0 0.0
        %6999 = vmatpush.msra.mxu0 0.0
        %7000 = vmatpush.msra.mxu0 0.0
        %7001 = vmatpush.msra.mxu0 0.0
        %7002 = vmatpush.msra.mxu0 0.0
        %7003 = vmatpush.msra.mxu0 0.0
        %7004 = vmatpush.msra.mxu0 0.0
        %7005 = vmatpush.msra.mxu0 0.0
        %7006 = vmatpush.msra.mxu0 %v4173
        %7007 = vmatmul.f32.gmra.mxu0 %v6989
        %v7008 = vpop.f32.mrf.mxu0
        %v7009 = vadd.f32 0.0, %v7008
        %7010 = vdwg.mxu0
        %v7012 = vsel %vm4250, %v3978, 0
        %7014 = vmatpush.msra.mxu0 0.0
        %7015 = vmatpush.msra.mxu0 0.0
        %7016 = vmatpush.msra.mxu0 0.0
        %7017 = vmatpush.msra.mxu0 0.0
        %7018 = vmatpush.msra.mxu0 0.0
        %7019 = vmatpush.msra.mxu0 0.0
        %7020 = vmatpush.msra.mxu0 0.0
        %7021 = vmatpush.msra.mxu0 0.0
        %7022 = vmatpush.msra.mxu0 0.0
        %7023 = vmatpush.msra.mxu0 0.0
        %7024 = vmatpush.msra.mxu0 0.0
        %7025 = vmatpush.msra.mxu0 0.0
        %7026 = vmatpush.msra.mxu0 0.0
        %7027 = vmatpush.msra.mxu0 0.0
        %7028 = vmatpush.msra.mxu0 0.0
        %7029 = vmatpush.msra.mxu0 %v4174
        %7030 = vmatmul.f32.gmra.mxu0 %v7012
        %v7031 = vpop.f32.mrf.mxu0
        %v7032 = vadd.f32 0.0, %v7031
        %7033 = vdwg.mxu0
        %v7035 = vsel %vm4250, %v3979, 0
        %7037 = vmatpush.msra.mxu0 0.0
        %7038 = vmatpush.msra.mxu0 0.0
        %7039 = vmatpush.msra.mxu0 0.0
        %7040 = vmatpush.msra.mxu0 0.0
        %7041 = vmatpush.msra.mxu0 0.0
        %7042 = vmatpush.msra.mxu0 0.0
        %7043 = vmatpush.msra.mxu0 0.0
        %7044 = vmatpush.msra.mxu0 0.0
        %7045 = vmatpush.msra.mxu0 0.0
        %7046 = vmatpush.msra.mxu0 0.0
        %7047 = vmatpush.msra.mxu0 0.0
        %7048 = vmatpush.msra.mxu0 0.0
        %7049 = vmatpush.msra.mxu0 0.0
        %7050 = vmatpush.msra.mxu0 0.0
        %7051 = vmatpush.msra.mxu0 0.0
        %7052 = vmatpush.msra.mxu0 %v4175
        %7053 = vmatmul.f32.gmra.mxu0 %v7035
        %v7054 = vpop.f32.mrf.mxu0
        %v7055 = vadd.f32 0.0, %v7054
        %7056 = vdwg.mxu0
        %v7058 = vsel %vm4250, %v3980, 0
        %7060 = vmatpush.msra.mxu0 0.0
        %7061 = vmatpush.msra.mxu0 0.0
        %7062 = vmatpush.msra.mxu0 0.0
        %7063 = vmatpush.msra.mxu0 0.0
        %7064 = vmatpush.msra.mxu0 0.0
        %7065 = vmatpush.msra.mxu0 0.0
        %7066 = vmatpush.msra.mxu0 0.0
        %7067 = vmatpush.msra.mxu0 0.0
        %7068 = vmatpush.msra.mxu0 0.0
        %7069 = vmatpush.msra.mxu0 0.0
        %7070 = vmatpush.msra.mxu0 0.0
        %7071 = vmatpush.msra.mxu0 0.0
        %7072 = vmatpush.msra.mxu0 0.0
        %7073 = vmatpush.msra.mxu0 0.0
        %7074 = vmatpush.msra.mxu0 0.0
        %7075 = vmatpush.msra.mxu0 %v4176
        %7076 = vmatmul.f32.gmra.mxu0 %v7058
        %v7077 = vpop.f32.mrf.mxu0
        %v7078 = vadd.f32 0.0, %v7077
        %7079 = vdwg.mxu0
        %v7081 = vsel %vm4250, %v3981, 0
        %7083 = vmatpush.msra.mxu0 0.0
        %7084 = vmatpush.msra.mxu0 0.0
        %7085 = vmatpush.msra.mxu0 0.0
        %7086 = vmatpush.msra.mxu0 0.0
        %7087 = vmatpush.msra.mxu0 0.0
        %7088 = vmatpush.msra.mxu0 0.0
        %7089 = vmatpush.msra.mxu0 0.0
        %7090 = vmatpush.msra.mxu0 0.0
        %7091 = vmatpush.msra.mxu0 0.0
        %7092 = vmatpush.msra.mxu0 0.0
        %7093 = vmatpush.msra.mxu0 0.0
        %7094 = vmatpush.msra.mxu0 0.0
        %7095 = vmatpush.msra.mxu0 0.0
        %7096 = vmatpush.msra.mxu0 0.0
        %7097 = vmatpush.msra.mxu0 0.0
        %7098 = vmatpush.msra.mxu0 %v4177
        %7099 = vmatmul.f32.gmra.mxu0 %v7081
        %v7100 = vpop.f32.mrf.mxu0
        %v7101 = vadd.f32 0.0, %v7100
        %7102 = vdwg.mxu0
        %v7104 = vsel %vm4250, %v3982, 0
        %7106 = vmatpush.msra.mxu0 0.0
        %7107 = vmatpush.msra.mxu0 0.0
        %7108 = vmatpush.msra.mxu0 0.0
        %7109 = vmatpush.msra.mxu0 0.0
        %7110 = vmatpush.msra.mxu0 0.0
        %7111 = vmatpush.msra.mxu0 0.0
        %7112 = vmatpush.msra.mxu0 0.0
        %7113 = vmatpush.msra.mxu0 0.0
        %7114 = vmatpush.msra.mxu0 0.0
        %7115 = vmatpush.msra.mxu0 0.0
        %7116 = vmatpush.msra.mxu0 0.0
        %7117 = vmatpush.msra.mxu0 0.0
        %7118 = vmatpush.msra.mxu0 0.0
        %7119 = vmatpush.msra.mxu0 0.0
        %7120 = vmatpush.msra.mxu0 0.0
        %7121 = vmatpush.msra.mxu0 %v4178
        %7122 = vmatmul.f32.gmra.mxu0 %v7104
        %v7123 = vpop.f32.mrf.mxu0
        %v7124 = vadd.f32 0.0, %v7123
        %7125 = vdwg.mxu0
        %v7127 = vsel %vm4250, %v3983, 0
        %7129 = vmatpush.msra.mxu0 0.0
        %7130 = vmatpush.msra.mxu0 0.0
        %7131 = vmatpush.msra.mxu0 0.0
        %7132 = vmatpush.msra.mxu0 0.0
        %7133 = vmatpush.msra.mxu0 0.0
        %7134 = vmatpush.msra.mxu0 0.0
        %7135 = vmatpush.msra.mxu0 0.0
        %7136 = vmatpush.msra.mxu0 0.0
        %7137 = vmatpush.msra.mxu0 0.0
        %7138 = vmatpush.msra.mxu0 0.0
        %7139 = vmatpush.msra.mxu0 0.0
        %7140 = vmatpush.msra.mxu0 0.0
        %7141 = vmatpush.msra.mxu0 0.0
        %7142 = vmatpush.msra.mxu0 0.0
        %7143 = vmatpush.msra.mxu0 0.0
        %7144 = vmatpush.msra.mxu0 %v4179
        %7145 = vmatmul.f32.gmra.mxu0 %v7127
        %v7146 = vpop.f32.mrf.mxu0
        %v7147 = vadd.f32 0.0, %v7146
        %7148 = vdwg.mxu0
        %v7150 = vsel %vm4250, %v3984, 0
        %7152 = vmatpush.msra.mxu0 0.0
        %7153 = vmatpush.msra.mxu0 0.0
        %7154 = vmatpush.msra.mxu0 0.0
        %7155 = vmatpush.msra.mxu0 0.0
        %7156 = vmatpush.msra.mxu0 0.0
        %7157 = vmatpush.msra.mxu0 0.0
        %7158 = vmatpush.msra.mxu0 0.0
        %7159 = vmatpush.msra.mxu0 0.0
        %7160 = vmatpush.msra.mxu0 0.0
        %7161 = vmatpush.msra.mxu0 0.0
        %7162 = vmatpush.msra.mxu0 0.0
        %7163 = vmatpush.msra.mxu0 0.0
        %7164 = vmatpush.msra.mxu0 0.0
        %7165 = vmatpush.msra.mxu0 0.0
        %7166 = vmatpush.msra.mxu0 0.0
        %7167 = vmatpush.msra.mxu0 %v4180
        %7168 = vmatmul.f32.gmra.mxu0 %v7150
        %v7169 = vpop.f32.mrf.mxu0
        %v7170 = vadd.f32 0.0, %v7169
        %7171 = vdwg.mxu0
        %v7173 = vsel %vm4250, %v3985, 0
        %7175 = vmatpush.msra.mxu0 0.0
        %7176 = vmatpush.msra.mxu0 0.0
        %7177 = vmatpush.msra.mxu0 0.0
        %7178 = vmatpush.msra.mxu0 0.0
        %7179 = vmatpush.msra.mxu0 0.0
        %7180 = vmatpush.msra.mxu0 0.0
        %7181 = vmatpush.msra.mxu0 0.0
        %7182 = vmatpush.msra.mxu0 0.0
        %7183 = vmatpush.msra.mxu0 0.0
        %7184 = vmatpush.msra.mxu0 0.0
        %7185 = vmatpush.msra.mxu0 0.0
        %7186 = vmatpush.msra.mxu0 0.0
        %7187 = vmatpush.msra.mxu0 0.0
        %7188 = vmatpush.msra.mxu0 0.0
        %7189 = vmatpush.msra.mxu0 0.0
        %7190 = vmatpush.msra.mxu0 %v4181
        %7191 = vmatmul.f32.gmra.mxu0 %v7173
        %v7192 = vpop.f32.mrf.mxu0
        %v7193 = vadd.f32 0.0, %v7192
        %7194 = vdwg.mxu0
        %v7196 = vsel %vm4250, %v3986, 0
        %7198 = vmatpush.msra.mxu0 0.0
        %7199 = vmatpush.msra.mxu0 0.0
        %7200 = vmatpush.msra.mxu0 0.0
        %7201 = vmatpush.msra.mxu0 0.0
        %7202 = vmatpush.msra.mxu0 0.0
        %7203 = vmatpush.msra.mxu0 0.0
        %7204 = vmatpush.msra.mxu0 0.0
        %7205 = vmatpush.msra.mxu0 0.0
        %7206 = vmatpush.msra.mxu0 0.0
        %7207 = vmatpush.msra.mxu0 0.0
        %7208 = vmatpush.msra.mxu0 0.0
        %7209 = vmatpush.msra.mxu0 0.0
        %7210 = vmatpush.msra.mxu0 0.0
        %7211 = vmatpush.msra.mxu0 0.0
        %7212 = vmatpush.msra.mxu0 0.0
        %7213 = vmatpush.msra.mxu0 %v4182
        %7214 = vmatmul.f32.gmra.mxu0 %v7196
        %v7215 = vpop.f32.mrf.mxu0
        %v7216 = vadd.f32 0.0, %v7215
        %7217 = vdwg.mxu0
        %v7219 = vsel %vm4250, %v3987, 0
        %7221 = vmatpush.msra.mxu0 0.0
        %7222 = vmatpush.msra.mxu0 0.0
        %7223 = vmatpush.msra.mxu0 0.0
        %7224 = vmatpush.msra.mxu0 0.0
        %7225 = vmatpush.msra.mxu0 0.0
        %7226 = vmatpush.msra.mxu0 0.0
        %7227 = vmatpush.msra.mxu0 0.0
        %7228 = vmatpush.msra.mxu0 0.0
        %7229 = vmatpush.msra.mxu0 0.0
        %7230 = vmatpush.msra.mxu0 0.0
        %7231 = vmatpush.msra.mxu0 0.0
        %7232 = vmatpush.msra.mxu0 0.0
        %7233 = vmatpush.msra.mxu0 0.0
        %7234 = vmatpush.msra.mxu0 0.0
        %7235 = vmatpush.msra.mxu0 0.0
        %7236 = vmatpush.msra.mxu0 %v4183
        %7237 = vmatmul.f32.gmra.mxu0 %v7219
        %v7238 = vpop.f32.mrf.mxu0
        %v7239 = vadd.f32 0.0, %v7238
        %7240 = vdwg.mxu0
        %v7242 = vsel %vm4250, %v3988, 0
        %7244 = vmatpush.msra.mxu0 0.0
        %7245 = vmatpush.msra.mxu0 0.0
        %7246 = vmatpush.msra.mxu0 0.0
        %7247 = vmatpush.msra.mxu0 0.0
        %7248 = vmatpush.msra.mxu0 0.0
        %7249 = vmatpush.msra.mxu0 0.0
        %7250 = vmatpush.msra.mxu0 0.0
        %7251 = vmatpush.msra.mxu0 0.0
        %7252 = vmatpush.msra.mxu0 0.0
        %7253 = vmatpush.msra.mxu0 0.0
        %7254 = vmatpush.msra.mxu0 0.0
        %7255 = vmatpush.msra.mxu0 0.0
        %7256 = vmatpush.msra.mxu0 0.0
        %7257 = vmatpush.msra.mxu0 0.0
        %7258 = vmatpush.msra.mxu0 0.0
        %7259 = vmatpush.msra.mxu0 %v4184
        %7260 = vmatmul.f32.gmra.mxu0 %v7242
        %v7261 = vpop.f32.mrf.mxu0
        %v7262 = vadd.f32 0.0, %v7261
        %7263 = vdwg.mxu0
        %v7265 = vsel %vm4250, %v3989, 0
        %7267 = vmatpush.msra.mxu0 0.0
        %7268 = vmatpush.msra.mxu0 0.0
        %7269 = vmatpush.msra.mxu0 0.0
        %7270 = vmatpush.msra.mxu0 0.0
        %7271 = vmatpush.msra.mxu0 0.0
        %7272 = vmatpush.msra.mxu0 0.0
        %7273 = vmatpush.msra.mxu0 0.0
        %7274 = vmatpush.msra.mxu0 0.0
        %7275 = vmatpush.msra.mxu0 0.0
        %7276 = vmatpush.msra.mxu0 0.0
        %7277 = vmatpush.msra.mxu0 0.0
        %7278 = vmatpush.msra.mxu0 0.0
        %7279 = vmatpush.msra.mxu0 0.0
        %7280 = vmatpush.msra.mxu0 0.0
        %7281 = vmatpush.msra.mxu0 0.0
        %7282 = vmatpush.msra.mxu0 %v4185
        %7283 = vmatmul.f32.gmra.mxu0 %v7265
        %v7284 = vpop.f32.mrf.mxu0
        %v7285 = vadd.f32 0.0, %v7284
        %7286 = vdwg.mxu0
        %v7288 = vsel %vm4250, %v3990, 0
        %7290 = vmatpush.msra.mxu0 0.0
        %7291 = vmatpush.msra.mxu0 0.0
        %7292 = vmatpush.msra.mxu0 0.0
        %7293 = vmatpush.msra.mxu0 0.0
        %7294 = vmatpush.msra.mxu0 0.0
        %7295 = vmatpush.msra.mxu0 0.0
        %7296 = vmatpush.msra.mxu0 0.0
        %7297 = vmatpush.msra.mxu0 0.0
        %7298 = vmatpush.msra.mxu0 0.0
        %7299 = vmatpush.msra.mxu0 0.0
        %7300 = vmatpush.msra.mxu0 0.0
        %7301 = vmatpush.msra.mxu0 0.0
        %7302 = vmatpush.msra.mxu0 0.0
        %7303 = vmatpush.msra.mxu0 0.0
        %7304 = vmatpush.msra.mxu0 0.0
        %7305 = vmatpush.msra.mxu0 %v4186
        %7306 = vmatmul.f32.gmra.mxu0 %v7288
        %v7307 = vpop.f32.mrf.mxu0
        %v7308 = vadd.f32 0.0, %v7307
        %7309 = vdwg.mxu0
        %v7311 = vsel %vm4250, %v3991, 0
        %7313 = vmatpush.msra.mxu0 0.0
        %7314 = vmatpush.msra.mxu0 0.0
        %7315 = vmatpush.msra.mxu0 0.0
        %7316 = vmatpush.msra.mxu0 0.0
        %7317 = vmatpush.msra.mxu0 0.0
        %7318 = vmatpush.msra.mxu0 0.0
        %7319 = vmatpush.msra.mxu0 0.0
        %7320 = vmatpush.msra.mxu0 0.0
        %7321 = vmatpush.msra.mxu0 0.0
        %7322 = vmatpush.msra.mxu0 0.0
        %7323 = vmatpush.msra.mxu0 0.0
        %7324 = vmatpush.msra.mxu0 0.0
        %7325 = vmatpush.msra.mxu0 0.0
        %7326 = vmatpush.msra.mxu0 0.0
        %7327 = vmatpush.msra.mxu0 0.0
        %7328 = vmatpush.msra.mxu0 %v4187
        %7329 = vmatmul.f32.gmra.mxu0 %v7311
        %v7330 = vpop.f32.mrf.mxu0
        %v7331 = vadd.f32 0.0, %v7330
        %7332 = vdwg.mxu0
        %v7334 = vsel %vm4250, %v3992, 0
        %7336 = vmatpush.msra.mxu0 0.0
        %7337 = vmatpush.msra.mxu0 0.0
        %7338 = vmatpush.msra.mxu0 0.0
        %7339 = vmatpush.msra.mxu0 0.0
        %7340 = vmatpush.msra.mxu0 0.0
        %7341 = vmatpush.msra.mxu0 0.0
        %7342 = vmatpush.msra.mxu0 0.0
        %7343 = vmatpush.msra.mxu0 0.0
        %7344 = vmatpush.msra.mxu0 0.0
        %7345 = vmatpush.msra.mxu0 0.0
        %7346 = vmatpush.msra.mxu0 0.0
        %7347 = vmatpush.msra.mxu0 0.0
        %7348 = vmatpush.msra.mxu0 0.0
        %7349 = vmatpush.msra.mxu0 0.0
        %7350 = vmatpush.msra.mxu0 0.0
        %7351 = vmatpush.msra.mxu0 %v4188
        %7352 = vmatmul.f32.gmra.mxu0 %v7334
        %v7353 = vpop.f32.mrf.mxu0
        %v7354 = vadd.f32 0.0, %v7353
        %7355 = vdwg.mxu0
        %v7357 = vsel %vm4250, %v3993, 0
        %7359 = vmatpush.msra.mxu0 0.0
        %7360 = vmatpush.msra.mxu0 0.0
        %7361 = vmatpush.msra.mxu0 0.0
        %7362 = vmatpush.msra.mxu0 0.0
        %7363 = vmatpush.msra.mxu0 0.0
        %7364 = vmatpush.msra.mxu0 0.0
        %7365 = vmatpush.msra.mxu0 0.0
        %7366 = vmatpush.msra.mxu0 0.0
        %7367 = vmatpush.msra.mxu0 0.0
        %7368 = vmatpush.msra.mxu0 0.0
        %7369 = vmatpush.msra.mxu0 0.0
        %7370 = vmatpush.msra.mxu0 0.0
        %7371 = vmatpush.msra.mxu0 0.0
        %7372 = vmatpush.msra.mxu0 0.0
        %7373 = vmatpush.msra.mxu0 0.0
        %7374 = vmatpush.msra.mxu0 %v4189
        %7375 = vmatmul.f32.gmra.mxu0 %v7357
        %v7376 = vpop.f32.mrf.mxu0
        %v7377 = vadd.f32 0.0, %v7376
        %7378 = vdwg.mxu0
        %v7380 = vsel %vm4250, %v3994, 0
        %7382 = vmatpush.msra.mxu0 0.0
        %7383 = vmatpush.msra.mxu0 0.0
        %7384 = vmatpush.msra.mxu0 0.0
        %7385 = vmatpush.msra.mxu0 0.0
        %7386 = vmatpush.msra.mxu0 0.0
        %7387 = vmatpush.msra.mxu0 0.0
        %7388 = vmatpush.msra.mxu0 0.0
        %7389 = vmatpush.msra.mxu0 0.0
        %7390 = vmatpush.msra.mxu0 0.0
        %7391 = vmatpush.msra.mxu0 0.0
        %7392 = vmatpush.msra.mxu0 0.0
        %7393 = vmatpush.msra.mxu0 0.0
        %7394 = vmatpush.msra.mxu0 0.0
        %7395 = vmatpush.msra.mxu0 0.0
        %7396 = vmatpush.msra.mxu0 0.0
        %7397 = vmatpush.msra.mxu0 %v4190
        %7398 = vmatmul.f32.gmra.mxu0 %v7380
        %v7399 = vpop.f32.mrf.mxu0
        %v7400 = vadd.f32 0.0, %v7399
        %7401 = vdwg.mxu0
        %v7403 = vsel %vm4250, %v3995, 0
        %7405 = vmatpush.msra.mxu0 0.0
        %7406 = vmatpush.msra.mxu0 0.0
        %7407 = vmatpush.msra.mxu0 0.0
        %7408 = vmatpush.msra.mxu0 0.0
        %7409 = vmatpush.msra.mxu0 0.0
        %7410 = vmatpush.msra.mxu0 0.0
        %7411 = vmatpush.msra.mxu0 0.0
        %7412 = vmatpush.msra.mxu0 0.0
        %7413 = vmatpush.msra.mxu0 0.0
        %7414 = vmatpush.msra.mxu0 0.0
        %7415 = vmatpush.msra.mxu0 0.0
        %7416 = vmatpush.msra.mxu0 0.0
        %7417 = vmatpush.msra.mxu0 0.0
        %7418 = vmatpush.msra.mxu0 0.0
        %7419 = vmatpush.msra.mxu0 0.0
        %7420 = vmatpush.msra.mxu0 %v4191
        %7421 = vmatmul.f32.gmra.mxu0 %v7403
        %v7422 = vpop.f32.mrf.mxu0
        %v7423 = vadd.f32 0.0, %v7422
        %7424 = vdwg.mxu0
        %v7426 = vsel %vm4250, %v3996, 0
        %7428 = vmatpush.msra.mxu0 0.0
        %7429 = vmatpush.msra.mxu0 0.0
        %7430 = vmatpush.msra.mxu0 0.0
        %7431 = vmatpush.msra.mxu0 0.0
        %7432 = vmatpush.msra.mxu0 0.0
        %7433 = vmatpush.msra.mxu0 0.0
        %7434 = vmatpush.msra.mxu0 0.0
        %7435 = vmatpush.msra.mxu0 0.0
        %7436 = vmatpush.msra.mxu0 0.0
        %7437 = vmatpush.msra.mxu0 0.0
        %7438 = vmatpush.msra.mxu0 0.0
        %7439 = vmatpush.msra.mxu0 0.0
        %7440 = vmatpush.msra.mxu0 0.0
        %7441 = vmatpush.msra.mxu0 0.0
        %7442 = vmatpush.msra.mxu0 0.0
        %7443 = vmatpush.msra.mxu0 %v4192
        %7444 = vmatmul.f32.gmra.mxu0 %v7426
        %v7445 = vpop.f32.mrf.mxu0
        %v7446 = vadd.f32 0.0, %v7445
        %7447 = vdwg.mxu0
        %v7449 = vsel %vm4250, %v3997, 0
        %7451 = vmatpush.msra.mxu0 0.0
        %7452 = vmatpush.msra.mxu0 0.0
        %7453 = vmatpush.msra.mxu0 0.0
        %7454 = vmatpush.msra.mxu0 0.0
        %7455 = vmatpush.msra.mxu0 0.0
        %7456 = vmatpush.msra.mxu0 0.0
        %7457 = vmatpush.msra.mxu0 0.0
        %7458 = vmatpush.msra.mxu0 0.0
        %7459 = vmatpush.msra.mxu0 0.0
        %7460 = vmatpush.msra.mxu0 0.0
        %7461 = vmatpush.msra.mxu0 0.0
        %7462 = vmatpush.msra.mxu0 0.0
        %7463 = vmatpush.msra.mxu0 0.0
        %7464 = vmatpush.msra.mxu0 0.0
        %7465 = vmatpush.msra.mxu0 0.0
        %7466 = vmatpush.msra.mxu0 %v4193
        %7467 = vmatmul.f32.gmra.mxu0 %v7449
        %v7468 = vpop.f32.mrf.mxu0
        %v7469 = vadd.f32 0.0, %v7468
        %7470 = vdwg.mxu0
        %v7472 = vsel %vm4250, %v3998, 0
        %7474 = vmatpush.msra.mxu0 0.0
        %7475 = vmatpush.msra.mxu0 0.0
        %7476 = vmatpush.msra.mxu0 0.0
        %7477 = vmatpush.msra.mxu0 0.0
        %7478 = vmatpush.msra.mxu0 0.0
        %7479 = vmatpush.msra.mxu0 0.0
        %7480 = vmatpush.msra.mxu0 0.0
        %7481 = vmatpush.msra.mxu0 0.0
        %7482 = vmatpush.msra.mxu0 0.0
        %7483 = vmatpush.msra.mxu0 0.0
        %7484 = vmatpush.msra.mxu0 0.0
        %7485 = vmatpush.msra.mxu0 0.0
        %7486 = vmatpush.msra.mxu0 0.0
        %7487 = vmatpush.msra.mxu0 0.0
        %7488 = vmatpush.msra.mxu0 0.0
        %7489 = vmatpush.msra.mxu0 %v4194
        %7490 = vmatmul.f32.gmra.mxu0 %v7472
        %v7491 = vpop.f32.mrf.mxu0
        %v7492 = vadd.f32 0.0, %v7491
        %7493 = vdwg.mxu0
        %v7495 = vsel %vm4250, %v3999, 0
        %7497 = vmatpush.msra.mxu0 0.0
        %7498 = vmatpush.msra.mxu0 0.0
        %7499 = vmatpush.msra.mxu0 0.0
        %7500 = vmatpush.msra.mxu0 0.0
        %7501 = vmatpush.msra.mxu0 0.0
        %7502 = vmatpush.msra.mxu0 0.0
        %7503 = vmatpush.msra.mxu0 0.0
        %7504 = vmatpush.msra.mxu0 0.0
        %7505 = vmatpush.msra.mxu0 0.0
        %7506 = vmatpush.msra.mxu0 0.0
        %7507 = vmatpush.msra.mxu0 0.0
        %7508 = vmatpush.msra.mxu0 0.0
        %7509 = vmatpush.msra.mxu0 0.0
        %7510 = vmatpush.msra.mxu0 0.0
        %7511 = vmatpush.msra.mxu0 0.0
        %7512 = vmatpush.msra.mxu0 %v4195
        %7513 = vmatmul.f32.gmra.mxu0 %v7495
        %v7514 = vpop.f32.mrf.mxu0
        %v7515 = vadd.f32 0.0, %v7514
        %7516 = vdwg.mxu0
        %v7518 = vsel %vm4250, %v4000, 0
        %7520 = vmatpush.msra.mxu0 0.0
        %7521 = vmatpush.msra.mxu0 0.0
        %7522 = vmatpush.msra.mxu0 0.0
        %7523 = vmatpush.msra.mxu0 0.0
        %7524 = vmatpush.msra.mxu0 0.0
        %7525 = vmatpush.msra.mxu0 0.0
        %7526 = vmatpush.msra.mxu0 0.0
        %7527 = vmatpush.msra.mxu0 0.0
        %7528 = vmatpush.msra.mxu0 0.0
        %7529 = vmatpush.msra.mxu0 0.0
        %7530 = vmatpush.msra.mxu0 0.0
        %7531 = vmatpush.msra.mxu0 0.0
        %7532 = vmatpush.msra.mxu0 0.0
        %7533 = vmatpush.msra.mxu0 0.0
        %7534 = vmatpush.msra.mxu0 0.0
        %7535 = vmatpush.msra.mxu0 %v4196
        %7536 = vmatmul.f32.gmra.mxu0 %v7518
        %v7537 = vpop.f32.mrf.mxu0
        %v7538 = vadd.f32 0.0, %v7537
        %7539 = vdwg.mxu0
        %v7541 = vsel %vm4250, %v4001, 0
        %7543 = vmatpush.msra.mxu0 0.0
        %7544 = vmatpush.msra.mxu0 0.0
        %7545 = vmatpush.msra.mxu0 0.0
        %7546 = vmatpush.msra.mxu0 0.0
        %7547 = vmatpush.msra.mxu0 0.0
        %7548 = vmatpush.msra.mxu0 0.0
        %7549 = vmatpush.msra.mxu0 0.0
        %7550 = vmatpush.msra.mxu0 0.0
        %7551 = vmatpush.msra.mxu0 0.0
        %7552 = vmatpush.msra.mxu0 0.0
        %7553 = vmatpush.msra.mxu0 0.0
        %7554 = vmatpush.msra.mxu0 0.0
        %7555 = vmatpush.msra.mxu0 0.0
        %7556 = vmatpush.msra.mxu0 0.0
        %7557 = vmatpush.msra.mxu0 0.0
        %7558 = vmatpush.msra.mxu0 %v4197
        %7559 = vmatmul.f32.gmra.mxu0 %v7541
        %v7560 = vpop.f32.mrf.mxu0
        %v7561 = vadd.f32 0.0, %v7560
        %7562 = vdwg.mxu0
        %v7564 = vsel %vm4250, %v4002, 0
        %7566 = vmatpush.msra.mxu0 0.0
        %7567 = vmatpush.msra.mxu0 0.0
        %7568 = vmatpush.msra.mxu0 0.0
        %7569 = vmatpush.msra.mxu0 0.0
        %7570 = vmatpush.msra.mxu0 0.0
        %7571 = vmatpush.msra.mxu0 0.0
        %7572 = vmatpush.msra.mxu0 0.0
        %7573 = vmatpush.msra.mxu0 0.0
        %7574 = vmatpush.msra.mxu0 0.0
        %7575 = vmatpush.msra.mxu0 0.0
        %7576 = vmatpush.msra.mxu0 0.0
        %7577 = vmatpush.msra.mxu0 0.0
        %7578 = vmatpush.msra.mxu0 0.0
        %7579 = vmatpush.msra.mxu0 0.0
        %7580 = vmatpush.msra.mxu0 0.0
        %7581 = vmatpush.msra.mxu0 %v4198
        %7582 = vmatmul.f32.gmra.mxu0 %v7564
        %v7583 = vpop.f32.mrf.mxu0
        %v7584 = vadd.f32 0.0, %v7583
        %7585 = vdwg.mxu0
        %v7587 = vsel %vm4250, %v4003, 0
        %7589 = vmatpush.msra.mxu0 0.0
        %7590 = vmatpush.msra.mxu0 0.0
        %7591 = vmatpush.msra.mxu0 0.0
        %7592 = vmatpush.msra.mxu0 0.0
        %7593 = vmatpush.msra.mxu0 0.0
        %7594 = vmatpush.msra.mxu0 0.0
        %7595 = vmatpush.msra.mxu0 0.0
        %7596 = vmatpush.msra.mxu0 0.0
        %7597 = vmatpush.msra.mxu0 0.0
        %7598 = vmatpush.msra.mxu0 0.0
        %7599 = vmatpush.msra.mxu0 0.0
        %7600 = vmatpush.msra.mxu0 0.0
        %7601 = vmatpush.msra.mxu0 0.0
        %7602 = vmatpush.msra.mxu0 0.0
        %7603 = vmatpush.msra.mxu0 0.0
        %7604 = vmatpush.msra.mxu0 %v4199
        %7605 = vmatmul.f32.gmra.mxu0 %v7587
        %v7606 = vpop.f32.mrf.mxu0
        %v7607 = vadd.f32 0.0, %v7606
        %7608 = vdwg.mxu0
        %v7610 = vsel %vm4250, %v4004, 0
        %7612 = vmatpush.msra.mxu0 0.0
        %7613 = vmatpush.msra.mxu0 0.0
        %7614 = vmatpush.msra.mxu0 0.0
        %7615 = vmatpush.msra.mxu0 0.0
        %7616 = vmatpush.msra.mxu0 0.0
        %7617 = vmatpush.msra.mxu0 0.0
        %7618 = vmatpush.msra.mxu0 0.0
        %7619 = vmatpush.msra.mxu0 0.0
        %7620 = vmatpush.msra.mxu0 0.0
        %7621 = vmatpush.msra.mxu0 0.0
        %7622 = vmatpush.msra.mxu0 0.0
        %7623 = vmatpush.msra.mxu0 0.0
        %7624 = vmatpush.msra.mxu0 0.0
        %7625 = vmatpush.msra.mxu0 0.0
        %7626 = vmatpush.msra.mxu0 0.0
        %7627 = vmatpush.msra.mxu0 %v4200
        %7628 = vmatmul.f32.gmra.mxu0 %v7610
        %v7629 = vpop.f32.mrf.mxu0
        %v7630 = vadd.f32 0.0, %v7629
        %7631 = vdwg.mxu0
        %v7633 = vsel %vm4250, %v4005, 0
        %7635 = vmatpush.msra.mxu0 0.0
        %7636 = vmatpush.msra.mxu0 0.0
        %7637 = vmatpush.msra.mxu0 0.0
        %7638 = vmatpush.msra.mxu0 0.0
        %7639 = vmatpush.msra.mxu0 0.0
        %7640 = vmatpush.msra.mxu0 0.0
        %7641 = vmatpush.msra.mxu0 0.0
        %7642 = vmatpush.msra.mxu0 0.0
        %7643 = vmatpush.msra.mxu0 0.0
        %7644 = vmatpush.msra.mxu0 0.0
        %7645 = vmatpush.msra.mxu0 0.0
        %7646 = vmatpush.msra.mxu0 0.0
        %7647 = vmatpush.msra.mxu0 0.0
        %7648 = vmatpush.msra.mxu0 0.0
        %7649 = vmatpush.msra.mxu0 0.0
        %7650 = vmatpush.msra.mxu0 %v4201
        %7651 = vmatmul.f32.gmra.mxu0 %v7633
        %v7652 = vpop.f32.mrf.mxu0
        %v7653 = vadd.f32 0.0, %v7652
        %7654 = vdwg.mxu0
        %v7656 = vsel %vm4250, %v4006, 0
        %7658 = vmatpush.msra.mxu0 0.0
        %7659 = vmatpush.msra.mxu0 0.0
        %7660 = vmatpush.msra.mxu0 0.0
        %7661 = vmatpush.msra.mxu0 0.0
        %7662 = vmatpush.msra.mxu0 0.0
        %7663 = vmatpush.msra.mxu0 0.0
        %7664 = vmatpush.msra.mxu0 0.0
        %7665 = vmatpush.msra.mxu0 0.0
        %7666 = vmatpush.msra.mxu0 0.0
        %7667 = vmatpush.msra.mxu0 0.0
        %7668 = vmatpush.msra.mxu0 0.0
        %7669 = vmatpush.msra.mxu0 0.0
        %7670 = vmatpush.msra.mxu0 0.0
        %7671 = vmatpush.msra.mxu0 0.0
        %7672 = vmatpush.msra.mxu0 0.0
        %7673 = vmatpush.msra.mxu0 %v4202
        %7674 = vmatmul.f32.gmra.mxu0 %v7656
        %v7675 = vpop.f32.mrf.mxu0
        %v7676 = vadd.f32 0.0, %v7675
        %7677 = vdwg.mxu0
        %v7679 = vsel %vm4250, %v4007, 0
        %7681 = vmatpush.msra.mxu0 0.0
        %7682 = vmatpush.msra.mxu0 0.0
        %7683 = vmatpush.msra.mxu0 0.0
        %7684 = vmatpush.msra.mxu0 0.0
        %7685 = vmatpush.msra.mxu0 0.0
        %7686 = vmatpush.msra.mxu0 0.0
        %7687 = vmatpush.msra.mxu0 0.0
        %7688 = vmatpush.msra.mxu0 0.0
        %7689 = vmatpush.msra.mxu0 0.0
        %7690 = vmatpush.msra.mxu0 0.0
        %7691 = vmatpush.msra.mxu0 0.0
        %7692 = vmatpush.msra.mxu0 0.0
        %7693 = vmatpush.msra.mxu0 0.0
        %7694 = vmatpush.msra.mxu0 0.0
        %7695 = vmatpush.msra.mxu0 0.0
        %7696 = vmatpush.msra.mxu0 %v4203
        %7697 = vmatmul.f32.gmra.mxu0 %v7679
        %v7698 = vpop.f32.mrf.mxu0
        %v7699 = vadd.f32 0.0, %v7698
        %7700 = vdwg.mxu0
        %v7702 = vsel %vm4250, %v4008, 0
        %7704 = vmatpush.msra.mxu0 0.0
        %7705 = vmatpush.msra.mxu0 0.0
        %7706 = vmatpush.msra.mxu0 0.0
        %7707 = vmatpush.msra.mxu0 0.0
        %7708 = vmatpush.msra.mxu0 0.0
        %7709 = vmatpush.msra.mxu0 0.0
        %7710 = vmatpush.msra.mxu0 0.0
        %7711 = vmatpush.msra.mxu0 0.0
        %7712 = vmatpush.msra.mxu0 0.0
        %7713 = vmatpush.msra.mxu0 0.0
        %7714 = vmatpush.msra.mxu0 0.0
        %7715 = vmatpush.msra.mxu0 0.0
        %7716 = vmatpush.msra.mxu0 0.0
        %7717 = vmatpush.msra.mxu0 0.0
        %7718 = vmatpush.msra.mxu0 0.0
        %7719 = vmatpush.msra.mxu0 %v4204
        %7720 = vmatmul.f32.gmra.mxu0 %v7702
        %v7721 = vpop.f32.mrf.mxu0
        %v7722 = vadd.f32 0.0, %v7721
        %7723 = vdwg.mxu0
        %v7725 = vsel %vm4250, %v4009, 0
        %7727 = vmatpush.msra.mxu0 0.0
        %7728 = vmatpush.msra.mxu0 0.0
        %7729 = vmatpush.msra.mxu0 0.0
        %7730 = vmatpush.msra.mxu0 0.0
        %7731 = vmatpush.msra.mxu0 0.0
        %7732 = vmatpush.msra.mxu0 0.0
        %7733 = vmatpush.msra.mxu0 0.0
        %7734 = vmatpush.msra.mxu0 0.0
        %7735 = vmatpush.msra.mxu0 0.0
        %7736 = vmatpush.msra.mxu0 0.0
        %7737 = vmatpush.msra.mxu0 0.0
        %7738 = vmatpush.msra.mxu0 0.0
        %7739 = vmatpush.msra.mxu0 0.0
        %7740 = vmatpush.msra.mxu0 0.0
        %7741 = vmatpush.msra.mxu0 0.0
        %7742 = vmatpush.msra.mxu0 %v4205
        %7743 = vmatmul.f32.gmra.mxu0 %v7725
        %v7744 = vpop.f32.mrf.mxu0
        %v7745 = vadd.f32 0.0, %v7744
        %7746 = vdwg.mxu0
        %v7748 = vsel %vm4250, %v4010, 0
        %7750 = vmatpush.msra.mxu0 0.0
        %7751 = vmatpush.msra.mxu0 0.0
        %7752 = vmatpush.msra.mxu0 0.0
        %7753 = vmatpush.msra.mxu0 0.0
        %7754 = vmatpush.msra.mxu0 0.0
        %7755 = vmatpush.msra.mxu0 0.0
        %7756 = vmatpush.msra.mxu0 0.0
        %7757 = vmatpush.msra.mxu0 0.0
        %7758 = vmatpush.msra.mxu0 0.0
        %7759 = vmatpush.msra.mxu0 0.0
        %7760 = vmatpush.msra.mxu0 0.0
        %7761 = vmatpush.msra.mxu0 0.0
        %7762 = vmatpush.msra.mxu0 0.0
        %7763 = vmatpush.msra.mxu0 0.0
        %7764 = vmatpush.msra.mxu0 0.0
        %7765 = vmatpush.msra.mxu0 %v4206
        %7766 = vmatmul.f32.gmra.mxu0 %v7748
        %v7767 = vpop.f32.mrf.mxu0
        %v7768 = vadd.f32 0.0, %v7767
        %7769 = vdwg.mxu0
        %v7771 = vsel %vm4250, %v4011, 0
        %7773 = vmatpush.msra.mxu0 0.0
        %7774 = vmatpush.msra.mxu0 0.0
        %7775 = vmatpush.msra.mxu0 0.0
        %7776 = vmatpush.msra.mxu0 0.0
        %7777 = vmatpush.msra.mxu0 0.0
        %7778 = vmatpush.msra.mxu0 0.0
        %7779 = vmatpush.msra.mxu0 0.0
        %7780 = vmatpush.msra.mxu0 0.0
        %7781 = vmatpush.msra.mxu0 0.0
        %7782 = vmatpush.msra.mxu0 0.0
        %7783 = vmatpush.msra.mxu0 0.0
        %7784 = vmatpush.msra.mxu0 0.0
        %7785 = vmatpush.msra.mxu0 0.0
        %7786 = vmatpush.msra.mxu0 0.0
        %7787 = vmatpush.msra.mxu0 0.0
        %7788 = vmatpush.msra.mxu0 %v4207
        %7789 = vmatmul.f32.gmra.mxu0 %v7771
        %v7790 = vpop.f32.mrf.mxu0
        %v7791 = vadd.f32 0.0, %v7790
        %7792 = vdwg.mxu0
        %v7794 = vsel %vm4250, %v4012, 0
        %7796 = vmatpush.msra.mxu0 0.0
        %7797 = vmatpush.msra.mxu0 0.0
        %7798 = vmatpush.msra.mxu0 0.0
        %7799 = vmatpush.msra.mxu0 0.0
        %7800 = vmatpush.msra.mxu0 0.0
        %7801 = vmatpush.msra.mxu0 0.0
        %7802 = vmatpush.msra.mxu0 0.0
        %7803 = vmatpush.msra.mxu0 0.0
        %7804 = vmatpush.msra.mxu0 0.0
        %7805 = vmatpush.msra.mxu0 0.0
        %7806 = vmatpush.msra.mxu0 0.0
        %7807 = vmatpush.msra.mxu0 0.0
        %7808 = vmatpush.msra.mxu0 0.0
        %7809 = vmatpush.msra.mxu0 0.0
        %7810 = vmatpush.msra.mxu0 0.0
        %7811 = vmatpush.msra.mxu0 %v4208
        %7812 = vmatmul.f32.gmra.mxu0 %v7794
        %v7813 = vpop.f32.mrf.mxu0
        %v7814 = vadd.f32 0.0, %v7813
        %7815 = vdwg.mxu0
        %v7817 = vsel %vm4250, %v4013, 0
        %7819 = vmatpush.msra.mxu0 0.0
        %7820 = vmatpush.msra.mxu0 0.0
        %7821 = vmatpush.msra.mxu0 0.0
        %7822 = vmatpush.msra.mxu0 0.0
        %7823 = vmatpush.msra.mxu0 0.0
        %7824 = vmatpush.msra.mxu0 0.0
        %7825 = vmatpush.msra.mxu0 0.0
        %7826 = vmatpush.msra.mxu0 0.0
        %7827 = vmatpush.msra.mxu0 0.0
        %7828 = vmatpush.msra.mxu0 0.0
        %7829 = vmatpush.msra.mxu0 0.0
        %7830 = vmatpush.msra.mxu0 0.0
        %7831 = vmatpush.msra.mxu0 0.0
        %7832 = vmatpush.msra.mxu0 0.0
        %7833 = vmatpush.msra.mxu0 0.0
        %7834 = vmatpush.msra.mxu0 %v4209
        %7835 = vmatmul.f32.gmra.mxu0 %v7817
        %v7836 = vpop.f32.mrf.mxu0
        %v7837 = vadd.f32 0.0, %v7836
        %7838 = vdwg.mxu0
        %v7840 = vsel %vm4250, %v4014, 0
        %7842 = vmatpush.msra.mxu0 0.0
        %7843 = vmatpush.msra.mxu0 0.0
        %7844 = vmatpush.msra.mxu0 0.0
        %7845 = vmatpush.msra.mxu0 0.0
        %7846 = vmatpush.msra.mxu0 0.0
        %7847 = vmatpush.msra.mxu0 0.0
        %7848 = vmatpush.msra.mxu0 0.0
        %7849 = vmatpush.msra.mxu0 0.0
        %7850 = vmatpush.msra.mxu0 0.0
        %7851 = vmatpush.msra.mxu0 0.0
        %7852 = vmatpush.msra.mxu0 0.0
        %7853 = vmatpush.msra.mxu0 0.0
        %7854 = vmatpush.msra.mxu0 0.0
        %7855 = vmatpush.msra.mxu0 0.0
        %7856 = vmatpush.msra.mxu0 0.0
        %7857 = vmatpush.msra.mxu0 %v4210
        %7858 = vmatmul.f32.gmra.mxu0 %v7840
        %v7859 = vpop.f32.mrf.mxu0
        %v7860 = vadd.f32 0.0, %v7859
        %7861 = vdwg.mxu0
        %v7863 = vsel %vm4250, %v4015, 0
        %7865 = vmatpush.msra.mxu0 0.0
        %7866 = vmatpush.msra.mxu0 0.0
        %7867 = vmatpush.msra.mxu0 0.0
        %7868 = vmatpush.msra.mxu0 0.0
        %7869 = vmatpush.msra.mxu0 0.0
        %7870 = vmatpush.msra.mxu0 0.0
        %7871 = vmatpush.msra.mxu0 0.0
        %7872 = vmatpush.msra.mxu0 0.0
        %7873 = vmatpush.msra.mxu0 0.0
        %7874 = vmatpush.msra.mxu0 0.0
        %7875 = vmatpush.msra.mxu0 0.0
        %7876 = vmatpush.msra.mxu0 0.0
        %7877 = vmatpush.msra.mxu0 0.0
        %7878 = vmatpush.msra.mxu0 0.0
        %7879 = vmatpush.msra.mxu0 0.0
        %7880 = vmatpush.msra.mxu0 %v4211
        %7881 = vmatmul.f32.gmra.mxu0 %v7863
        %v7882 = vpop.f32.mrf.mxu0
        %v7883 = vadd.f32 0.0, %v7882
        %7884 = vdwg.mxu0
        %v7886 = vsel %vm4250, %v4016, 0
        %7888 = vmatpush.msra.mxu0 0.0
        %7889 = vmatpush.msra.mxu0 0.0
        %7890 = vmatpush.msra.mxu0 0.0
        %7891 = vmatpush.msra.mxu0 0.0
        %7892 = vmatpush.msra.mxu0 0.0
        %7893 = vmatpush.msra.mxu0 0.0
        %7894 = vmatpush.msra.mxu0 0.0
        %7895 = vmatpush.msra.mxu0 0.0
        %7896 = vmatpush.msra.mxu0 0.0
        %7897 = vmatpush.msra.mxu0 0.0
        %7898 = vmatpush.msra.mxu0 0.0
        %7899 = vmatpush.msra.mxu0 0.0
        %7900 = vmatpush.msra.mxu0 0.0
        %7901 = vmatpush.msra.mxu0 0.0
        %7902 = vmatpush.msra.mxu0 0.0
        %7903 = vmatpush.msra.mxu0 %v4212
        %7904 = vmatmul.f32.gmra.mxu0 %v7886
        %v7905 = vpop.f32.mrf.mxu0
        %v7906 = vadd.f32 0.0, %v7905
        %7907 = vdwg.mxu0
        %v7909 = vsel %vm4250, %v4017, 0
        %7911 = vmatpush.msra.mxu0 0.0
        %7912 = vmatpush.msra.mxu0 0.0
        %7913 = vmatpush.msra.mxu0 0.0
        %7914 = vmatpush.msra.mxu0 0.0
        %7915 = vmatpush.msra.mxu0 0.0
        %7916 = vmatpush.msra.mxu0 0.0
        %7917 = vmatpush.msra.mxu0 0.0
        %7918 = vmatpush.msra.mxu0 0.0
        %7919 = vmatpush.msra.mxu0 0.0
        %7920 = vmatpush.msra.mxu0 0.0
        %7921 = vmatpush.msra.mxu0 0.0
        %7922 = vmatpush.msra.mxu0 0.0
        %7923 = vmatpush.msra.mxu0 0.0
        %7924 = vmatpush.msra.mxu0 0.0
        %7925 = vmatpush.msra.mxu0 0.0
        %7926 = vmatpush.msra.mxu0 %v4213
        %7927 = vmatmul.f32.gmra.mxu0 %v7909
        %v7928 = vpop.f32.mrf.mxu0
        %v7929 = vadd.f32 0.0, %v7928
        %7930 = vdwg.mxu0
        %v7932 = vsel %vm4250, %v4018, 0
        %7934 = vmatpush.msra.mxu0 0.0
        %7935 = vmatpush.msra.mxu0 0.0
        %7936 = vmatpush.msra.mxu0 0.0
        %7937 = vmatpush.msra.mxu0 0.0
        %7938 = vmatpush.msra.mxu0 0.0
        %7939 = vmatpush.msra.mxu0 0.0
        %7940 = vmatpush.msra.mxu0 0.0
        %7941 = vmatpush.msra.mxu0 0.0
        %7942 = vmatpush.msra.mxu0 0.0
        %7943 = vmatpush.msra.mxu0 0.0
        %7944 = vmatpush.msra.mxu0 0.0
        %7945 = vmatpush.msra.mxu0 0.0
        %7946 = vmatpush.msra.mxu0 0.0
        %7947 = vmatpush.msra.mxu0 0.0
        %7948 = vmatpush.msra.mxu0 0.0
        %7949 = vmatpush.msra.mxu0 %v4214
        %7950 = vmatmul.f32.gmra.mxu0 %v7932
        %v7951 = vpop.f32.mrf.mxu0
        %v7952 = vadd.f32 0.0, %v7951
        %7953 = vdwg.mxu0
        %v7955 = vsel %vm4250, %v4019, 0
        %7957 = vmatpush.msra.mxu0 0.0
        %7958 = vmatpush.msra.mxu0 0.0
        %7959 = vmatpush.msra.mxu0 0.0
        %7960 = vmatpush.msra.mxu0 0.0
        %7961 = vmatpush.msra.mxu0 0.0
        %7962 = vmatpush.msra.mxu0 0.0
        %7963 = vmatpush.msra.mxu0 0.0
        %7964 = vmatpush.msra.mxu0 0.0
        %7965 = vmatpush.msra.mxu0 0.0
        %7966 = vmatpush.msra.mxu0 0.0
        %7967 = vmatpush.msra.mxu0 0.0
        %7968 = vmatpush.msra.mxu0 0.0
        %7969 = vmatpush.msra.mxu0 0.0
        %7970 = vmatpush.msra.mxu0 0.0
        %7971 = vmatpush.msra.mxu0 0.0
        %7972 = vmatpush.msra.mxu0 %v4215
        %7973 = vmatmul.f32.gmra.mxu0 %v7955
        %v7974 = vpop.f32.mrf.mxu0
        %v7975 = vadd.f32 0.0, %v7974
        %7976 = vdwg.mxu0
        %v7978 = vsel %vm4250, %v4020, 0
        %7980 = vmatpush.msra.mxu0 0.0
        %7981 = vmatpush.msra.mxu0 0.0
        %7982 = vmatpush.msra.mxu0 0.0
        %7983 = vmatpush.msra.mxu0 0.0
        %7984 = vmatpush.msra.mxu0 0.0
        %7985 = vmatpush.msra.mxu0 0.0
        %7986 = vmatpush.msra.mxu0 0.0
        %7987 = vmatpush.msra.mxu0 0.0
        %7988 = vmatpush.msra.mxu0 0.0
        %7989 = vmatpush.msra.mxu0 0.0
        %7990 = vmatpush.msra.mxu0 0.0
        %7991 = vmatpush.msra.mxu0 0.0
        %7992 = vmatpush.msra.mxu0 0.0
        %7993 = vmatpush.msra.mxu0 0.0
        %7994 = vmatpush.msra.mxu0 0.0
        %7995 = vmatpush.msra.mxu0 %v4216
        %7996 = vmatmul.f32.gmra.mxu0 %v7978
        %v7997 = vpop.f32.mrf.mxu0
        %v7998 = vadd.f32 0.0, %v7997
        %7999 = vdwg.mxu0
        %v8001 = vsel %vm4250, %v4021, 0
        %8003 = vmatpush.msra.mxu0 0.0
        %8004 = vmatpush.msra.mxu0 0.0
        %8005 = vmatpush.msra.mxu0 0.0
        %8006 = vmatpush.msra.mxu0 0.0
        %8007 = vmatpush.msra.mxu0 0.0
        %8008 = vmatpush.msra.mxu0 0.0
        %8009 = vmatpush.msra.mxu0 0.0
        %8010 = vmatpush.msra.mxu0 0.0
        %8011 = vmatpush.msra.mxu0 0.0
        %8012 = vmatpush.msra.mxu0 0.0
        %8013 = vmatpush.msra.mxu0 0.0
        %8014 = vmatpush.msra.mxu0 0.0
        %8015 = vmatpush.msra.mxu0 0.0
        %8016 = vmatpush.msra.mxu0 0.0
        %8017 = vmatpush.msra.mxu0 0.0
        %8018 = vmatpush.msra.mxu0 %v4217
        %8019 = vmatmul.f32.gmra.mxu0 %v8001
        %v8020 = vpop.f32.mrf.mxu0
        %v8021 = vadd.f32 0.0, %v8020
        %8022 = vdwg.mxu0
        %v8024 = vsel %vm4250, %v4022, 0
        %8026 = vmatpush.msra.mxu0 0.0
        %8027 = vmatpush.msra.mxu0 0.0
        %8028 = vmatpush.msra.mxu0 0.0
        %8029 = vmatpush.msra.mxu0 0.0
        %8030 = vmatpush.msra.mxu0 0.0
        %8031 = vmatpush.msra.mxu0 0.0
        %8032 = vmatpush.msra.mxu0 0.0
        %8033 = vmatpush.msra.mxu0 0.0
        %8034 = vmatpush.msra.mxu0 0.0
        %8035 = vmatpush.msra.mxu0 0.0
        %8036 = vmatpush.msra.mxu0 0.0
        %8037 = vmatpush.msra.mxu0 0.0
        %8038 = vmatpush.msra.mxu0 0.0
        %8039 = vmatpush.msra.mxu0 0.0
        %8040 = vmatpush.msra.mxu0 0.0
        %8041 = vmatpush.msra.mxu0 %v4218
        %8042 = vmatmul.f32.gmra.mxu0 %v8024
        %v8043 = vpop.f32.mrf.mxu0
        %v8044 = vadd.f32 0.0, %v8043
        %8045 = vdwg.mxu0
        %v8047 = vsel %vm4250, %v4023, 0
        %8049 = vmatpush.msra.mxu0 0.0
        %8050 = vmatpush.msra.mxu0 0.0
        %8051 = vmatpush.msra.mxu0 0.0
        %8052 = vmatpush.msra.mxu0 0.0
        %8053 = vmatpush.msra.mxu0 0.0
        %8054 = vmatpush.msra.mxu0 0.0
        %8055 = vmatpush.msra.mxu0 0.0
        %8056 = vmatpush.msra.mxu0 0.0
        %8057 = vmatpush.msra.mxu0 0.0
        %8058 = vmatpush.msra.mxu0 0.0
        %8059 = vmatpush.msra.mxu0 0.0
        %8060 = vmatpush.msra.mxu0 0.0
        %8061 = vmatpush.msra.mxu0 0.0
        %8062 = vmatpush.msra.mxu0 0.0
        %8063 = vmatpush.msra.mxu0 0.0
        %8064 = vmatpush.msra.mxu0 %v4219
        %8065 = vmatmul.f32.gmra.mxu0 %v8047
        %v8066 = vpop.f32.mrf.mxu0
        %v8067 = vadd.f32 0.0, %v8066
        %8068 = vdwg.mxu0
        %v8070 = vsel %vm4250, %v4024, 0
        %8072 = vmatpush.msra.mxu0 0.0
        %8073 = vmatpush.msra.mxu0 0.0
        %8074 = vmatpush.msra.mxu0 0.0
        %8075 = vmatpush.msra.mxu0 0.0
        %8076 = vmatpush.msra.mxu0 0.0
        %8077 = vmatpush.msra.mxu0 0.0
        %8078 = vmatpush.msra.mxu0 0.0
        %8079 = vmatpush.msra.mxu0 0.0
        %8080 = vmatpush.msra.mxu0 0.0
        %8081 = vmatpush.msra.mxu0 0.0
        %8082 = vmatpush.msra.mxu0 0.0
        %8083 = vmatpush.msra.mxu0 0.0
        %8084 = vmatpush.msra.mxu0 0.0
        %8085 = vmatpush.msra.mxu0 0.0
        %8086 = vmatpush.msra.mxu0 0.0
        %8087 = vmatpush.msra.mxu0 %v4220
        %8088 = vmatmul.f32.gmra.mxu0 %v8070
        %v8089 = vpop.f32.mrf.mxu0
        %v8090 = vadd.f32 0.0, %v8089
        %8091 = vdwg.mxu0
        %v8093 = vsel %vm4250, %v4025, 0
        %8095 = vmatpush.msra.mxu0 0.0
        %8096 = vmatpush.msra.mxu0 0.0
        %8097 = vmatpush.msra.mxu0 0.0
        %8098 = vmatpush.msra.mxu0 0.0
        %8099 = vmatpush.msra.mxu0 0.0
        %8100 = vmatpush.msra.mxu0 0.0
        %8101 = vmatpush.msra.mxu0 0.0
        %8102 = vmatpush.msra.mxu0 0.0
        %8103 = vmatpush.msra.mxu0 0.0
        %8104 = vmatpush.msra.mxu0 0.0
        %8105 = vmatpush.msra.mxu0 0.0
        %8106 = vmatpush.msra.mxu0 0.0
        %8107 = vmatpush.msra.mxu0 0.0
        %8108 = vmatpush.msra.mxu0 0.0
        %8109 = vmatpush.msra.mxu0 0.0
        %8110 = vmatpush.msra.mxu0 %v4221
        %8111 = vmatmul.f32.gmra.mxu0 %v8093
        %v8112 = vpop.f32.mrf.mxu0
        %v8113 = vadd.f32 0.0, %v8112
        %8114 = vdwg.mxu0
        %v8116 = vsel %vm4250, %v4026, 0
        %8118 = vmatpush.msra.mxu0 0.0
        %8119 = vmatpush.msra.mxu0 0.0
        %8120 = vmatpush.msra.mxu0 0.0
        %8121 = vmatpush.msra.mxu0 0.0
        %8122 = vmatpush.msra.mxu0 0.0
        %8123 = vmatpush.msra.mxu0 0.0
        %8124 = vmatpush.msra.mxu0 0.0
        %8125 = vmatpush.msra.mxu0 0.0
        %8126 = vmatpush.msra.mxu0 0.0
        %8127 = vmatpush.msra.mxu0 0.0
        %8128 = vmatpush.msra.mxu0 0.0
        %8129 = vmatpush.msra.mxu0 0.0
        %8130 = vmatpush.msra.mxu0 0.0
        %8131 = vmatpush.msra.mxu0 0.0
        %8132 = vmatpush.msra.mxu0 0.0
        %8133 = vmatpush.msra.mxu0 %v4222
        %8134 = vmatmul.f32.gmra.mxu0 %v8116
        %v8135 = vpop.f32.mrf.mxu0
        %v8136 = vadd.f32 0.0, %v8135
        %8137 = vdwg.mxu0
        %v8139 = vsel %vm4250, %v4027, 0
        %8141 = vmatpush.msra.mxu0 0.0
        %8142 = vmatpush.msra.mxu0 0.0
        %8143 = vmatpush.msra.mxu0 0.0
        %8144 = vmatpush.msra.mxu0 0.0
        %8145 = vmatpush.msra.mxu0 0.0
        %8146 = vmatpush.msra.mxu0 0.0
        %8147 = vmatpush.msra.mxu0 0.0
        %8148 = vmatpush.msra.mxu0 0.0
        %8149 = vmatpush.msra.mxu0 0.0
        %8150 = vmatpush.msra.mxu0 0.0
        %8151 = vmatpush.msra.mxu0 0.0
        %8152 = vmatpush.msra.mxu0 0.0
        %8153 = vmatpush.msra.mxu0 0.0
        %8154 = vmatpush.msra.mxu0 0.0
        %8155 = vmatpush.msra.mxu0 0.0
        %8156 = vmatpush.msra.mxu0 %v4223
        %8157 = vmatmul.f32.gmra.mxu0 %v8139
        %v8158 = vpop.f32.mrf.mxu0
        %v8159 = vadd.f32 0.0, %v8158
        %8160 = vdwg.mxu0
        %v8162 = vsel %vm4250, %v4028, 0
        %8164 = vmatpush.msra.mxu0 0.0
        %8165 = vmatpush.msra.mxu0 0.0
        %8166 = vmatpush.msra.mxu0 0.0
        %8167 = vmatpush.msra.mxu0 0.0
        %8168 = vmatpush.msra.mxu0 0.0
        %8169 = vmatpush.msra.mxu0 0.0
        %8170 = vmatpush.msra.mxu0 0.0
        %8171 = vmatpush.msra.mxu0 0.0
        %8172 = vmatpush.msra.mxu0 0.0
        %8173 = vmatpush.msra.mxu0 0.0
        %8174 = vmatpush.msra.mxu0 0.0
        %8175 = vmatpush.msra.mxu0 0.0
        %8176 = vmatpush.msra.mxu0 0.0
        %8177 = vmatpush.msra.mxu0 0.0
        %8178 = vmatpush.msra.mxu0 0.0
        %8179 = vmatpush.msra.mxu0 %v4224
        %8180 = vmatmul.f32.gmra.mxu0 %v8162
        %v8181 = vpop.f32.mrf.mxu0
        %v8182 = vadd.f32 0.0, %v8181
        %8183 = vdwg.mxu0
        %v8185 = vsel %vm4250, %v4029, 0
        %8187 = vmatpush.msra.mxu0 0.0
        %8188 = vmatpush.msra.mxu0 0.0
        %8189 = vmatpush.msra.mxu0 0.0
        %8190 = vmatpush.msra.mxu0 0.0
        %8191 = vmatpush.msra.mxu0 0.0
        %8192 = vmatpush.msra.mxu0 0.0
        %8193 = vmatpush.msra.mxu0 0.0
        %8194 = vmatpush.msra.mxu0 0.0
        %8195 = vmatpush.msra.mxu0 0.0
        %8196 = vmatpush.msra.mxu0 0.0
        %8197 = vmatpush.msra.mxu0 0.0
        %8198 = vmatpush.msra.mxu0 0.0
        %8199 = vmatpush.msra.mxu0 0.0
        %8200 = vmatpush.msra.mxu0 0.0
        %8201 = vmatpush.msra.mxu0 0.0
        %8202 = vmatpush.msra.mxu0 %v4225
        %8203 = vmatmul.f32.gmra.mxu0 %v8185
        %v8204 = vpop.f32.mrf.mxu0
        %v8205 = vadd.f32 0.0, %v8204
        %8206 = vdwg.mxu0
        %v8208 = vsel %vm4250, %v4030, 0
        %8210 = vmatpush.msra.mxu0 0.0
        %8211 = vmatpush.msra.mxu0 0.0
        %8212 = vmatpush.msra.mxu0 0.0
        %8213 = vmatpush.msra.mxu0 0.0
        %8214 = vmatpush.msra.mxu0 0.0
        %8215 = vmatpush.msra.mxu0 0.0
        %8216 = vmatpush.msra.mxu0 0.0
        %8217 = vmatpush.msra.mxu0 0.0
        %8218 = vmatpush.msra.mxu0 0.0
        %8219 = vmatpush.msra.mxu0 0.0
        %8220 = vmatpush.msra.mxu0 0.0
        %8221 = vmatpush.msra.mxu0 0.0
        %8222 = vmatpush.msra.mxu0 0.0
        %8223 = vmatpush.msra.mxu0 0.0
        %8224 = vmatpush.msra.mxu0 0.0
        %8225 = vmatpush.msra.mxu0 %v4226
        %8226 = vmatmul.f32.gmra.mxu0 %v8208
        %v8227 = vpop.f32.mrf.mxu0
        %v8228 = vadd.f32 0.0, %v8227
        %8229 = vdwg.mxu0
        %v8231 = vsel %vm4250, %v4031, 0
        %8233 = vmatpush.msra.mxu0 0.0
        %8234 = vmatpush.msra.mxu0 0.0
        %8235 = vmatpush.msra.mxu0 0.0
        %8236 = vmatpush.msra.mxu0 0.0
        %8237 = vmatpush.msra.mxu0 0.0
        %8238 = vmatpush.msra.mxu0 0.0
        %8239 = vmatpush.msra.mxu0 0.0
        %8240 = vmatpush.msra.mxu0 0.0
        %8241 = vmatpush.msra.mxu0 0.0
        %8242 = vmatpush.msra.mxu0 0.0
        %8243 = vmatpush.msra.mxu0 0.0
        %8244 = vmatpush.msra.mxu0 0.0
        %8245 = vmatpush.msra.mxu0 0.0
        %8246 = vmatpush.msra.mxu0 0.0
        %8247 = vmatpush.msra.mxu0 0.0
        %8248 = vmatpush.msra.mxu0 %v4227
        %8249 = vmatmul.f32.gmra.mxu0 %v8231
        %v8250 = vpop.f32.mrf.mxu0
        %v8251 = vadd.f32 0.0, %v8250
        %8252 = vdwg.mxu0
        %v8254 = vsel %vm4250, %v4032, 0
        %8256 = vmatpush.msra.mxu0 0.0
        %8257 = vmatpush.msra.mxu0 0.0
        %8258 = vmatpush.msra.mxu0 0.0
        %8259 = vmatpush.msra.mxu0 0.0
        %8260 = vmatpush.msra.mxu0 0.0
        %8261 = vmatpush.msra.mxu0 0.0
        %8262 = vmatpush.msra.mxu0 0.0
        %8263 = vmatpush.msra.mxu0 0.0
        %8264 = vmatpush.msra.mxu0 0.0
        %8265 = vmatpush.msra.mxu0 0.0
        %8266 = vmatpush.msra.mxu0 0.0
        %8267 = vmatpush.msra.mxu0 0.0
        %8268 = vmatpush.msra.mxu0 0.0
        %8269 = vmatpush.msra.mxu0 0.0
        %8270 = vmatpush.msra.mxu0 0.0
        %8271 = vmatpush.msra.mxu0 %v4228
        %8272 = vmatmul.f32.gmra.mxu0 %v8254
        %v8273 = vpop.f32.mrf.mxu0
        %v8274 = vadd.f32 0.0, %v8273
        %8275 = vdwg.mxu0
        %v8277 = vsel %vm4250, %v4033, 0
        %8279 = vmatpush.msra.mxu0 0.0
        %8280 = vmatpush.msra.mxu0 0.0
        %8281 = vmatpush.msra.mxu0 0.0
        %8282 = vmatpush.msra.mxu0 0.0
        %8283 = vmatpush.msra.mxu0 0.0
        %8284 = vmatpush.msra.mxu0 0.0
        %8285 = vmatpush.msra.mxu0 0.0
        %8286 = vmatpush.msra.mxu0 0.0
        %8287 = vmatpush.msra.mxu0 0.0
        %8288 = vmatpush.msra.mxu0 0.0
        %8289 = vmatpush.msra.mxu0 0.0
        %8290 = vmatpush.msra.mxu0 0.0
        %8291 = vmatpush.msra.mxu0 0.0
        %8292 = vmatpush.msra.mxu0 0.0
        %8293 = vmatpush.msra.mxu0 0.0
        %8294 = vmatpush.msra.mxu0 %v4229
        %8295 = vmatmul.f32.gmra.mxu0 %v8277
        %v8296 = vpop.f32.mrf.mxu0
        %v8297 = vadd.f32 0.0, %v8296
        %8298 = vdwg.mxu0
        %v8300 = vsel %vm4250, %v4034, 0
        %8302 = vmatpush.msra.mxu0 0.0
        %8303 = vmatpush.msra.mxu0 0.0
        %8304 = vmatpush.msra.mxu0 0.0
        %8305 = vmatpush.msra.mxu0 0.0
        %8306 = vmatpush.msra.mxu0 0.0
        %8307 = vmatpush.msra.mxu0 0.0
        %8308 = vmatpush.msra.mxu0 0.0
        %8309 = vmatpush.msra.mxu0 0.0
        %8310 = vmatpush.msra.mxu0 0.0
        %8311 = vmatpush.msra.mxu0 0.0
        %8312 = vmatpush.msra.mxu0 0.0
        %8313 = vmatpush.msra.mxu0 0.0
        %8314 = vmatpush.msra.mxu0 0.0
        %8315 = vmatpush.msra.mxu0 0.0
        %8316 = vmatpush.msra.mxu0 0.0
        %8317 = vmatpush.msra.mxu0 %v4230
        %8318 = vmatmul.f32.gmra.mxu0 %v8300
        %v8319 = vpop.f32.mrf.mxu0
        %v8320 = vadd.f32 0.0, %v8319
        %8321 = vdwg.mxu0
        %v8323 = vsel %vm4250, %v4035, 0
        %8325 = vmatpush.msra.mxu0 0.0
        %8326 = vmatpush.msra.mxu0 0.0
        %8327 = vmatpush.msra.mxu0 0.0
        %8328 = vmatpush.msra.mxu0 0.0
        %8329 = vmatpush.msra.mxu0 0.0
        %8330 = vmatpush.msra.mxu0 0.0
        %8331 = vmatpush.msra.mxu0 0.0
        %8332 = vmatpush.msra.mxu0 0.0
        %8333 = vmatpush.msra.mxu0 0.0
        %8334 = vmatpush.msra.mxu0 0.0
        %8335 = vmatpush.msra.mxu0 0.0
        %8336 = vmatpush.msra.mxu0 0.0
        %8337 = vmatpush.msra.mxu0 0.0
        %8338 = vmatpush.msra.mxu0 0.0
        %8339 = vmatpush.msra.mxu0 0.0
        %8340 = vmatpush.msra.mxu0 %v4231
        %8341 = vmatmul.f32.gmra.mxu0 %v8323
        %v8342 = vpop.f32.mrf.mxu0
        %v8343 = vadd.f32 0.0, %v8342
        %8344 = vdwg.mxu0
        %v8346 = vsel %vm4250, %v4036, 0
        %8348 = vmatpush.msra.mxu0 0.0
        %8349 = vmatpush.msra.mxu0 0.0
        %8350 = vmatpush.msra.mxu0 0.0
        %8351 = vmatpush.msra.mxu0 0.0
        %8352 = vmatpush.msra.mxu0 0.0
        %8353 = vmatpush.msra.mxu0 0.0
        %8354 = vmatpush.msra.mxu0 0.0
        %8355 = vmatpush.msra.mxu0 0.0
        %8356 = vmatpush.msra.mxu0 0.0
        %8357 = vmatpush.msra.mxu0 0.0
        %8358 = vmatpush.msra.mxu0 0.0
        %8359 = vmatpush.msra.mxu0 0.0
        %8360 = vmatpush.msra.mxu0 0.0
        %8361 = vmatpush.msra.mxu0 0.0
        %8362 = vmatpush.msra.mxu0 0.0
        %8363 = vmatpush.msra.mxu0 %v4232
        %8364 = vmatmul.f32.gmra.mxu0 %v8346
        %v8365 = vpop.f32.mrf.mxu0
        %v8366 = vadd.f32 0.0, %v8365
        %8367 = vdwg.mxu0
        %v8369 = vsel %vm4250, %v4037, 0
        %8371 = vmatpush.msra.mxu0 0.0
        %8372 = vmatpush.msra.mxu0 0.0
        %8373 = vmatpush.msra.mxu0 0.0
        %8374 = vmatpush.msra.mxu0 0.0
        %8375 = vmatpush.msra.mxu0 0.0
        %8376 = vmatpush.msra.mxu0 0.0
        %8377 = vmatpush.msra.mxu0 0.0
        %8378 = vmatpush.msra.mxu0 0.0
        %8379 = vmatpush.msra.mxu0 0.0
        %8380 = vmatpush.msra.mxu0 0.0
        %8381 = vmatpush.msra.mxu0 0.0
        %8382 = vmatpush.msra.mxu0 0.0
        %8383 = vmatpush.msra.mxu0 0.0
        %8384 = vmatpush.msra.mxu0 0.0
        %8385 = vmatpush.msra.mxu0 0.0
        %8386 = vmatpush.msra.mxu0 %v4233
        %8387 = vmatmul.f32.gmra.mxu0 %v8369
        %v8388 = vpop.f32.mrf.mxu0
        %v8389 = vadd.f32 0.0, %v8388
        %8390 = vdwg.mxu0
        %v8392 = vsel %vm4250, %v4038, 0
        %8394 = vmatpush.msra.mxu0 0.0
        %8395 = vmatpush.msra.mxu0 0.0
        %8396 = vmatpush.msra.mxu0 0.0
        %8397 = vmatpush.msra.mxu0 0.0
        %8398 = vmatpush.msra.mxu0 0.0
        %8399 = vmatpush.msra.mxu0 0.0
        %8400 = vmatpush.msra.mxu0 0.0
        %8401 = vmatpush.msra.mxu0 0.0
        %8402 = vmatpush.msra.mxu0 0.0
        %8403 = vmatpush.msra.mxu0 0.0
        %8404 = vmatpush.msra.mxu0 0.0
        %8405 = vmatpush.msra.mxu0 0.0
        %8406 = vmatpush.msra.mxu0 0.0
        %8407 = vmatpush.msra.mxu0 0.0
        %8408 = vmatpush.msra.mxu0 0.0
        %8409 = vmatpush.msra.mxu0 %v4234
        %8410 = vmatmul.f32.gmra.mxu0 %v8392
        %v8411 = vpop.f32.mrf.mxu0
        %v8412 = vadd.f32 0.0, %v8411
        %8413 = vdwg.mxu0
        %v8415 = vsel %vm4250, %v4039, 0
        %8417 = vmatpush.msra.mxu0 0.0
        %8418 = vmatpush.msra.mxu0 0.0
        %8419 = vmatpush.msra.mxu0 0.0
        %8420 = vmatpush.msra.mxu0 0.0
        %8421 = vmatpush.msra.mxu0 0.0
        %8422 = vmatpush.msra.mxu0 0.0
        %8423 = vmatpush.msra.mxu0 0.0
        %8424 = vmatpush.msra.mxu0 0.0
        %8425 = vmatpush.msra.mxu0 0.0
        %8426 = vmatpush.msra.mxu0 0.0
        %8427 = vmatpush.msra.mxu0 0.0
        %8428 = vmatpush.msra.mxu0 0.0
        %8429 = vmatpush.msra.mxu0 0.0
        %8430 = vmatpush.msra.mxu0 0.0
        %8431 = vmatpush.msra.mxu0 0.0
        %8432 = vmatpush.msra.mxu0 %v4235
        %8433 = vmatmul.f32.gmra.mxu0 %v8415
        %v8434 = vpop.f32.mrf.mxu0
        %v8435 = vadd.f32 0.0, %v8434
        %8436 = vdwg.mxu0
        %v8438 = vsel %vm4250, %v4040, 0
        %8440 = vmatpush.msra.mxu0 0.0
        %8441 = vmatpush.msra.mxu0 0.0
        %8442 = vmatpush.msra.mxu0 0.0
        %8443 = vmatpush.msra.mxu0 0.0
        %8444 = vmatpush.msra.mxu0 0.0
        %8445 = vmatpush.msra.mxu0 0.0
        %8446 = vmatpush.msra.mxu0 0.0
        %8447 = vmatpush.msra.mxu0 0.0
        %8448 = vmatpush.msra.mxu0 0.0
        %8449 = vmatpush.msra.mxu0 0.0
        %8450 = vmatpush.msra.mxu0 0.0
        %8451 = vmatpush.msra.mxu0 0.0
        %8452 = vmatpush.msra.mxu0 0.0
        %8453 = vmatpush.msra.mxu0 0.0
        %8454 = vmatpush.msra.mxu0 0.0
        %8455 = vmatpush.msra.mxu0 %v4236
        %8456 = vmatmul.f32.gmra.mxu0 %v8438
        %v8457 = vpop.f32.mrf.mxu0
        %v8458 = vadd.f32 0.0, %v8457
        %8459 = vdwg.mxu0
        %v8461 = vsel %vm4250, %v4041, 0
        %8463 = vmatpush.msra.mxu0 0.0
        %8464 = vmatpush.msra.mxu0 0.0
        %8465 = vmatpush.msra.mxu0 0.0
        %8466 = vmatpush.msra.mxu0 0.0
        %8467 = vmatpush.msra.mxu0 0.0
        %8468 = vmatpush.msra.mxu0 0.0
        %8469 = vmatpush.msra.mxu0 0.0
        %8470 = vmatpush.msra.mxu0 0.0
        %8471 = vmatpush.msra.mxu0 0.0
        %8472 = vmatpush.msra.mxu0 0.0
        %8473 = vmatpush.msra.mxu0 0.0
        %8474 = vmatpush.msra.mxu0 0.0
        %8475 = vmatpush.msra.mxu0 0.0
        %8476 = vmatpush.msra.mxu0 0.0
        %8477 = vmatpush.msra.mxu0 0.0
        %8478 = vmatpush.msra.mxu0 %v4237
        %8479 = vmatmul.f32.gmra.mxu0 %v8461
        %v8480 = vpop.f32.mrf.mxu0
        %v8481 = vadd.f32 0.0, %v8480
        %8482 = vdwg.mxu0
        %v8484 = vsel %vm4250, %v4042, 0
        %8486 = vmatpush.msra.mxu0 0.0
        %8487 = vmatpush.msra.mxu0 0.0
        %8488 = vmatpush.msra.mxu0 0.0
        %8489 = vmatpush.msra.mxu0 0.0
        %8490 = vmatpush.msra.mxu0 0.0
        %8491 = vmatpush.msra.mxu0 0.0
        %8492 = vmatpush.msra.mxu0 0.0
        %8493 = vmatpush.msra.mxu0 0.0
        %8494 = vmatpush.msra.mxu0 0.0
        %8495 = vmatpush.msra.mxu0 0.0
        %8496 = vmatpush.msra.mxu0 0.0
        %8497 = vmatpush.msra.mxu0 0.0
        %8498 = vmatpush.msra.mxu0 0.0
        %8499 = vmatpush.msra.mxu0 0.0
        %8500 = vmatpush.msra.mxu0 0.0
        %8501 = vmatpush.msra.mxu0 %v4238
        %8502 = vmatmul.f32.gmra.mxu0 %v8484
        %v8503 = vpop.f32.mrf.mxu0
        %v8504 = vadd.f32 0.0, %v8503
        %8505 = vdwg.mxu0
        %v8507 = vsel %vm4250, %v4043, 0
        %8509 = vmatpush.msra.mxu0 0.0
        %8510 = vmatpush.msra.mxu0 0.0
        %8511 = vmatpush.msra.mxu0 0.0
        %8512 = vmatpush.msra.mxu0 0.0
        %8513 = vmatpush.msra.mxu0 0.0
        %8514 = vmatpush.msra.mxu0 0.0
        %8515 = vmatpush.msra.mxu0 0.0
        %8516 = vmatpush.msra.mxu0 0.0
        %8517 = vmatpush.msra.mxu0 0.0
        %8518 = vmatpush.msra.mxu0 0.0
        %8519 = vmatpush.msra.mxu0 0.0
        %8520 = vmatpush.msra.mxu0 0.0
        %8521 = vmatpush.msra.mxu0 0.0
        %8522 = vmatpush.msra.mxu0 0.0
        %8523 = vmatpush.msra.mxu0 0.0
        %8524 = vmatpush.msra.mxu0 %v4239
        %8525 = vmatmul.f32.gmra.mxu0 %v8507
        %v8526 = vpop.f32.mrf.mxu0
        %v8527 = vadd.f32 0.0, %v8526
        %8528 = vdwg.mxu0
        %v8530 = vsel %vm4250, %v4044, 0
        %8532 = vmatpush.msra.mxu0 0.0
        %8533 = vmatpush.msra.mxu0 0.0
        %8534 = vmatpush.msra.mxu0 0.0
        %8535 = vmatpush.msra.mxu0 0.0
        %8536 = vmatpush.msra.mxu0 0.0
        %8537 = vmatpush.msra.mxu0 0.0
        %8538 = vmatpush.msra.mxu0 0.0
        %8539 = vmatpush.msra.mxu0 0.0
        %8540 = vmatpush.msra.mxu0 0.0
        %8541 = vmatpush.msra.mxu0 0.0
        %8542 = vmatpush.msra.mxu0 0.0
        %8543 = vmatpush.msra.mxu0 0.0
        %8544 = vmatpush.msra.mxu0 0.0
        %8545 = vmatpush.msra.mxu0 0.0
        %8546 = vmatpush.msra.mxu0 0.0
        %8547 = vmatpush.msra.mxu0 %v4240
        %8548 = vmatmul.f32.gmra.mxu0 %v8530
        %v8549 = vpop.f32.mrf.mxu0
        %v8550 = vadd.f32 0.0, %v8549
        %8551 = vdwg.mxu0
        %v8553 = vsel %vm4250, %v4045, 0
        %8555 = vmatpush.msra.mxu0 0.0
        %8556 = vmatpush.msra.mxu0 0.0
        %8557 = vmatpush.msra.mxu0 0.0
        %8558 = vmatpush.msra.mxu0 0.0
        %8559 = vmatpush.msra.mxu0 0.0
        %8560 = vmatpush.msra.mxu0 0.0
        %8561 = vmatpush.msra.mxu0 0.0
        %8562 = vmatpush.msra.mxu0 0.0
        %8563 = vmatpush.msra.mxu0 0.0
        %8564 = vmatpush.msra.mxu0 0.0
        %8565 = vmatpush.msra.mxu0 0.0
        %8566 = vmatpush.msra.mxu0 0.0
        %8567 = vmatpush.msra.mxu0 0.0
        %8568 = vmatpush.msra.mxu0 0.0
        %8569 = vmatpush.msra.mxu0 0.0
        %8570 = vmatpush.msra.mxu0 %v4241
        %8571 = vmatmul.f32.gmra.mxu0 %v8553
        %v8572 = vpop.f32.mrf.mxu0
        %v8573 = vadd.f32 0.0, %v8572
        %8574 = vdwg.mxu0
        %v8576 = vsel %vm4250, %v4046, 0
        %8578 = vmatpush.msra.mxu0 0.0
        %8579 = vmatpush.msra.mxu0 0.0
        %8580 = vmatpush.msra.mxu0 0.0
        %8581 = vmatpush.msra.mxu0 0.0
        %8582 = vmatpush.msra.mxu0 0.0
        %8583 = vmatpush.msra.mxu0 0.0
        %8584 = vmatpush.msra.mxu0 0.0
        %8585 = vmatpush.msra.mxu0 0.0
        %8586 = vmatpush.msra.mxu0 0.0
        %8587 = vmatpush.msra.mxu0 0.0
        %8588 = vmatpush.msra.mxu0 0.0
        %8589 = vmatpush.msra.mxu0 0.0
        %8590 = vmatpush.msra.mxu0 0.0
        %8591 = vmatpush.msra.mxu0 0.0
        %8592 = vmatpush.msra.mxu0 0.0
        %8593 = vmatpush.msra.mxu0 %v4242
        %8594 = vmatmul.f32.gmra.mxu0 %v8576
        %v8595 = vpop.f32.mrf.mxu0
        %v8596 = vadd.f32 0.0, %v8595
        %8597 = vdwg.mxu0
        %v8599 = vsel %vm4250, %v4047, 0
        %8601 = vmatpush.msra.mxu0 0.0
        %8602 = vmatpush.msra.mxu0 0.0
        %8603 = vmatpush.msra.mxu0 0.0
        %8604 = vmatpush.msra.mxu0 0.0
        %8605 = vmatpush.msra.mxu0 0.0
        %8606 = vmatpush.msra.mxu0 0.0
        %8607 = vmatpush.msra.mxu0 0.0
        %8608 = vmatpush.msra.mxu0 0.0
        %8609 = vmatpush.msra.mxu0 0.0
        %8610 = vmatpush.msra.mxu0 0.0
        %8611 = vmatpush.msra.mxu0 0.0
        %8612 = vmatpush.msra.mxu0 0.0
        %8613 = vmatpush.msra.mxu0 0.0
        %8614 = vmatpush.msra.mxu0 0.0
        %8615 = vmatpush.msra.mxu0 0.0
        %8616 = vmatpush.msra.mxu0 %v4243
        %8617 = vmatmul.f32.gmra.mxu0 %v8599
        %v8618 = vpop.f32.mrf.mxu0
        %v8619 = vadd.f32 0.0, %v8618
        %8620 = vdwg.mxu0
        %v8622 = vsel %vm4250, %v4048, 0
        %8624 = vmatpush.msra.mxu0 0.0
        %8625 = vmatpush.msra.mxu0 0.0
        %8626 = vmatpush.msra.mxu0 0.0
        %8627 = vmatpush.msra.mxu0 0.0
        %8628 = vmatpush.msra.mxu0 0.0
        %8629 = vmatpush.msra.mxu0 0.0
        %8630 = vmatpush.msra.mxu0 0.0
        %8631 = vmatpush.msra.mxu0 0.0
        %8632 = vmatpush.msra.mxu0 0.0
        %8633 = vmatpush.msra.mxu0 0.0
        %8634 = vmatpush.msra.mxu0 0.0
        %8635 = vmatpush.msra.mxu0 0.0
        %8636 = vmatpush.msra.mxu0 0.0
        %8637 = vmatpush.msra.mxu0 0.0
        %8638 = vmatpush.msra.mxu0 0.0
        %8639 = vmatpush.msra.mxu0 %v4244
        %8640 = vmatmul.f32.gmra.mxu0 %v8622
        %v8641 = vpop.f32.mrf.mxu0
        %v8642 = vadd.f32 0.0, %v8641
        %8643 = vdwg.mxu0
        %v8645 = vsel %vm4250, %v4049, 0
        %8647 = vmatpush.msra.mxu0 0.0
        %8648 = vmatpush.msra.mxu0 0.0
        %8649 = vmatpush.msra.mxu0 0.0
        %8650 = vmatpush.msra.mxu0 0.0
        %8651 = vmatpush.msra.mxu0 0.0
        %8652 = vmatpush.msra.mxu0 0.0
        %8653 = vmatpush.msra.mxu0 0.0
        %8654 = vmatpush.msra.mxu0 0.0
        %8655 = vmatpush.msra.mxu0 0.0
        %8656 = vmatpush.msra.mxu0 0.0
        %8657 = vmatpush.msra.mxu0 0.0
        %8658 = vmatpush.msra.mxu0 0.0
        %8659 = vmatpush.msra.mxu0 0.0
        %8660 = vmatpush.msra.mxu0 0.0
        %8661 = vmatpush.msra.mxu0 0.0
        %8662 = vmatpush.msra.mxu0 %v4245
        %8663 = vmatmul.f32.gmra.mxu0 %v8645
        %v8664 = vpop.f32.mrf.mxu0
        %v8665 = vadd.f32 0.0, %v8664
        %8666 = vdwg.mxu0
        %v8668 = vsel %vm4250, %v4050, 0
        %8670 = vmatpush.msra.mxu0 0.0
        %8671 = vmatpush.msra.mxu0 0.0
        %8672 = vmatpush.msra.mxu0 0.0
        %8673 = vmatpush.msra.mxu0 0.0
        %8674 = vmatpush.msra.mxu0 0.0
        %8675 = vmatpush.msra.mxu0 0.0
        %8676 = vmatpush.msra.mxu0 0.0
        %8677 = vmatpush.msra.mxu0 0.0
        %8678 = vmatpush.msra.mxu0 0.0
        %8679 = vmatpush.msra.mxu0 0.0
        %8680 = vmatpush.msra.mxu0 0.0
        %8681 = vmatpush.msra.mxu0 0.0
        %8682 = vmatpush.msra.mxu0 0.0
        %8683 = vmatpush.msra.mxu0 0.0
        %8684 = vmatpush.msra.mxu0 0.0
        %8685 = vmatpush.msra.mxu0 %v4246
        %8686 = vmatmul.f32.gmra.mxu0 %v8668
        %v8687 = vpop.f32.mrf.mxu0
        %v8688 = vadd.f32 0.0, %v8687
        %8689 = vdwg.mxu0
        %v8691 = vsel %vm4250, %v4051, 0
        %8693 = vmatpush.msra.mxu0 0.0
        %8694 = vmatpush.msra.mxu0 0.0
        %8695 = vmatpush.msra.mxu0 0.0
        %8696 = vmatpush.msra.mxu0 0.0
        %8697 = vmatpush.msra.mxu0 0.0
        %8698 = vmatpush.msra.mxu0 0.0
        %8699 = vmatpush.msra.mxu0 0.0
        %8700 = vmatpush.msra.mxu0 0.0
        %8701 = vmatpush.msra.mxu0 0.0
        %8702 = vmatpush.msra.mxu0 0.0
        %8703 = vmatpush.msra.mxu0 0.0
        %8704 = vmatpush.msra.mxu0 0.0
        %8705 = vmatpush.msra.mxu0 0.0
        %8706 = vmatpush.msra.mxu0 0.0
        %8707 = vmatpush.msra.mxu0 0.0
        %8708 = vmatpush.msra.mxu0 %v4247
        %8709 = vmatmul.f32.gmra.mxu0 %v8691
        %v8710 = vpop.f32.mrf.mxu0
        %v8711 = vadd.f32 0.0, %v8710
        %8712 = vdwg.mxu0
        %v8714 = vsel %vm4250, %v4052, 0
        %8716 = vmatpush.msra.mxu0 0.0
        %8717 = vmatpush.msra.mxu0 0.0
        %8718 = vmatpush.msra.mxu0 0.0
        %8719 = vmatpush.msra.mxu0 0.0
        %8720 = vmatpush.msra.mxu0 0.0
        %8721 = vmatpush.msra.mxu0 0.0
        %8722 = vmatpush.msra.mxu0 0.0
        %8723 = vmatpush.msra.mxu0 0.0
        %8724 = vmatpush.msra.mxu0 0.0
        %8725 = vmatpush.msra.mxu0 0.0
        %8726 = vmatpush.msra.mxu0 0.0
        %8727 = vmatpush.msra.mxu0 0.0
        %8728 = vmatpush.msra.mxu0 0.0
        %8729 = vmatpush.msra.mxu0 0.0
        %8730 = vmatpush.msra.mxu0 0.0
        %8731 = vmatpush.msra.mxu0 %v4248
        %8732 = vmatmul.f32.gmra.mxu0 %v8714
        %v8733 = vpop.f32.mrf.mxu0
        %v8734 = vadd.f32 0.0, %v8733
        %8735 = vdwg.mxu0
        %v8737 = vsel %vm4250, %v4053, 0
        %8739 = vmatpush.msra.mxu0 0.0
        %8740 = vmatpush.msra.mxu0 0.0
        %8741 = vmatpush.msra.mxu0 0.0
        %8742 = vmatpush.msra.mxu0 0.0
        %8743 = vmatpush.msra.mxu0 0.0
        %8744 = vmatpush.msra.mxu0 0.0
        %8745 = vmatpush.msra.mxu0 0.0
        %8746 = vmatpush.msra.mxu0 0.0
        %8747 = vmatpush.msra.mxu0 0.0
        %8748 = vmatpush.msra.mxu0 0.0
        %8749 = vmatpush.msra.mxu0 0.0
        %8750 = vmatpush.msra.mxu0 0.0
        %8751 = vmatpush.msra.mxu0 0.0
        %8752 = vmatpush.msra.mxu0 0.0
        %8753 = vmatpush.msra.mxu0 0.0
        %8754 = vmatpush.msra.mxu0 %v4249
        %8755 = vmatmul.f32.gmra.mxu0 %v8737
        %v8756 = vpop.f32.mrf.mxu0
        %v8757 = vadd.f32 0.0, %v8756
        %8758 = vdwg.mxu0
        %v8759 = vadd.f32 %v4272, %v4295
        %v8760 = vadd.f32 %v8759, %v4318
        %v8761 = vadd.f32 %v8760, %v4341
        %v8762 = vadd.f32 %v8761, %v4364
        %v8763 = vadd.f32 %v8762, %v4387
        %v8764 = vadd.f32 %v8763, %v4410
        %v8765 = vadd.f32 %v8764, %v4433
        %v8766 = vadd.f32 %v8765, %v4456
        %v8767 = vadd.f32 %v8766, %v4479
        %v8768 = vadd.f32 %v8767, %v4502
        %v8769 = vadd.f32 %v8768, %v4525
        %v8770 = vadd.f32 %v8769, %v4548
        %v8771 = vadd.f32 %v8770, %v4571
        %v8772 = vadd.f32 %v8771, %v4594
        %v8773 = vadd.f32 %v8772, %v4617
        %v8774 = vadd.f32 %v8773, %v4640
        %v8775 = vadd.f32 %v8774, %v4663
        %v8776 = vadd.f32 %v8775, %v4686
        %v8777 = vadd.f32 %v8776, %v4709
        %v8778 = vadd.f32 %v8777, %v4732
        %v8779 = vadd.f32 %v8778, %v4755
        %v8780 = vadd.f32 %v8779, %v4778
        %v8781 = vadd.f32 %v8780, %v4801
        %v8782 = vadd.f32 %v8781, %v4824
        %v8783 = vadd.f32 %v8782, %v4847
        %v8784 = vadd.f32 %v8783, %v4870
        %v8785 = vadd.f32 %v8784, %v4893
        %v8786 = vadd.f32 %v8785, %v4916
        %v8787 = vadd.f32 %v8786, %v4939
        %v8788 = vadd.f32 %v8787, %v4962
        %v8789 = vadd.f32 %v8788, %v4985
        %v8790 = vadd.f32 %v8789, %v5008
        %v8791 = vadd.f32 %v8790, %v5031
        %v8792 = vadd.f32 %v8791, %v5054
        %v8793 = vadd.f32 %v8792, %v5077
        %v8794 = vadd.f32 %v8793, %v5100
        %v8795 = vadd.f32 %v8794, %v5123
        %v8796 = vadd.f32 %v8795, %v5146
        %v8797 = vadd.f32 %v8796, %v5169
        %v8798 = vadd.f32 %v8797, %v5192
        %v8799 = vadd.f32 %v8798, %v5215
        %v8800 = vadd.f32 %v8799, %v5238
        %v8801 = vadd.f32 %v8800, %v5261
        %v8802 = vadd.f32 %v8801, %v5284
        %v8803 = vadd.f32 %v8802, %v5307
        %v8804 = vadd.f32 %v8803, %v5330
        %v8805 = vadd.f32 %v8804, %v5353
        %v8806 = vadd.f32 %v8805, %v5376
        %v8807 = vadd.f32 %v8806, %v5399
        %v8808 = vadd.f32 %v8807, %v5422
        %v8809 = vadd.f32 %v8808, %v5445
        %v8810 = vadd.f32 %v8809, %v5468
        %v8811 = vadd.f32 %v8810, %v5491
        %v8812 = vadd.f32 %v8811, %v5514
        %v8813 = vadd.f32 %v8812, %v5537
        %v8814 = vadd.f32 %v8813, %v5560
        %v8815 = vadd.f32 %v8814, %v5583
        %v8816 = vadd.f32 %v8815, %v5606
        %v8817 = vadd.f32 %v8816, %v5629
        %v8818 = vadd.f32 %v8817, %v5652
        %v8819 = vadd.f32 %v8818, %v5675
        %v8820 = vadd.f32 %v8819, %v5698
        %v8821 = vadd.f32 %v8820, %v5721
        %v8822 = vadd.f32 %v8821, %v5744
        %v8823 = vadd.f32 %v8822, %v5767
        %v8824 = vadd.f32 %v8823, %v5790
        %v8825 = vadd.f32 %v8824, %v5813
        %v8826 = vadd.f32 %v8825, %v5836
        %v8827 = vadd.f32 %v8826, %v5859
        %v8828 = vadd.f32 %v8827, %v5882
        %v8829 = vadd.f32 %v8828, %v5905
        %v8830 = vadd.f32 %v8829, %v5928
        %v8831 = vadd.f32 %v8830, %v5951
        %v8832 = vadd.f32 %v8831, %v5974
        %v8833 = vadd.f32 %v8832, %v5997
        %v8834 = vadd.f32 %v8833, %v6020
        %v8835 = vadd.f32 %v8834, %v6043
        %v8836 = vadd.f32 %v8835, %v6066
        %v8837 = vadd.f32 %v8836, %v6089
        %v8838 = vadd.f32 %v8837, %v6112
        %v8839 = vadd.f32 %v8838, %v6135
        %v8840 = vadd.f32 %v8839, %v6158
        %v8841 = vadd.f32 %v8840, %v6181
        %v8842 = vadd.f32 %v8841, %v6204
        %v8843 = vadd.f32 %v8842, %v6227
        %v8844 = vadd.f32 %v8843, %v6250
        %v8845 = vadd.f32 %v8844, %v6273
        %v8846 = vadd.f32 %v8845, %v6296
        %v8847 = vadd.f32 %v8846, %v6319
        %v8848 = vadd.f32 %v8847, %v6342
        %v8849 = vadd.f32 %v8848, %v6365
        %v8850 = vadd.f32 %v8849, %v6388
        %v8851 = vadd.f32 %v8850, %v6411
        %v8852 = vadd.f32 %v8851, %v6434
        %v8853 = vadd.f32 %v8852, %v6457
        %v8854 = vadd.f32 %v8853, %v6480
        %v8855 = vadd.f32 %v8854, %v6503
        %v8856 = vadd.f32 %v8855, %v6526
        %v8857 = vadd.f32 %v8856, %v6549
        %v8858 = vadd.f32 %v8857, %v6572
        %v8859 = vadd.f32 %v8858, %v6595
        %v8860 = vadd.f32 %v8859, %v6618
        %v8861 = vadd.f32 %v8860, %v6641
        %v8862 = vadd.f32 %v8861, %v6664
        %v8863 = vadd.f32 %v8862, %v6687
        %v8864 = vadd.f32 %v8863, %v6710
        %v8865 = vadd.f32 %v8864, %v6733
        %v8866 = vadd.f32 %v8865, %v6756
        %v8867 = vadd.f32 %v8866, %v6779
        %v8868 = vadd.f32 %v8867, %v6802
        %v8869 = vadd.f32 %v8868, %v6825
        %v8870 = vadd.f32 %v8869, %v6848
        %v8871 = vadd.f32 %v8870, %v6871
        %v8872 = vadd.f32 %v8871, %v6894
        %v8873 = vadd.f32 %v8872, %v6917
        %v8874 = vadd.f32 %v8873, %v6940
        %v8875 = vadd.f32 %v8874, %v6963
        %v8876 = vadd.f32 %v8875, %v6986
        %v8877 = vadd.f32 %v8876, %v7009
        %v8878 = vadd.f32 %v8877, %v7032
        %v8879 = vadd.f32 %v8878, %v7055
        %v8880 = vadd.f32 %v8879, %v7078
        %v8881 = vadd.f32 %v8880, %v7101
        %v8882 = vadd.f32 %v8881, %v7124
        %v8883 = vadd.f32 %v8882, %v7147
        %v8884 = vadd.f32 %v8883, %v7170
        %v8885 = vadd.f32 %v8884, %v7193
        %v8886 = vadd.f32 %v8885, %v7216
        %v8887 = vadd.f32 %v8886, %v7239
        %v8888 = vadd.f32 %v8887, %v7262
        %v8889 = vadd.f32 %v8888, %v7285
        %v8890 = vadd.f32 %v8889, %v7308
        %v8891 = vadd.f32 %v8890, %v7331
        %v8892 = vadd.f32 %v8891, %v7354
        %v8893 = vadd.f32 %v8892, %v7377
        %v8894 = vadd.f32 %v8893, %v7400
        %v8895 = vadd.f32 %v8894, %v7423
        %v8896 = vadd.f32 %v8895, %v7446
        %v8897 = vadd.f32 %v8896, %v7469
        %v8898 = vadd.f32 %v8897, %v7492
        %v8899 = vadd.f32 %v8898, %v7515
        %v8900 = vadd.f32 %v8899, %v7538
        %v8901 = vadd.f32 %v8900, %v7561
        %v8902 = vadd.f32 %v8901, %v7584
        %v8903 = vadd.f32 %v8902, %v7607
        %v8904 = vadd.f32 %v8903, %v7630
        %v8905 = vadd.f32 %v8904, %v7653
        %v8906 = vadd.f32 %v8905, %v7676
        %v8907 = vadd.f32 %v8906, %v7699
        %v8908 = vadd.f32 %v8907, %v7722
        %v8909 = vadd.f32 %v8908, %v7745
        %v8910 = vadd.f32 %v8909, %v7768
        %v8911 = vadd.f32 %v8910, %v7791
        %v8912 = vadd.f32 %v8911, %v7814
        %v8913 = vadd.f32 %v8912, %v7837
        %v8914 = vadd.f32 %v8913, %v7860
        %v8915 = vadd.f32 %v8914, %v7883
        %v8916 = vadd.f32 %v8915, %v7906
        %v8917 = vadd.f32 %v8916, %v7929
        %v8918 = vadd.f32 %v8917, %v7952
        %v8919 = vadd.f32 %v8918, %v7975
        %v8920 = vadd.f32 %v8919, %v7998
        %v8921 = vadd.f32 %v8920, %v8021
        %v8922 = vadd.f32 %v8921, %v8044
        %v8923 = vadd.f32 %v8922, %v8067
        %v8924 = vadd.f32 %v8923, %v8090
        %v8925 = vadd.f32 %v8924, %v8113
        %v8926 = vadd.f32 %v8925, %v8136
        %v8927 = vadd.f32 %v8926, %v8159
        %v8928 = vadd.f32 %v8927, %v8182
        %v8929 = vadd.f32 %v8928, %v8205
        %v8930 = vadd.f32 %v8929, %v8228
        %v8931 = vadd.f32 %v8930, %v8251
        %v8932 = vadd.f32 %v8931, %v8274
        %v8933 = vadd.f32 %v8932, %v8297
        %v8934 = vadd.f32 %v8933, %v8320
        %v8935 = vadd.f32 %v8934, %v8343
        %v8936 = vadd.f32 %v8935, %v8366
        %v8937 = vadd.f32 %v8936, %v8389
        %v8938 = vadd.f32 %v8937, %v8412
        %v8939 = vadd.f32 %v8938, %v8435
        %v8940 = vadd.f32 %v8939, %v8458
        %v8941 = vadd.f32 %v8940, %v8481
        %v8942 = vadd.f32 %v8941, %v8504
        %v8943 = vadd.f32 %v8942, %v8527
        %v8944 = vadd.f32 %v8943, %v8550
        %v8945 = vadd.f32 %v8944, %v8573
        %v8946 = vadd.f32 %v8945, %v8596
        %v8947 = vadd.f32 %v8946, %v8619
        %v8948 = vadd.f32 %v8947, %v8642
        %v8949 = vadd.f32 %v8948, %v8665
        %v8950 = vadd.f32 %v8949, %v8688
        %v8951 = vadd.f32 %v8950, %v8711
        %v8952 = vadd.f32 %v8951, %v8734
        %v8953 = vadd.f32 %v8952, %v8757
        %v8954 = vld [vmem:[#allocation8] sm:$0x1]
        %v8956 = vperm.slane %v8954, 0
        %v8958 = vadd.f32 %v8953, %v8956
        %8959 = vst [vmem:[%s289] sm:$0xff] %v8958
        %s8960 = sand.u32 %s142, 1
        %s8961 = scalar_lea.sflag [#allocation4], %s8960
        %s8962 = sand.u32 %s142, 1
        %s8963 = smul.addr %s8962, 8
        %s8964 = scalar_lea.vmem [#allocation10], %s8963
        // Predicated region
        $region57: #{tpu_custom_call.1} parent=39 // pred_check
          %p8965 = pneg %p152
        $region58: #{tpu_custom_call.1} parent=39 // pred_check_branch
          %8967 = sbr.rel (%p8965) target = $region60
        $region59: #{tpu_custom_call.1} parent=39 // pred_region
          %8969 = vsyncadd %s8961, 0
          %s8970 = smul.addr %s24, 8
          %s8971 = scalar_lea.hbm %s5, %s8970
          %s8973 = sshll.u32 %s8964, 4
          %s8974 = int_to_ptr.vmem [resolvable:$true] %s8973
          %s8975 = sshll.u32 %s8971, 4
          %s8976 = int_to_ptr.hbm [resolvable:$true] %s8975
          %8978 = dma.vmem_to_hbm [thread:$0]  %s8974, 128, %s8976, %s8961
        $region60: #{tpu_custom_call.1} parent=39 // pred_fallthru
          _
      $region40: #{tpu_custom_call.1} parent=5 // pred_fallthru
        _
      %p8979 = scmp.le.s32.totalorder 2, %s19
      // Predicated region
      $region61: #{tpu_custom_call.1} parent=5 // pred_check
        %p8980 = pneg %p8979
      $region62: #{tpu_custom_call.1} parent=5 // pred_check_branch
        %8982 = sbr.rel (%p8980) target = $region64
      $region63: #{tpu_custom_call.1} parent=5 // pred_region
        %s8983 = ssub.s32 %s19, 2
        // Predicated region
        $region65: #{tpu_custom_call.1} parent=63 // pred_check
          %p8984 = pneg %p158
        $region66: #{tpu_custom_call.1} parent=63 // pred_check_branch
          %8986 = sbr.rel (%p8984) target = $region68
        $region67: #{tpu_custom_call.1} parent=63 // pred_region
          %s8987 = sand.u32 %s143, 1
          %s8988 = scalar_lea.sflag [#allocation4], %s8987
          %s8989 = sand.u32 %s143, 1
          %s8990 = smul.addr %s8989, 8
          %s8991 = scalar_lea.vmem [#allocation10], %s8990
          %8993 = dma.done %s8988, 128
        $region68: #{tpu_custom_call.1} parent=63 // pred_fallthru
          _
      $region64: #{tpu_custom_call.1} parent=5 // pred_fallthru
        _
    $region6: #{tpu_custom_call.1} parent=1 // loop_footer
      %s23 = sadd.s32 1, %s19
    $region7: #{tpu_custom_call.1} parent=1 // loop_footer_branch
      %18 = sbr.rel target = $region3
    $region8: #{tpu_custom_call.1} parent=1 // loop_exit
      _
    %8994 = vsyncpa [#allocation3], 1
    %s8995 = scalar_lea.sflag [#allocation3], 1
    %8996 = vsyncpa %s8995, 1
    %8997 = vsyncpa [#allocation6], 1
    %8998 = vsyncpa [#allocation9], 1
    %8999 = vsyncpa [#allocation4], 1
    %s9000 = scalar_lea.sflag [#allocation4], 1
    %9001 = vsyncpa %s9000, 1

</llo_original>
